<compile_context>
chip_gen: v5e
topology: v5e:2x2
jax: 0.10.0
libtpu: 0.0.40
codegen_flags: <defaults>
</compile_context>

<pallas_src>
import jax
import jax.numpy as jnp
from jax.experimental import pallas as pl
from jax.experimental.pallas import tpu as pltpu

KER = 3        # opt.ker_size
PAD = 1        # opt.padd_size
BN_EPS = 1e-5  # nn.BatchNorm2d default eps
SLOPE = 0.2    # LeakyReLU negative slope

NC_IM = 3      # opt.nc_im
NFC = 32       # opt.nfc
MIN_NFC = 8    # opt.min_nfc
NUM_LAYER = 5  # opt.num_layer


def _round8(n):
    return ((n + 7) // 8) * 8


def _round128(n):
    return ((n + 127) // 128) * 128


def channel_plan(nc_im=NC_IM, nfc=NFC, min_nfc=MIN_NFC, num_layer=NUM_LAYER):
    """(cin, cout) per ConvBlock (head + body) and for the tail Conv2d."""
    plan = [(nc_im, nfc)]
    n = nfc
    for i in range(num_layer - 2):
        n = int(nfc / (2 ** (i + 1)))
        plan.append((max(2 * n, min_nfc), max(n, min_nfc)))
    tail_io = (max(n, min_nfc), nc_im)
    return plan, tail_io


def _make_generator_kernel(batch, height, width, wp, plan, tail_io, margin,
                           np_pad):
    m_real = batch * height * width          # number of real (interior) pixels
    inv_m = 1.0 / float(m_real)
    n_blocks = len(plan)

    def kernel(*refs):
        x_ref, mask_ref = refs[0], refs[1]
        block_refs = refs[2:2 + 3 * n_blocks]
        wt_ref = refs[2 + 3 * n_blocks]
        bt_ref = refs[3 + 3 * n_blocks]
        o_ref = refs[4 + 3 * n_blocks]
        act_ref = refs[5 + 3 * n_blocks]

        # Zero ONLY the guard margins (shifted tap reads treat them as the conv's
        # zero padding). Every interior element is written before it is read, so
        # no full-slab zero-init is needed.
        zeros_m = jnp.zeros((act_ref.shape[0], margin), act_ref.dtype)
        act_ref[:, 0:margin] = zeros_m
        act_ref[:, margin + np_pad:margin + np_pad + margin] = zeros_m

        # Channels-major bf16 input (cin0_pad, np_pad) into the resident window.
        cin0_pad = x_ref.shape[0]
        act_ref[0:cin0_pad, margin:margin + np_pad] = x_ref[...]

        mask = mask_ref[...]                 # (1, np_pad) f32: 1 at interior

        def conv3x3(w_ref, cin_pad):
            # Direct conv: 9 shifted small-K bf16 matmuls, f32 accumulation.
            # No im2col materialization -> no patch-slab stores / scratch.
            acc = None
            for kh in range(KER):
                for kw in range(KER):
                    shift = (kh - PAD) * wp + (kw - PAD)
                    start = margin + shift   # static offset; margin > |shift|
                    rhs = act_ref[0:cin_pad, start:start + np_pad]
                    d = jnp.dot(w_ref[kh * KER + kw], rhs,
                                preferred_element_type=jnp.float32)
                    acc = d if acc is None else acc + d
            return acc                       # (cout, np_pad) f32

        # head + body ConvBlocks, statically unrolled (shapes differ per layer).
        for li in range(n_blocks):
            cin, cout = plan[li]
            w_ref = block_refs[3 * li]
            g_ref = block_refs[3 * li + 1]
            b_ref = block_refs[3 * li + 2]

            acc = conv3x3(w_ref, _round8(cin))
            # BatchNorm2d (training-mode batch stats) over the N*H*W interior
            # pixels only: masked mean, then variance on mean-centered values.
            # Conv bias omitted — the mean subtraction cancels it exactly.
            mean = jnp.sum(acc * mask, axis=1, keepdims=True) * inv_m
            cen = (acc - mean) * mask        # centered; ring/tail zeroed
            var = jnp.sum(cen * cen, axis=1, keepdims=True) * inv_m
            scale = jax.lax.rsqrt(var + BN_EPS) * g_ref[...]
            y = cen * scale + b_ref[...]
            y = jnp.where(y >= 0.0, y, SLOPE * y)          # LeakyReLU(0.2)
            # Interior-only, lane-aligned write-back; re-masking keeps the
            # padding ring exactly zero for the next conv.
            act_ref[0:cout, margin:margin + np_pad] = (
                (y * mask).astype(act_ref.dtype))

        # Tail: Conv2d (+ bias, no BN) + Tanh, f32 output.
        cin_t, _ = tail_io
        acc = conv3x3(wt_ref, _round8(cin_t))
        o_ref[...] = jnp.tanh(acc + bt_ref[...])

    return kernel


def build_generator(batch, height, width, plan=None, tail_io=None):
    if plan is None or tail_io is None:
        plan, tail_io = channel_plan()
    c_max = max([c for io in plan for c in io] + list(tail_io))
    hp, wp = height + 2 * PAD, width + 2 * PAD
    np_flat = batch * hp * wp                # padded, flattened spatial length
    np_pad = _round128(np_flat)              # lane-aligned spatial length
    # Guard band around the resident slab so every shifted tap read is a plain
    # in-bounds static slice; 128-aligned so the interior window stays
    # lane-aligned for stores.
    margin = max(128, _round128(wp + PAD))
    cin0_pad = _round8(plan[0][0])
    nc_out = tail_io[1]
    n_blocks = len(plan)

    kernel = _make_generator_kernel(batch, height, width, wp, plan, tail_io,
                                    margin, np_pad)
    vmem = pl.BlockSpec(memory_space=pltpu.MemorySpace.VMEM)
    n_inputs = 2 + 3 * n_blocks + 2

    # VMEM budget sized to the actual footprint (slab + IO + headroom); a flat
    # 48 MiB request would starve the compiler on v7x (64 MiB physical).
    act_bytes = c_max * (np_pad + 2 * margin) * 2               # bf16 slab
    io_bytes = (cin0_pad * 2 + (1 + nc_out) * 4) * np_pad       # x + mask + out
    vmem_limit = min(64 * 1024 * 1024,
                     max(16 * 1024 * 1024, 4 * (act_bytes + io_bytes)))

    # TODO(synk): for realistic SinGAN scales (e.g. 252x252) add a grid over
    # batch x spatial row-tiles with dimension_semantics=("parallel","arbitrary"),
    # turn the BN stats into sum/sumsq accumulators finalized with pl.when, and
    # re-derive tile sizes for v7x's 64 MiB VMEM / second TensorCore. The
    # monolithic single-invocation form below is for small scales only.
    pallas_fn = pl.pallas_call(
        kernel,
        out_shape=jax.ShapeDtypeStruct((nc_out, np_pad), jnp.float32),
        in_specs=[vmem] * n_inputs,
        out_specs=vmem,
        scratch_shapes=[
            pltpu.VMEM((c_max, np_pad + 2 * margin), jnp.bfloat16),  # act slab
        ],
        compiler_params=pltpu.CompilerParams(vmem_limit_bytes=vmem_limit),
    )

    @jax.jit
    def forward(x_nchw, params):
        x = x_nchw.astype(jnp.float32)
        # NCHW -> channels-major, zero-padded, spatially flattened, lane-padded.
        xp = jnp.pad(x, ((0, 0), (0, 0), (PAD, PAD), (PAD, PAD)))
        x_cm = jnp.transpose(xp, (1, 0, 2, 3)).reshape(x.shape[1], np_flat)
        x_cm = jnp.pad(x_cm, ((0, cin0_pad - x.shape[1]), (0, np_pad - np_flat)))
        x_cm = x_cm.astype(jnp.bfloat16)
        # Interior-pixel mask (1 at real pixels, 0 on the ring / lane-pad tail).
        ones = jnp.ones((batch, 1, height, width), jnp.float32)
        mask = jnp.pad(ones, ((0, 0), (0, 0), (PAD, PAD), (PAD, PAD)))
        mask = jnp.transpose(mask, (1, 0, 2, 3)).reshape(1, np_flat)
        mask = jnp.pad(mask, ((0, 0), (0, np_pad - np_flat)))

        args = [x_cm, mask]
        for (w, g, b) in params["blocks"]:
            args.extend([w, g, b])
        args.extend(params["tail"])
        out = pallas_fn(*args)                               # (nc_im, np_pad)
        out = out[:, :np_flat].reshape(nc_out, batch, hp, wp)
        out = out[:, :, PAD:PAD + height, PAD:PAD + width]   # drop padding ring
        return jnp.transpose(out, (1, 0, 2, 3))              # -> NCHW

    return forward


def init_params(key, plan=None, tail_io=None):
    """Deterministic random params mirroring Generator.__init__ shapes."""
    if plan is None or tail_io is None:
        plan, tail_io = channel_plan()
    kk = KER * KER

    def make_wtaps(k, cin, cout):
        # Tap-major weights (9, cout, round8(cin)), bf16: entry [kh*3+kw, co, ci]
        # holds the PyTorch OIHW weight W[co, ci, kh, kw]; pad channels are 0.
        cin_pad = _round8(cin)
        w = 0.05 * jax.random.normal(k, (kk, cout, cin), jnp.float32)
        full = jnp.zeros((kk, cout, cin_pad), jnp.float32).at[:, :, :cin].set(w)
        return full.astype(jnp.bfloat16)

    blocks = []
    for cin, cout in plan:
        key, k1, k2, k3 = jax.random.split(key, 4)
        # ConvBlock conv bias not materialized: training-mode BatchNorm subtracts
        # the per-channel batch mean, which cancels a constant bias exactly.
        gamma = 1.0 + 0.1 * jax.random.normal(k2, (cout, 1), jnp.float32)
        beta = 0.1 * jax.random.normal(k3, (cout, 1), jnp.float32)
        blocks.append((make_wtaps(k1, cin, cout), gamma, beta))

    cin_t, cout_t = tail_io
    key, k1, k2 = jax.random.split(key, 3)
    wt = make_wtaps(k1, cin_t, cout_t)
    bt = 0.05 * jax.random.normal(k2, (cout_t, 1), jnp.float32)
    return {"blocks": blocks, "tail": (wt, bt)}


def reference_forward(x, params, plan, tail_io):
    """Pure-JAX (f32) reference of the PyTorch forward, for a sanity check."""
    def conv(h, w_taps, cin):
        w = w_taps.astype(jnp.float32)[:, :, :cin]            # (9, cout, cin)
        w = w.reshape(KER, KER, w.shape[1], cin)               # (kh, kw, O, I)
        w = jnp.transpose(w, (2, 3, 0, 1))                     # OIHW
        return jax.lax.conv_general_dilated(
            h, w, window_strides=(1, 1), padding=[(PAD, PAD), (PAD, PAD)],
            dimension_numbers=("NCHW", "OIHW", "NCHW"))

    h = x.astype(jnp.float32)
    for (cin, _), (w, g, b) in zip(plan, params["blocks"]):
        h = conv(h, w, cin)
        mean = jnp.mean(h, axis=(0, 2, 3), keepdims=True)
        var = jnp.mean((h - mean) ** 2, axis=(0, 2, 3), keepdims=True)
        h = (h - mean) * jax.lax.rsqrt(var + BN_EPS)
        h = h * g.reshape(1, -1, 1, 1) + b.reshape(1, -1, 1, 1)
        h = jnp.where(h >= 0.0, h, SLOPE * h)
    wt, bt = params["tail"]
    h = conv(h, wt, tail_io[0]) + bt.reshape(1, -1, 1, 1)
    return jnp.tanh(h)


if __name__ == "__main__":
    plan, tail_io = channel_plan()
    key = jax.random.PRNGKey(0)
    pkey, xkey = jax.random.split(key)
    params = init_params(pkey, plan, tail_io)

    batch, height, width = 2, 16, 16
    x = jax.random.normal(xkey, (batch, NC_IM, height, width), jnp.float32)

    forward = build_generator(batch, height, width, plan, tail_io)
    y = jax.block_until_ready(forward(x, params))

    assert y.shape == (batch, NC_IM, height, width)
    assert bool(jnp.all(jnp.isfinite(y)))
    assert bool(jnp.all(jnp.abs(y) <= 1.0))   # tail ends with Tanh

    # Sanity check vs a pure-JAX f32 reference (kernel matmuls/storage are bf16).
    y_ref = jax.block_until_ready(reference_forward(x, params, plan, tail_io))
    max_err = float(jnp.max(jnp.abs(y - y_ref)))
    assert max_err < 0.1, f"kernel/reference mismatch: max abs err {max_err}"
    print("KERNEL_OK")
</pallas_src>

<mosaic_0001>
module attributes {stable_mosaic.version = 11 : i64} {
  func.func @kernel(%arg0: memref<8x768xbf16, #tpu.memory_space<vmem>>, %arg1: memref<1x768xf32, #tpu.memory_space<vmem>>, %arg2: memref<9x32x8xbf16, #tpu.memory_space<vmem>>, %arg3: memref<32x1xf32, #tpu.memory_space<vmem>>, %arg4: memref<32x1xf32, #tpu.memory_space<vmem>>, %arg5: memref<9x16x32xbf16, #tpu.memory_space<vmem>>, %arg6: memref<16x1xf32, #tpu.memory_space<vmem>>, %arg7: memref<16x1xf32, #tpu.memory_space<vmem>>, %arg8: memref<9x8x16xbf16, #tpu.memory_space<vmem>>, %arg9: memref<8x1xf32, #tpu.memory_space<vmem>>, %arg10: memref<8x1xf32, #tpu.memory_space<vmem>>, %arg11: memref<9x8x8xbf16, #tpu.memory_space<vmem>>, %arg12: memref<8x1xf32, #tpu.memory_space<vmem>>, %arg13: memref<8x1xf32, #tpu.memory_space<vmem>>, %arg14: memref<9x3x8xbf16, #tpu.memory_space<vmem>>, %arg15: memref<3x1xf32, #tpu.memory_space<vmem>>, %arg16: memref<3x768xf32, #tpu.memory_space<vmem>>, %arg17: memref<32x1024xbf16, #tpu.memory_space<vmem>>) attributes {dimension_semantics = [], scalar_prefetch = 0 : i64, scratch_operands = 1 : i64, tpu.core_type = #tpu.core_type<tc>} {
    %cst = arith.constant 0.000000e+00 : bf16
    %0 = vector.broadcast %cst : bf16 to vector<32x128xbf16>
    %c0 = arith.constant 0 : index
    %c0_0 = arith.constant 0 : index
    %1 = vector.load %arg17[%c0, %c0_0] : memref<32x1024xbf16, #tpu.memory_space<vmem>>, vector<32x128xbf16>
    tpu.vector_store %arg17[%c0, %c0_0], %0 {strides = array<i32>} : memref<32x1024xbf16, #tpu.memory_space<vmem>>, vector<32x128xbf16>,
    %c0_1 = arith.constant 0 : index
    %c896 = arith.constant 896 : index
    %2 = vector.load %arg17[%c0_1, %c896] : memref<32x1024xbf16, #tpu.memory_space<vmem>>, vector<32x128xbf16>
    tpu.vector_store %arg17[%c0_1, %c896], %0 {strides = array<i32>} : memref<32x1024xbf16, #tpu.memory_space<vmem>>, vector<32x128xbf16>,
    %c0_2 = arith.constant 0 : index
    %c0_3 = arith.constant 0 : index
    %3 = vector.load %arg0[%c0_2, %c0_3] : memref<8x768xbf16, #tpu.memory_space<vmem>>, vector<8x768xbf16>
    %c0_4 = arith.constant 0 : index
    %c128 = arith.constant 128 : index
    %4 = vector.load %arg17[%c0_4, %c128] : memref<32x1024xbf16, #tpu.memory_space<vmem>>, vector<8x768xbf16>
    tpu.vector_store %arg17[%c0_4, %c128], %3 {strides = array<i32>} : memref<32x1024xbf16, #tpu.memory_space<vmem>>, vector<8x768xbf16>,
    %c0_5 = arith.constant 0 : index
    %c0_6 = arith.constant 0 : index
    %5 = vector.load %arg1[%c0_5, %c0_6] : memref<1x768xf32, #tpu.memory_space<vmem>>, vector<1x768xf32>
    %c0_7 = arith.constant 0 : index
    %c109 = arith.constant 109 : index
    %6 = vector.load %arg17[%c0_7, %c109] : memref<32x1024xbf16, #tpu.memory_space<vmem>>, vector<8x768xbf16>
    %c0_8 = arith.constant 0 : index
    %c0_9 = arith.constant 0 : index
    %c0_10 = arith.constant 0 : index
    %7 = vector.load %arg2[%c0_8, %c0_9, %c0_10] : memref<9x32x8xbf16, #tpu.memory_space<vmem>>, vector<1x32x8xbf16>
    %8 = vector.shape_cast %7 : vector<1x32x8xbf16> to vector<32x8xbf16>
    %cst_11 = arith.constant dense<0.000000e+00> : vector<32x768xf32>
    %9 = tpu.matmul %8, %6, %cst_11 {dimension_numbers = #tpu.dot_dimension_numbers<[1], [0], [0], [1], [0, 0, 1, 1], [], []>} : vector<32x8xbf16>, vector<8x768xbf16>, vector<32x768xf32> -> vector<32x768xf32>
    %c0_12 = arith.constant 0 : index
    %c110 = arith.constant 110 : index
    %10 = vector.load %arg17[%c0_12, %c110] : memref<32x1024xbf16, #tpu.memory_space<vmem>>, vector<8x768xbf16>
    %c1 = arith.constant 1 : index
    %c0_13 = arith.constant 0 : index
    %c0_14 = arith.constant 0 : index
    %11 = vector.load %arg2[%c1, %c0_13, %c0_14] : memref<9x32x8xbf16, #tpu.memory_space<vmem>>, vector<1x32x8xbf16>
    %12 = vector.shape_cast %11 : vector<1x32x8xbf16> to vector<32x8xbf16>
    %cst_15 = arith.constant dense<0.000000e+00> : vector<32x768xf32>
    %13 = tpu.matmul %12, %10, %cst_15 {dimension_numbers = #tpu.dot_dimension_numbers<[1], [0], [0], [1], [0, 0, 1, 1], [], []>} : vector<32x8xbf16>, vector<8x768xbf16>, vector<32x768xf32> -> vector<32x768xf32>
    %14 = arith.addf %9, %13 : vector<32x768xf32>
    %c0_16 = arith.constant 0 : index
    %c111 = arith.constant 111 : index
    %15 = vector.load %arg17[%c0_16, %c111] : memref<32x1024xbf16, #tpu.memory_space<vmem>>, vector<8x768xbf16>
    %c2 = arith.constant 2 : index
    %c0_17 = arith.constant 0 : index
    %c0_18 = arith.constant 0 : index
    %16 = vector.load %arg2[%c2, %c0_17, %c0_18] : memref<9x32x8xbf16, #tpu.memory_space<vmem>>, vector<1x32x8xbf16>
    %17 = vector.shape_cast %16 : vector<1x32x8xbf16> to vector<32x8xbf16>
    %cst_19 = arith.constant dense<0.000000e+00> : vector<32x768xf32>
    %18 = tpu.matmul %17, %15, %cst_19 {dimension_numbers = #tpu.dot_dimension_numbers<[1], [0], [0], [1], [0, 0, 1, 1], [], []>} : vector<32x8xbf16>, vector<8x768xbf16>, vector<32x768xf32> -> vector<32x768xf32>
    %19 = arith.addf %14, %18 : vector<32x768xf32>
    %c0_20 = arith.constant 0 : index
    %c127 = arith.constant 127 : index
    %20 = vector.load %arg17[%c0_20, %c127] : memref<32x1024xbf16, #tpu.memory_space<vmem>>, vector<8x768xbf16>
    %c3 = arith.constant 3 : index
    %c0_21 = arith.constant 0 : index
    %c0_22 = arith.constant 0 : index
    %21 = vector.load %arg2[%c3, %c0_21, %c0_22] : memref<9x32x8xbf16, #tpu.memory_space<vmem>>, vector<1x32x8xbf16>
    %22 = vector.shape_cast %21 : vector<1x32x8xbf16> to vector<32x8xbf16>
    %cst_23 = arith.constant dense<0.000000e+00> : vector<32x768xf32>
    %23 = tpu.matmul %22, %20, %cst_23 {dimension_numbers = #tpu.dot_dimension_numbers<[1], [0], [0], [1], [0, 0, 1, 1], [], []>} : vector<32x8xbf16>, vector<8x768xbf16>, vector<32x768xf32> -> vector<32x768xf32>
    %24 = arith.addf %19, %23 : vector<32x768xf32>
    %c0_24 = arith.constant 0 : index
    %c128_25 = arith.constant 128 : index
    %25 = vector.load %arg17[%c0_24, %c128_25] : memref<32x1024xbf16, #tpu.memory_space<vmem>>, vector<8x768xbf16>
    %c4 = arith.constant 4 : index
    %c0_26 = arith.constant 0 : index
    %c0_27 = arith.constant 0 : index
    %26 = vector.load %arg2[%c4, %c0_26, %c0_27] : memref<9x32x8xbf16, #tpu.memory_space<vmem>>, vector<1x32x8xbf16>
    %27 = vector.shape_cast %26 : vector<1x32x8xbf16> to vector<32x8xbf16>
    %cst_28 = arith.constant dense<0.000000e+00> : vector<32x768xf32>
    %28 = tpu.matmul %27, %25, %cst_28 {dimension_numbers = #tpu.dot_dimension_numbers<[1], [0], [0], [1], [0, 0, 1, 1], [], []>} : vector<32x8xbf16>, vector<8x768xbf16>, vector<32x768xf32> -> vector<32x768xf32>
    %29 = arith.addf %24, %28 : vector<32x768xf32>
    %c0_29 = arith.constant 0 : index
    %c129 = arith.constant 129 : index
    %30 = vector.load %arg17[%c0_29, %c129] : memref<32x1024xbf16, #tpu.memory_space<vmem>>, vector<8x768xbf16>
    %c5 = arith.constant 5 : index
    %c0_30 = arith.constant 0 : index
    %c0_31 = arith.constant 0 : index
    %31 = vector.load %arg2[%c5, %c0_30, %c0_31] : memref<9x32x8xbf16, #tpu.memory_space<vmem>>, vector<1x32x8xbf16>
    %32 = vector.shape_cast %31 : vector<1x32x8xbf16> to vector<32x8xbf16>
    %cst_32 = arith.constant dense<0.000000e+00> : vector<32x768xf32>
    %33 = tpu.matmul %32, %30, %cst_32 {dimension_numbers = #tpu.dot_dimension_numbers<[1], [0], [0], [1], [0, 0, 1, 1], [], []>} : vector<32x8xbf16>, vector<8x768xbf16>, vector<32x768xf32> -> vector<32x768xf32>
    %34 = arith.addf %29, %33 : vector<32x768xf32>
    %c0_33 = arith.constant 0 : index
    %c145 = arith.constant 145 : index
    %35 = vector.load %arg17[%c0_33, %c145] : memref<32x1024xbf16, #tpu.memory_space<vmem>>, vector<8x768xbf16>
    %c6 = arith.constant 6 : index
    %c0_34 = arith.constant 0 : index
    %c0_35 = arith.constant 0 : index
    %36 = vector.load %arg2[%c6, %c0_34, %c0_35] : memref<9x32x8xbf16, #tpu.memory_space<vmem>>, vector<1x32x8xbf16>
    %37 = vector.shape_cast %36 : vector<1x32x8xbf16> to vector<32x8xbf16>
    %cst_36 = arith.constant dense<0.000000e+00> : vector<32x768xf32>
    %38 = tpu.matmul %37, %35, %cst_36 {dimension_numbers = #tpu.dot_dimension_numbers<[1], [0], [0], [1], [0, 0, 1, 1], [], []>} : vector<32x8xbf16>, vector<8x768xbf16>, vector<32x768xf32> -> vector<32x768xf32>
    %39 = arith.addf %34, %38 : vector<32x768xf32>
    %c0_37 = arith.constant 0 : index
    %c146 = arith.constant 146 : index
    %40 = vector.load %arg17[%c0_37, %c146] : memref<32x1024xbf16, #tpu.memory_space<vmem>>, vector<8x768xbf16>
    %c7 = arith.constant 7 : index
    %c0_38 = arith.constant 0 : index
    %c0_39 = arith.constant 0 : index
    %41 = vector.load %arg2[%c7, %c0_38, %c0_39] : memref<9x32x8xbf16, #tpu.memory_space<vmem>>, vector<1x32x8xbf16>
    %42 = vector.shape_cast %41 : vector<1x32x8xbf16> to vector<32x8xbf16>
    %cst_40 = arith.constant dense<0.000000e+00> : vector<32x768xf32>
    %43 = tpu.matmul %42, %40, %cst_40 {dimension_numbers = #tpu.dot_dimension_numbers<[1], [0], [0], [1], [0, 0, 1, 1], [], []>} : vector<32x8xbf16>, vector<8x768xbf16>, vector<32x768xf32> -> vector<32x768xf32>
    %44 = arith.addf %39, %43 : vector<32x768xf32>
    %c0_41 = arith.constant 0 : index
    %c147 = arith.constant 147 : index
    %45 = vector.load %arg17[%c0_41, %c147] : memref<32x1024xbf16, #tpu.memory_space<vmem>>, vector<8x768xbf16>
    %c8 = arith.constant 8 : index
    %c0_42 = arith.constant 0 : index
    %c0_43 = arith.constant 0 : index
    %46 = vector.load %arg2[%c8, %c0_42, %c0_43] : memref<9x32x8xbf16, #tpu.memory_space<vmem>>, vector<1x32x8xbf16>
    %47 = vector.shape_cast %46 : vector<1x32x8xbf16> to vector<32x8xbf16>
    %cst_44 = arith.constant dense<0.000000e+00> : vector<32x768xf32>
    %48 = tpu.matmul %47, %45, %cst_44 {dimension_numbers = #tpu.dot_dimension_numbers<[1], [0], [0], [1], [0, 0, 1, 1], [], []>} : vector<32x8xbf16>, vector<8x768xbf16>, vector<32x768xf32> -> vector<32x768xf32>
    %49 = arith.addf %44, %48 : vector<32x768xf32>
    %50 = vector.broadcast %5 : vector<1x768xf32> to vector<32x768xf32>
    %51 = arith.mulf %49, %50 : vector<32x768xf32>
    %cst_45 = arith.constant dense<0.000000e+00> : vector<32xf32>
    %52 = vector.multi_reduction <add>, %51, %cst_45 [1] : vector<32x768xf32> to vector<32xf32>
    %53 = vector.shape_cast %52 : vector<32xf32> to vector<32x1xf32>
    %cst_46 = arith.constant 0.001953125 : f32
    %54 = vector.broadcast %cst_46 : f32 to vector<32x1xf32>
    %55 = arith.mulf %53, %54 : vector<32x1xf32>
    %56 = vector.broadcast %55 : vector<32x1xf32> to vector<32x768xf32>
    %57 = arith.subf %49, %56 : vector<32x768xf32>
    %58 = vector.broadcast %5 : vector<1x768xf32> to vector<32x768xf32>
    %59 = arith.mulf %57, %58 : vector<32x768xf32>
    %60 = arith.mulf %59, %59 : vector<32x768xf32>
    %cst_47 = arith.constant dense<0.000000e+00> : vector<32xf32>
    %61 = vector.multi_reduction <add>, %60, %cst_47 [1] : vector<32x768xf32> to vector<32xf32>
    %62 = vector.shape_cast %61 : vector<32xf32> to vector<32x1xf32>
    %cst_48 = arith.constant 0.001953125 : f32
    %63 = vector.broadcast %cst_48 : f32 to vector<32x1xf32>
    %64 = arith.mulf %62, %63 : vector<32x1xf32>
    %cst_49 = arith.constant 9.99999974E-6 : f32
    %65 = vector.broadcast %cst_49 : f32 to vector<32x1xf32>
    %66 = arith.addf %64, %65 : vector<32x1xf32>
    %67 = math.rsqrt %66 : vector<32x1xf32>
    %c0_50 = arith.constant 0 : index
    %c0_51 = arith.constant 0 : index
    %68 = vector.load %arg3[%c0_50, %c0_51] : memref<32x1xf32, #tpu.memory_space<vmem>>, vector<32x1xf32>
    %69 = arith.mulf %67, %68 : vector<32x1xf32>
    %70 = vector.broadcast %69 : vector<32x1xf32> to vector<32x768xf32>
    %71 = arith.mulf %59, %70 : vector<32x768xf32>
    %c0_52 = arith.constant 0 : index
    %c0_53 = arith.constant 0 : index
    %72 = vector.load %arg4[%c0_52, %c0_53] : memref<32x1xf32, #tpu.memory_space<vmem>>, vector<32x1xf32>
    %73 = vector.broadcast %72 : vector<32x1xf32> to vector<32x768xf32>
    %74 = arith.addf %71, %73 : vector<32x768xf32>
    %cst_54 = arith.constant 0.000000e+00 : f32
    %75 = vector.broadcast %cst_54 : f32 to vector<32x768xf32>
    %76 = arith.cmpf oge, %74, %75 : vector<32x768xf32>
    %cst_55 = arith.constant 2.000000e-01 : f32
    %77 = vector.broadcast %cst_55 : f32 to vector<32x768xf32>
    %78 = arith.mulf %77, %74 : vector<32x768xf32>
    %79 = arith.select %76, %74, %78 : vector<32x768xi1>, vector<32x768xf32>
    %80 = vector.broadcast %5 : vector<1x768xf32> to vector<32x768xf32>
    %81 = arith.mulf %79, %80 : vector<32x768xf32>
    %82 = arith.truncf %81 : vector<32x768xf32> to vector<32x768xbf16>
    %c0_56 = arith.constant 0 : index
    %c128_57 = arith.constant 128 : index
    %83 = vector.load %arg17[%c0_56, %c128_57] : memref<32x1024xbf16, #tpu.memory_space<vmem>>, vector<32x768xbf16>
    tpu.vector_store %arg17[%c0_56, %c128_57], %82 {strides = array<i32>} : memref<32x1024xbf16, #tpu.memory_space<vmem>>, vector<32x768xbf16>,
    %c0_58 = arith.constant 0 : index
    %c109_59 = arith.constant 109 : index
    %84 = vector.load %arg17[%c0_58, %c109_59] : memref<32x1024xbf16, #tpu.memory_space<vmem>>, vector<32x768xbf16>
    %c0_60 = arith.constant 0 : index
    %c0_61 = arith.constant 0 : index
    %c0_62 = arith.constant 0 : index
    %85 = vector.load %arg5[%c0_60, %c0_61, %c0_62] : memref<9x16x32xbf16, #tpu.memory_space<vmem>>, vector<1x16x32xbf16>
    %86 = vector.shape_cast %85 : vector<1x16x32xbf16> to vector<16x32xbf16>
    %cst_63 = arith.constant dense<0.000000e+00> : vector<16x768xf32>
    %87 = tpu.matmul %86, %84, %cst_63 {dimension_numbers = #tpu.dot_dimension_numbers<[1], [0], [0], [1], [0, 0, 1, 1], [], []>} : vector<16x32xbf16>, vector<32x768xbf16>, vector<16x768xf32> -> vector<16x768xf32>
    %c0_64 = arith.constant 0 : index
    %c110_65 = arith.constant 110 : index
    %88 = vector.load %arg17[%c0_64, %c110_65] : memref<32x1024xbf16, #tpu.memory_space<vmem>>, vector<32x768xbf16>
    %c1_66 = arith.constant 1 : index
    %c0_67 = arith.constant 0 : index
    %c0_68 = arith.constant 0 : index
    %89 = vector.load %arg5[%c1_66, %c0_67, %c0_68] : memref<9x16x32xbf16, #tpu.memory_space<vmem>>, vector<1x16x32xbf16>
    %90 = vector.shape_cast %89 : vector<1x16x32xbf16> to vector<16x32xbf16>
    %cst_69 = arith.constant dense<0.000000e+00> : vector<16x768xf32>
    %91 = tpu.matmul %90, %88, %cst_69 {dimension_numbers = #tpu.dot_dimension_numbers<[1], [0], [0], [1], [0, 0, 1, 1], [], []>} : vector<16x32xbf16>, vector<32x768xbf16>, vector<16x768xf32> -> vector<16x768xf32>
    %92 = arith.addf %87, %91 : vector<16x768xf32>
    %c0_70 = arith.constant 0 : index
    %c111_71 = arith.constant 111 : index
    %93 = vector.load %arg17[%c0_70, %c111_71] : memref<32x1024xbf16, #tpu.memory_space<vmem>>, vector<32x768xbf16>
    %c2_72 = arith.constant 2 : index
    %c0_73 = arith.constant 0 : index
    %c0_74 = arith.constant 0 : index
    %94 = vector.load %arg5[%c2_72, %c0_73, %c0_74] : memref<9x16x32xbf16, #tpu.memory_space<vmem>>, vector<1x16x32xbf16>
    %95 = vector.shape_cast %94 : vector<1x16x32xbf16> to vector<16x32xbf16>
    %cst_75 = arith.constant dense<0.000000e+00> : vector<16x768xf32>
    %96 = tpu.matmul %95, %93, %cst_75 {dimension_numbers = #tpu.dot_dimension_numbers<[1], [0], [0], [1], [0, 0, 1, 1], [], []>} : vector<16x32xbf16>, vector<32x768xbf16>, vector<16x768xf32> -> vector<16x768xf32>
    %97 = arith.addf %92, %96 : vector<16x768xf32>
    %c0_76 = arith.constant 0 : index
    %c127_77 = arith.constant 127 : index
    %98 = vector.load %arg17[%c0_76, %c127_77] : memref<32x1024xbf16, #tpu.memory_space<vmem>>, vector<32x768xbf16>
    %c3_78 = arith.constant 3 : index
    %c0_79 = arith.constant 0 : index
    %c0_80 = arith.constant 0 : index
    %99 = vector.load %arg5[%c3_78, %c0_79, %c0_80] : memref<9x16x32xbf16, #tpu.memory_space<vmem>>, vector<1x16x32xbf16>
    %100 = vector.shape_cast %99 : vector<1x16x32xbf16> to vector<16x32xbf16>
    %cst_81 = arith.constant dense<0.000000e+00> : vector<16x768xf32>
    %101 = tpu.matmul %100, %98, %cst_81 {dimension_numbers = #tpu.dot_dimension_numbers<[1], [0], [0], [1], [0, 0, 1, 1], [], []>} : vector<16x32xbf16>, vector<32x768xbf16>, vector<16x768xf32> -> vector<16x768xf32>
    %102 = arith.addf %97, %101 : vector<16x768xf32>
    %c0_82 = arith.constant 0 : index
    %c128_83 = arith.constant 128 : index
    %103 = vector.load %arg17[%c0_82, %c128_83] : memref<32x1024xbf16, #tpu.memory_space<vmem>>, vector<32x768xbf16>
    %c4_84 = arith.constant 4 : index
    %c0_85 = arith.constant 0 : index
    %c0_86 = arith.constant 0 : index
    %104 = vector.load %arg5[%c4_84, %c0_85, %c0_86] : memref<9x16x32xbf16, #tpu.memory_space<vmem>>, vector<1x16x32xbf16>
    %105 = vector.shape_cast %104 : vector<1x16x32xbf16> to vector<16x32xbf16>
    %cst_87 = arith.constant dense<0.000000e+00> : vector<16x768xf32>
    %106 = tpu.matmul %105, %103, %cst_87 {dimension_numbers = #tpu.dot_dimension_numbers<[1], [0], [0], [1], [0, 0, 1, 1], [], []>} : vector<16x32xbf16>, vector<32x768xbf16>, vector<16x768xf32> -> vector<16x768xf32>
    %107 = arith.addf %102, %106 : vector<16x768xf32>
    %c0_88 = arith.constant 0 : index
    %c129_89 = arith.constant 129 : index
    %108 = vector.load %arg17[%c0_88, %c129_89] : memref<32x1024xbf16, #tpu.memory_space<vmem>>, vector<32x768xbf16>
    %c5_90 = arith.constant 5 : index
    %c0_91 = arith.constant 0 : index
    %c0_92 = arith.constant 0 : index
    %109 = vector.load %arg5[%c5_90, %c0_91, %c0_92] : memref<9x16x32xbf16, #tpu.memory_space<vmem>>, vector<1x16x32xbf16>
    %110 = vector.shape_cast %109 : vector<1x16x32xbf16> to vector<16x32xbf16>
    %cst_93 = arith.constant dense<0.000000e+00> : vector<16x768xf32>
    %111 = tpu.matmul %110, %108, %cst_93 {dimension_numbers = #tpu.dot_dimension_numbers<[1], [0], [0], [1], [0, 0, 1, 1], [], []>} : vector<16x32xbf16>, vector<32x768xbf16>, vector<16x768xf32> -> vector<16x768xf32>
    %112 = arith.addf %107, %111 : vector<16x768xf32>
    %c0_94 = arith.constant 0 : index
    %c145_95 = arith.constant 145 : index
    %113 = vector.load %arg17[%c0_94, %c145_95] : memref<32x1024xbf16, #tpu.memory_space<vmem>>, vector<32x768xbf16>
    %c6_96 = arith.constant 6 : index
    %c0_97 = arith.constant 0 : index
    %c0_98 = arith.constant 0 : index
    %114 = vector.load %arg5[%c6_96, %c0_97, %c0_98] : memref<9x16x32xbf16, #tpu.memory_space<vmem>>, vector<1x16x32xbf16>
    %115 = vector.shape_cast %114 : vector<1x16x32xbf16> to vector<16x32xbf16>
    %cst_99 = arith.constant dense<0.000000e+00> : vector<16x768xf32>
    %116 = tpu.matmul %115, %113, %cst_99 {dimension_numbers = #tpu.dot_dimension_numbers<[1], [0], [0], [1], [0, 0, 1, 1], [], []>} : vector<16x32xbf16>, vector<32x768xbf16>, vector<16x768xf32> -> vector<16x768xf32>
    %117 = arith.addf %112, %116 : vector<16x768xf32>
    %c0_100 = arith.constant 0 : index
    %c146_101 = arith.constant 146 : index
    %118 = vector.load %arg17[%c0_100, %c146_101] : memref<32x1024xbf16, #tpu.memory_space<vmem>>, vector<32x768xbf16>
    %c7_102 = arith.constant 7 : index
    %c0_103 = arith.constant 0 : index
    %c0_104 = arith.constant 0 : index
    %119 = vector.load %arg5[%c7_102, %c0_103, %c0_104] : memref<9x16x32xbf16, #tpu.memory_space<vmem>>, vector<1x16x32xbf16>
    %120 = vector.shape_cast %119 : vector<1x16x32xbf16> to vector<16x32xbf16>
    %cst_105 = arith.constant dense<0.000000e+00> : vector<16x768xf32>
    %121 = tpu.matmul %120, %118, %cst_105 {dimension_numbers = #tpu.dot_dimension_numbers<[1], [0], [0], [1], [0, 0, 1, 1], [], []>} : vector<16x32xbf16>, vector<32x768xbf16>, vector<16x768xf32> -> vector<16x768xf32>
    %122 = arith.addf %117, %121 : vector<16x768xf32>
    %c0_106 = arith.constant 0 : index
    %c147_107 = arith.constant 147 : index
    %123 = vector.load %arg17[%c0_106, %c147_107] : memref<32x1024xbf16, #tpu.memory_space<vmem>>, vector<32x768xbf16>
    %c8_108 = arith.constant 8 : index
    %c0_109 = arith.constant 0 : index
    %c0_110 = arith.constant 0 : index
    %124 = vector.load %arg5[%c8_108, %c0_109, %c0_110] : memref<9x16x32xbf16, #tpu.memory_space<vmem>>, vector<1x16x32xbf16>
    %125 = vector.shape_cast %124 : vector<1x16x32xbf16> to vector<16x32xbf16>
    %cst_111 = arith.constant dense<0.000000e+00> : vector<16x768xf32>
    %126 = tpu.matmul %125, %123, %cst_111 {dimension_numbers = #tpu.dot_dimension_numbers<[1], [0], [0], [1], [0, 0, 1, 1], [], []>} : vector<16x32xbf16>, vector<32x768xbf16>, vector<16x768xf32> -> vector<16x768xf32>
    %127 = arith.addf %122, %126 : vector<16x768xf32>
    %128 = vector.broadcast %5 : vector<1x768xf32> to vector<16x768xf32>
    %129 = arith.mulf %127, %128 : vector<16x768xf32>
    %cst_112 = arith.constant dense<0.000000e+00> : vector<16xf32>
    %130 = vector.multi_reduction <add>, %129, %cst_112 [1] : vector<16x768xf32> to vector<16xf32>
    %131 = vector.shape_cast %130 : vector<16xf32> to vector<16x1xf32>
    %cst_113 = arith.constant 0.001953125 : f32
    %132 = vector.broadcast %cst_113 : f32 to vector<16x1xf32>
    %133 = arith.mulf %131, %132 : vector<16x1xf32>
    %134 = vector.broadcast %133 : vector<16x1xf32> to vector<16x768xf32>
    %135 = arith.subf %127, %134 : vector<16x768xf32>
    %136 = vector.broadcast %5 : vector<1x768xf32> to vector<16x768xf32>
    %137 = arith.mulf %135, %136 : vector<16x768xf32>
    %138 = arith.mulf %137, %137 : vector<16x768xf32>
    %cst_114 = arith.constant dense<0.000000e+00> : vector<16xf32>
    %139 = vector.multi_reduction <add>, %138, %cst_114 [1] : vector<16x768xf32> to vector<16xf32>
    %140 = vector.shape_cast %139 : vector<16xf32> to vector<16x1xf32>
    %cst_115 = arith.constant 0.001953125 : f32
    %141 = vector.broadcast %cst_115 : f32 to vector<16x1xf32>
    %142 = arith.mulf %140, %141 : vector<16x1xf32>
    %cst_116 = arith.constant 9.99999974E-6 : f32
    %143 = vector.broadcast %cst_116 : f32 to vector<16x1xf32>
    %144 = arith.addf %142, %143 : vector<16x1xf32>
    %145 = math.rsqrt %144 : vector<16x1xf32>
    %c0_117 = arith.constant 0 : index
    %c0_118 = arith.constant 0 : index
    %146 = vector.load %arg6[%c0_117, %c0_118] : memref<16x1xf32, #tpu.memory_space<vmem>>, vector<16x1xf32>
    %147 = arith.mulf %145, %146 : vector<16x1xf32>
    %148 = vector.broadcast %147 : vector<16x1xf32> to vector<16x768xf32>
    %149 = arith.mulf %137, %148 : vector<16x768xf32>
    %c0_119 = arith.constant 0 : index
    %c0_120 = arith.constant 0 : index
    %150 = vector.load %arg7[%c0_119, %c0_120] : memref<16x1xf32, #tpu.memory_space<vmem>>, vector<16x1xf32>
    %151 = vector.broadcast %150 : vector<16x1xf32> to vector<16x768xf32>
    %152 = arith.addf %149, %151 : vector<16x768xf32>
    %cst_121 = arith.constant 0.000000e+00 : f32
    %153 = vector.broadcast %cst_121 : f32 to vector<16x768xf32>
    %154 = arith.cmpf oge, %152, %153 : vector<16x768xf32>
    %cst_122 = arith.constant 2.000000e-01 : f32
    %155 = vector.broadcast %cst_122 : f32 to vector<16x768xf32>
    %156 = arith.mulf %155, %152 : vector<16x768xf32>
    %157 = arith.select %154, %152, %156 : vector<16x768xi1>, vector<16x768xf32>
    %158 = vector.broadcast %5 : vector<1x768xf32> to vector<16x768xf32>
    %159 = arith.mulf %157, %158 : vector<16x768xf32>
    %160 = arith.truncf %159 : vector<16x768xf32> to vector<16x768xbf16>
    %c0_123 = arith.constant 0 : index
    %c128_124 = arith.constant 128 : index
    %161 = vector.load %arg17[%c0_123, %c128_124] : memref<32x1024xbf16, #tpu.memory_space<vmem>>, vector<16x768xbf16>
    tpu.vector_store %arg17[%c0_123, %c128_124], %160 {strides = array<i32>} : memref<32x1024xbf16, #tpu.memory_space<vmem>>, vector<16x768xbf16>,
    %c0_125 = arith.constant 0 : index
    %c109_126 = arith.constant 109 : index
    %162 = vector.load %arg17[%c0_125, %c109_126] : memref<32x1024xbf16, #tpu.memory_space<vmem>>, vector<16x768xbf16>
    %c0_127 = arith.constant 0 : index
    %c0_128 = arith.constant 0 : index
    %c0_129 = arith.constant 0 : index
    %163 = vector.load %arg8[%c0_127, %c0_128, %c0_129] : memref<9x8x16xbf16, #tpu.memory_space<vmem>>, vector<1x8x16xbf16>
    %164 = vector.shape_cast %163 : vector<1x8x16xbf16> to vector<8x16xbf16>
    %cst_130 = arith.constant dense<0.000000e+00> : vector<8x768xf32>
    %165 = tpu.matmul %164, %162, %cst_130 {dimension_numbers = #tpu.dot_dimension_numbers<[1], [0], [0], [1], [0, 0, 1, 1], [], []>} : vector<8x16xbf16>, vector<16x768xbf16>, vector<8x768xf32> -> vector<8x768xf32>
    %c0_131 = arith.constant 0 : index
    %c110_132 = arith.constant 110 : index
    %166 = vector.load %arg17[%c0_131, %c110_132] : memref<32x1024xbf16, #tpu.memory_space<vmem>>, vector<16x768xbf16>
    %c1_133 = arith.constant 1 : index
    %c0_134 = arith.constant 0 : index
    %c0_135 = arith.constant 0 : index
    %167 = vector.load %arg8[%c1_133, %c0_134, %c0_135] : memref<9x8x16xbf16, #tpu.memory_space<vmem>>, vector<1x8x16xbf16>
    %168 = vector.shape_cast %167 : vector<1x8x16xbf16> to vector<8x16xbf16>
    %cst_136 = arith.constant dense<0.000000e+00> : vector<8x768xf32>
    %169 = tpu.matmul %168, %166, %cst_136 {dimension_numbers = #tpu.dot_dimension_numbers<[1], [0], [0], [1], [0, 0, 1, 1], [], []>} : vector<8x16xbf16>, vector<16x768xbf16>, vector<8x768xf32> -> vector<8x768xf32>
    %170 = arith.addf %165, %169 : vector<8x768xf32>
    %c0_137 = arith.constant 0 : index
    %c111_138 = arith.constant 111 : index
    %171 = vector.load %arg17[%c0_137, %c111_138] : memref<32x1024xbf16, #tpu.memory_space<vmem>>, vector<16x768xbf16>
    %c2_139 = arith.constant 2 : index
    %c0_140 = arith.constant 0 : index
    %c0_141 = arith.constant 0 : index
    %172 = vector.load %arg8[%c2_139, %c0_140, %c0_141] : memref<9x8x16xbf16, #tpu.memory_space<vmem>>, vector<1x8x16xbf16>
    %173 = vector.shape_cast %172 : vector<1x8x16xbf16> to vector<8x16xbf16>
    %cst_142 = arith.constant dense<0.000000e+00> : vector<8x768xf32>
    %174 = tpu.matmul %173, %171, %cst_142 {dimension_numbers = #tpu.dot_dimension_numbers<[1], [0], [0], [1], [0, 0, 1, 1], [], []>} : vector<8x16xbf16>, vector<16x768xbf16>, vector<8x768xf32> -> vector<8x768xf32>
    %175 = arith.addf %170, %174 : vector<8x768xf32>
    %c0_143 = arith.constant 0 : index
    %c127_144 = arith.constant 127 : index
    %176 = vector.load %arg17[%c0_143, %c127_144] : memref<32x1024xbf16, #tpu.memory_space<vmem>>, vector<16x768xbf16>
    %c3_145 = arith.constant 3 : index
    %c0_146 = arith.constant 0 : index
    %c0_147 = arith.constant 0 : index
    %177 = vector.load %arg8[%c3_145, %c0_146, %c0_147] : memref<9x8x16xbf16, #tpu.memory_space<vmem>>, vector<1x8x16xbf16>
    %178 = vector.shape_cast %177 : vector<1x8x16xbf16> to vector<8x16xbf16>
    %cst_148 = arith.constant dense<0.000000e+00> : vector<8x768xf32>
    %179 = tpu.matmul %178, %176, %cst_148 {dimension_numbers = #tpu.dot_dimension_numbers<[1], [0], [0], [1], [0, 0, 1, 1], [], []>} : vector<8x16xbf16>, vector<16x768xbf16>, vector<8x768xf32> -> vector<8x768xf32>
    %180 = arith.addf %175, %179 : vector<8x768xf32>
    %c0_149 = arith.constant 0 : index
    %c128_150 = arith.constant 128 : index
    %181 = vector.load %arg17[%c0_149, %c128_150] : memref<32x1024xbf16, #tpu.memory_space<vmem>>, vector<16x768xbf16>
    %c4_151 = arith.constant 4 : index
    %c0_152 = arith.constant 0 : index
    %c0_153 = arith.constant 0 : index
    %182 = vector.load %arg8[%c4_151, %c0_152, %c0_153] : memref<9x8x16xbf16, #tpu.memory_space<vmem>>, vector<1x8x16xbf16>
    %183 = vector.shape_cast %182 : vector<1x8x16xbf16> to vector<8x16xbf16>
    %cst_154 = arith.constant dense<0.000000e+00> : vector<8x768xf32>
    %184 = tpu.matmul %183, %181, %cst_154 {dimension_numbers = #tpu.dot_dimension_numbers<[1], [0], [0], [1], [0, 0, 1, 1], [], []>} : vector<8x16xbf16>, vector<16x768xbf16>, vector<8x768xf32> -> vector<8x768xf32>
    %185 = arith.addf %180, %184 : vector<8x768xf32>
    %c0_155 = arith.constant 0 : index
    %c129_156 = arith.constant 129 : index
    %186 = vector.load %arg17[%c0_155, %c129_156] : memref<32x1024xbf16, #tpu.memory_space<vmem>>, vector<16x768xbf16>
    %c5_157 = arith.constant 5 : index
    %c0_158 = arith.constant 0 : index
    %c0_159 = arith.constant 0 : index
    %187 = vector.load %arg8[%c5_157, %c0_158, %c0_159] : memref<9x8x16xbf16, #tpu.memory_space<vmem>>, vector<1x8x16xbf16>
    %188 = vector.shape_cast %187 : vector<1x8x16xbf16> to vector<8x16xbf16>
    %cst_160 = arith.constant dense<0.000000e+00> : vector<8x768xf32>
    %189 = tpu.matmul %188, %186, %cst_160 {dimension_numbers = #tpu.dot_dimension_numbers<[1], [0], [0], [1], [0, 0, 1, 1], [], []>} : vector<8x16xbf16>, vector<16x768xbf16>, vector<8x768xf32> -> vector<8x768xf32>
    %190 = arith.addf %185, %189 : vector<8x768xf32>
    %c0_161 = arith.constant 0 : index
    %c145_162 = arith.constant 145 : index
    %191 = vector.load %arg17[%c0_161, %c145_162] : memref<32x1024xbf16, #tpu.memory_space<vmem>>, vector<16x768xbf16>
    %c6_163 = arith.constant 6 : index
    %c0_164 = arith.constant 0 : index
    %c0_165 = arith.constant 0 : index
    %192 = vector.load %arg8[%c6_163, %c0_164, %c0_165] : memref<9x8x16xbf16, #tpu.memory_space<vmem>>, vector<1x8x16xbf16>
    %193 = vector.shape_cast %192 : vector<1x8x16xbf16> to vector<8x16xbf16>
    %cst_166 = arith.constant dense<0.000000e+00> : vector<8x768xf32>
    %194 = tpu.matmul %193, %191, %cst_166 {dimension_numbers = #tpu.dot_dimension_numbers<[1], [0], [0], [1], [0, 0, 1, 1], [], []>} : vector<8x16xbf16>, vector<16x768xbf16>, vector<8x768xf32> -> vector<8x768xf32>
    %195 = arith.addf %190, %194 : vector<8x768xf32>
    %c0_167 = arith.constant 0 : index
    %c146_168 = arith.constant 146 : index
    %196 = vector.load %arg17[%c0_167, %c146_168] : memref<32x1024xbf16, #tpu.memory_space<vmem>>, vector<16x768xbf16>
    %c7_169 = arith.constant 7 : index
    %c0_170 = arith.constant 0 : index
    %c0_171 = arith.constant 0 : index
    %197 = vector.load %arg8[%c7_169, %c0_170, %c0_171] : memref<9x8x16xbf16, #tpu.memory_space<vmem>>, vector<1x8x16xbf16>
    %198 = vector.shape_cast %197 : vector<1x8x16xbf16> to vector<8x16xbf16>
    %cst_172 = arith.constant dense<0.000000e+00> : vector<8x768xf32>
    %199 = tpu.matmul %198, %196, %cst_172 {dimension_numbers = #tpu.dot_dimension_numbers<[1], [0], [0], [1], [0, 0, 1, 1], [], []>} : vector<8x16xbf16>, vector<16x768xbf16>, vector<8x768xf32> -> vector<8x768xf32>
    %200 = arith.addf %195, %199 : vector<8x768xf32>
    %c0_173 = arith.constant 0 : index
    %c147_174 = arith.constant 147 : index
    %201 = vector.load %arg17[%c0_173, %c147_174] : memref<32x1024xbf16, #tpu.memory_space<vmem>>, vector<16x768xbf16>
    %c8_175 = arith.constant 8 : index
    %c0_176 = arith.constant 0 : index
    %c0_177 = arith.constant 0 : index
    %202 = vector.load %arg8[%c8_175, %c0_176, %c0_177] : memref<9x8x16xbf16, #tpu.memory_space<vmem>>, vector<1x8x16xbf16>
    %203 = vector.shape_cast %202 : vector<1x8x16xbf16> to vector<8x16xbf16>
    %cst_178 = arith.constant dense<0.000000e+00> : vector<8x768xf32>
    %204 = tpu.matmul %203, %201, %cst_178 {dimension_numbers = #tpu.dot_dimension_numbers<[1], [0], [0], [1], [0, 0, 1, 1], [], []>} : vector<8x16xbf16>, vector<16x768xbf16>, vector<8x768xf32> -> vector<8x768xf32>
    %205 = arith.addf %200, %204 : vector<8x768xf32>
    %206 = vector.broadcast %5 : vector<1x768xf32> to vector<8x768xf32>
    %207 = arith.mulf %205, %206 : vector<8x768xf32>
    %cst_179 = arith.constant dense<0.000000e+00> : vector<8xf32>
    %208 = vector.multi_reduction <add>, %207, %cst_179 [1] : vector<8x768xf32> to vector<8xf32>
    %209 = vector.shape_cast %208 : vector<8xf32> to vector<8x1xf32>
    %cst_180 = arith.constant 0.001953125 : f32
    %210 = vector.broadcast %cst_180 : f32 to vector<8x1xf32>
    %211 = arith.mulf %209, %210 : vector<8x1xf32>
    %212 = vector.broadcast %211 : vector<8x1xf32> to vector<8x768xf32>
    %213 = arith.subf %205, %212 : vector<8x768xf32>
    %214 = vector.broadcast %5 : vector<1x768xf32> to vector<8x768xf32>
    %215 = arith.mulf %213, %214 : vector<8x768xf32>
    %216 = arith.mulf %215, %215 : vector<8x768xf32>
    %cst_181 = arith.constant dense<0.000000e+00> : vector<8xf32>
    %217 = vector.multi_reduction <add>, %216, %cst_181 [1] : vector<8x768xf32> to vector<8xf32>
    %218 = vector.shape_cast %217 : vector<8xf32> to vector<8x1xf32>
    %cst_182 = arith.constant 0.001953125 : f32
    %219 = vector.broadcast %cst_182 : f32 to vector<8x1xf32>
    %220 = arith.mulf %218, %219 : vector<8x1xf32>
    %cst_183 = arith.constant 9.99999974E-6 : f32
    %221 = vector.broadcast %cst_183 : f32 to vector<8x1xf32>
    %222 = arith.addf %220, %221 : vector<8x1xf32>
    %223 = math.rsqrt %222 : vector<8x1xf32>
    %c0_184 = arith.constant 0 : index
    %c0_185 = arith.constant 0 : index
    %224 = vector.load %arg9[%c0_184, %c0_185] : memref<8x1xf32, #tpu.memory_space<vmem>>, vector<8x1xf32>
    %225 = arith.mulf %223, %224 : vector<8x1xf32>
    %226 = vector.broadcast %225 : vector<8x1xf32> to vector<8x768xf32>
    %227 = arith.mulf %215, %226 : vector<8x768xf32>
    %c0_186 = arith.constant 0 : index
    %c0_187 = arith.constant 0 : index
    %228 = vector.load %arg10[%c0_186, %c0_187] : memref<8x1xf32, #tpu.memory_space<vmem>>, vector<8x1xf32>
    %229 = vector.broadcast %228 : vector<8x1xf32> to vector<8x768xf32>
    %230 = arith.addf %227, %229 : vector<8x768xf32>
    %cst_188 = arith.constant 0.000000e+00 : f32
    %231 = vector.broadcast %cst_188 : f32 to vector<8x768xf32>
    %232 = arith.cmpf oge, %230, %231 : vector<8x768xf32>
    %cst_189 = arith.constant 2.000000e-01 : f32
    %233 = vector.broadcast %cst_189 : f32 to vector<8x768xf32>
    %234 = arith.mulf %233, %230 : vector<8x768xf32>
    %235 = arith.select %232, %230, %234 : vector<8x768xi1>, vector<8x768xf32>
    %236 = vector.broadcast %5 : vector<1x768xf32> to vector<8x768xf32>
    %237 = arith.mulf %235, %236 : vector<8x768xf32>
    %238 = arith.truncf %237 : vector<8x768xf32> to vector<8x768xbf16>
    %c0_190 = arith.constant 0 : index
    %c128_191 = arith.constant 128 : index
    %239 = vector.load %arg17[%c0_190, %c128_191] : memref<32x1024xbf16, #tpu.memory_space<vmem>>, vector<8x768xbf16>
    tpu.vector_store %arg17[%c0_190, %c128_191], %238 {strides = array<i32>} : memref<32x1024xbf16, #tpu.memory_space<vmem>>, vector<8x768xbf16>,
    %c0_192 = arith.constant 0 : index
    %c109_193 = arith.constant 109 : index
    %240 = vector.load %arg17[%c0_192, %c109_193] : memref<32x1024xbf16, #tpu.memory_space<vmem>>, vector<8x768xbf16>
    %c0_194 = arith.constant 0 : index
    %c0_195 = arith.constant 0 : index
    %c0_196 = arith.constant 0 : index
    %241 = vector.load %arg11[%c0_194, %c0_195, %c0_196] : memref<9x8x8xbf16, #tpu.memory_space<vmem>>, vector<1x8x8xbf16>
    %242 = vector.shape_cast %241 : vector<1x8x8xbf16> to vector<8x8xbf16>
    %cst_197 = arith.constant dense<0.000000e+00> : vector<8x768xf32>
    %243 = tpu.matmul %242, %240, %cst_197 {dimension_numbers = #tpu.dot_dimension_numbers<[1], [0], [0], [1], [0, 0, 1, 1], [], []>} : vector<8x8xbf16>, vector<8x768xbf16>, vector<8x768xf32> -> vector<8x768xf32>
    %c0_198 = arith.constant 0 : index
    %c110_199 = arith.constant 110 : index
    %244 = vector.load %arg17[%c0_198, %c110_199] : memref<32x1024xbf16, #tpu.memory_space<vmem>>, vector<8x768xbf16>
    %c1_200 = arith.constant 1 : index
    %c0_201 = arith.constant 0 : index
    %c0_202 = arith.constant 0 : index
    %245 = vector.load %arg11[%c1_200, %c0_201, %c0_202] : memref<9x8x8xbf16, #tpu.memory_space<vmem>>, vector<1x8x8xbf16>
    %246 = vector.shape_cast %245 : vector<1x8x8xbf16> to vector<8x8xbf16>
    %cst_203 = arith.constant dense<0.000000e+00> : vector<8x768xf32>
    %247 = tpu.matmul %246, %244, %cst_203 {dimension_numbers = #tpu.dot_dimension_numbers<[1], [0], [0], [1], [0, 0, 1, 1], [], []>} : vector<8x8xbf16>, vector<8x768xbf16>, vector<8x768xf32> -> vector<8x768xf32>
    %248 = arith.addf %243, %247 : vector<8x768xf32>
    %c0_204 = arith.constant 0 : index
    %c111_205 = arith.constant 111 : index
    %249 = vector.load %arg17[%c0_204, %c111_205] : memref<32x1024xbf16, #tpu.memory_space<vmem>>, vector<8x768xbf16>
    %c2_206 = arith.constant 2 : index
    %c0_207 = arith.constant 0 : index
    %c0_208 = arith.constant 0 : index
    %250 = vector.load %arg11[%c2_206, %c0_207, %c0_208] : memref<9x8x8xbf16, #tpu.memory_space<vmem>>, vector<1x8x8xbf16>
    %251 = vector.shape_cast %250 : vector<1x8x8xbf16> to vector<8x8xbf16>
    %cst_209 = arith.constant dense<0.000000e+00> : vector<8x768xf32>
    %252 = tpu.matmul %251, %249, %cst_209 {dimension_numbers = #tpu.dot_dimension_numbers<[1], [0], [0], [1], [0, 0, 1, 1], [], []>} : vector<8x8xbf16>, vector<8x768xbf16>, vector<8x768xf32> -> vector<8x768xf32>
    %253 = arith.addf %248, %252 : vector<8x768xf32>
    %c0_210 = arith.constant 0 : index
    %c127_211 = arith.constant 127 : index
    %254 = vector.load %arg17[%c0_210, %c127_211] : memref<32x1024xbf16, #tpu.memory_space<vmem>>, vector<8x768xbf16>
    %c3_212 = arith.constant 3 : index
    %c0_213 = arith.constant 0 : index
    %c0_214 = arith.constant 0 : index
    %255 = vector.load %arg11[%c3_212, %c0_213, %c0_214] : memref<9x8x8xbf16, #tpu.memory_space<vmem>>, vector<1x8x8xbf16>
    %256 = vector.shape_cast %255 : vector<1x8x8xbf16> to vector<8x8xbf16>
    %cst_215 = arith.constant dense<0.000000e+00> : vector<8x768xf32>
    %257 = tpu.matmul %256, %254, %cst_215 {dimension_numbers = #tpu.dot_dimension_numbers<[1], [0], [0], [1], [0, 0, 1, 1], [], []>} : vector<8x8xbf16>, vector<8x768xbf16>, vector<8x768xf32> -> vector<8x768xf32>
    %258 = arith.addf %253, %257 : vector<8x768xf32>
    %c0_216 = arith.constant 0 : index
    %c128_217 = arith.constant 128 : index
    %259 = vector.load %arg17[%c0_216, %c128_217] : memref<32x1024xbf16, #tpu.memory_space<vmem>>, vector<8x768xbf16>
    %c4_218 = arith.constant 4 : index
    %c0_219 = arith.constant 0 : index
    %c0_220 = arith.constant 0 : index
    %260 = vector.load %arg11[%c4_218, %c0_219, %c0_220] : memref<9x8x8xbf16, #tpu.memory_space<vmem>>, vector<1x8x8xbf16>
    %261 = vector.shape_cast %260 : vector<1x8x8xbf16> to vector<8x8xbf16>
    %cst_221 = arith.constant dense<0.000000e+00> : vector<8x768xf32>
    %262 = tpu.matmul %261, %259, %cst_221 {dimension_numbers = #tpu.dot_dimension_numbers<[1], [0], [0], [1], [0, 0, 1, 1], [], []>} : vector<8x8xbf16>, vector<8x768xbf16>, vector<8x768xf32> -> vector<8x768xf32>
    %263 = arith.addf %258, %262 : vector<8x768xf32>
    %c0_222 = arith.constant 0 : index
    %c129_223 = arith.constant 129 : index
    %264 = vector.load %arg17[%c0_222, %c129_223] : memref<32x1024xbf16, #tpu.memory_space<vmem>>, vector<8x768xbf16>
    %c5_224 = arith.constant 5 : index
    %c0_225 = arith.constant 0 : index
    %c0_226 = arith.constant 0 : index
    %265 = vector.load %arg11[%c5_224, %c0_225, %c0_226] : memref<9x8x8xbf16, #tpu.memory_space<vmem>>, vector<1x8x8xbf16>
    %266 = vector.shape_cast %265 : vector<1x8x8xbf16> to vector<8x8xbf16>
    %cst_227 = arith.constant dense<0.000000e+00> : vector<8x768xf32>
    %267 = tpu.matmul %266, %264, %cst_227 {dimension_numbers = #tpu.dot_dimension_numbers<[1], [0], [0], [1], [0, 0, 1, 1], [], []>} : vector<8x8xbf16>, vector<8x768xbf16>, vector<8x768xf32> -> vector<8x768xf32>
    %268 = arith.addf %263, %267 : vector<8x768xf32>
    %c0_228 = arith.constant 0 : index
    %c145_229 = arith.constant 145 : index
    %269 = vector.load %arg17[%c0_228, %c145_229] : memref<32x1024xbf16, #tpu.memory_space<vmem>>, vector<8x768xbf16>
    %c6_230 = arith.constant 6 : index
    %c0_231 = arith.constant 0 : index
    %c0_232 = arith.constant 0 : index
    %270 = vector.load %arg11[%c6_230, %c0_231, %c0_232] : memref<9x8x8xbf16, #tpu.memory_space<vmem>>, vector<1x8x8xbf16>
    %271 = vector.shape_cast %270 : vector<1x8x8xbf16> to vector<8x8xbf16>
    %cst_233 = arith.constant dense<0.000000e+00> : vector<8x768xf32>
    %272 = tpu.matmul %271, %269, %cst_233 {dimension_numbers = #tpu.dot_dimension_numbers<[1], [0], [0], [1], [0, 0, 1, 1], [], []>} : vector<8x8xbf16>, vector<8x768xbf16>, vector<8x768xf32> -> vector<8x768xf32>
    %273 = arith.addf %268, %272 : vector<8x768xf32>
    %c0_234 = arith.constant 0 : index
    %c146_235 = arith.constant 146 : index
    %274 = vector.load %arg17[%c0_234, %c146_235] : memref<32x1024xbf16, #tpu.memory_space<vmem>>, vector<8x768xbf16>
    %c7_236 = arith.constant 7 : index
    %c0_237 = arith.constant 0 : index
    %c0_238 = arith.constant 0 : index
    %275 = vector.load %arg11[%c7_236, %c0_237, %c0_238] : memref<9x8x8xbf16, #tpu.memory_space<vmem>>, vector<1x8x8xbf16>
    %276 = vector.shape_cast %275 : vector<1x8x8xbf16> to vector<8x8xbf16>
    %cst_239 = arith.constant dense<0.000000e+00> : vector<8x768xf32>
    %277 = tpu.matmul %276, %274, %cst_239 {dimension_numbers = #tpu.dot_dimension_numbers<[1], [0], [0], [1], [0, 0, 1, 1], [], []>} : vector<8x8xbf16>, vector<8x768xbf16>, vector<8x768xf32> -> vector<8x768xf32>
    %278 = arith.addf %273, %277 : vector<8x768xf32>
    %c0_240 = arith.constant 0 : index
    %c147_241 = arith.constant 147 : index
    %279 = vector.load %arg17[%c0_240, %c147_241] : memref<32x1024xbf16, #tpu.memory_space<vmem>>, vector<8x768xbf16>
    %c8_242 = arith.constant 8 : index
    %c0_243 = arith.constant 0 : index
    %c0_244 = arith.constant 0 : index
    %280 = vector.load %arg11[%c8_242, %c0_243, %c0_244] : memref<9x8x8xbf16, #tpu.memory_space<vmem>>, vector<1x8x8xbf16>
    %281 = vector.shape_cast %280 : vector<1x8x8xbf16> to vector<8x8xbf16>
    %cst_245 = arith.constant dense<0.000000e+00> : vector<8x768xf32>
    %282 = tpu.matmul %281, %279, %cst_245 {dimension_numbers = #tpu.dot_dimension_numbers<[1], [0], [0], [1], [0, 0, 1, 1], [], []>} : vector<8x8xbf16>, vector<8x768xbf16>, vector<8x768xf32> -> vector<8x768xf32>
    %283 = arith.addf %278, %282 : vector<8x768xf32>
    %284 = vector.broadcast %5 : vector<1x768xf32> to vector<8x768xf32>
    %285 = arith.mulf %283, %284 : vector<8x768xf32>
    %cst_246 = arith.constant dense<0.000000e+00> : vector<8xf32>
    %286 = vector.multi_reduction <add>, %285, %cst_246 [1] : vector<8x768xf32> to vector<8xf32>
    %287 = vector.shape_cast %286 : vector<8xf32> to vector<8x1xf32>
    %cst_247 = arith.constant 0.001953125 : f32
    %288 = vector.broadcast %cst_247 : f32 to vector<8x1xf32>
    %289 = arith.mulf %287, %288 : vector<8x1xf32>
    %290 = vector.broadcast %289 : vector<8x1xf32> to vector<8x768xf32>
    %291 = arith.subf %283, %290 : vector<8x768xf32>
    %292 = vector.broadcast %5 : vector<1x768xf32> to vector<8x768xf32>
    %293 = arith.mulf %291, %292 : vector<8x768xf32>
    %294 = arith.mulf %293, %293 : vector<8x768xf32>
    %cst_248 = arith.constant dense<0.000000e+00> : vector<8xf32>
    %295 = vector.multi_reduction <add>, %294, %cst_248 [1] : vector<8x768xf32> to vector<8xf32>
    %296 = vector.shape_cast %295 : vector<8xf32> to vector<8x1xf32>
    %cst_249 = arith.constant 0.001953125 : f32
    %297 = vector.broadcast %cst_249 : f32 to vector<8x1xf32>
    %298 = arith.mulf %296, %297 : vector<8x1xf32>
    %cst_250 = arith.constant 9.99999974E-6 : f32
    %299 = vector.broadcast %cst_250 : f32 to vector<8x1xf32>
    %300 = arith.addf %298, %299 : vector<8x1xf32>
    %301 = math.rsqrt %300 : vector<8x1xf32>
    %c0_251 = arith.constant 0 : index
    %c0_252 = arith.constant 0 : index
    %302 = vector.load %arg12[%c0_251, %c0_252] : memref<8x1xf32, #tpu.memory_space<vmem>>, vector<8x1xf32>
    %303 = arith.mulf %301, %302 : vector<8x1xf32>
    %304 = vector.broadcast %303 : vector<8x1xf32> to vector<8x768xf32>
    %305 = arith.mulf %293, %304 : vector<8x768xf32>
    %c0_253 = arith.constant 0 : index
    %c0_254 = arith.constant 0 : index
    %306 = vector.load %arg13[%c0_253, %c0_254] : memref<8x1xf32, #tpu.memory_space<vmem>>, vector<8x1xf32>
    %307 = vector.broadcast %306 : vector<8x1xf32> to vector<8x768xf32>
    %308 = arith.addf %305, %307 : vector<8x768xf32>
    %cst_255 = arith.constant 0.000000e+00 : f32
    %309 = vector.broadcast %cst_255 : f32 to vector<8x768xf32>
    %310 = arith.cmpf oge, %308, %309 : vector<8x768xf32>
    %cst_256 = arith.constant 2.000000e-01 : f32
    %311 = vector.broadcast %cst_256 : f32 to vector<8x768xf32>
    %312 = arith.mulf %311, %308 : vector<8x768xf32>
    %313 = arith.select %310, %308, %312 : vector<8x768xi1>, vector<8x768xf32>
    %314 = vector.broadcast %5 : vector<1x768xf32> to vector<8x768xf32>
    %315 = arith.mulf %313, %314 : vector<8x768xf32>
    %316 = arith.truncf %315 : vector<8x768xf32> to vector<8x768xbf16>
    %c0_257 = arith.constant 0 : index
    %c128_258 = arith.constant 128 : index
    %317 = vector.load %arg17[%c0_257, %c128_258] : memref<32x1024xbf16, #tpu.memory_space<vmem>>, vector<8x768xbf16>
    tpu.vector_store %arg17[%c0_257, %c128_258], %316 {strides = array<i32>} : memref<32x1024xbf16, #tpu.memory_space<vmem>>, vector<8x768xbf16>,
    %c0_259 = arith.constant 0 : index
    %c109_260 = arith.constant 109 : index
    %318 = vector.load %arg17[%c0_259, %c109_260] : memref<32x1024xbf16, #tpu.memory_space<vmem>>, vector<8x768xbf16>
    %c0_261 = arith.constant 0 : index
    %c0_262 = arith.constant 0 : index
    %c0_263 = arith.constant 0 : index
    %319 = vector.load %arg14[%c0_261, %c0_262, %c0_263] : memref<9x3x8xbf16, #tpu.memory_space<vmem>>, vector<1x3x8xbf16>
    %320 = vector.shape_cast %319 : vector<1x3x8xbf16> to vector<3x8xbf16>
    %cst_264 = arith.constant dense<0.000000e+00> : vector<3x768xf32>
    %321 = tpu.matmul %320, %318, %cst_264 {dimension_numbers = #tpu.dot_dimension_numbers<[1], [0], [0], [1], [0, 0, 1, 1], [], []>} : vector<3x8xbf16>, vector<8x768xbf16>, vector<3x768xf32> -> vector<3x768xf32>
    %c0_265 = arith.constant 0 : index
    %c110_266 = arith.constant 110 : index
    %322 = vector.load %arg17[%c0_265, %c110_266] : memref<32x1024xbf16, #tpu.memory_space<vmem>>, vector<8x768xbf16>
    %c1_267 = arith.constant 1 : index
    %c0_268 = arith.constant 0 : index
    %c0_269 = arith.constant 0 : index
    %323 = vector.load %arg14[%c1_267, %c0_268, %c0_269] : memref<9x3x8xbf16, #tpu.memory_space<vmem>>, vector<1x3x8xbf16>
    %324 = vector.shape_cast %323 : vector<1x3x8xbf16> to vector<3x8xbf16>
    %cst_270 = arith.constant dense<0.000000e+00> : vector<3x768xf32>
    %325 = tpu.matmul %324, %322, %cst_270 {dimension_numbers = #tpu.dot_dimension_numbers<[1], [0], [0], [1], [0, 0, 1, 1], [], []>} : vector<3x8xbf16>, vector<8x768xbf16>, vector<3x768xf32> -> vector<3x768xf32>
    %326 = arith.addf %321, %325 : vector<3x768xf32>
    %c0_271 = arith.constant 0 : index
    %c111_272 = arith.constant 111 : index
    %327 = vector.load %arg17[%c0_271, %c111_272] : memref<32x1024xbf16, #tpu.memory_space<vmem>>, vector<8x768xbf16>
    %c2_273 = arith.constant 2 : index
    %c0_274 = arith.constant 0 : index
    %c0_275 = arith.constant 0 : index
    %328 = vector.load %arg14[%c2_273, %c0_274, %c0_275] : memref<9x3x8xbf16, #tpu.memory_space<vmem>>, vector<1x3x8xbf16>
    %329 = vector.shape_cast %328 : vector<1x3x8xbf16> to vector<3x8xbf16>
    %cst_276 = arith.constant dense<0.000000e+00> : vector<3x768xf32>
    %330 = tpu.matmul %329, %327, %cst_276 {dimension_numbers = #tpu.dot_dimension_numbers<[1], [0], [0], [1], [0, 0, 1, 1], [], []>} : vector<3x8xbf16>, vector<8x768xbf16>, vector<3x768xf32> -> vector<3x768xf32>
    %331 = arith.addf %326, %330 : vector<3x768xf32>
    %c0_277 = arith.constant 0 : index
    %c127_278 = arith.constant 127 : index
    %332 = vector.load %arg17[%c0_277, %c127_278] : memref<32x1024xbf16, #tpu.memory_space<vmem>>, vector<8x768xbf16>
    %c3_279 = arith.constant 3 : index
    %c0_280 = arith.constant 0 : index
    %c0_281 = arith.constant 0 : index
    %333 = vector.load %arg14[%c3_279, %c0_280, %c0_281] : memref<9x3x8xbf16, #tpu.memory_space<vmem>>, vector<1x3x8xbf16>
    %334 = vector.shape_cast %333 : vector<1x3x8xbf16> to vector<3x8xbf16>
    %cst_282 = arith.constant dense<0.000000e+00> : vector<3x768xf32>
    %335 = tpu.matmul %334, %332, %cst_282 {dimension_numbers = #tpu.dot_dimension_numbers<[1], [0], [0], [1], [0, 0, 1, 1], [], []>} : vector<3x8xbf16>, vector<8x768xbf16>, vector<3x768xf32> -> vector<3x768xf32>
    %336 = arith.addf %331, %335 : vector<3x768xf32>
    %c0_283 = arith.constant 0 : index
    %c128_284 = arith.constant 128 : index
    %337 = vector.load %arg17[%c0_283, %c128_284] : memref<32x1024xbf16, #tpu.memory_space<vmem>>, vector<8x768xbf16>
    %c4_285 = arith.constant 4 : index
    %c0_286 = arith.constant 0 : index
    %c0_287 = arith.constant 0 : index
    %338 = vector.load %arg14[%c4_285, %c0_286, %c0_287] : memref<9x3x8xbf16, #tpu.memory_space<vmem>>, vector<1x3x8xbf16>
    %339 = vector.shape_cast %338 : vector<1x3x8xbf16> to vector<3x8xbf16>
    %cst_288 = arith.constant dense<0.000000e+00> : vector<3x768xf32>
    %340 = tpu.matmul %339, %337, %cst_288 {dimension_numbers = #tpu.dot_dimension_numbers<[1], [0], [0], [1], [0, 0, 1, 1], [], []>} : vector<3x8xbf16>, vector<8x768xbf16>, vector<3x768xf32> -> vector<3x768xf32>
    %341 = arith.addf %336, %340 : vector<3x768xf32>
    %c0_289 = arith.constant 0 : index
    %c129_290 = arith.constant 129 : index
    %342 = vector.load %arg17[%c0_289, %c129_290] : memref<32x1024xbf16, #tpu.memory_space<vmem>>, vector<8x768xbf16>
    %c5_291 = arith.constant 5 : index
    %c0_292 = arith.constant 0 : index
    %c0_293 = arith.constant 0 : index
    %343 = vector.load %arg14[%c5_291, %c0_292, %c0_293] : memref<9x3x8xbf16, #tpu.memory_space<vmem>>, vector<1x3x8xbf16>
    %344 = vector.shape_cast %343 : vector<1x3x8xbf16> to vector<3x8xbf16>
    %cst_294 = arith.constant dense<0.000000e+00> : vector<3x768xf32>
    %345 = tpu.matmul %344, %342, %cst_294 {dimension_numbers = #tpu.dot_dimension_numbers<[1], [0], [0], [1], [0, 0, 1, 1], [], []>} : vector<3x8xbf16>, vector<8x768xbf16>, vector<3x768xf32> -> vector<3x768xf32>
    %346 = arith.addf %341, %345 : vector<3x768xf32>
    %c0_295 = arith.constant 0 : index
    %c145_296 = arith.constant 145 : index
    %347 = vector.load %arg17[%c0_295, %c145_296] : memref<32x1024xbf16, #tpu.memory_space<vmem>>, vector<8x768xbf16>
    %c6_297 = arith.constant 6 : index
    %c0_298 = arith.constant 0 : index
    %c0_299 = arith.constant 0 : index
    %348 = vector.load %arg14[%c6_297, %c0_298, %c0_299] : memref<9x3x8xbf16, #tpu.memory_space<vmem>>, vector<1x3x8xbf16>
    %349 = vector.shape_cast %348 : vector<1x3x8xbf16> to vector<3x8xbf16>
    %cst_300 = arith.constant dense<0.000000e+00> : vector<3x768xf32>
    %350 = tpu.matmul %349, %347, %cst_300 {dimension_numbers = #tpu.dot_dimension_numbers<[1], [0], [0], [1], [0, 0, 1, 1], [], []>} : vector<3x8xbf16>, vector<8x768xbf16>, vector<3x768xf32> -> vector<3x768xf32>
    %351 = arith.addf %346, %350 : vector<3x768xf32>
    %c0_301 = arith.constant 0 : index
    %c146_302 = arith.constant 146 : index
    %352 = vector.load %arg17[%c0_301, %c146_302] : memref<32x1024xbf16, #tpu.memory_space<vmem>>, vector<8x768xbf16>
    %c7_303 = arith.constant 7 : index
    %c0_304 = arith.constant 0 : index
    %c0_305 = arith.constant 0 : index
    %353 = vector.load %arg14[%c7_303, %c0_304, %c0_305] : memref<9x3x8xbf16, #tpu.memory_space<vmem>>, vector<1x3x8xbf16>
    %354 = vector.shape_cast %353 : vector<1x3x8xbf16> to vector<3x8xbf16>
    %cst_306 = arith.constant dense<0.000000e+00> : vector<3x768xf32>
    %355 = tpu.matmul %354, %352, %cst_306 {dimension_numbers = #tpu.dot_dimension_numbers<[1], [0], [0], [1], [0, 0, 1, 1], [], []>} : vector<3x8xbf16>, vector<8x768xbf16>, vector<3x768xf32> -> vector<3x768xf32>
    %356 = arith.addf %351, %355 : vector<3x768xf32>
    %c0_307 = arith.constant 0 : index
    %c147_308 = arith.constant 147 : index
    %357 = vector.load %arg17[%c0_307, %c147_308] : memref<32x1024xbf16, #tpu.memory_space<vmem>>, vector<8x768xbf16>
    %c8_309 = arith.constant 8 : index
    %c0_310 = arith.constant 0 : index
    %c0_311 = arith.constant 0 : index
    %358 = vector.load %arg14[%c8_309, %c0_310, %c0_311] : memref<9x3x8xbf16, #tpu.memory_space<vmem>>, vector<1x3x8xbf16>
    %359 = vector.shape_cast %358 : vector<1x3x8xbf16> to vector<3x8xbf16>
    %cst_312 = arith.constant dense<0.000000e+00> : vector<3x768xf32>
    %360 = tpu.matmul %359, %357, %cst_312 {dimension_numbers = #tpu.dot_dimension_numbers<[1], [0], [0], [1], [0, 0, 1, 1], [], []>} : vector<3x8xbf16>, vector<8x768xbf16>, vector<3x768xf32> -> vector<3x768xf32>
    %361 = arith.addf %356, %360 : vector<3x768xf32>
    %c0_313 = arith.constant 0 : index
    %c0_314 = arith.constant 0 : index
    %362 = vector.load %arg15[%c0_313, %c0_314] : memref<3x1xf32, #tpu.memory_space<vmem>>, vector<3x1xf32>
    %363 = vector.broadcast %362 : vector<3x1xf32> to vector<3x768xf32>
    %364 = arith.addf %361, %363 : vector<3x768xf32>
    %365 = math.tanh %364 : vector<3x768xf32>
    %c0_315 = arith.constant 0 : index
    %c0_316 = arith.constant 0 : index
    %366 = vector.load %arg16[%c0_315, %c0_316] : memref<3x768xf32, #tpu.memory_space<vmem>>, vector<3x768xf32>
    tpu.vector_store %arg16[%c0_315, %c0_316], %365 {strides = array<i32>} : memref<3x768xf32, #tpu.memory_space<vmem>>, vector<3x768xf32>,
    return
  }
}

</mosaic_0001>

<llo_original>
// kernel: forward.1
$region0: #{forward.1}
  #allocation0 [shape = 'u32[]', space=smem, size = 0x4, offset = 0x4, fixed_abs, tag = 'smem constant byte address 0x4 - core index']
  #allocation1 [shape = 'u32[72,128]{1,0:T(1,128)}', space=vmem, size = 0x9000, scoped, tag = 'internal scratch']
  #allocation2 [shape = 'bf16[32,1024]{1,0:T(8,128)(2,1)}', space=vmem, size = 0x10000, scoped, tag = 'scratch operand']
  %s0 = inlined_call_operand.vmem [shape: bf16[8,768], index: 0, kind: input, shape index: {}]
  %s1 = inlined_call_operand.vmem [shape: f32[1,768], index: 1, kind: input, shape index: {}]
  %s2 = inlined_call_operand.vmem [shape: bf16[9,32,8], index: 2, kind: input, shape index: {}]
  %s3 = inlined_call_operand.vmem [shape: f32[32,1], index: 3, kind: input, shape index: {}]
  %s4 = inlined_call_operand.vmem [shape: f32[32,1], index: 4, kind: input, shape index: {}]
  %s5 = inlined_call_operand.vmem [shape: bf16[9,16,32], index: 5, kind: input, shape index: {}]
  %s6 = inlined_call_operand.vmem [shape: f32[16,1], index: 6, kind: input, shape index: {}]
  %s7 = inlined_call_operand.vmem [shape: f32[16,1], index: 7, kind: input, shape index: {}]
  %s8 = inlined_call_operand.vmem [shape: bf16[9,8,16], index: 8, kind: input, shape index: {}]
  %s9 = inlined_call_operand.vmem [shape: f32[8,1], index: 9, kind: input, shape index: {}]
  %s10 = inlined_call_operand.vmem [shape: f32[8,1], index: 10, kind: input, shape index: {}]
  %s11 = inlined_call_operand.vmem [shape: bf16[9,8,8], index: 11, kind: input, shape index: {}]
  %s12 = inlined_call_operand.vmem [shape: f32[8,1], index: 12, kind: input, shape index: {}]
  %s13 = inlined_call_operand.vmem [shape: f32[8,1], index: 13, kind: input, shape index: {}]
  %s14 = inlined_call_operand.vmem [shape: bf16[9,3,8], index: 14, kind: input, shape index: {}]
  %s15 = inlined_call_operand.vmem [shape: f32[3,1], index: 15, kind: input, shape index: {}]
  %s16 = inlined_call_operand.vmem [shape: f32[3,768], index: 16, kind: output, shape index: {}]
  %s17 = sld [smem:[#allocation0]]
  $region74: #{forward.1} parent=0
    _
  %s19 = ssub.s32 1, %s17
  %s20 = scalar_select 0, %s19, %s17
  // Predicated region
  $region2: #{forward.1} parent=0 // pred_check
    _
  $region3: #{forward.1} parent=0 // pred_check_branch
    %22 = sbr.rel (0) target = $region5
  $region4: #{forward.1} parent=0 // pred_region
    _
  $region5: #{forward.1} parent=0 // pred_fallthru
    _
  // Predicated region
  $region6: #{forward.1} parent=0 // pred_check
    _
  $region7: #{forward.1} parent=0 // pred_check_branch
    %24 = sbr.rel (0) target = $region9
  $region8: #{forward.1} parent=0 // pred_region
    _
  $region9: #{forward.1} parent=0 // pred_fallthru
    _
  // Predicated region
  $region10: #{forward.1} parent=0 // pred_check
    _
  $region11: #{forward.1} parent=0 // pred_check_branch
    %26 = sbr.rel (0) target = $region13
  $region12: #{forward.1} parent=0 // pred_region
    _
  $region13: #{forward.1} parent=0 // pred_fallthru
    _
  // Predicated region
  $region14: #{forward.1} parent=0 // pred_check
    _
  $region15: #{forward.1} parent=0 // pred_check_branch
    %28 = sbr.rel (0) target = $region17
  $region16: #{forward.1} parent=0 // pred_region
    _
  $region17: #{forward.1} parent=0 // pred_fallthru
    _
  // Predicated region
  $region18: #{forward.1} parent=0 // pred_check
    _
  $region19: #{forward.1} parent=0 // pred_check_branch
    %30 = sbr.rel (0) target = $region21
  $region20: #{forward.1} parent=0 // pred_region
    _
  $region21: #{forward.1} parent=0 // pred_fallthru
    _
  // Predicated region
  $region22: #{forward.1} parent=0 // pred_check
    _
  $region23: #{forward.1} parent=0 // pred_check_branch
    %32 = sbr.rel (0) target = $region25
  $region24: #{forward.1} parent=0 // pred_region
    _
  $region25: #{forward.1} parent=0 // pred_fallthru
    _
  // Predicated region
  $region26: #{forward.1} parent=0 // pred_check
    _
  $region27: #{forward.1} parent=0 // pred_check_branch
    %34 = sbr.rel (0) target = $region29
  $region28: #{forward.1} parent=0 // pred_region
    _
  $region29: #{forward.1} parent=0 // pred_fallthru
    _
  // Predicated region
  $region30: #{forward.1} parent=0 // pred_check
    _
  $region31: #{forward.1} parent=0 // pred_check_branch
    %36 = sbr.rel (0) target = $region33
  $region32: #{forward.1} parent=0 // pred_region
    _
  $region33: #{forward.1} parent=0 // pred_fallthru
    _
  // Predicated region
  $region34: #{forward.1} parent=0 // pred_check
    _
  $region35: #{forward.1} parent=0 // pred_check_branch
    %38 = sbr.rel (0) target = $region37
  $region36: #{forward.1} parent=0 // pred_region
    _
  $region37: #{forward.1} parent=0 // pred_fallthru
    _
  // Predicated region
  $region38: #{forward.1} parent=0 // pred_check
    _
  $region39: #{forward.1} parent=0 // pred_check_branch
    %40 = sbr.rel (0) target = $region41
  $region40: #{forward.1} parent=0 // pred_region
    _
  $region41: #{forward.1} parent=0 // pred_fallthru
    _
  // Predicated region
  $region42: #{forward.1} parent=0 // pred_check
    _
  $region43: #{forward.1} parent=0 // pred_check_branch
    %42 = sbr.rel (0) target = $region45
  $region44: #{forward.1} parent=0 // pred_region
    _
  $region45: #{forward.1} parent=0 // pred_fallthru
    _
  // Predicated region
  $region46: #{forward.1} parent=0 // pred_check
    _
  $region47: #{forward.1} parent=0 // pred_check_branch
    %44 = sbr.rel (0) target = $region49
  $region48: #{forward.1} parent=0 // pred_region
    _
  $region49: #{forward.1} parent=0 // pred_fallthru
    _
  // Predicated region
  $region50: #{forward.1} parent=0 // pred_check
    _
  $region51: #{forward.1} parent=0 // pred_check_branch
    %46 = sbr.rel (0) target = $region53
  $region52: #{forward.1} parent=0 // pred_region
    _
  $region53: #{forward.1} parent=0 // pred_fallthru
    _
  // Predicated region
  $region54: #{forward.1} parent=0 // pred_check
    _
  $region55: #{forward.1} parent=0 // pred_check_branch
    %48 = sbr.rel (0) target = $region57
  $region56: #{forward.1} parent=0 // pred_region
    _
  $region57: #{forward.1} parent=0 // pred_fallthru
    _
  // Predicated region
  $region58: #{forward.1} parent=0 // pred_check
    _
  $region59: #{forward.1} parent=0 // pred_check_branch
    %50 = sbr.rel (0) target = $region61
  $region60: #{forward.1} parent=0 // pred_region
    _
  $region61: #{forward.1} parent=0 // pred_fallthru
    _
  // Predicated region
  $region62: #{forward.1} parent=0 // pred_check
    _
  $region63: #{forward.1} parent=0 // pred_check_branch
    %52 = sbr.rel (0) target = $region65
  $region64: #{forward.1} parent=0 // pred_region
    _
  $region65: #{forward.1} parent=0 // pred_fallthru
    _
  %54 = vst [vmem:[#allocation2] sm:$0xf] 0
  %55 = vst [vmem:[#allocation2 + $0x20] sm:$0xf] 0
  %56 = vst [vmem:[#allocation2 + $0x40] sm:$0xf] 0
  %57 = vst [vmem:[#allocation2 + $0x60] sm:$0xf] 0
  %58 = vst [vmem:[#allocation2 + $0x1c] sm:$0xf] 0
  %59 = vst [vmem:[#allocation2 + $0x3c] sm:$0xf] 0
  %60 = vst [vmem:[#allocation2 + $0x5c] sm:$0xf] 0
  %61 = vst [vmem:[#allocation2 + $0x7c] sm:$0xf] 0
  %v62 = vld [vmem:[%s0] sm:$0xff]
  %v63 = vld [vmem:[%s0 + $0x8] sm:$0xff]
  %v64 = vld [vmem:[%s0 + $0x10] sm:$0xff]
  %65 = vst [vmem:[#allocation2 + $0x4] sm:$0xff] %v62
  %66 = vst [vmem:[#allocation2 + $0xc] sm:$0xff] %v63
  %67 = vst [vmem:[#allocation2 + $0x14] sm:$0xff] %v64
  %v68 = vld [vmem:[%s1] sm:$0x3f]
  %v69 = vld [vmem:[#allocation2] sm:$0xff]
  %v70 = vld [vmem:[#allocation2 + $0x8] sm:$0xff]
  %v71 = vld [vmem:[#allocation2 + $0x10] sm:$0xff]
  %v72 = vld [vmem:[#allocation2 + $0x18] sm:$0xf]
  %v73 = vld [vmem:[%s2] sm:$0xf]
  %v74 = vld [vmem:[%s2 + $0x4] sm:$0xf]
  %v75 = vld [vmem:[%s2 + $0x8] sm:$0xf]
  %v76 = vld [vmem:[%s2 + $0xc] sm:$0xf]
  %s77 = scalar_lea.vmem %s2, 16
  %v78 = vld [vmem:[%s77] sm:$0xf]
  %v79 = vld [vmem:[%s77 + $0x4] sm:$0xf]
  %v80 = vld [vmem:[%s77 + $0x8] sm:$0xf]
  %v81 = vld [vmem:[%s77 + $0xc] sm:$0xf]
  %v86 = vunpack.c.l.b16 %v78
  %v87 = vunpack.c.l.b16 %v79
  %v88 = vunpack.c.l.b16 %v80
  %v89 = vunpack.c.l.b16 %v81
  %v90 = vpack.c.b16 %v87, %v86
  %v91 = vpack.c.b16 %v89, %v88
  %v96 = vunpack.c.l.b16 %v69
  %v97 = vunpack.c.h.b16 %v69
  %v98 = vunpack.c.l.b16 %v70
  %v99 = vunpack.c.h.b16 %v70
  %v100 = vunpack.c.l.b16 %v71
  %v101 = vunpack.c.h.b16 %v71
  %v102 = vunpack.c.l.b16 %v72
  %v103 = vpack.c.b16 %v96, %v96
  %v104 = vpack.c.b16 %v97, %v97
  %v105 = vpack.c.b16 %v98, %v98
  %v106 = vpack.c.b16 %v99, %v99
  %v107 = vpack.c.b16 %v100, %v100
  %v108 = vpack.c.b16 %v101, %v101
  %v109 = vpack.c.b16 %v102, %v102
  %110 = vrot.lane.b32.xlu0 %v103, 18
  %v111 = vpop.permute.xlu0 %110
  %112 = vrot.lane.b32.xlu0 %v104, 18
  %v113 = vpop.permute.xlu0 %112
  %114 = vrot.lane.b32.xlu0 %v105, 18
  %v115 = vpop.permute.xlu0 %114
  %116 = vrot.lane.b32.xlu0 %v106, 18
  %v117 = vpop.permute.xlu0 %116
  %118 = vrot.lane.b32.xlu0 %v107, 18
  %v119 = vpop.permute.xlu0 %118
  %120 = vrot.lane.b32.xlu0 %v108, 18
  %v121 = vpop.permute.xlu0 %120
  %122 = vrot.lane.b32.xlu0 %v109, 18
  %v123 = vpop.permute.xlu0 %122
  %vm124 = vcmask 146432
  %v125 = vsel %vm124, %v111, %v113
  %v126 = vsel %vm124, %v113, %v115
  %v127 = vsel %vm124, %v115, %v117
  %v128 = vsel %vm124, %v117, %v119
  %v129 = vsel %vm124, %v119, %v121
  %v130 = vsel %vm124, %v121, %v123
  %vm131 = vcmask 64512
  %v133 = vsel %vm131, %v90, 0
  %v136 = vsel %vm131, %v91, 0
  %vm138 = vcmask 1043456
  %v140 = vsel %vm138, %v125, 0
  %v143 = vsel %vm138, %v126, 0
  %v146 = vsel %vm138, %v127, 0
  %v149 = vsel %vm138, %v128, 0
  %v152 = vsel %vm138, %v129, 0
  %v155 = vsel %vm138, %v130, 0
  %157 = vmatpush.bf16.msra.mxu0 0
  %158 = vmatpush.bf16.msra.mxu0 0
  %159 = vmatpush.bf16.msra.mxu0 0
  %160 = vmatpush.bf16.msra.mxu0 0
  %161 = vmatpush.bf16.msra.mxu0 0
  %162 = vmatpush.bf16.msra.mxu0 0
  %163 = vmatpush.bf16.msra.mxu0 0
  %164 = vmatpush.bf16.msra.mxu0 %v140
  %165 = vmatmul.bf16.gmra.mxu0 %v133
  %v166 = vpop.f32.mrf.mxu0
  %v167 = vadd.f32 0.0, %v166
  %v168 = vpop.f32.mrf.mxu0
  %v169 = vadd.f32 0.0, %v168
  %170 = vmatmul.bf16.gmra.mxu0 %v136
  %v171 = vpop.f32.mrf.mxu0
  %v172 = vadd.f32 0.0, %v171
  %v173 = vpop.f32.mrf.mxu0
  %v174 = vadd.f32 0.0, %v173
  %175 = vdwg.mxu0
  %176 = vmatpush.bf16.msra.mxu0 0
  %177 = vmatpush.bf16.msra.mxu0 0
  %178 = vmatpush.bf16.msra.mxu0 0
  %179 = vmatpush.bf16.msra.mxu0 0
  %180 = vmatpush.bf16.msra.mxu0 0
  %181 = vmatpush.bf16.msra.mxu0 0
  %182 = vmatpush.bf16.msra.mxu0 0
  %183 = vmatpush.bf16.msra.mxu0 %v143
  %184 = vmatmul.bf16.gmra.mxu0 %v133
  %v185 = vpop.f32.mrf.mxu0
  %v186 = vadd.f32 0.0, %v185
  %v187 = vpop.f32.mrf.mxu0
  %v188 = vadd.f32 0.0, %v187
  %189 = vmatmul.bf16.gmra.mxu0 %v136
  %v190 = vpop.f32.mrf.mxu0
  %v191 = vadd.f32 0.0, %v190
  %v192 = vpop.f32.mrf.mxu0
  %v193 = vadd.f32 0.0, %v192
  %194 = vdwg.mxu0
  %195 = vmatpush.bf16.msra.mxu0 0
  %196 = vmatpush.bf16.msra.mxu0 0
  %197 = vmatpush.bf16.msra.mxu0 0
  %198 = vmatpush.bf16.msra.mxu0 0
  %199 = vmatpush.bf16.msra.mxu0 0
  %200 = vmatpush.bf16.msra.mxu0 0
  %201 = vmatpush.bf16.msra.mxu0 0
  %202 = vmatpush.bf16.msra.mxu0 %v146
  %203 = vmatmul.bf16.gmra.mxu0 %v133
  %v204 = vpop.f32.mrf.mxu0
  %v205 = vadd.f32 0.0, %v204
  %v206 = vpop.f32.mrf.mxu0
  %v207 = vadd.f32 0.0, %v206
  %208 = vmatmul.bf16.gmra.mxu0 %v136
  %v209 = vpop.f32.mrf.mxu0
  %v210 = vadd.f32 0.0, %v209
  %v211 = vpop.f32.mrf.mxu0
  %v212 = vadd.f32 0.0, %v211
  %213 = vdwg.mxu0
  %214 = vmatpush.bf16.msra.mxu0 0
  %215 = vmatpush.bf16.msra.mxu0 0
  %216 = vmatpush.bf16.msra.mxu0 0
  %217 = vmatpush.bf16.msra.mxu0 0
  %218 = vmatpush.bf16.msra.mxu0 0
  %219 = vmatpush.bf16.msra.mxu0 0
  %220 = vmatpush.bf16.msra.mxu0 0
  %221 = vmatpush.bf16.msra.mxu0 %v149
  %222 = vmatmul.bf16.gmra.mxu0 %v133
  %v223 = vpop.f32.mrf.mxu0
  %v224 = vadd.f32 0.0, %v223
  %v225 = vpop.f32.mrf.mxu0
  %v226 = vadd.f32 0.0, %v225
  %227 = vmatmul.bf16.gmra.mxu0 %v136
  %v228 = vpop.f32.mrf.mxu0
  %v229 = vadd.f32 0.0, %v228
  %v230 = vpop.f32.mrf.mxu0
  %v231 = vadd.f32 0.0, %v230
  %232 = vdwg.mxu0
  %233 = vmatpush.bf16.msra.mxu0 0
  %234 = vmatpush.bf16.msra.mxu0 0
  %235 = vmatpush.bf16.msra.mxu0 0
  %236 = vmatpush.bf16.msra.mxu0 0
  %237 = vmatpush.bf16.msra.mxu0 0
  %238 = vmatpush.bf16.msra.mxu0 0
  %239 = vmatpush.bf16.msra.mxu0 0
  %240 = vmatpush.bf16.msra.mxu0 %v152
  %241 = vmatmul.bf16.gmra.mxu0 %v133
  %v242 = vpop.f32.mrf.mxu0
  %v243 = vadd.f32 0.0, %v242
  %v244 = vpop.f32.mrf.mxu0
  %v245 = vadd.f32 0.0, %v244
  %246 = vmatmul.bf16.gmra.mxu0 %v136
  %v247 = vpop.f32.mrf.mxu0
  %v248 = vadd.f32 0.0, %v247
  %v249 = vpop.f32.mrf.mxu0
  %v250 = vadd.f32 0.0, %v249
  %251 = vdwg.mxu0
  %252 = vmatpush.bf16.msra.mxu0 0
  %253 = vmatpush.bf16.msra.mxu0 0
  %254 = vmatpush.bf16.msra.mxu0 0
  %255 = vmatpush.bf16.msra.mxu0 0
  %256 = vmatpush.bf16.msra.mxu0 0
  %257 = vmatpush.bf16.msra.mxu0 0
  %258 = vmatpush.bf16.msra.mxu0 0
  %259 = vmatpush.bf16.msra.mxu0 %v155
  %260 = vmatmul.bf16.gmra.mxu0 %v133
  %v261 = vpop.f32.mrf.mxu0
  %v262 = vadd.f32 0.0, %v261
  %v263 = vpop.f32.mrf.mxu0
  %v264 = vadd.f32 0.0, %v263
  %265 = vmatmul.bf16.gmra.mxu0 %v136
  %v266 = vpop.f32.mrf.mxu0
  %v267 = vadd.f32 0.0, %v266
  %v268 = vpop.f32.mrf.mxu0
  %v269 = vadd.f32 0.0, %v268
  %270 = vdwg.mxu0
  %v275 = vunpack.c.l.b16 %v73
  %v276 = vunpack.c.l.b16 %v74
  %v277 = vunpack.c.l.b16 %v75
  %v278 = vunpack.c.l.b16 %v76
  %v279 = vpack.c.b16 %v276, %v275
  %v280 = vpack.c.b16 %v278, %v277
  %281 = vrot.lane.b32.xlu0 %v103, 19
  %v282 = vpop.permute.xlu0 %281
  %283 = vrot.lane.b32.xlu0 %v104, 19
  %v284 = vpop.permute.xlu0 %283
  %285 = vrot.lane.b32.xlu0 %v105, 19
  %v286 = vpop.permute.xlu0 %285
  %287 = vrot.lane.b32.xlu0 %v106, 19
  %v288 = vpop.permute.xlu0 %287
  %289 = vrot.lane.b32.xlu0 %v107, 19
  %v290 = vpop.permute.xlu0 %289
  %291 = vrot.lane.b32.xlu0 %v108, 19
  %v292 = vpop.permute.xlu0 %291
  %293 = vrot.lane.b32.xlu0 %v109, 19
  %v294 = vpop.permute.xlu0 %293
  %vm295 = vcmask 154624
  %v296 = vsel %vm295, %v282, %v284
  %v297 = vsel %vm295, %v284, %v286
  %v298 = vsel %vm295, %v286, %v288
  %v299 = vsel %vm295, %v288, %v290
  %v300 = vsel %vm295, %v290, %v292
  %v301 = vsel %vm295, %v292, %v294
  %v303 = vsel %vm131, %v279, 0
  %v306 = vsel %vm131, %v280, 0
  %v309 = vsel %vm138, %v296, 0
  %v312 = vsel %vm138, %v297, 0
  %v315 = vsel %vm138, %v298, 0
  %v318 = vsel %vm138, %v299, 0
  %v321 = vsel %vm138, %v300, 0
  %v324 = vsel %vm138, %v301, 0
  %326 = vmatpush.bf16.msra.mxu0 0
  %327 = vmatpush.bf16.msra.mxu0 0
  %328 = vmatpush.bf16.msra.mxu0 0
  %329 = vmatpush.bf16.msra.mxu0 0
  %330 = vmatpush.bf16.msra.mxu0 0
  %331 = vmatpush.bf16.msra.mxu0 0
  %332 = vmatpush.bf16.msra.mxu0 0
  %333 = vmatpush.bf16.msra.mxu0 %v309
  %334 = vmatmul.bf16.gmra.mxu0 %v303
  %v335 = vpop.f32.mrf.mxu0
  %v336 = vadd.f32 %v167, %v335
  %v337 = vpop.f32.mrf.mxu0
  %v338 = vadd.f32 %v169, %v337
  %339 = vmatmul.bf16.gmra.mxu0 %v306
  %v340 = vpop.f32.mrf.mxu0
  %v341 = vadd.f32 %v172, %v340
  %v342 = vpop.f32.mrf.mxu0
  %v343 = vadd.f32 %v174, %v342
  %344 = vdwg.mxu0
  %345 = vmatpush.bf16.msra.mxu0 0
  %346 = vmatpush.bf16.msra.mxu0 0
  %347 = vmatpush.bf16.msra.mxu0 0
  %348 = vmatpush.bf16.msra.mxu0 0
  %349 = vmatpush.bf16.msra.mxu0 0
  %350 = vmatpush.bf16.msra.mxu0 0
  %351 = vmatpush.bf16.msra.mxu0 0
  %352 = vmatpush.bf16.msra.mxu0 %v312
  %353 = vmatmul.bf16.gmra.mxu0 %v303
  %v354 = vpop.f32.mrf.mxu0
  %v355 = vadd.f32 %v186, %v354
  %v356 = vpop.f32.mrf.mxu0
  %v357 = vadd.f32 %v188, %v356
  %358 = vmatmul.bf16.gmra.mxu0 %v306
  %v359 = vpop.f32.mrf.mxu0
  %v360 = vadd.f32 %v191, %v359
  %v361 = vpop.f32.mrf.mxu0
  %v362 = vadd.f32 %v193, %v361
  %363 = vdwg.mxu0
  %364 = vmatpush.bf16.msra.mxu0 0
  %365 = vmatpush.bf16.msra.mxu0 0
  %366 = vmatpush.bf16.msra.mxu0 0
  %367 = vmatpush.bf16.msra.mxu0 0
  %368 = vmatpush.bf16.msra.mxu0 0
  %369 = vmatpush.bf16.msra.mxu0 0
  %370 = vmatpush.bf16.msra.mxu0 0
  %371 = vmatpush.bf16.msra.mxu0 %v315
  %372 = vmatmul.bf16.gmra.mxu0 %v303
  %v373 = vpop.f32.mrf.mxu0
  %v374 = vadd.f32 %v205, %v373
  %v375 = vpop.f32.mrf.mxu0
  %v376 = vadd.f32 %v207, %v375
  %377 = vmatmul.bf16.gmra.mxu0 %v306
  %v378 = vpop.f32.mrf.mxu0
  %v379 = vadd.f32 %v210, %v378
  %v380 = vpop.f32.mrf.mxu0
  %v381 = vadd.f32 %v212, %v380
  %382 = vdwg.mxu0
  %383 = vmatpush.bf16.msra.mxu0 0
  %384 = vmatpush.bf16.msra.mxu0 0
  %385 = vmatpush.bf16.msra.mxu0 0
  %386 = vmatpush.bf16.msra.mxu0 0
  %387 = vmatpush.bf16.msra.mxu0 0
  %388 = vmatpush.bf16.msra.mxu0 0
  %389 = vmatpush.bf16.msra.mxu0 0
  %390 = vmatpush.bf16.msra.mxu0 %v318
  %391 = vmatmul.bf16.gmra.mxu0 %v303
  %v392 = vpop.f32.mrf.mxu0
  %v393 = vadd.f32 %v224, %v392
  %v394 = vpop.f32.mrf.mxu0
  %v395 = vadd.f32 %v226, %v394
  %396 = vmatmul.bf16.gmra.mxu0 %v306
  %v397 = vpop.f32.mrf.mxu0
  %v398 = vadd.f32 %v229, %v397
  %v399 = vpop.f32.mrf.mxu0
  %v400 = vadd.f32 %v231, %v399
  %401 = vdwg.mxu0
  %402 = vmatpush.bf16.msra.mxu0 0
  %403 = vmatpush.bf16.msra.mxu0 0
  %404 = vmatpush.bf16.msra.mxu0 0
  %405 = vmatpush.bf16.msra.mxu0 0
  %406 = vmatpush.bf16.msra.mxu0 0
  %407 = vmatpush.bf16.msra.mxu0 0
  %408 = vmatpush.bf16.msra.mxu0 0
  %409 = vmatpush.bf16.msra.mxu0 %v321
  %410 = vmatmul.bf16.gmra.mxu0 %v303
  %v411 = vpop.f32.mrf.mxu0
  %v412 = vadd.f32 %v243, %v411
  %v413 = vpop.f32.mrf.mxu0
  %v414 = vadd.f32 %v245, %v413
  %415 = vmatmul.bf16.gmra.mxu0 %v306
  %v416 = vpop.f32.mrf.mxu0
  %v417 = vadd.f32 %v248, %v416
  %v418 = vpop.f32.mrf.mxu0
  %v419 = vadd.f32 %v250, %v418
  %420 = vdwg.mxu0
  %421 = vmatpush.bf16.msra.mxu0 0
  %422 = vmatpush.bf16.msra.mxu0 0
  %423 = vmatpush.bf16.msra.mxu0 0
  %424 = vmatpush.bf16.msra.mxu0 0
  %425 = vmatpush.bf16.msra.mxu0 0
  %426 = vmatpush.bf16.msra.mxu0 0
  %427 = vmatpush.bf16.msra.mxu0 0
  %428 = vmatpush.bf16.msra.mxu0 %v324
  %429 = vmatmul.bf16.gmra.mxu0 %v303
  %v430 = vpop.f32.mrf.mxu0
  %v431 = vadd.f32 %v262, %v430
  %v432 = vpop.f32.mrf.mxu0
  %v433 = vadd.f32 %v264, %v432
  %434 = vmatmul.bf16.gmra.mxu0 %v306
  %v435 = vpop.f32.mrf.mxu0
  %v436 = vadd.f32 %v267, %v435
  %v437 = vpop.f32.mrf.mxu0
  %v438 = vadd.f32 %v269, %v437
  %439 = vdwg.mxu0
  %s440 = scalar_lea.vmem %s2, 32
  %v441 = vld [vmem:[%s440] sm:$0xf]
  %v442 = vld [vmem:[%s440 + $0x4] sm:$0xf]
  %v443 = vld [vmem:[%s440 + $0x8] sm:$0xf]
  %v444 = vld [vmem:[%s440 + $0xc] sm:$0xf]
  %v449 = vunpack.c.l.b16 %v441
  %v450 = vunpack.c.l.b16 %v442
  %v451 = vunpack.c.l.b16 %v443
  %v452 = vunpack.c.l.b16 %v444
  %v453 = vpack.c.b16 %v450, %v449
  %v454 = vpack.c.b16 %v452, %v451
  %455 = vrot.lane.b32.xlu0 %v103, 17
  %v456 = vpop.permute.xlu0 %455
  %457 = vrot.lane.b32.xlu0 %v104, 17
  %v458 = vpop.permute.xlu0 %457
  %459 = vrot.lane.b32.xlu0 %v105, 17
  %v460 = vpop.permute.xlu0 %459
  %461 = vrot.lane.b32.xlu0 %v106, 17
  %v462 = vpop.permute.xlu0 %461
  %463 = vrot.lane.b32.xlu0 %v107, 17
  %v464 = vpop.permute.xlu0 %463
  %465 = vrot.lane.b32.xlu0 %v108, 17
  %v466 = vpop.permute.xlu0 %465
  %467 = vrot.lane.b32.xlu0 %v109, 17
  %v468 = vpop.permute.xlu0 %467
  %vm469 = vcmask 138240
  %v470 = vsel %vm469, %v456, %v458
  %v471 = vsel %vm469, %v458, %v460
  %v472 = vsel %vm469, %v460, %v462
  %v473 = vsel %vm469, %v462, %v464
  %v474 = vsel %vm469, %v464, %v466
  %v475 = vsel %vm469, %v466, %v468
  %v477 = vsel %vm131, %v453, 0
  %v480 = vsel %vm131, %v454, 0
  %v483 = vsel %vm138, %v470, 0
  %v486 = vsel %vm138, %v471, 0
  %v489 = vsel %vm138, %v472, 0
  %v492 = vsel %vm138, %v473, 0
  %v495 = vsel %vm138, %v474, 0
  %v498 = vsel %vm138, %v475, 0
  %500 = vmatpush.bf16.msra.mxu0 0
  %501 = vmatpush.bf16.msra.mxu0 0
  %502 = vmatpush.bf16.msra.mxu0 0
  %503 = vmatpush.bf16.msra.mxu0 0
  %504 = vmatpush.bf16.msra.mxu0 0
  %505 = vmatpush.bf16.msra.mxu0 0
  %506 = vmatpush.bf16.msra.mxu0 0
  %507 = vmatpush.bf16.msra.mxu0 %v483
  %508 = vmatmul.bf16.gmra.mxu0 %v477
  %v509 = vpop.f32.mrf.mxu0
  %v510 = vadd.f32 0.0, %v509
  %v511 = vpop.f32.mrf.mxu0
  %v512 = vadd.f32 0.0, %v511
  %513 = vmatmul.bf16.gmra.mxu0 %v480
  %v514 = vpop.f32.mrf.mxu0
  %v515 = vadd.f32 0.0, %v514
  %v516 = vpop.f32.mrf.mxu0
  %v517 = vadd.f32 0.0, %v516
  %518 = vdwg.mxu0
  %519 = vmatpush.bf16.msra.mxu0 0
  %520 = vmatpush.bf16.msra.mxu0 0
  %521 = vmatpush.bf16.msra.mxu0 0
  %522 = vmatpush.bf16.msra.mxu0 0
  %523 = vmatpush.bf16.msra.mxu0 0
  %524 = vmatpush.bf16.msra.mxu0 0
  %525 = vmatpush.bf16.msra.mxu0 0
  %526 = vmatpush.bf16.msra.mxu0 %v486
  %527 = vmatmul.bf16.gmra.mxu0 %v477
  %v528 = vpop.f32.mrf.mxu0
  %v529 = vadd.f32 0.0, %v528
  %v530 = vpop.f32.mrf.mxu0
  %v531 = vadd.f32 0.0, %v530
  %532 = vmatmul.bf16.gmra.mxu0 %v480
  %v533 = vpop.f32.mrf.mxu0
  %v534 = vadd.f32 0.0, %v533
  %v535 = vpop.f32.mrf.mxu0
  %v536 = vadd.f32 0.0, %v535
  %537 = vdwg.mxu0
  %538 = vmatpush.bf16.msra.mxu0 0
  %539 = vmatpush.bf16.msra.mxu0 0
  %540 = vmatpush.bf16.msra.mxu0 0
  %541 = vmatpush.bf16.msra.mxu0 0
  %542 = vmatpush.bf16.msra.mxu0 0
  %543 = vmatpush.bf16.msra.mxu0 0
  %544 = vmatpush.bf16.msra.mxu0 0
  %545 = vmatpush.bf16.msra.mxu0 %v489
  %546 = vmatmul.bf16.gmra.mxu0 %v477
  %v547 = vpop.f32.mrf.mxu0
  %v548 = vadd.f32 0.0, %v547
  %v549 = vpop.f32.mrf.mxu0
  %v550 = vadd.f32 0.0, %v549
  %551 = vmatmul.bf16.gmra.mxu0 %v480
  %v552 = vpop.f32.mrf.mxu0
  %v553 = vadd.f32 0.0, %v552
  %v554 = vpop.f32.mrf.mxu0
  %v555 = vadd.f32 0.0, %v554
  %556 = vdwg.mxu0
  %557 = vmatpush.bf16.msra.mxu0 0
  %558 = vmatpush.bf16.msra.mxu0 0
  %559 = vmatpush.bf16.msra.mxu0 0
  %560 = vmatpush.bf16.msra.mxu0 0
  %561 = vmatpush.bf16.msra.mxu0 0
  %562 = vmatpush.bf16.msra.mxu0 0
  %563 = vmatpush.bf16.msra.mxu0 0
  %564 = vmatpush.bf16.msra.mxu0 %v492
  %565 = vmatmul.bf16.gmra.mxu0 %v477
  %v566 = vpop.f32.mrf.mxu0
  %v567 = vadd.f32 0.0, %v566
  %v568 = vpop.f32.mrf.mxu0
  %v569 = vadd.f32 0.0, %v568
  %570 = vmatmul.bf16.gmra.mxu0 %v480
  %v571 = vpop.f32.mrf.mxu0
  %v572 = vadd.f32 0.0, %v571
  %v573 = vpop.f32.mrf.mxu0
  %v574 = vadd.f32 0.0, %v573
  %575 = vdwg.mxu0
  %576 = vmatpush.bf16.msra.mxu0 0
  %577 = vmatpush.bf16.msra.mxu0 0
  %578 = vmatpush.bf16.msra.mxu0 0
  %579 = vmatpush.bf16.msra.mxu0 0
  %580 = vmatpush.bf16.msra.mxu0 0
  %581 = vmatpush.bf16.msra.mxu0 0
  %582 = vmatpush.bf16.msra.mxu0 0
  %583 = vmatpush.bf16.msra.mxu0 %v495
  %584 = vmatmul.bf16.gmra.mxu0 %v477
  %v585 = vpop.f32.mrf.mxu0
  %v586 = vadd.f32 0.0, %v585
  %v587 = vpop.f32.mrf.mxu0
  %v588 = vadd.f32 0.0, %v587
  %589 = vmatmul.bf16.gmra.mxu0 %v480
  %v590 = vpop.f32.mrf.mxu0
  %v591 = vadd.f32 0.0, %v590
  %v592 = vpop.f32.mrf.mxu0
  %v593 = vadd.f32 0.0, %v592
  %594 = vdwg.mxu0
  %595 = vmatpush.bf16.msra.mxu0 0
  %596 = vmatpush.bf16.msra.mxu0 0
  %597 = vmatpush.bf16.msra.mxu0 0
  %598 = vmatpush.bf16.msra.mxu0 0
  %599 = vmatpush.bf16.msra.mxu0 0
  %600 = vmatpush.bf16.msra.mxu0 0
  %601 = vmatpush.bf16.msra.mxu0 0
  %602 = vmatpush.bf16.msra.mxu0 %v498
  %603 = vmatmul.bf16.gmra.mxu0 %v477
  %v604 = vpop.f32.mrf.mxu0
  %v605 = vadd.f32 0.0, %v604
  %v606 = vpop.f32.mrf.mxu0
  %v607 = vadd.f32 0.0, %v606
  %608 = vmatmul.bf16.gmra.mxu0 %v480
  %v609 = vpop.f32.mrf.mxu0
  %v610 = vadd.f32 0.0, %v609
  %v611 = vpop.f32.mrf.mxu0
  %v612 = vadd.f32 0.0, %v611
  %613 = vdwg.mxu0
  %v614 = vadd.f32 %v336, %v510
  %v615 = vadd.f32 %v355, %v529
  %v616 = vadd.f32 %v374, %v548
  %v617 = vadd.f32 %v393, %v567
  %v618 = vadd.f32 %v412, %v586
  %v619 = vadd.f32 %v431, %v605
  %v620 = vadd.f32 %v338, %v512
  %v621 = vadd.f32 %v357, %v531
  %v622 = vadd.f32 %v376, %v550
  %v623 = vadd.f32 %v395, %v569
  %v624 = vadd.f32 %v414, %v588
  %v625 = vadd.f32 %v433, %v607
  %v626 = vadd.f32 %v341, %v515
  %v627 = vadd.f32 %v360, %v534
  %v628 = vadd.f32 %v379, %v553
  %v629 = vadd.f32 %v398, %v572
  %v630 = vadd.f32 %v417, %v591
  %v631 = vadd.f32 %v436, %v610
  %v632 = vadd.f32 %v343, %v517
  %v633 = vadd.f32 %v362, %v536
  %v634 = vadd.f32 %v381, %v555
  %v635 = vadd.f32 %v400, %v574
  %v636 = vadd.f32 %v419, %v593
  %v637 = vadd.f32 %v438, %v612
  %s638 = scalar_lea.vmem %s2, 48
  %v639 = vld [vmem:[%s638] sm:$0xf]
  %v640 = vld [vmem:[%s638 + $0x4] sm:$0xf]
  %v641 = vld [vmem:[%s638 + $0x8] sm:$0xf]
  %v642 = vld [vmem:[%s638 + $0xc] sm:$0xf]
  %v647 = vunpack.c.l.b16 %v639
  %v648 = vunpack.c.l.b16 %v640
  %v649 = vunpack.c.l.b16 %v641
  %v650 = vunpack.c.l.b16 %v642
  %v651 = vpack.c.b16 %v648, %v647
  %v652 = vpack.c.b16 %v650, %v649
  %653 = vrot.lane.b32.xlu0 %v103, 1
  %v654 = vpop.permute.xlu0 %653
  %655 = vrot.lane.b32.xlu0 %v104, 1
  %v656 = vpop.permute.xlu0 %655
  %657 = vrot.lane.b32.xlu0 %v105, 1
  %v658 = vpop.permute.xlu0 %657
  %659 = vrot.lane.b32.xlu0 %v106, 1
  %v660 = vpop.permute.xlu0 %659
  %661 = vrot.lane.b32.xlu0 %v107, 1
  %v662 = vpop.permute.xlu0 %661
  %663 = vrot.lane.b32.xlu0 %v108, 1
  %v664 = vpop.permute.xlu0 %663
  %665 = vrot.lane.b32.xlu0 %v109, 1
  %v666 = vpop.permute.xlu0 %665
  %vm667 = vcmask 7168
  %v668 = vsel %vm667, %v654, %v656
  %v669 = vsel %vm667, %v656, %v658
  %v670 = vsel %vm667, %v658, %v660
  %v671 = vsel %vm667, %v660, %v662
  %v672 = vsel %vm667, %v662, %v664
  %v673 = vsel %vm667, %v664, %v666
  %v675 = vsel %vm131, %v651, 0
  %v678 = vsel %vm131, %v652, 0
  %v681 = vsel %vm138, %v668, 0
  %v684 = vsel %vm138, %v669, 0
  %v687 = vsel %vm138, %v670, 0
  %v690 = vsel %vm138, %v671, 0
  %v693 = vsel %vm138, %v672, 0
  %v696 = vsel %vm138, %v673, 0
  %698 = vmatpush.bf16.msra.mxu0 0
  %699 = vmatpush.bf16.msra.mxu0 0
  %700 = vmatpush.bf16.msra.mxu0 0
  %701 = vmatpush.bf16.msra.mxu0 0
  %702 = vmatpush.bf16.msra.mxu0 0
  %703 = vmatpush.bf16.msra.mxu0 0
  %704 = vmatpush.bf16.msra.mxu0 0
  %705 = vmatpush.bf16.msra.mxu0 %v681
  %706 = vmatmul.bf16.gmra.mxu0 %v675
  %v707 = vpop.f32.mrf.mxu0
  %v708 = vadd.f32 0.0, %v707
  %v709 = vpop.f32.mrf.mxu0
  %v710 = vadd.f32 0.0, %v709
  %711 = vmatmul.bf16.gmra.mxu0 %v678
  %v712 = vpop.f32.mrf.mxu0
  %v713 = vadd.f32 0.0, %v712
  %v714 = vpop.f32.mrf.mxu0
  %v715 = vadd.f32 0.0, %v714
  %716 = vdwg.mxu0
  %717 = vmatpush.bf16.msra.mxu0 0
  %718 = vmatpush.bf16.msra.mxu0 0
  %719 = vmatpush.bf16.msra.mxu0 0
  %720 = vmatpush.bf16.msra.mxu0 0
  %721 = vmatpush.bf16.msra.mxu0 0
  %722 = vmatpush.bf16.msra.mxu0 0
  %723 = vmatpush.bf16.msra.mxu0 0
  %724 = vmatpush.bf16.msra.mxu0 %v684
  %725 = vmatmul.bf16.gmra.mxu0 %v675
  %v726 = vpop.f32.mrf.mxu0
  %v727 = vadd.f32 0.0, %v726
  %v728 = vpop.f32.mrf.mxu0
  %v729 = vadd.f32 0.0, %v728
  %730 = vmatmul.bf16.gmra.mxu0 %v678
  %v731 = vpop.f32.mrf.mxu0
  %v732 = vadd.f32 0.0, %v731
  %v733 = vpop.f32.mrf.mxu0
  %v734 = vadd.f32 0.0, %v733
  %735 = vdwg.mxu0
  %736 = vmatpush.bf16.msra.mxu0 0
  %737 = vmatpush.bf16.msra.mxu0 0
  %738 = vmatpush.bf16.msra.mxu0 0
  %739 = vmatpush.bf16.msra.mxu0 0
  %740 = vmatpush.bf16.msra.mxu0 0
  %741 = vmatpush.bf16.msra.mxu0 0
  %742 = vmatpush.bf16.msra.mxu0 0
  %743 = vmatpush.bf16.msra.mxu0 %v687
  %744 = vmatmul.bf16.gmra.mxu0 %v675
  %v745 = vpop.f32.mrf.mxu0
  %v746 = vadd.f32 0.0, %v745
  %v747 = vpop.f32.mrf.mxu0
  %v748 = vadd.f32 0.0, %v747
  %749 = vmatmul.bf16.gmra.mxu0 %v678
  %v750 = vpop.f32.mrf.mxu0
  %v751 = vadd.f32 0.0, %v750
  %v752 = vpop.f32.mrf.mxu0
  %v753 = vadd.f32 0.0, %v752
  %754 = vdwg.mxu0
  %755 = vmatpush.bf16.msra.mxu0 0
  %756 = vmatpush.bf16.msra.mxu0 0
  %757 = vmatpush.bf16.msra.mxu0 0
  %758 = vmatpush.bf16.msra.mxu0 0
  %759 = vmatpush.bf16.msra.mxu0 0
  %760 = vmatpush.bf16.msra.mxu0 0
  %761 = vmatpush.bf16.msra.mxu0 0
  %762 = vmatpush.bf16.msra.mxu0 %v690
  %763 = vmatmul.bf16.gmra.mxu0 %v675
  %v764 = vpop.f32.mrf.mxu0
  %v765 = vadd.f32 0.0, %v764
  %v766 = vpop.f32.mrf.mxu0
  %v767 = vadd.f32 0.0, %v766
  %768 = vmatmul.bf16.gmra.mxu0 %v678
  %v769 = vpop.f32.mrf.mxu0
  %v770 = vadd.f32 0.0, %v769
  %v771 = vpop.f32.mrf.mxu0
  %v772 = vadd.f32 0.0, %v771
  %773 = vdwg.mxu0
  %774 = vmatpush.bf16.msra.mxu0 0
  %775 = vmatpush.bf16.msra.mxu0 0
  %776 = vmatpush.bf16.msra.mxu0 0
  %777 = vmatpush.bf16.msra.mxu0 0
  %778 = vmatpush.bf16.msra.mxu0 0
  %779 = vmatpush.bf16.msra.mxu0 0
  %780 = vmatpush.bf16.msra.mxu0 0
  %781 = vmatpush.bf16.msra.mxu0 %v693
  %782 = vmatmul.bf16.gmra.mxu0 %v675
  %v783 = vpop.f32.mrf.mxu0
  %v784 = vadd.f32 0.0, %v783
  %v785 = vpop.f32.mrf.mxu0
  %v786 = vadd.f32 0.0, %v785
  %787 = vmatmul.bf16.gmra.mxu0 %v678
  %v788 = vpop.f32.mrf.mxu0
  %v789 = vadd.f32 0.0, %v788
  %v790 = vpop.f32.mrf.mxu0
  %v791 = vadd.f32 0.0, %v790
  %792 = vdwg.mxu0
  %793 = vmatpush.bf16.msra.mxu0 0
  %794 = vmatpush.bf16.msra.mxu0 0
  %795 = vmatpush.bf16.msra.mxu0 0
  %796 = vmatpush.bf16.msra.mxu0 0
  %797 = vmatpush.bf16.msra.mxu0 0
  %798 = vmatpush.bf16.msra.mxu0 0
  %799 = vmatpush.bf16.msra.mxu0 0
  %800 = vmatpush.bf16.msra.mxu0 %v696
  %801 = vmatmul.bf16.gmra.mxu0 %v675
  %v802 = vpop.f32.mrf.mxu0
  %v803 = vadd.f32 0.0, %v802
  %v804 = vpop.f32.mrf.mxu0
  %v805 = vadd.f32 0.0, %v804
  %806 = vmatmul.bf16.gmra.mxu0 %v678
  %v807 = vpop.f32.mrf.mxu0
  %v808 = vadd.f32 0.0, %v807
  %v809 = vpop.f32.mrf.mxu0
  %v810 = vadd.f32 0.0, %v809
  %811 = vdwg.mxu0
  %v812 = vadd.f32 %v614, %v708
  %v813 = vadd.f32 %v615, %v727
  %v814 = vadd.f32 %v616, %v746
  %v815 = vadd.f32 %v617, %v765
  %v816 = vadd.f32 %v618, %v784
  %v817 = vadd.f32 %v619, %v803
  %v818 = vadd.f32 %v620, %v710
  %v819 = vadd.f32 %v621, %v729
  %v820 = vadd.f32 %v622, %v748
  %v821 = vadd.f32 %v623, %v767
  %v822 = vadd.f32 %v624, %v786
  %v823 = vadd.f32 %v625, %v805
  %v824 = vadd.f32 %v626, %v713
  %v825 = vadd.f32 %v627, %v732
  %v826 = vadd.f32 %v628, %v751
  %v827 = vadd.f32 %v629, %v770
  %v828 = vadd.f32 %v630, %v789
  %v829 = vadd.f32 %v631, %v808
  %v830 = vadd.f32 %v632, %v715
  %v831 = vadd.f32 %v633, %v734
  %v832 = vadd.f32 %v634, %v753
  %v833 = vadd.f32 %v635, %v772
  %v834 = vadd.f32 %v636, %v791
  %v835 = vadd.f32 %v637, %v810
  %v836 = vld [vmem:[#allocation2 + $0x4] sm:$0xff]
  %v837 = vld [vmem:[#allocation2 + $0xc] sm:$0xff]
  %v838 = vld [vmem:[#allocation2 + $0x14] sm:$0xff]
  %s839 = scalar_lea.vmem %s2, 64
  %v840 = vld [vmem:[%s839] sm:$0xf]
  %v841 = vld [vmem:[%s839 + $0x4] sm:$0xf]
  %v842 = vld [vmem:[%s839 + $0x8] sm:$0xf]
  %v843 = vld [vmem:[%s839 + $0xc] sm:$0xf]
  %v848 = vunpack.c.l.b16 %v840
  %v849 = vunpack.c.l.b16 %v841
  %v850 = vunpack.c.l.b16 %v842
  %v851 = vunpack.c.l.b16 %v843
  %v852 = vpack.c.b16 %v849, %v848
  %v853 = vpack.c.b16 %v851, %v850
  %v857 = vunpack.c.l.b16 %v836
  %v858 = vunpack.c.h.b16 %v836
  %v859 = vunpack.c.l.b16 %v837
  %v860 = vunpack.c.h.b16 %v837
  %v861 = vunpack.c.l.b16 %v838
  %v862 = vunpack.c.h.b16 %v838
  %v863 = vpack.c.b16 %v857, %v857
  %v864 = vpack.c.b16 %v858, %v858
  %v865 = vpack.c.b16 %v859, %v859
  %v866 = vpack.c.b16 %v860, %v860
  %v867 = vpack.c.b16 %v861, %v861
  %v868 = vpack.c.b16 %v862, %v862
  %v870 = vsel %vm131, %v852, 0
  %v873 = vsel %vm131, %v853, 0
  %v876 = vsel %vm138, %v863, 0
  %v879 = vsel %vm138, %v864, 0
  %v882 = vsel %vm138, %v865, 0
  %v885 = vsel %vm138, %v866, 0
  %v888 = vsel %vm138, %v867, 0
  %v891 = vsel %vm138, %v868, 0
  %893 = vmatpush.bf16.msra.mxu0 0
  %894 = vmatpush.bf16.msra.mxu0 0
  %895 = vmatpush.bf16.msra.mxu0 0
  %896 = vmatpush.bf16.msra.mxu0 0
  %897 = vmatpush.bf16.msra.mxu0 0
  %898 = vmatpush.bf16.msra.mxu0 0
  %899 = vmatpush.bf16.msra.mxu0 0
  %900 = vmatpush.bf16.msra.mxu0 %v876
  %901 = vmatmul.bf16.gmra.mxu0 %v870
  %v902 = vpop.f32.mrf.mxu0
  %v903 = vadd.f32 0.0, %v902
  %v904 = vpop.f32.mrf.mxu0
  %v905 = vadd.f32 0.0, %v904
  %906 = vmatmul.bf16.gmra.mxu0 %v873
  %v907 = vpop.f32.mrf.mxu0
  %v908 = vadd.f32 0.0, %v907
  %v909 = vpop.f32.mrf.mxu0
  %v910 = vadd.f32 0.0, %v909
  %911 = vdwg.mxu0
  %912 = vmatpush.bf16.msra.mxu0 0
  %913 = vmatpush.bf16.msra.mxu0 0
  %914 = vmatpush.bf16.msra.mxu0 0
  %915 = vmatpush.bf16.msra.mxu0 0
  %916 = vmatpush.bf16.msra.mxu0 0
  %917 = vmatpush.bf16.msra.mxu0 0
  %918 = vmatpush.bf16.msra.mxu0 0
  %919 = vmatpush.bf16.msra.mxu0 %v879
  %920 = vmatmul.bf16.gmra.mxu0 %v870
  %v921 = vpop.f32.mrf.mxu0
  %v922 = vadd.f32 0.0, %v921
  %v923 = vpop.f32.mrf.mxu0
  %v924 = vadd.f32 0.0, %v923
  %925 = vmatmul.bf16.gmra.mxu0 %v873
  %v926 = vpop.f32.mrf.mxu0
  %v927 = vadd.f32 0.0, %v926
  %v928 = vpop.f32.mrf.mxu0
  %v929 = vadd.f32 0.0, %v928
  %930 = vdwg.mxu0
  %931 = vmatpush.bf16.msra.mxu0 0
  %932 = vmatpush.bf16.msra.mxu0 0
  %933 = vmatpush.bf16.msra.mxu0 0
  %934 = vmatpush.bf16.msra.mxu0 0
  %935 = vmatpush.bf16.msra.mxu0 0
  %936 = vmatpush.bf16.msra.mxu0 0
  %937 = vmatpush.bf16.msra.mxu0 0
  %938 = vmatpush.bf16.msra.mxu0 %v882
  %939 = vmatmul.bf16.gmra.mxu0 %v870
  %v940 = vpop.f32.mrf.mxu0
  %v941 = vadd.f32 0.0, %v940
  %v942 = vpop.f32.mrf.mxu0
  %v943 = vadd.f32 0.0, %v942
  %944 = vmatmul.bf16.gmra.mxu0 %v873
  %v945 = vpop.f32.mrf.mxu0
  %v946 = vadd.f32 0.0, %v945
  %v947 = vpop.f32.mrf.mxu0
  %v948 = vadd.f32 0.0, %v947
  %949 = vdwg.mxu0
  %950 = vmatpush.bf16.msra.mxu0 0
  %951 = vmatpush.bf16.msra.mxu0 0
  %952 = vmatpush.bf16.msra.mxu0 0
  %953 = vmatpush.bf16.msra.mxu0 0
  %954 = vmatpush.bf16.msra.mxu0 0
  %955 = vmatpush.bf16.msra.mxu0 0
  %956 = vmatpush.bf16.msra.mxu0 0
  %957 = vmatpush.bf16.msra.mxu0 %v885
  %958 = vmatmul.bf16.gmra.mxu0 %v870
  %v959 = vpop.f32.mrf.mxu0
  %v960 = vadd.f32 0.0, %v959
  %v961 = vpop.f32.mrf.mxu0
  %v962 = vadd.f32 0.0, %v961
  %963 = vmatmul.bf16.gmra.mxu0 %v873
  %v964 = vpop.f32.mrf.mxu0
  %v965 = vadd.f32 0.0, %v964
  %v966 = vpop.f32.mrf.mxu0
  %v967 = vadd.f32 0.0, %v966
  %968 = vdwg.mxu0
  %969 = vmatpush.bf16.msra.mxu0 0
  %970 = vmatpush.bf16.msra.mxu0 0
  %971 = vmatpush.bf16.msra.mxu0 0
  %972 = vmatpush.bf16.msra.mxu0 0
  %973 = vmatpush.bf16.msra.mxu0 0
  %974 = vmatpush.bf16.msra.mxu0 0
  %975 = vmatpush.bf16.msra.mxu0 0
  %976 = vmatpush.bf16.msra.mxu0 %v888
  %977 = vmatmul.bf16.gmra.mxu0 %v870
  %v978 = vpop.f32.mrf.mxu0
  %v979 = vadd.f32 0.0, %v978
  %v980 = vpop.f32.mrf.mxu0
  %v981 = vadd.f32 0.0, %v980
  %982 = vmatmul.bf16.gmra.mxu0 %v873
  %v983 = vpop.f32.mrf.mxu0
  %v984 = vadd.f32 0.0, %v983
  %v985 = vpop.f32.mrf.mxu0
  %v986 = vadd.f32 0.0, %v985
  %987 = vdwg.mxu0
  %988 = vmatpush.bf16.msra.mxu0 0
  %989 = vmatpush.bf16.msra.mxu0 0
  %990 = vmatpush.bf16.msra.mxu0 0
  %991 = vmatpush.bf16.msra.mxu0 0
  %992 = vmatpush.bf16.msra.mxu0 0
  %993 = vmatpush.bf16.msra.mxu0 0
  %994 = vmatpush.bf16.msra.mxu0 0
  %995 = vmatpush.bf16.msra.mxu0 %v891
  %996 = vmatmul.bf16.gmra.mxu0 %v870
  %v997 = vpop.f32.mrf.mxu0
  %v998 = vadd.f32 0.0, %v997
  %v999 = vpop.f32.mrf.mxu0
  %v1000 = vadd.f32 0.0, %v999
  %1001 = vmatmul.bf16.gmra.mxu0 %v873
  %v1002 = vpop.f32.mrf.mxu0
  %v1003 = vadd.f32 0.0, %v1002
  %v1004 = vpop.f32.mrf.mxu0
  %v1005 = vadd.f32 0.0, %v1004
  %1006 = vdwg.mxu0
  %v1007 = vadd.f32 %v812, %v903
  %v1008 = vadd.f32 %v813, %v922
  %v1009 = vadd.f32 %v814, %v941
  %v1010 = vadd.f32 %v815, %v960
  %v1011 = vadd.f32 %v816, %v979
  %v1012 = vadd.f32 %v817, %v998
  %v1013 = vadd.f32 %v818, %v905
  %v1014 = vadd.f32 %v819, %v924
  %v1015 = vadd.f32 %v820, %v943
  %v1016 = vadd.f32 %v821, %v962
  %v1017 = vadd.f32 %v822, %v981
  %v1018 = vadd.f32 %v823, %v1000
  %v1019 = vadd.f32 %v824, %v908
  %v1020 = vadd.f32 %v825, %v927
  %v1021 = vadd.f32 %v826, %v946
  %v1022 = vadd.f32 %v827, %v965
  %v1023 = vadd.f32 %v828, %v984
  %v1024 = vadd.f32 %v829, %v1003
  %v1025 = vadd.f32 %v830, %v910
  %v1026 = vadd.f32 %v831, %v929
  %v1027 = vadd.f32 %v832, %v948
  %v1028 = vadd.f32 %v833, %v967
  %v1029 = vadd.f32 %v834, %v986
  %v1030 = vadd.f32 %v835, %v1005
  %v1031 = vld [vmem:[#allocation2 + $0x4] sm:$0xff]
  %v1032 = vld [vmem:[#allocation2 + $0xc] sm:$0xff]
  %v1033 = vld [vmem:[#allocation2 + $0x14] sm:$0xff]
  %v1034 = vld [vmem:[#allocation2 + $0x1c] sm:$0xf]
  %s1035 = scalar_lea.vmem %s2, 80
  %v1036 = vld [vmem:[%s1035] sm:$0xf]
  %v1037 = vld [vmem:[%s1035 + $0x4] sm:$0xf]
  %v1038 = vld [vmem:[%s1035 + $0x8] sm:$0xf]
  %v1039 = vld [vmem:[%s1035 + $0xc] sm:$0xf]
  %v1044 = vunpack.c.l.b16 %v1036
  %v1045 = vunpack.c.l.b16 %v1037
  %v1046 = vunpack.c.l.b16 %v1038
  %v1047 = vunpack.c.l.b16 %v1039
  %v1048 = vpack.c.b16 %v1045, %v1044
  %v1049 = vpack.c.b16 %v1047, %v1046
  %v1054 = vunpack.c.l.b16 %v1031
  %v1055 = vunpack.c.h.b16 %v1031
  %v1056 = vunpack.c.l.b16 %v1032
  %v1057 = vunpack.c.h.b16 %v1032
  %v1058 = vunpack.c.l.b16 %v1033
  %v1059 = vunpack.c.h.b16 %v1033
  %v1060 = vunpack.c.l.b16 %v1034
  %v1061 = vpack.c.b16 %v1054, %v1054
  %v1062 = vpack.c.b16 %v1055, %v1055
  %v1063 = vpack.c.b16 %v1056, %v1056
  %v1064 = vpack.c.b16 %v1057, %v1057
  %v1065 = vpack.c.b16 %v1058, %v1058
  %v1066 = vpack.c.b16 %v1059, %v1059
  %v1067 = vpack.c.b16 %v1060, %v1060
  %1068 = vrot.lane.b32.xlu0 %v1061, 127
  %v1069 = vpop.permute.xlu0 %1068
  %1070 = vrot.lane.b32.xlu0 %v1062, 127
  %v1071 = vpop.permute.xlu0 %1070
  %1072 = vrot.lane.b32.xlu0 %v1063, 127
  %v1073 = vpop.permute.xlu0 %1072
  %1074 = vrot.lane.b32.xlu0 %v1064, 127
  %v1075 = vpop.permute.xlu0 %1074
  %1076 = vrot.lane.b32.xlu0 %v1065, 127
  %v1077 = vpop.permute.xlu0 %1076
  %1078 = vrot.lane.b32.xlu0 %v1066, 127
  %v1079 = vpop.permute.xlu0 %1078
  %1080 = vrot.lane.b32.xlu0 %v1067, 127
  %v1081 = vpop.permute.xlu0 %1080
  %vm1082 = vcmask 1039360
  %v1083 = vsel %vm1082, %v1069, %v1071
  %v1084 = vsel %vm1082, %v1071, %v1073
  %v1085 = vsel %vm1082, %v1073, %v1075
  %v1086 = vsel %vm1082, %v1075, %v1077
  %v1087 = vsel %vm1082, %v1077, %v1079
  %v1088 = vsel %vm1082, %v1079, %v1081
  %v1090 = vsel %vm131, %v1048, 0
  %v1093 = vsel %vm131, %v1049, 0
  %v1096 = vsel %vm138, %v1083, 0
  %v1099 = vsel %vm138, %v1084, 0
  %v1102 = vsel %vm138, %v1085, 0
  %v1105 = vsel %vm138, %v1086, 0
  %v1108 = vsel %vm138, %v1087, 0
  %v1111 = vsel %vm138, %v1088, 0
  %1113 = vmatpush.bf16.msra.mxu0 0
  %1114 = vmatpush.bf16.msra.mxu0 0
  %1115 = vmatpush.bf16.msra.mxu0 0
  %1116 = vmatpush.bf16.msra.mxu0 0
  %1117 = vmatpush.bf16.msra.mxu0 0
  %1118 = vmatpush.bf16.msra.mxu0 0
  %1119 = vmatpush.bf16.msra.mxu0 0
  %1120 = vmatpush.bf16.msra.mxu0 %v1096
  %1121 = vmatmul.bf16.gmra.mxu0 %v1090
  %v1122 = vpop.f32.mrf.mxu0
  %v1123 = vadd.f32 0.0, %v1122
  %v1124 = vpop.f32.mrf.mxu0
  %v1125 = vadd.f32 0.0, %v1124
  %1126 = vmatmul.bf16.gmra.mxu0 %v1093
  %v1127 = vpop.f32.mrf.mxu0
  %v1128 = vadd.f32 0.0, %v1127
  %v1129 = vpop.f32.mrf.mxu0
  %v1130 = vadd.f32 0.0, %v1129
  %1131 = vdwg.mxu0
  %1132 = vmatpush.bf16.msra.mxu0 0
  %1133 = vmatpush.bf16.msra.mxu0 0
  %1134 = vmatpush.bf16.msra.mxu0 0
  %1135 = vmatpush.bf16.msra.mxu0 0
  %1136 = vmatpush.bf16.msra.mxu0 0
  %1137 = vmatpush.bf16.msra.mxu0 0
  %1138 = vmatpush.bf16.msra.mxu0 0
  %1139 = vmatpush.bf16.msra.mxu0 %v1099
  %1140 = vmatmul.bf16.gmra.mxu0 %v1090
  %v1141 = vpop.f32.mrf.mxu0
  %v1142 = vadd.f32 0.0, %v1141
  %v1143 = vpop.f32.mrf.mxu0
  %v1144 = vadd.f32 0.0, %v1143
  %1145 = vmatmul.bf16.gmra.mxu0 %v1093
  %v1146 = vpop.f32.mrf.mxu0
  %v1147 = vadd.f32 0.0, %v1146
  %v1148 = vpop.f32.mrf.mxu0
  %v1149 = vadd.f32 0.0, %v1148
  %1150 = vdwg.mxu0
  %1151 = vmatpush.bf16.msra.mxu0 0
  %1152 = vmatpush.bf16.msra.mxu0 0
  %1153 = vmatpush.bf16.msra.mxu0 0
  %1154 = vmatpush.bf16.msra.mxu0 0
  %1155 = vmatpush.bf16.msra.mxu0 0
  %1156 = vmatpush.bf16.msra.mxu0 0
  %1157 = vmatpush.bf16.msra.mxu0 0
  %1158 = vmatpush.bf16.msra.mxu0 %v1102
  %1159 = vmatmul.bf16.gmra.mxu0 %v1090
  %v1160 = vpop.f32.mrf.mxu0
  %v1161 = vadd.f32 0.0, %v1160
  %v1162 = vpop.f32.mrf.mxu0
  %v1163 = vadd.f32 0.0, %v1162
  %1164 = vmatmul.bf16.gmra.mxu0 %v1093
  %v1165 = vpop.f32.mrf.mxu0
  %v1166 = vadd.f32 0.0, %v1165
  %v1167 = vpop.f32.mrf.mxu0
  %v1168 = vadd.f32 0.0, %v1167
  %1169 = vdwg.mxu0
  %1170 = vmatpush.bf16.msra.mxu0 0
  %1171 = vmatpush.bf16.msra.mxu0 0
  %1172 = vmatpush.bf16.msra.mxu0 0
  %1173 = vmatpush.bf16.msra.mxu0 0
  %1174 = vmatpush.bf16.msra.mxu0 0
  %1175 = vmatpush.bf16.msra.mxu0 0
  %1176 = vmatpush.bf16.msra.mxu0 0
  %1177 = vmatpush.bf16.msra.mxu0 %v1105
  %1178 = vmatmul.bf16.gmra.mxu0 %v1090
  %v1179 = vpop.f32.mrf.mxu0
  %v1180 = vadd.f32 0.0, %v1179
  %v1181 = vpop.f32.mrf.mxu0
  %v1182 = vadd.f32 0.0, %v1181
  %1183 = vmatmul.bf16.gmra.mxu0 %v1093
  %v1184 = vpop.f32.mrf.mxu0
  %v1185 = vadd.f32 0.0, %v1184
  %v1186 = vpop.f32.mrf.mxu0
  %v1187 = vadd.f32 0.0, %v1186
  %1188 = vdwg.mxu0
  %1189 = vmatpush.bf16.msra.mxu0 0
  %1190 = vmatpush.bf16.msra.mxu0 0
  %1191 = vmatpush.bf16.msra.mxu0 0
  %1192 = vmatpush.bf16.msra.mxu0 0
  %1193 = vmatpush.bf16.msra.mxu0 0
  %1194 = vmatpush.bf16.msra.mxu0 0
  %1195 = vmatpush.bf16.msra.mxu0 0
  %1196 = vmatpush.bf16.msra.mxu0 %v1108
  %1197 = vmatmul.bf16.gmra.mxu0 %v1090
  %v1198 = vpop.f32.mrf.mxu0
  %v1199 = vadd.f32 0.0, %v1198
  %v1200 = vpop.f32.mrf.mxu0
  %v1201 = vadd.f32 0.0, %v1200
  %1202 = vmatmul.bf16.gmra.mxu0 %v1093
  %v1203 = vpop.f32.mrf.mxu0
  %v1204 = vadd.f32 0.0, %v1203
  %v1205 = vpop.f32.mrf.mxu0
  %v1206 = vadd.f32 0.0, %v1205
  %1207 = vdwg.mxu0
  %1208 = vmatpush.bf16.msra.mxu0 0
  %1209 = vmatpush.bf16.msra.mxu0 0
  %1210 = vmatpush.bf16.msra.mxu0 0
  %1211 = vmatpush.bf16.msra.mxu0 0
  %1212 = vmatpush.bf16.msra.mxu0 0
  %1213 = vmatpush.bf16.msra.mxu0 0
  %1214 = vmatpush.bf16.msra.mxu0 0
  %1215 = vmatpush.bf16.msra.mxu0 %v1111
  %1216 = vmatmul.bf16.gmra.mxu0 %v1090
  %v1217 = vpop.f32.mrf.mxu0
  %v1218 = vadd.f32 0.0, %v1217
  %v1219 = vpop.f32.mrf.mxu0
  %v1220 = vadd.f32 0.0, %v1219
  %1221 = vmatmul.bf16.gmra.mxu0 %v1093
  %v1222 = vpop.f32.mrf.mxu0
  %v1223 = vadd.f32 0.0, %v1222
  %v1224 = vpop.f32.mrf.mxu0
  %v1225 = vadd.f32 0.0, %v1224
  %1226 = vdwg.mxu0
  %v1227 = vadd.f32 %v1007, %v1123
  %v1228 = vadd.f32 %v1008, %v1142
  %v1229 = vadd.f32 %v1009, %v1161
  %v1230 = vadd.f32 %v1010, %v1180
  %v1231 = vadd.f32 %v1011, %v1199
  %v1232 = vadd.f32 %v1012, %v1218
  %v1233 = vadd.f32 %v1013, %v1125
  %v1234 = vadd.f32 %v1014, %v1144
  %v1235 = vadd.f32 %v1015, %v1163
  %v1236 = vadd.f32 %v1016, %v1182
  %v1237 = vadd.f32 %v1017, %v1201
  %v1238 = vadd.f32 %v1018, %v1220
  %v1239 = vadd.f32 %v1019, %v1128
  %v1240 = vadd.f32 %v1020, %v1147
  %v1241 = vadd.f32 %v1021, %v1166
  %v1242 = vadd.f32 %v1022, %v1185
  %v1243 = vadd.f32 %v1023, %v1204
  %v1244 = vadd.f32 %v1024, %v1223
  %v1245 = vadd.f32 %v1025, %v1130
  %v1246 = vadd.f32 %v1026, %v1149
  %v1247 = vadd.f32 %v1027, %v1168
  %v1248 = vadd.f32 %v1028, %v1187
  %v1249 = vadd.f32 %v1029, %v1206
  %v1250 = vadd.f32 %v1030, %v1225
  %s1251 = scalar_lea.vmem %s2, 96
  %v1252 = vld [vmem:[%s1251] sm:$0xf]
  %v1253 = vld [vmem:[%s1251 + $0x4] sm:$0xf]
  %v1254 = vld [vmem:[%s1251 + $0x8] sm:$0xf]
  %v1255 = vld [vmem:[%s1251 + $0xc] sm:$0xf]
  %v1260 = vunpack.c.l.b16 %v1252
  %v1261 = vunpack.c.l.b16 %v1253
  %v1262 = vunpack.c.l.b16 %v1254
  %v1263 = vunpack.c.l.b16 %v1255
  %v1264 = vpack.c.b16 %v1261, %v1260
  %v1265 = vpack.c.b16 %v1263, %v1262
  %1266 = vrot.lane.b32.xlu0 %v1061, 111
  %v1267 = vpop.permute.xlu0 %1266
  %1268 = vrot.lane.b32.xlu0 %v1062, 111
  %v1269 = vpop.permute.xlu0 %1268
  %1270 = vrot.lane.b32.xlu0 %v1063, 111
  %v1271 = vpop.permute.xlu0 %1270
  %1272 = vrot.lane.b32.xlu0 %v1064, 111
  %v1273 = vpop.permute.xlu0 %1272
  %1274 = vrot.lane.b32.xlu0 %v1065, 111
  %v1275 = vpop.permute.xlu0 %1274
  %1276 = vrot.lane.b32.xlu0 %v1066, 111
  %v1277 = vpop.permute.xlu0 %1276
  %1278 = vrot.lane.b32.xlu0 %v1067, 111
  %v1279 = vpop.permute.xlu0 %1278
  %vm1280 = vcmask 908288
  %v1281 = vsel %vm1280, %v1267, %v1269
  %v1282 = vsel %vm1280, %v1269, %v1271
  %v1283 = vsel %vm1280, %v1271, %v1273
  %v1284 = vsel %vm1280, %v1273, %v1275
  %v1285 = vsel %vm1280, %v1275, %v1277
  %v1286 = vsel %vm1280, %v1277, %v1279
  %v1288 = vsel %vm131, %v1264, 0
  %v1291 = vsel %vm131, %v1265, 0
  %v1294 = vsel %vm138, %v1281, 0
  %v1297 = vsel %vm138, %v1282, 0
  %v1300 = vsel %vm138, %v1283, 0
  %v1303 = vsel %vm138, %v1284, 0
  %v1306 = vsel %vm138, %v1285, 0
  %v1309 = vsel %vm138, %v1286, 0
  %1311 = vmatpush.bf16.msra.mxu0 0
  %1312 = vmatpush.bf16.msra.mxu0 0
  %1313 = vmatpush.bf16.msra.mxu0 0
  %1314 = vmatpush.bf16.msra.mxu0 0
  %1315 = vmatpush.bf16.msra.mxu0 0
  %1316 = vmatpush.bf16.msra.mxu0 0
  %1317 = vmatpush.bf16.msra.mxu0 0
  %1318 = vmatpush.bf16.msra.mxu0 %v1294
  %1319 = vmatmul.bf16.gmra.mxu0 %v1288
  %v1320 = vpop.f32.mrf.mxu0
  %v1321 = vadd.f32 0.0, %v1320
  %v1322 = vpop.f32.mrf.mxu0
  %v1323 = vadd.f32 0.0, %v1322
  %1324 = vmatmul.bf16.gmra.mxu0 %v1291
  %v1325 = vpop.f32.mrf.mxu0
  %v1326 = vadd.f32 0.0, %v1325
  %v1327 = vpop.f32.mrf.mxu0
  %v1328 = vadd.f32 0.0, %v1327
  %1329 = vdwg.mxu0
  %1330 = vmatpush.bf16.msra.mxu0 0
  %1331 = vmatpush.bf16.msra.mxu0 0
  %1332 = vmatpush.bf16.msra.mxu0 0
  %1333 = vmatpush.bf16.msra.mxu0 0
  %1334 = vmatpush.bf16.msra.mxu0 0
  %1335 = vmatpush.bf16.msra.mxu0 0
  %1336 = vmatpush.bf16.msra.mxu0 0
  %1337 = vmatpush.bf16.msra.mxu0 %v1297
  %1338 = vmatmul.bf16.gmra.mxu0 %v1288
  %v1339 = vpop.f32.mrf.mxu0
  %v1340 = vadd.f32 0.0, %v1339
  %v1341 = vpop.f32.mrf.mxu0
  %v1342 = vadd.f32 0.0, %v1341
  %1343 = vmatmul.bf16.gmra.mxu0 %v1291
  %v1344 = vpop.f32.mrf.mxu0
  %v1345 = vadd.f32 0.0, %v1344
  %v1346 = vpop.f32.mrf.mxu0
  %v1347 = vadd.f32 0.0, %v1346
  %1348 = vdwg.mxu0
  %1349 = vmatpush.bf16.msra.mxu0 0
  %1350 = vmatpush.bf16.msra.mxu0 0
  %1351 = vmatpush.bf16.msra.mxu0 0
  %1352 = vmatpush.bf16.msra.mxu0 0
  %1353 = vmatpush.bf16.msra.mxu0 0
  %1354 = vmatpush.bf16.msra.mxu0 0
  %1355 = vmatpush.bf16.msra.mxu0 0
  %1356 = vmatpush.bf16.msra.mxu0 %v1300
  %1357 = vmatmul.bf16.gmra.mxu0 %v1288
  %v1358 = vpop.f32.mrf.mxu0
  %v1359 = vadd.f32 0.0, %v1358
  %v1360 = vpop.f32.mrf.mxu0
  %v1361 = vadd.f32 0.0, %v1360
  %1362 = vmatmul.bf16.gmra.mxu0 %v1291
  %v1363 = vpop.f32.mrf.mxu0
  %v1364 = vadd.f32 0.0, %v1363
  %v1365 = vpop.f32.mrf.mxu0
  %v1366 = vadd.f32 0.0, %v1365
  %1367 = vdwg.mxu0
  %1368 = vmatpush.bf16.msra.mxu0 0
  %1369 = vmatpush.bf16.msra.mxu0 0
  %1370 = vmatpush.bf16.msra.mxu0 0
  %1371 = vmatpush.bf16.msra.mxu0 0
  %1372 = vmatpush.bf16.msra.mxu0 0
  %1373 = vmatpush.bf16.msra.mxu0 0
  %1374 = vmatpush.bf16.msra.mxu0 0
  %1375 = vmatpush.bf16.msra.mxu0 %v1303
  %1376 = vmatmul.bf16.gmra.mxu0 %v1288
  %v1377 = vpop.f32.mrf.mxu0
  %v1378 = vadd.f32 0.0, %v1377
  %v1379 = vpop.f32.mrf.mxu0
  %v1380 = vadd.f32 0.0, %v1379
  %1381 = vmatmul.bf16.gmra.mxu0 %v1291
  %v1382 = vpop.f32.mrf.mxu0
  %v1383 = vadd.f32 0.0, %v1382
  %v1384 = vpop.f32.mrf.mxu0
  %v1385 = vadd.f32 0.0, %v1384
  %1386 = vdwg.mxu0
  %1387 = vmatpush.bf16.msra.mxu0 0
  %1388 = vmatpush.bf16.msra.mxu0 0
  %1389 = vmatpush.bf16.msra.mxu0 0
  %1390 = vmatpush.bf16.msra.mxu0 0
  %1391 = vmatpush.bf16.msra.mxu0 0
  %1392 = vmatpush.bf16.msra.mxu0 0
  %1393 = vmatpush.bf16.msra.mxu0 0
  %1394 = vmatpush.bf16.msra.mxu0 %v1306
  %1395 = vmatmul.bf16.gmra.mxu0 %v1288
  %v1396 = vpop.f32.mrf.mxu0
  %v1397 = vadd.f32 0.0, %v1396
  %v1398 = vpop.f32.mrf.mxu0
  %v1399 = vadd.f32 0.0, %v1398
  %1400 = vmatmul.bf16.gmra.mxu0 %v1291
  %v1401 = vpop.f32.mrf.mxu0
  %v1402 = vadd.f32 0.0, %v1401
  %v1403 = vpop.f32.mrf.mxu0
  %v1404 = vadd.f32 0.0, %v1403
  %1405 = vdwg.mxu0
  %1406 = vmatpush.bf16.msra.mxu0 0
  %1407 = vmatpush.bf16.msra.mxu0 0
  %1408 = vmatpush.bf16.msra.mxu0 0
  %1409 = vmatpush.bf16.msra.mxu0 0
  %1410 = vmatpush.bf16.msra.mxu0 0
  %1411 = vmatpush.bf16.msra.mxu0 0
  %1412 = vmatpush.bf16.msra.mxu0 0
  %1413 = vmatpush.bf16.msra.mxu0 %v1309
  %1414 = vmatmul.bf16.gmra.mxu0 %v1288
  %v1415 = vpop.f32.mrf.mxu0
  %v1416 = vadd.f32 0.0, %v1415
  %v1417 = vpop.f32.mrf.mxu0
  %v1418 = vadd.f32 0.0, %v1417
  %1419 = vmatmul.bf16.gmra.mxu0 %v1291
  %v1420 = vpop.f32.mrf.mxu0
  %v1421 = vadd.f32 0.0, %v1420
  %v1422 = vpop.f32.mrf.mxu0
  %v1423 = vadd.f32 0.0, %v1422
  %1424 = vdwg.mxu0
  %v1425 = vadd.f32 %v1227, %v1321
  %v1426 = vadd.f32 %v1228, %v1340
  %v1427 = vadd.f32 %v1229, %v1359
  %v1428 = vadd.f32 %v1230, %v1378
  %v1429 = vadd.f32 %v1231, %v1397
  %v1430 = vadd.f32 %v1232, %v1416
  %v1431 = vadd.f32 %v1233, %v1323
  %v1432 = vadd.f32 %v1234, %v1342
  %v1433 = vadd.f32 %v1235, %v1361
  %v1434 = vadd.f32 %v1236, %v1380
  %v1435 = vadd.f32 %v1237, %v1399
  %v1436 = vadd.f32 %v1238, %v1418
  %v1437 = vadd.f32 %v1239, %v1326
  %v1438 = vadd.f32 %v1240, %v1345
  %v1439 = vadd.f32 %v1241, %v1364
  %v1440 = vadd.f32 %v1242, %v1383
  %v1441 = vadd.f32 %v1243, %v1402
  %v1442 = vadd.f32 %v1244, %v1421
  %v1443 = vadd.f32 %v1245, %v1328
  %v1444 = vadd.f32 %v1246, %v1347
  %v1445 = vadd.f32 %v1247, %v1366
  %v1446 = vadd.f32 %v1248, %v1385
  %v1447 = vadd.f32 %v1249, %v1404
  %v1448 = vadd.f32 %v1250, %v1423
  %s1449 = scalar_lea.vmem %s2, 112
  %v1450 = vld [vmem:[%s1449] sm:$0xf]
  %v1451 = vld [vmem:[%s1449 + $0x4] sm:$0xf]
  %v1452 = vld [vmem:[%s1449 + $0x8] sm:$0xf]
  %v1453 = vld [vmem:[%s1449 + $0xc] sm:$0xf]
  %v1458 = vunpack.c.l.b16 %v1450
  %v1459 = vunpack.c.l.b16 %v1451
  %v1460 = vunpack.c.l.b16 %v1452
  %v1461 = vunpack.c.l.b16 %v1453
  %v1462 = vpack.c.b16 %v1459, %v1458
  %v1463 = vpack.c.b16 %v1461, %v1460
  %1464 = vrot.lane.b32.xlu0 %v1061, 110
  %v1465 = vpop.permute.xlu0 %1464
  %1466 = vrot.lane.b32.xlu0 %v1062, 110
  %v1467 = vpop.permute.xlu0 %1466
  %1468 = vrot.lane.b32.xlu0 %v1063, 110
  %v1469 = vpop.permute.xlu0 %1468
  %1470 = vrot.lane.b32.xlu0 %v1064, 110
  %v1471 = vpop.permute.xlu0 %1470
  %1472 = vrot.lane.b32.xlu0 %v1065, 110
  %v1473 = vpop.permute.xlu0 %1472
  %1474 = vrot.lane.b32.xlu0 %v1066, 110
  %v1475 = vpop.permute.xlu0 %1474
  %1476 = vrot.lane.b32.xlu0 %v1067, 110
  %v1477 = vpop.permute.xlu0 %1476
  %vm1478 = vcmask 900096
  %v1479 = vsel %vm1478, %v1465, %v1467
  %v1480 = vsel %vm1478, %v1467, %v1469
  %v1481 = vsel %vm1478, %v1469, %v1471
  %v1482 = vsel %vm1478, %v1471, %v1473
  %v1483 = vsel %vm1478, %v1473, %v1475
  %v1484 = vsel %vm1478, %v1475, %v1477
  %v1486 = vsel %vm131, %v1462, 0
  %v1489 = vsel %vm131, %v1463, 0
  %v1492 = vsel %vm138, %v1479, 0
  %v1495 = vsel %vm138, %v1480, 0
  %v1498 = vsel %vm138, %v1481, 0
  %v1501 = vsel %vm138, %v1482, 0
  %v1504 = vsel %vm138, %v1483, 0
  %v1507 = vsel %vm138, %v1484, 0
  %1509 = vmatpush.bf16.msra.mxu0 0
  %1510 = vmatpush.bf16.msra.mxu0 0
  %1511 = vmatpush.bf16.msra.mxu0 0
  %1512 = vmatpush.bf16.msra.mxu0 0
  %1513 = vmatpush.bf16.msra.mxu0 0
  %1514 = vmatpush.bf16.msra.mxu0 0
  %1515 = vmatpush.bf16.msra.mxu0 0
  %1516 = vmatpush.bf16.msra.mxu0 %v1492
  %1517 = vmatmul.bf16.gmra.mxu0 %v1486
  %v1518 = vpop.f32.mrf.mxu0
  %v1519 = vadd.f32 0.0, %v1518
  %v1520 = vpop.f32.mrf.mxu0
  %v1521 = vadd.f32 0.0, %v1520
  %1522 = vmatmul.bf16.gmra.mxu0 %v1489
  %v1523 = vpop.f32.mrf.mxu0
  %v1524 = vadd.f32 0.0, %v1523
  %v1525 = vpop.f32.mrf.mxu0
  %v1526 = vadd.f32 0.0, %v1525
  %1527 = vdwg.mxu0
  %1528 = vmatpush.bf16.msra.mxu0 0
  %1529 = vmatpush.bf16.msra.mxu0 0
  %1530 = vmatpush.bf16.msra.mxu0 0
  %1531 = vmatpush.bf16.msra.mxu0 0
  %1532 = vmatpush.bf16.msra.mxu0 0
  %1533 = vmatpush.bf16.msra.mxu0 0
  %1534 = vmatpush.bf16.msra.mxu0 0
  %1535 = vmatpush.bf16.msra.mxu0 %v1495
  %1536 = vmatmul.bf16.gmra.mxu0 %v1486
  %v1537 = vpop.f32.mrf.mxu0
  %v1538 = vadd.f32 0.0, %v1537
  %v1539 = vpop.f32.mrf.mxu0
  %v1540 = vadd.f32 0.0, %v1539
  %1541 = vmatmul.bf16.gmra.mxu0 %v1489
  %v1542 = vpop.f32.mrf.mxu0
  %v1543 = vadd.f32 0.0, %v1542
  %v1544 = vpop.f32.mrf.mxu0
  %v1545 = vadd.f32 0.0, %v1544
  %1546 = vdwg.mxu0
  %1547 = vmatpush.bf16.msra.mxu0 0
  %1548 = vmatpush.bf16.msra.mxu0 0
  %1549 = vmatpush.bf16.msra.mxu0 0
  %1550 = vmatpush.bf16.msra.mxu0 0
  %1551 = vmatpush.bf16.msra.mxu0 0
  %1552 = vmatpush.bf16.msra.mxu0 0
  %1553 = vmatpush.bf16.msra.mxu0 0
  %1554 = vmatpush.bf16.msra.mxu0 %v1498
  %1555 = vmatmul.bf16.gmra.mxu0 %v1486
  %v1556 = vpop.f32.mrf.mxu0
  %v1557 = vadd.f32 0.0, %v1556
  %v1558 = vpop.f32.mrf.mxu0
  %v1559 = vadd.f32 0.0, %v1558
  %1560 = vmatmul.bf16.gmra.mxu0 %v1489
  %v1561 = vpop.f32.mrf.mxu0
  %v1562 = vadd.f32 0.0, %v1561
  %v1563 = vpop.f32.mrf.mxu0
  %v1564 = vadd.f32 0.0, %v1563
  %1565 = vdwg.mxu0
  %1566 = vmatpush.bf16.msra.mxu0 0
  %1567 = vmatpush.bf16.msra.mxu0 0
  %1568 = vmatpush.bf16.msra.mxu0 0
  %1569 = vmatpush.bf16.msra.mxu0 0
  %1570 = vmatpush.bf16.msra.mxu0 0
  %1571 = vmatpush.bf16.msra.mxu0 0
  %1572 = vmatpush.bf16.msra.mxu0 0
  %1573 = vmatpush.bf16.msra.mxu0 %v1501
  %1574 = vmatmul.bf16.gmra.mxu0 %v1486
  %v1575 = vpop.f32.mrf.mxu0
  %v1576 = vadd.f32 0.0, %v1575
  %v1577 = vpop.f32.mrf.mxu0
  %v1578 = vadd.f32 0.0, %v1577
  %1579 = vmatmul.bf16.gmra.mxu0 %v1489
  %v1580 = vpop.f32.mrf.mxu0
  %v1581 = vadd.f32 0.0, %v1580
  %v1582 = vpop.f32.mrf.mxu0
  %v1583 = vadd.f32 0.0, %v1582
  %1584 = vdwg.mxu0
  %1585 = vmatpush.bf16.msra.mxu0 0
  %1586 = vmatpush.bf16.msra.mxu0 0
  %1587 = vmatpush.bf16.msra.mxu0 0
  %1588 = vmatpush.bf16.msra.mxu0 0
  %1589 = vmatpush.bf16.msra.mxu0 0
  %1590 = vmatpush.bf16.msra.mxu0 0
  %1591 = vmatpush.bf16.msra.mxu0 0
  %1592 = vmatpush.bf16.msra.mxu0 %v1504
  %1593 = vmatmul.bf16.gmra.mxu0 %v1486
  %v1594 = vpop.f32.mrf.mxu0
  %v1595 = vadd.f32 0.0, %v1594
  %v1596 = vpop.f32.mrf.mxu0
  %v1597 = vadd.f32 0.0, %v1596
  %1598 = vmatmul.bf16.gmra.mxu0 %v1489
  %v1599 = vpop.f32.mrf.mxu0
  %v1600 = vadd.f32 0.0, %v1599
  %v1601 = vpop.f32.mrf.mxu0
  %v1602 = vadd.f32 0.0, %v1601
  %1603 = vdwg.mxu0
  %1604 = vmatpush.bf16.msra.mxu0 0
  %1605 = vmatpush.bf16.msra.mxu0 0
  %1606 = vmatpush.bf16.msra.mxu0 0
  %1607 = vmatpush.bf16.msra.mxu0 0
  %1608 = vmatpush.bf16.msra.mxu0 0
  %1609 = vmatpush.bf16.msra.mxu0 0
  %1610 = vmatpush.bf16.msra.mxu0 0
  %1611 = vmatpush.bf16.msra.mxu0 %v1507
  %1612 = vmatmul.bf16.gmra.mxu0 %v1486
  %v1613 = vpop.f32.mrf.mxu0
  %v1614 = vadd.f32 0.0, %v1613
  %v1615 = vpop.f32.mrf.mxu0
  %v1616 = vadd.f32 0.0, %v1615
  %1617 = vmatmul.bf16.gmra.mxu0 %v1489
  %v1618 = vpop.f32.mrf.mxu0
  %v1619 = vadd.f32 0.0, %v1618
  %v1620 = vpop.f32.mrf.mxu0
  %v1621 = vadd.f32 0.0, %v1620
  %1622 = vdwg.mxu0
  %v1623 = vadd.f32 %v1425, %v1519
  %v1624 = vadd.f32 %v1426, %v1538
  %v1625 = vadd.f32 %v1427, %v1557
  %v1626 = vadd.f32 %v1428, %v1576
  %v1627 = vadd.f32 %v1429, %v1595
  %v1628 = vadd.f32 %v1430, %v1614
  %v1629 = vadd.f32 %v1431, %v1521
  %v1630 = vadd.f32 %v1432, %v1540
  %v1631 = vadd.f32 %v1433, %v1559
  %v1632 = vadd.f32 %v1434, %v1578
  %v1633 = vadd.f32 %v1435, %v1597
  %v1634 = vadd.f32 %v1436, %v1616
  %v1635 = vadd.f32 %v1437, %v1524
  %v1636 = vadd.f32 %v1438, %v1543
  %v1637 = vadd.f32 %v1439, %v1562
  %v1638 = vadd.f32 %v1440, %v1581
  %v1639 = vadd.f32 %v1441, %v1600
  %v1640 = vadd.f32 %v1442, %v1619
  %v1641 = vadd.f32 %v1443, %v1526
  %v1642 = vadd.f32 %v1444, %v1545
  %v1643 = vadd.f32 %v1445, %v1564
  %v1644 = vadd.f32 %v1446, %v1583
  %v1645 = vadd.f32 %v1447, %v1602
  %v1646 = vadd.f32 %v1448, %v1621
  %s1647 = scalar_lea.vmem %s2, 128
  %v1648 = vld [vmem:[%s1647] sm:$0xf]
  %v1649 = vld [vmem:[%s1647 + $0x4] sm:$0xf]
  %v1650 = vld [vmem:[%s1647 + $0x8] sm:$0xf]
  %v1651 = vld [vmem:[%s1647 + $0xc] sm:$0xf]
  %v1656 = vunpack.c.l.b16 %v1648
  %v1657 = vunpack.c.l.b16 %v1649
  %v1658 = vunpack.c.l.b16 %v1650
  %v1659 = vunpack.c.l.b16 %v1651
  %v1660 = vpack.c.b16 %v1657, %v1656
  %v1661 = vpack.c.b16 %v1659, %v1658
  %1662 = vrot.lane.b32.xlu0 %v1061, 109
  %v1663 = vpop.permute.xlu0 %1662
  %1664 = vrot.lane.b32.xlu0 %v1062, 109
  %v1665 = vpop.permute.xlu0 %1664
  %1666 = vrot.lane.b32.xlu0 %v1063, 109
  %v1667 = vpop.permute.xlu0 %1666
  %1668 = vrot.lane.b32.xlu0 %v1064, 109
  %v1669 = vpop.permute.xlu0 %1668
  %1670 = vrot.lane.b32.xlu0 %v1065, 109
  %v1671 = vpop.permute.xlu0 %1670
  %1672 = vrot.lane.b32.xlu0 %v1066, 109
  %v1673 = vpop.permute.xlu0 %1672
  %1674 = vrot.lane.b32.xlu0 %v1067, 109
  %v1675 = vpop.permute.xlu0 %1674
  %vm1676 = vcmask 891904
  %v1677 = vsel %vm1676, %v1663, %v1665
  %v1678 = vsel %vm1676, %v1665, %v1667
  %v1679 = vsel %vm1676, %v1667, %v1669
  %v1680 = vsel %vm1676, %v1669, %v1671
  %v1681 = vsel %vm1676, %v1671, %v1673
  %v1682 = vsel %vm1676, %v1673, %v1675
  %v1684 = vsel %vm131, %v1660, 0
  %v1687 = vsel %vm131, %v1661, 0
  %v1690 = vsel %vm138, %v1677, 0
  %v1693 = vsel %vm138, %v1678, 0
  %v1696 = vsel %vm138, %v1679, 0
  %v1699 = vsel %vm138, %v1680, 0
  %v1702 = vsel %vm138, %v1681, 0
  %v1705 = vsel %vm138, %v1682, 0
  %1707 = vmatpush.bf16.msra.mxu0 0
  %1708 = vmatpush.bf16.msra.mxu0 0
  %1709 = vmatpush.bf16.msra.mxu0 0
  %1710 = vmatpush.bf16.msra.mxu0 0
  %1711 = vmatpush.bf16.msra.mxu0 0
  %1712 = vmatpush.bf16.msra.mxu0 0
  %1713 = vmatpush.bf16.msra.mxu0 0
  %1714 = vmatpush.bf16.msra.mxu0 %v1690
  %1715 = vmatmul.bf16.gmra.mxu0 %v1684
  %v1716 = vpop.f32.mrf.mxu0
  %v1717 = vadd.f32 0.0, %v1716
  %v1718 = vpop.f32.mrf.mxu0
  %v1719 = vadd.f32 0.0, %v1718
  %1720 = vmatmul.bf16.gmra.mxu0 %v1687
  %v1721 = vpop.f32.mrf.mxu0
  %v1722 = vadd.f32 0.0, %v1721
  %v1723 = vpop.f32.mrf.mxu0
  %v1724 = vadd.f32 0.0, %v1723
  %1725 = vdwg.mxu0
  %1726 = vmatpush.bf16.msra.mxu0 0
  %1727 = vmatpush.bf16.msra.mxu0 0
  %1728 = vmatpush.bf16.msra.mxu0 0
  %1729 = vmatpush.bf16.msra.mxu0 0
  %1730 = vmatpush.bf16.msra.mxu0 0
  %1731 = vmatpush.bf16.msra.mxu0 0
  %1732 = vmatpush.bf16.msra.mxu0 0
  %1733 = vmatpush.bf16.msra.mxu0 %v1693
  %1734 = vmatmul.bf16.gmra.mxu0 %v1684
  %v1735 = vpop.f32.mrf.mxu0
  %v1736 = vadd.f32 0.0, %v1735
  %v1737 = vpop.f32.mrf.mxu0
  %v1738 = vadd.f32 0.0, %v1737
  %1739 = vmatmul.bf16.gmra.mxu0 %v1687
  %v1740 = vpop.f32.mrf.mxu0
  %v1741 = vadd.f32 0.0, %v1740
  %v1742 = vpop.f32.mrf.mxu0
  %v1743 = vadd.f32 0.0, %v1742
  %1744 = vdwg.mxu0
  %1745 = vmatpush.bf16.msra.mxu0 0
  %1746 = vmatpush.bf16.msra.mxu0 0
  %1747 = vmatpush.bf16.msra.mxu0 0
  %1748 = vmatpush.bf16.msra.mxu0 0
  %1749 = vmatpush.bf16.msra.mxu0 0
  %1750 = vmatpush.bf16.msra.mxu0 0
  %1751 = vmatpush.bf16.msra.mxu0 0
  %1752 = vmatpush.bf16.msra.mxu0 %v1696
  %1753 = vmatmul.bf16.gmra.mxu0 %v1684
  %v1754 = vpop.f32.mrf.mxu0
  %v1755 = vadd.f32 0.0, %v1754
  %v1756 = vpop.f32.mrf.mxu0
  %v1757 = vadd.f32 0.0, %v1756
  %1758 = vmatmul.bf16.gmra.mxu0 %v1687
  %v1759 = vpop.f32.mrf.mxu0
  %v1760 = vadd.f32 0.0, %v1759
  %v1761 = vpop.f32.mrf.mxu0
  %v1762 = vadd.f32 0.0, %v1761
  %1763 = vdwg.mxu0
  %1764 = vmatpush.bf16.msra.mxu0 0
  %1765 = vmatpush.bf16.msra.mxu0 0
  %1766 = vmatpush.bf16.msra.mxu0 0
  %1767 = vmatpush.bf16.msra.mxu0 0
  %1768 = vmatpush.bf16.msra.mxu0 0
  %1769 = vmatpush.bf16.msra.mxu0 0
  %1770 = vmatpush.bf16.msra.mxu0 0
  %1771 = vmatpush.bf16.msra.mxu0 %v1699
  %1772 = vmatmul.bf16.gmra.mxu0 %v1684
  %v1773 = vpop.f32.mrf.mxu0
  %v1774 = vadd.f32 0.0, %v1773
  %v1775 = vpop.f32.mrf.mxu0
  %v1776 = vadd.f32 0.0, %v1775
  %1777 = vmatmul.bf16.gmra.mxu0 %v1687
  %v1778 = vpop.f32.mrf.mxu0
  %v1779 = vadd.f32 0.0, %v1778
  %v1780 = vpop.f32.mrf.mxu0
  %v1781 = vadd.f32 0.0, %v1780
  %1782 = vdwg.mxu0
  %1783 = vmatpush.bf16.msra.mxu0 0
  %1784 = vmatpush.bf16.msra.mxu0 0
  %1785 = vmatpush.bf16.msra.mxu0 0
  %1786 = vmatpush.bf16.msra.mxu0 0
  %1787 = vmatpush.bf16.msra.mxu0 0
  %1788 = vmatpush.bf16.msra.mxu0 0
  %1789 = vmatpush.bf16.msra.mxu0 0
  %1790 = vmatpush.bf16.msra.mxu0 %v1702
  %1791 = vmatmul.bf16.gmra.mxu0 %v1684
  %v1792 = vpop.f32.mrf.mxu0
  %v1793 = vadd.f32 0.0, %v1792
  %v1794 = vpop.f32.mrf.mxu0
  %v1795 = vadd.f32 0.0, %v1794
  %1796 = vmatmul.bf16.gmra.mxu0 %v1687
  %v1797 = vpop.f32.mrf.mxu0
  %v1798 = vadd.f32 0.0, %v1797
  %v1799 = vpop.f32.mrf.mxu0
  %v1800 = vadd.f32 0.0, %v1799
  %1801 = vdwg.mxu0
  %1802 = vmatpush.bf16.msra.mxu0 0
  %1803 = vmatpush.bf16.msra.mxu0 0
  %1804 = vmatpush.bf16.msra.mxu0 0
  %1805 = vmatpush.bf16.msra.mxu0 0
  %1806 = vmatpush.bf16.msra.mxu0 0
  %1807 = vmatpush.bf16.msra.mxu0 0
  %1808 = vmatpush.bf16.msra.mxu0 0
  %1809 = vmatpush.bf16.msra.mxu0 %v1705
  %1810 = vmatmul.bf16.gmra.mxu0 %v1684
  %v1811 = vpop.f32.mrf.mxu0
  %v1812 = vadd.f32 0.0, %v1811
  %v1813 = vpop.f32.mrf.mxu0
  %v1814 = vadd.f32 0.0, %v1813
  %1815 = vmatmul.bf16.gmra.mxu0 %v1687
  %v1816 = vpop.f32.mrf.mxu0
  %v1817 = vadd.f32 0.0, %v1816
  %v1818 = vpop.f32.mrf.mxu0
  %v1819 = vadd.f32 0.0, %v1818
  %1820 = vdwg.mxu0
  %v1821 = vadd.f32 %v1623, %v1717
  %v1822 = vadd.f32 %v1624, %v1736
  %v1823 = vadd.f32 %v1625, %v1755
  %v1824 = vadd.f32 %v1626, %v1774
  %v1825 = vadd.f32 %v1627, %v1793
  %v1826 = vadd.f32 %v1628, %v1812
  %v1827 = vadd.f32 %v1629, %v1719
  %v1828 = vadd.f32 %v1630, %v1738
  %v1829 = vadd.f32 %v1631, %v1757
  %v1830 = vadd.f32 %v1632, %v1776
  %v1831 = vadd.f32 %v1633, %v1795
  %v1832 = vadd.f32 %v1634, %v1814
  %v1833 = vadd.f32 %v1635, %v1722
  %v1834 = vadd.f32 %v1636, %v1741
  %v1835 = vadd.f32 %v1637, %v1760
  %v1836 = vadd.f32 %v1638, %v1779
  %v1837 = vadd.f32 %v1639, %v1798
  %v1838 = vadd.f32 %v1640, %v1817
  %v1839 = vadd.f32 %v1641, %v1724
  %v1840 = vadd.f32 %v1642, %v1743
  %v1841 = vadd.f32 %v1643, %v1762
  %v1842 = vadd.f32 %v1644, %v1781
  %v1843 = vadd.f32 %v1645, %v1800
  %v1844 = vadd.f32 %v1646, %v1819
  %v1846 = vperm.slane %v68, 0
  %v1847 = vperm.slane %v68, 1
  %v1848 = vperm.slane %v68, 2
  %v1849 = vperm.slane %v68, 3
  %v1850 = vperm.slane %v68, 4
  %v1851 = vperm.slane %v68, 5
  %v1858 = vmul.f32 %v1821, %v1846
  %v1859 = vmul.f32 %v1822, %v1847
  %v1860 = vmul.f32 %v1823, %v1848
  %v1861 = vmul.f32 %v1824, %v1849
  %v1862 = vmul.f32 %v1825, %v1850
  %v1863 = vmul.f32 %v1826, %v1851
  %v1864 = vmul.f32 %v1827, %v1846
  %v1865 = vmul.f32 %v1828, %v1847
  %v1866 = vmul.f32 %v1829, %v1848
  %v1867 = vmul.f32 %v1830, %v1849
  %v1868 = vmul.f32 %v1831, %v1850
  %v1869 = vmul.f32 %v1832, %v1851
  %v1870 = vmul.f32 %v1833, %v1846
  %v1871 = vmul.f32 %v1834, %v1847
  %v1872 = vmul.f32 %v1835, %v1848
  %v1873 = vmul.f32 %v1836, %v1849
  %v1874 = vmul.f32 %v1837, %v1850
  %v1875 = vmul.f32 %v1838, %v1851
  %v1876 = vmul.f32 %v1839, %v1846
  %v1877 = vmul.f32 %v1840, %v1847
  %v1878 = vmul.f32 %v1841, %v1848
  %v1879 = vmul.f32 %v1842, %v1849
  %v1880 = vmul.f32 %v1843, %v1850
  %v1881 = vmul.f32 %v1844, %v1851
  %v1882 = vadd.f32 %v1858, %v1859
  %v1883 = vadd.f32 %v1882, %v1860
  %v1884 = vadd.f32 %v1883, %v1861
  %v1885 = vadd.f32 %v1884, %v1862
  %v1886 = vadd.f32 %v1885, %v1863
  %1887 = vadd.xlane.f32.xlu0 %v1886
  %v1888 = vpop.xlane.xlu0 %1887
  %v1889 = vadd.f32 %v1864, %v1865
  %v1890 = vadd.f32 %v1889, %v1866
  %v1891 = vadd.f32 %v1890, %v1867
  %v1892 = vadd.f32 %v1891, %v1868
  %v1893 = vadd.f32 %v1892, %v1869
  %1894 = vadd.xlane.f32.xlu0 %v1893
  %v1895 = vpop.xlane.xlu0 %1894
  %v1896 = vadd.f32 %v1870, %v1871
  %v1897 = vadd.f32 %v1896, %v1872
  %v1898 = vadd.f32 %v1897, %v1873
  %v1899 = vadd.f32 %v1898, %v1874
  %v1900 = vadd.f32 %v1899, %v1875
  %1901 = vadd.xlane.f32.xlu0 %v1900
  %v1902 = vpop.xlane.xlu0 %1901
  %v1903 = vadd.f32 %v1876, %v1877
  %v1904 = vadd.f32 %v1903, %v1878
  %v1905 = vadd.f32 %v1904, %v1879
  %v1906 = vadd.f32 %v1905, %v1880
  %v1907 = vadd.f32 %v1906, %v1881
  %1908 = vadd.xlane.f32.xlu0 %v1907
  %v1909 = vpop.xlane.xlu0 %1908
  %v1910 = vmul.f32 %v1888, 0.001953125
  %v1911 = vmul.f32 %v1895, 0.001953125
  %v1912 = vmul.f32 %v1902, 0.001953125
  %v1913 = vmul.f32 %v1909, 0.001953125
  %v1914 = vsub.f32 %v1821, %v1910
  %v1915 = vsub.f32 %v1822, %v1910
  %v1916 = vsub.f32 %v1823, %v1910
  %v1917 = vsub.f32 %v1824, %v1910
  %v1918 = vsub.f32 %v1825, %v1910
  %v1919 = vsub.f32 %v1826, %v1910
  %v1920 = vsub.f32 %v1827, %v1911
  %v1921 = vsub.f32 %v1828, %v1911
  %v1922 = vsub.f32 %v1829, %v1911
  %v1923 = vsub.f32 %v1830, %v1911
  %v1924 = vsub.f32 %v1831, %v1911
  %v1925 = vsub.f32 %v1832, %v1911
  %v1926 = vsub.f32 %v1833, %v1912
  %v1927 = vsub.f32 %v1834, %v1912
  %v1928 = vsub.f32 %v1835, %v1912
  %v1929 = vsub.f32 %v1836, %v1912
  %v1930 = vsub.f32 %v1837, %v1912
  %v1931 = vsub.f32 %v1838, %v1912
  %v1932 = vsub.f32 %v1839, %v1913
  %v1933 = vsub.f32 %v1840, %v1913
  %v1934 = vsub.f32 %v1841, %v1913
  %v1935 = vsub.f32 %v1842, %v1913
  %v1936 = vsub.f32 %v1843, %v1913
  %v1937 = vsub.f32 %v1844, %v1913
  %v1938 = vmul.f32 %v1914, %v1846
  %v1939 = vmul.f32 %v1915, %v1847
  %v1940 = vmul.f32 %v1916, %v1848
  %v1941 = vmul.f32 %v1917, %v1849
  %v1942 = vmul.f32 %v1918, %v1850
  %v1943 = vmul.f32 %v1919, %v1851
  %v1944 = vmul.f32 %v1920, %v1846
  %v1945 = vmul.f32 %v1921, %v1847
  %v1946 = vmul.f32 %v1922, %v1848
  %v1947 = vmul.f32 %v1923, %v1849
  %v1948 = vmul.f32 %v1924, %v1850
  %v1949 = vmul.f32 %v1925, %v1851
  %v1950 = vmul.f32 %v1926, %v1846
  %v1951 = vmul.f32 %v1927, %v1847
  %v1952 = vmul.f32 %v1928, %v1848
  %v1953 = vmul.f32 %v1929, %v1849
  %v1954 = vmul.f32 %v1930, %v1850
  %v1955 = vmul.f32 %v1931, %v1851
  %v1956 = vmul.f32 %v1932, %v1846
  %v1957 = vmul.f32 %v1933, %v1847
  %v1958 = vmul.f32 %v1934, %v1848
  %v1959 = vmul.f32 %v1935, %v1849
  %v1960 = vmul.f32 %v1936, %v1850
  %v1961 = vmul.f32 %v1937, %v1851
  %v1962 = vmul.f32 %v1938, %v1938
  %v1963 = vmul.f32 %v1939, %v1939
  %v1964 = vmul.f32 %v1940, %v1940
  %v1965 = vmul.f32 %v1941, %v1941
  %v1966 = vmul.f32 %v1942, %v1942
  %v1967 = vmul.f32 %v1943, %v1943
  %v1968 = vmul.f32 %v1944, %v1944
  %v1969 = vmul.f32 %v1945, %v1945
  %v1970 = vmul.f32 %v1946, %v1946
  %v1971 = vmul.f32 %v1947, %v1947
  %v1972 = vmul.f32 %v1948, %v1948
  %v1973 = vmul.f32 %v1949, %v1949
  %v1974 = vmul.f32 %v1950, %v1950
  %v1975 = vmul.f32 %v1951, %v1951
  %v1976 = vmul.f32 %v1952, %v1952
  %v1977 = vmul.f32 %v1953, %v1953
  %v1978 = vmul.f32 %v1954, %v1954
  %v1979 = vmul.f32 %v1955, %v1955
  %v1980 = vmul.f32 %v1956, %v1956
  %v1981 = vmul.f32 %v1957, %v1957
  %v1982 = vmul.f32 %v1958, %v1958
  %v1983 = vmul.f32 %v1959, %v1959
  %v1984 = vmul.f32 %v1960, %v1960
  %v1985 = vmul.f32 %v1961, %v1961
  %v1986 = vadd.f32 %v1962, %v1963
  %v1987 = vadd.f32 %v1986, %v1964
  %v1988 = vadd.f32 %v1987, %v1965
  %v1989 = vadd.f32 %v1988, %v1966
  %v1990 = vadd.f32 %v1989, %v1967
  %1991 = vadd.xlane.f32.xlu0 %v1990
  %v1992 = vpop.xlane.xlu0 %1991
  %v1993 = vadd.f32 %v1968, %v1969
  %v1994 = vadd.f32 %v1993, %v1970
  %v1995 = vadd.f32 %v1994, %v1971
  %v1996 = vadd.f32 %v1995, %v1972
  %v1997 = vadd.f32 %v1996, %v1973
  %1998 = vadd.xlane.f32.xlu0 %v1997
  %v1999 = vpop.xlane.xlu0 %1998
  %v2000 = vadd.f32 %v1974, %v1975
  %v2001 = vadd.f32 %v2000, %v1976
  %v2002 = vadd.f32 %v2001, %v1977
  %v2003 = vadd.f32 %v2002, %v1978
  %v2004 = vadd.f32 %v2003, %v1979
  %2005 = vadd.xlane.f32.xlu0 %v2004
  %v2006 = vpop.xlane.xlu0 %2005
  %v2007 = vadd.f32 %v1980, %v1981
  %v2008 = vadd.f32 %v2007, %v1982
  %v2009 = vadd.f32 %v2008, %v1983
  %v2010 = vadd.f32 %v2009, %v1984
  %v2011 = vadd.f32 %v2010, %v1985
  %2012 = vadd.xlane.f32.xlu0 %v2011
  %v2013 = vpop.xlane.xlu0 %2012
  %v2014 = vmul.f32 %v1992, 0.001953125
  %v2015 = vmul.f32 %v1999, 0.001953125
  %v2016 = vmul.f32 %v2006, 0.001953125
  %v2017 = vmul.f32 %v2013, 0.001953125
  %v2018 = vadd.f32 %v2014, 1e-05
  %v2019 = vadd.f32 %v2015, 1e-05
  %v2020 = vadd.f32 %v2016, 1e-05
  %v2021 = vadd.f32 %v2017, 1e-05
  %v2022 = vrsqrt.pop %v2018
  %v2023 = vmul.f32 %v2022, %v2018
  %v2024 = vmul.f32 %v2023, %v2022
  %v2025 = vmul.f32 0.5, %v2024
  %v2026 = vsub.f32 1.5, %v2025
  %v2027 = vmul.f32 %v2022, %v2026
  %vm2028 = vweird.f32 %v2018
  %vm2029 = vweird.f32 %v2022
  %vm2030 = vmor %vm2028, %vm2029
  %v2031 = vsel %vm2030, %v2022, %v2027
  %v2032 = vrsqrt.pop %v2019
  %v2033 = vmul.f32 %v2032, %v2019
  %v2034 = vmul.f32 %v2033, %v2032
  %v2035 = vmul.f32 0.5, %v2034
  %v2036 = vsub.f32 1.5, %v2035
  %v2037 = vmul.f32 %v2032, %v2036
  %vm2038 = vweird.f32 %v2019
  %vm2039 = vweird.f32 %v2032
  %vm2040 = vmor %vm2038, %vm2039
  %v2041 = vsel %vm2040, %v2032, %v2037
  %v2042 = vrsqrt.pop %v2020
  %v2043 = vmul.f32 %v2042, %v2020
  %v2044 = vmul.f32 %v2043, %v2042
  %v2045 = vmul.f32 0.5, %v2044
  %v2046 = vsub.f32 1.5, %v2045
  %v2047 = vmul.f32 %v2042, %v2046
  %vm2048 = vweird.f32 %v2020
  %vm2049 = vweird.f32 %v2042
  %vm2050 = vmor %vm2048, %vm2049
  %v2051 = vsel %vm2050, %v2042, %v2047
  %v2052 = vrsqrt.pop %v2021
  %v2053 = vmul.f32 %v2052, %v2021
  %v2054 = vmul.f32 %v2053, %v2052
  %v2055 = vmul.f32 0.5, %v2054
  %v2056 = vsub.f32 1.5, %v2055
  %v2057 = vmul.f32 %v2052, %v2056
  %vm2058 = vweird.f32 %v2021
  %vm2059 = vweird.f32 %v2052
  %vm2060 = vmor %vm2058, %vm2059
  %v2061 = vsel %vm2060, %v2052, %v2057
  %v2062 = vld [vmem:[%s3] sm:$0xff]
  %v2063 = vld [vmem:[%s3 + $0x8] sm:$0xff]
  %v2064 = vld [vmem:[%s3 + $0x10] sm:$0xff]
  %v2065 = vld [vmem:[%s3 + $0x18] sm:$0xff]
  %v2066 = vmul.f32 %v2031, %v2062
  %v2067 = vmul.f32 %v2041, %v2063
  %v2068 = vmul.f32 %v2051, %v2064
  %v2069 = vmul.f32 %v2061, %v2065
  %2071 = vset.pattern.permute.xlu0 0
  %2072 = vperm.xlu0 %2071, %v2066
  %v2073 = vpop.permute.xlu0 %2072
  %2076 = vset.pattern.permute.xlu0 0
  %2077 = vperm.xlu0 %2076, %v2067
  %v2078 = vpop.permute.xlu0 %2077
  %2081 = vset.pattern.permute.xlu0 0
  %2082 = vperm.xlu0 %2081, %v2068
  %v2083 = vpop.permute.xlu0 %2082
  %2086 = vset.pattern.permute.xlu0 0
  %2087 = vperm.xlu0 %2086, %v2069
  %v2088 = vpop.permute.xlu0 %2087
  %v2090 = vmul.f32 %v1938, %v2073
  %v2091 = vmul.f32 %v1939, %v2073
  %v2092 = vmul.f32 %v1940, %v2073
  %v2093 = vmul.f32 %v1941, %v2073
  %v2094 = vmul.f32 %v1942, %v2073
  %v2095 = vmul.f32 %v1943, %v2073
  %v2096 = vmul.f32 %v1944, %v2078
  %v2097 = vmul.f32 %v1945, %v2078
  %v2098 = vmul.f32 %v1946, %v2078
  %v2099 = vmul.f32 %v1947, %v2078
  %v2100 = vmul.f32 %v1948, %v2078
  %v2101 = vmul.f32 %v1949, %v2078
  %v2102 = vmul.f32 %v1950, %v2083
  %v2103 = vmul.f32 %v1951, %v2083
  %v2104 = vmul.f32 %v1952, %v2083
  %v2105 = vmul.f32 %v1953, %v2083
  %v2106 = vmul.f32 %v1954, %v2083
  %v2107 = vmul.f32 %v1955, %v2083
  %v2108 = vmul.f32 %v1956, %v2088
  %v2109 = vmul.f32 %v1957, %v2088
  %v2110 = vmul.f32 %v1958, %v2088
  %v2111 = vmul.f32 %v1959, %v2088
  %v2112 = vmul.f32 %v1960, %v2088
  %v2113 = vmul.f32 %v1961, %v2088
  %v2114 = vld [vmem:[%s4] sm:$0xff]
  %v2115 = vld [vmem:[%s4 + $0x8] sm:$0xff]
  %v2116 = vld [vmem:[%s4 + $0x10] sm:$0xff]
  %v2117 = vld [vmem:[%s4 + $0x18] sm:$0xff]
  %2119 = vset.pattern.permute.xlu0 0
  %2120 = vperm.xlu0 %2119, %v2114
  %v2121 = vpop.permute.xlu0 %2120
  %2124 = vset.pattern.permute.xlu0 0
  %2125 = vperm.xlu0 %2124, %v2115
  %v2126 = vpop.permute.xlu0 %2125
  %2129 = vset.pattern.permute.xlu0 0
  %2130 = vperm.xlu0 %2129, %v2116
  %v2131 = vpop.permute.xlu0 %2130
  %2134 = vset.pattern.permute.xlu0 0
  %2135 = vperm.xlu0 %2134, %v2117
  %v2136 = vpop.permute.xlu0 %2135
  %v2138 = vadd.f32 %v2090, %v2121
  %v2139 = vadd.f32 %v2091, %v2121
  %v2140 = vadd.f32 %v2092, %v2121
  %v2141 = vadd.f32 %v2093, %v2121
  %v2142 = vadd.f32 %v2094, %v2121
  %v2143 = vadd.f32 %v2095, %v2121
  %v2144 = vadd.f32 %v2096, %v2126
  %v2145 = vadd.f32 %v2097, %v2126
  %v2146 = vadd.f32 %v2098, %v2126
  %v2147 = vadd.f32 %v2099, %v2126
  %v2148 = vadd.f32 %v2100, %v2126
  %v2149 = vadd.f32 %v2101, %v2126
  %v2150 = vadd.f32 %v2102, %v2131
  %v2151 = vadd.f32 %v2103, %v2131
  %v2152 = vadd.f32 %v2104, %v2131
  %v2153 = vadd.f32 %v2105, %v2131
  %v2154 = vadd.f32 %v2106, %v2131
  %v2155 = vadd.f32 %v2107, %v2131
  %v2156 = vadd.f32 %v2108, %v2136
  %v2157 = vadd.f32 %v2109, %v2136
  %v2158 = vadd.f32 %v2110, %v2136
  %v2159 = vadd.f32 %v2111, %v2136
  %v2160 = vadd.f32 %v2112, %v2136
  %v2161 = vadd.f32 %v2113, %v2136
  %vm2162 = vcmp.ge.f32.partialorder %v2138, 0.0
  %vm2163 = vcmp.ge.f32.partialorder %v2139, 0.0
  %vm2164 = vcmp.ge.f32.partialorder %v2140, 0.0
  %vm2165 = vcmp.ge.f32.partialorder %v2141, 0.0
  %vm2166 = vcmp.ge.f32.partialorder %v2142, 0.0
  %vm2167 = vcmp.ge.f32.partialorder %v2143, 0.0
  %vm2168 = vcmp.ge.f32.partialorder %v2144, 0.0
  %vm2169 = vcmp.ge.f32.partialorder %v2145, 0.0
  %vm2170 = vcmp.ge.f32.partialorder %v2146, 0.0
  %vm2171 = vcmp.ge.f32.partialorder %v2147, 0.0
  %vm2172 = vcmp.ge.f32.partialorder %v2148, 0.0
  %vm2173 = vcmp.ge.f32.partialorder %v2149, 0.0
  %vm2174 = vcmp.ge.f32.partialorder %v2150, 0.0
  %vm2175 = vcmp.ge.f32.partialorder %v2151, 0.0
  %vm2176 = vcmp.ge.f32.partialorder %v2152, 0.0
  %vm2177 = vcmp.ge.f32.partialorder %v2153, 0.0
  %vm2178 = vcmp.ge.f32.partialorder %v2154, 0.0
  %vm2179 = vcmp.ge.f32.partialorder %v2155, 0.0
  %vm2180 = vcmp.ge.f32.partialorder %v2156, 0.0
  %vm2181 = vcmp.ge.f32.partialorder %v2157, 0.0
  %vm2182 = vcmp.ge.f32.partialorder %v2158, 0.0
  %vm2183 = vcmp.ge.f32.partialorder %v2159, 0.0
  %vm2184 = vcmp.ge.f32.partialorder %v2160, 0.0
  %vm2185 = vcmp.ge.f32.partialorder %v2161, 0.0
  %v2186 = vmul.f32 %v2138, 0.2
  %v2187 = vmul.f32 %v2139, 0.2
  %v2188 = vmul.f32 %v2140, 0.2
  %v2189 = vmul.f32 %v2141, 0.2
  %v2190 = vmul.f32 %v2142, 0.2
  %v2191 = vmul.f32 %v2143, 0.2
  %v2192 = vmul.f32 %v2144, 0.2
  %v2193 = vmul.f32 %v2145, 0.2
  %v2194 = vmul.f32 %v2146, 0.2
  %v2195 = vmul.f32 %v2147, 0.2
  %v2196 = vmul.f32 %v2148, 0.2
  %v2197 = vmul.f32 %v2149, 0.2
  %v2198 = vmul.f32 %v2150, 0.2
  %v2199 = vmul.f32 %v2151, 0.2
  %v2200 = vmul.f32 %v2152, 0.2
  %v2201 = vmul.f32 %v2153, 0.2
  %v2202 = vmul.f32 %v2154, 0.2
  %v2203 = vmul.f32 %v2155, 0.2
  %v2204 = vmul.f32 %v2156, 0.2
  %v2205 = vmul.f32 %v2157, 0.2
  %v2206 = vmul.f32 %v2158, 0.2
  %v2207 = vmul.f32 %v2159, 0.2
  %v2208 = vmul.f32 %v2160, 0.2
  %v2209 = vmul.f32 %v2161, 0.2
  %v2210 = vsel %vm2162, %v2138, %v2186
  %v2211 = vsel %vm2163, %v2139, %v2187
  %v2212 = vsel %vm2164, %v2140, %v2188
  %v2213 = vsel %vm2165, %v2141, %v2189
  %v2214 = vsel %vm2166, %v2142, %v2190
  %v2215 = vsel %vm2167, %v2143, %v2191
  %v2216 = vsel %vm2168, %v2144, %v2192
  %v2217 = vsel %vm2169, %v2145, %v2193
  %v2218 = vsel %vm2170, %v2146, %v2194
  %v2219 = vsel %vm2171, %v2147, %v2195
  %v2220 = vsel %vm2172, %v2148, %v2196
  %v2221 = vsel %vm2173, %v2149, %v2197
  %v2222 = vsel %vm2174, %v2150, %v2198
  %v2223 = vsel %vm2175, %v2151, %v2199
  %v2224 = vsel %vm2176, %v2152, %v2200
  %v2225 = vsel %vm2177, %v2153, %v2201
  %v2226 = vsel %vm2178, %v2154, %v2202
  %v2227 = vsel %vm2179, %v2155, %v2203
  %v2228 = vsel %vm2180, %v2156, %v2204
  %v2229 = vsel %vm2181, %v2157, %v2205
  %v2230 = vsel %vm2182, %v2158, %v2206
  %v2231 = vsel %vm2183, %v2159, %v2207
  %v2232 = vsel %vm2184, %v2160, %v2208
  %v2233 = vsel %vm2185, %v2161, %v2209
  %v2234 = vmul.f32 %v2210, %v1846
  %v2235 = vmul.f32 %v2211, %v1847
  %v2236 = vmul.f32 %v2212, %v1848
  %v2237 = vmul.f32 %v2213, %v1849
  %v2238 = vmul.f32 %v2214, %v1850
  %v2239 = vmul.f32 %v2215, %v1851
  %v2240 = vmul.f32 %v2216, %v1846
  %v2241 = vmul.f32 %v2217, %v1847
  %v2242 = vmul.f32 %v2218, %v1848
  %v2243 = vmul.f32 %v2219, %v1849
  %v2244 = vmul.f32 %v2220, %v1850
  %v2245 = vmul.f32 %v2221, %v1851
  %v2246 = vmul.f32 %v2222, %v1846
  %v2247 = vmul.f32 %v2223, %v1847
  %v2248 = vmul.f32 %v2224, %v1848
  %v2249 = vmul.f32 %v2225, %v1849
  %v2250 = vmul.f32 %v2226, %v1850
  %v2251 = vmul.f32 %v2227, %v1851
  %v2252 = vmul.f32 %v2228, %v1846
  %v2253 = vmul.f32 %v2229, %v1847
  %v2254 = vmul.f32 %v2230, %v1848
  %v2255 = vmul.f32 %v2231, %v1849
  %v2256 = vmul.f32 %v2232, %v1850
  %v2257 = vmul.f32 %v2233, %v1851
  %v2258 = vpack.c.bf16 %v2235, %v2234
  %v2259 = vpack.c.bf16 %v2237, %v2236
  %v2260 = vpack.c.bf16 %v2239, %v2238
  %v2261 = vpack.c.bf16 %v2241, %v2240
  %v2262 = vpack.c.bf16 %v2243, %v2242
  %v2263 = vpack.c.bf16 %v2245, %v2244
  %v2264 = vpack.c.bf16 %v2247, %v2246
  %v2265 = vpack.c.bf16 %v2249, %v2248
  %v2266 = vpack.c.bf16 %v2251, %v2250
  %v2267 = vpack.c.bf16 %v2253, %v2252
  %v2268 = vpack.c.bf16 %v2255, %v2254
  %v2269 = vpack.c.bf16 %v2257, %v2256
  %2270 = vst [vmem:[#allocation2 + $0x4] sm:$0xff] %v2258
  %2271 = vst [vmem:[#allocation2 + $0xc] sm:$0xff] %v2259
  %2272 = vst [vmem:[#allocation2 + $0x14] sm:$0xff] %v2260
  %2273 = vst [vmem:[#allocation2 + $0x24] sm:$0xff] %v2261
  %2274 = vst [vmem:[#allocation2 + $0x2c] sm:$0xff] %v2262
  %2275 = vst [vmem:[#allocation2 + $0x34] sm:$0xff] %v2263
  %2276 = vst [vmem:[#allocation2 + $0x44] sm:$0xff] %v2264
  %2277 = vst [vmem:[#allocation2 + $0x4c] sm:$0xff] %v2265
  %2278 = vst [vmem:[#allocation2 + $0x54] sm:$0xff] %v2266
  %2279 = vst [vmem:[#allocation2 + $0x64] sm:$0xff] %v2267
  %2280 = vst [vmem:[#allocation2 + $0x6c] sm:$0xff] %v2268
  %2281 = vst [vmem:[#allocation2 + $0x74] sm:$0xff] %v2269
  %v2282 = vld [vmem:[#allocation2] sm:$0xff]
  %v2283 = vld [vmem:[#allocation2 + $0x8] sm:$0xff]
  %v2284 = vld [vmem:[#allocation2 + $0x10] sm:$0xff]
  %v2285 = vld [vmem:[#allocation2 + $0x18] sm:$0xf]
  %v2286 = vld [vmem:[#allocation2 + $0x20] sm:$0xff]
  %v2287 = vld [vmem:[#allocation2 + $0x28] sm:$0xff]
  %v2288 = vld [vmem:[#allocation2 + $0x30] sm:$0xff]
  %v2289 = vld [vmem:[#allocation2 + $0x38] sm:$0xf]
  %v2290 = vld [vmem:[#allocation2 + $0x40] sm:$0xff]
  %v2291 = vld [vmem:[#allocation2 + $0x48] sm:$0xff]
  %v2292 = vld [vmem:[#allocation2 + $0x50] sm:$0xff]
  %v2293 = vld [vmem:[#allocation2 + $0x58] sm:$0xf]
  %v2294 = vld [vmem:[#allocation2 + $0x60] sm:$0xff]
  %v2295 = vld [vmem:[#allocation2 + $0x68] sm:$0xff]
  %v2296 = vld [vmem:[#allocation2 + $0x70] sm:$0xff]
  %v2297 = vld [vmem:[#allocation2 + $0x78] sm:$0xf]
  %v2298 = vld [vmem:[%s5] sm:$0xf]
  %v2299 = vld [vmem:[%s5 + $0x4] sm:$0xf]
  %s2300 = scalar_lea.vmem %s5, 8
  %v2301 = vld [vmem:[%s2300] sm:$0xf]
  %v2302 = vld [vmem:[%s2300 + $0x4] sm:$0xf]
  %v2305 = vunpack.c.l.b16 %v2301
  %v2306 = vunpack.c.l.b16 %v2302
  %v2307 = vpack.c.b16 %v2306, %v2305
  %v2324 = vunpack.c.l.b16 %v2282
  %v2325 = vunpack.c.h.b16 %v2282
  %v2326 = vunpack.c.l.b16 %v2283
  %v2327 = vunpack.c.h.b16 %v2283
  %v2328 = vunpack.c.l.b16 %v2284
  %v2329 = vunpack.c.h.b16 %v2284
  %v2330 = vunpack.c.l.b16 %v2285
  %v2331 = vunpack.c.l.b16 %v2286
  %v2332 = vunpack.c.h.b16 %v2286
  %v2333 = vunpack.c.l.b16 %v2287
  %v2334 = vunpack.c.h.b16 %v2287
  %v2335 = vunpack.c.l.b16 %v2288
  %v2336 = vunpack.c.h.b16 %v2288
  %v2337 = vunpack.c.l.b16 %v2289
  %v2338 = vunpack.c.l.b16 %v2290
  %v2339 = vunpack.c.h.b16 %v2290
  %v2340 = vunpack.c.l.b16 %v2291
  %v2341 = vunpack.c.h.b16 %v2291
  %v2342 = vunpack.c.l.b16 %v2292
  %v2343 = vunpack.c.h.b16 %v2292
  %v2344 = vunpack.c.l.b16 %v2293
  %v2345 = vunpack.c.l.b16 %v2294
  %v2346 = vunpack.c.h.b16 %v2294
  %v2347 = vunpack.c.l.b16 %v2295
  %v2348 = vunpack.c.h.b16 %v2295
  %v2349 = vunpack.c.l.b16 %v2296
  %v2350 = vunpack.c.h.b16 %v2296
  %v2351 = vunpack.c.l.b16 %v2297
  %v2352 = vpack.c.b16 %v2331, %v2324
  %v2353 = vpack.c.b16 %v2332, %v2325
  %v2354 = vpack.c.b16 %v2333, %v2326
  %v2355 = vpack.c.b16 %v2334, %v2327
  %v2356 = vpack.c.b16 %v2335, %v2328
  %v2357 = vpack.c.b16 %v2336, %v2329
  %v2358 = vpack.c.b16 %v2337, %v2330
  %v2359 = vpack.c.b16 %v2345, %v2338
  %v2360 = vpack.c.b16 %v2346, %v2339
  %v2361 = vpack.c.b16 %v2347, %v2340
  %v2362 = vpack.c.b16 %v2348, %v2341
  %v2363 = vpack.c.b16 %v2349, %v2342
  %v2364 = vpack.c.b16 %v2350, %v2343
  %v2365 = vpack.c.b16 %v2351, %v2344
  %2366 = vrot.lane.b32.xlu0 %v2352, 18
  %v2367 = vpop.permute.xlu0 %2366
  %2368 = vrot.lane.b32.xlu0 %v2353, 18
  %v2369 = vpop.permute.xlu0 %2368
  %2370 = vrot.lane.b32.xlu0 %v2354, 18
  %v2371 = vpop.permute.xlu0 %2370
  %2372 = vrot.lane.b32.xlu0 %v2355, 18
  %v2373 = vpop.permute.xlu0 %2372
  %2374 = vrot.lane.b32.xlu0 %v2356, 18
  %v2375 = vpop.permute.xlu0 %2374
  %2376 = vrot.lane.b32.xlu0 %v2357, 18
  %v2377 = vpop.permute.xlu0 %2376
  %2378 = vrot.lane.b32.xlu0 %v2358, 18
  %v2379 = vpop.permute.xlu0 %2378
  %2380 = vrot.lane.b32.xlu0 %v2359, 18
  %v2381 = vpop.permute.xlu0 %2380
  %2382 = vrot.lane.b32.xlu0 %v2360, 18
  %v2383 = vpop.permute.xlu0 %2382
  %2384 = vrot.lane.b32.xlu0 %v2361, 18
  %v2385 = vpop.permute.xlu0 %2384
  %2386 = vrot.lane.b32.xlu0 %v2362, 18
  %v2387 = vpop.permute.xlu0 %2386
  %2388 = vrot.lane.b32.xlu0 %v2363, 18
  %v2389 = vpop.permute.xlu0 %2388
  %2390 = vrot.lane.b32.xlu0 %v2364, 18
  %v2391 = vpop.permute.xlu0 %2390
  %2392 = vrot.lane.b32.xlu0 %v2365, 18
  %v2393 = vpop.permute.xlu0 %2392
  %v2394 = vsel %vm124, %v2367, %v2369
  %v2395 = vsel %vm124, %v2369, %v2371
  %v2396 = vsel %vm124, %v2371, %v2373
  %v2397 = vsel %vm124, %v2373, %v2375
  %v2398 = vsel %vm124, %v2375, %v2377
  %v2399 = vsel %vm124, %v2377, %v2379
  %v2400 = vsel %vm124, %v2381, %v2383
  %v2401 = vsel %vm124, %v2383, %v2385
  %v2402 = vsel %vm124, %v2385, %v2387
  %v2403 = vsel %vm124, %v2387, %v2389
  %v2404 = vsel %vm124, %v2389, %v2391
  %v2405 = vsel %vm124, %v2391, %v2393
  %vm2418 = vcmask 261120
  %v2420 = vsel %vm2418, %v2307, 0
  %2422 = vmatpush.bf16.msra.mxu0 0
  %2423 = vmatpush.bf16.msra.mxu0 0
  %2424 = vmatpush.bf16.msra.mxu0 0
  %2425 = vmatpush.bf16.msra.mxu0 0
  %2426 = vmatpush.bf16.msra.mxu0 0
  %2427 = vmatpush.bf16.msra.mxu0 0
  %2428 = vmatpush.bf16.msra.mxu0 %v2400
  %2429 = vmatpush.bf16.msra.mxu0 %v2394
  %2430 = vmatmul.bf16.gmra.mxu0 %v2420
  %v2431 = vpop.f32.mrf.mxu0
  %v2432 = vadd.f32 0.0, %v2431
  %v2433 = vpop.f32.mrf.mxu0
  %v2434 = vadd.f32 0.0, %v2433
  %2435 = vdwg.mxu0
  %2436 = vmatpush.bf16.msra.mxu0 0
  %2437 = vmatpush.bf16.msra.mxu0 0
  %2438 = vmatpush.bf16.msra.mxu0 0
  %2439 = vmatpush.bf16.msra.mxu0 0
  %2440 = vmatpush.bf16.msra.mxu0 0
  %2441 = vmatpush.bf16.msra.mxu0 0
  %2442 = vmatpush.bf16.msra.mxu0 %v2401
  %2443 = vmatpush.bf16.msra.mxu0 %v2395
  %2444 = vmatmul.bf16.gmra.mxu0 %v2420
  %v2445 = vpop.f32.mrf.mxu0
  %v2446 = vadd.f32 0.0, %v2445
  %v2447 = vpop.f32.mrf.mxu0
  %v2448 = vadd.f32 0.0, %v2447
  %2449 = vdwg.mxu0
  %2450 = vmatpush.bf16.msra.mxu0 0
  %2451 = vmatpush.bf16.msra.mxu0 0
  %2452 = vmatpush.bf16.msra.mxu0 0
  %2453 = vmatpush.bf16.msra.mxu0 0
  %2454 = vmatpush.bf16.msra.mxu0 0
  %2455 = vmatpush.bf16.msra.mxu0 0
  %2456 = vmatpush.bf16.msra.mxu0 %v2402
  %2457 = vmatpush.bf16.msra.mxu0 %v2396
  %2458 = vmatmul.bf16.gmra.mxu0 %v2420
  %v2459 = vpop.f32.mrf.mxu0
  %v2460 = vadd.f32 0.0, %v2459
  %v2461 = vpop.f32.mrf.mxu0
  %v2462 = vadd.f32 0.0, %v2461
  %2463 = vdwg.mxu0
  %2464 = vmatpush.bf16.msra.mxu0 0
  %2465 = vmatpush.bf16.msra.mxu0 0
  %2466 = vmatpush.bf16.msra.mxu0 0
  %2467 = vmatpush.bf16.msra.mxu0 0
  %2468 = vmatpush.bf16.msra.mxu0 0
  %2469 = vmatpush.bf16.msra.mxu0 0
  %2470 = vmatpush.bf16.msra.mxu0 %v2403
  %2471 = vmatpush.bf16.msra.mxu0 %v2397
  %2472 = vmatmul.bf16.gmra.mxu0 %v2420
  %v2473 = vpop.f32.mrf.mxu0
  %v2474 = vadd.f32 0.0, %v2473
  %v2475 = vpop.f32.mrf.mxu0
  %v2476 = vadd.f32 0.0, %v2475
  %2477 = vdwg.mxu0
  %2478 = vmatpush.bf16.msra.mxu0 0
  %2479 = vmatpush.bf16.msra.mxu0 0
  %2480 = vmatpush.bf16.msra.mxu0 0
  %2481 = vmatpush.bf16.msra.mxu0 0
  %2482 = vmatpush.bf16.msra.mxu0 0
  %2483 = vmatpush.bf16.msra.mxu0 0
  %2484 = vmatpush.bf16.msra.mxu0 %v2404
  %2485 = vmatpush.bf16.msra.mxu0 %v2398
  %2486 = vmatmul.bf16.gmra.mxu0 %v2420
  %v2487 = vpop.f32.mrf.mxu0
  %v2488 = vadd.f32 0.0, %v2487
  %v2489 = vpop.f32.mrf.mxu0
  %v2490 = vadd.f32 0.0, %v2489
  %2491 = vdwg.mxu0
  %2492 = vmatpush.bf16.msra.mxu0 0
  %2493 = vmatpush.bf16.msra.mxu0 0
  %2494 = vmatpush.bf16.msra.mxu0 0
  %2495 = vmatpush.bf16.msra.mxu0 0
  %2496 = vmatpush.bf16.msra.mxu0 0
  %2497 = vmatpush.bf16.msra.mxu0 0
  %2498 = vmatpush.bf16.msra.mxu0 %v2405
  %2499 = vmatpush.bf16.msra.mxu0 %v2399
  %2500 = vmatmul.bf16.gmra.mxu0 %v2420
  %v2501 = vpop.f32.mrf.mxu0
  %v2502 = vadd.f32 0.0, %v2501
  %v2503 = vpop.f32.mrf.mxu0
  %v2504 = vadd.f32 0.0, %v2503
  %2505 = vdwg.mxu0
  %v2508 = vunpack.c.l.b16 %v2298
  %v2509 = vunpack.c.l.b16 %v2299
  %v2510 = vpack.c.b16 %v2509, %v2508
  %2511 = vrot.lane.b32.xlu0 %v2352, 19
  %v2512 = vpop.permute.xlu0 %2511
  %2513 = vrot.lane.b32.xlu0 %v2353, 19
  %v2514 = vpop.permute.xlu0 %2513
  %2515 = vrot.lane.b32.xlu0 %v2354, 19
  %v2516 = vpop.permute.xlu0 %2515
  %2517 = vrot.lane.b32.xlu0 %v2355, 19
  %v2518 = vpop.permute.xlu0 %2517
  %2519 = vrot.lane.b32.xlu0 %v2356, 19
  %v2520 = vpop.permute.xlu0 %2519
  %2521 = vrot.lane.b32.xlu0 %v2357, 19
  %v2522 = vpop.permute.xlu0 %2521
  %2523 = vrot.lane.b32.xlu0 %v2358, 19
  %v2524 = vpop.permute.xlu0 %2523
  %2525 = vrot.lane.b32.xlu0 %v2359, 19
  %v2526 = vpop.permute.xlu0 %2525
  %2527 = vrot.lane.b32.xlu0 %v2360, 19
  %v2528 = vpop.permute.xlu0 %2527
  %2529 = vrot.lane.b32.xlu0 %v2361, 19
  %v2530 = vpop.permute.xlu0 %2529
  %2531 = vrot.lane.b32.xlu0 %v2362, 19
  %v2532 = vpop.permute.xlu0 %2531
  %2533 = vrot.lane.b32.xlu0 %v2363, 19
  %v2534 = vpop.permute.xlu0 %2533
  %2535 = vrot.lane.b32.xlu0 %v2364, 19
  %v2536 = vpop.permute.xlu0 %2535
  %2537 = vrot.lane.b32.xlu0 %v2365, 19
  %v2538 = vpop.permute.xlu0 %2537
  %v2539 = vsel %vm295, %v2512, %v2514
  %v2540 = vsel %vm295, %v2514, %v2516
  %v2541 = vsel %vm295, %v2516, %v2518
  %v2542 = vsel %vm295, %v2518, %v2520
  %v2543 = vsel %vm295, %v2520, %v2522
  %v2544 = vsel %vm295, %v2522, %v2524
  %v2545 = vsel %vm295, %v2526, %v2528
  %v2546 = vsel %vm295, %v2528, %v2530
  %v2547 = vsel %vm295, %v2530, %v2532
  %v2548 = vsel %vm295, %v2532, %v2534
  %v2549 = vsel %vm295, %v2534, %v2536
  %v2550 = vsel %vm295, %v2536, %v2538
  %v2564 = vsel %vm2418, %v2510, 0
  %2566 = vmatpush.bf16.msra.mxu0 0
  %2567 = vmatpush.bf16.msra.mxu0 0
  %2568 = vmatpush.bf16.msra.mxu0 0
  %2569 = vmatpush.bf16.msra.mxu0 0
  %2570 = vmatpush.bf16.msra.mxu0 0
  %2571 = vmatpush.bf16.msra.mxu0 0
  %2572 = vmatpush.bf16.msra.mxu0 %v2545
  %2573 = vmatpush.bf16.msra.mxu0 %v2539
  %2574 = vmatmul.bf16.gmra.mxu0 %v2564
  %v2575 = vpop.f32.mrf.mxu0
  %v2576 = vadd.f32 %v2432, %v2575
  %v2577 = vpop.f32.mrf.mxu0
  %v2578 = vadd.f32 %v2434, %v2577
  %2579 = vdwg.mxu0
  %2580 = vmatpush.bf16.msra.mxu0 0
  %2581 = vmatpush.bf16.msra.mxu0 0
  %2582 = vmatpush.bf16.msra.mxu0 0
  %2583 = vmatpush.bf16.msra.mxu0 0
  %2584 = vmatpush.bf16.msra.mxu0 0
  %2585 = vmatpush.bf16.msra.mxu0 0
  %2586 = vmatpush.bf16.msra.mxu0 %v2546
  %2587 = vmatpush.bf16.msra.mxu0 %v2540
  %2588 = vmatmul.bf16.gmra.mxu0 %v2564
  %v2589 = vpop.f32.mrf.mxu0
  %v2590 = vadd.f32 %v2446, %v2589
  %v2591 = vpop.f32.mrf.mxu0
  %v2592 = vadd.f32 %v2448, %v2591
  %2593 = vdwg.mxu0
  %2594 = vmatpush.bf16.msra.mxu0 0
  %2595 = vmatpush.bf16.msra.mxu0 0
  %2596 = vmatpush.bf16.msra.mxu0 0
  %2597 = vmatpush.bf16.msra.mxu0 0
  %2598 = vmatpush.bf16.msra.mxu0 0
  %2599 = vmatpush.bf16.msra.mxu0 0
  %2600 = vmatpush.bf16.msra.mxu0 %v2547
  %2601 = vmatpush.bf16.msra.mxu0 %v2541
  %2602 = vmatmul.bf16.gmra.mxu0 %v2564
  %v2603 = vpop.f32.mrf.mxu0
  %v2604 = vadd.f32 %v2460, %v2603
  %v2605 = vpop.f32.mrf.mxu0
  %v2606 = vadd.f32 %v2462, %v2605
  %2607 = vdwg.mxu0
  %2608 = vmatpush.bf16.msra.mxu0 0
  %2609 = vmatpush.bf16.msra.mxu0 0
  %2610 = vmatpush.bf16.msra.mxu0 0
  %2611 = vmatpush.bf16.msra.mxu0 0
  %2612 = vmatpush.bf16.msra.mxu0 0
  %2613 = vmatpush.bf16.msra.mxu0 0
  %2614 = vmatpush.bf16.msra.mxu0 %v2548
  %2615 = vmatpush.bf16.msra.mxu0 %v2542
  %2616 = vmatmul.bf16.gmra.mxu0 %v2564
  %v2617 = vpop.f32.mrf.mxu0
  %v2618 = vadd.f32 %v2474, %v2617
  %v2619 = vpop.f32.mrf.mxu0
  %v2620 = vadd.f32 %v2476, %v2619
  %2621 = vdwg.mxu0
  %2622 = vmatpush.bf16.msra.mxu0 0
  %2623 = vmatpush.bf16.msra.mxu0 0
  %2624 = vmatpush.bf16.msra.mxu0 0
  %2625 = vmatpush.bf16.msra.mxu0 0
  %2626 = vmatpush.bf16.msra.mxu0 0
  %2627 = vmatpush.bf16.msra.mxu0 0
  %2628 = vmatpush.bf16.msra.mxu0 %v2549
  %2629 = vmatpush.bf16.msra.mxu0 %v2543
  %2630 = vmatmul.bf16.gmra.mxu0 %v2564
  %v2631 = vpop.f32.mrf.mxu0
  %v2632 = vadd.f32 %v2488, %v2631
  %v2633 = vpop.f32.mrf.mxu0
  %v2634 = vadd.f32 %v2490, %v2633
  %2635 = vdwg.mxu0
  %2636 = vmatpush.bf16.msra.mxu0 0
  %2637 = vmatpush.bf16.msra.mxu0 0
  %2638 = vmatpush.bf16.msra.mxu0 0
  %2639 = vmatpush.bf16.msra.mxu0 0
  %2640 = vmatpush.bf16.msra.mxu0 0
  %2641 = vmatpush.bf16.msra.mxu0 0
  %2642 = vmatpush.bf16.msra.mxu0 %v2550
  %2643 = vmatpush.bf16.msra.mxu0 %v2544
  %2644 = vmatmul.bf16.gmra.mxu0 %v2564
  %v2645 = vpop.f32.mrf.mxu0
  %v2646 = vadd.f32 %v2502, %v2645
  %v2647 = vpop.f32.mrf.mxu0
  %v2648 = vadd.f32 %v2504, %v2647
  %2649 = vdwg.mxu0
  %s2650 = scalar_lea.vmem %s5, 16
  %v2651 = vld [vmem:[%s2650] sm:$0xf]
  %v2652 = vld [vmem:[%s2650 + $0x4] sm:$0xf]
  %v2655 = vunpack.c.l.b16 %v2651
  %v2656 = vunpack.c.l.b16 %v2652
  %v2657 = vpack.c.b16 %v2656, %v2655
  %2658 = vrot.lane.b32.xlu0 %v2352, 17
  %v2659 = vpop.permute.xlu0 %2658
  %2660 = vrot.lane.b32.xlu0 %v2353, 17
  %v2661 = vpop.permute.xlu0 %2660
  %2662 = vrot.lane.b32.xlu0 %v2354, 17
  %v2663 = vpop.permute.xlu0 %2662
  %2664 = vrot.lane.b32.xlu0 %v2355, 17
  %v2665 = vpop.permute.xlu0 %2664
  %2666 = vrot.lane.b32.xlu0 %v2356, 17
  %v2667 = vpop.permute.xlu0 %2666
  %2668 = vrot.lane.b32.xlu0 %v2357, 17
  %v2669 = vpop.permute.xlu0 %2668
  %2670 = vrot.lane.b32.xlu0 %v2358, 17
  %v2671 = vpop.permute.xlu0 %2670
  %2672 = vrot.lane.b32.xlu0 %v2359, 17
  %v2673 = vpop.permute.xlu0 %2672
  %2674 = vrot.lane.b32.xlu0 %v2360, 17
  %v2675 = vpop.permute.xlu0 %2674
  %2676 = vrot.lane.b32.xlu0 %v2361, 17
  %v2677 = vpop.permute.xlu0 %2676
  %2678 = vrot.lane.b32.xlu0 %v2362, 17
  %v2679 = vpop.permute.xlu0 %2678
  %2680 = vrot.lane.b32.xlu0 %v2363, 17
  %v2681 = vpop.permute.xlu0 %2680
  %2682 = vrot.lane.b32.xlu0 %v2364, 17
  %v2683 = vpop.permute.xlu0 %2682
  %2684 = vrot.lane.b32.xlu0 %v2365, 17
  %v2685 = vpop.permute.xlu0 %2684
  %v2686 = vsel %vm469, %v2659, %v2661
  %v2687 = vsel %vm469, %v2661, %v2663
  %v2688 = vsel %vm469, %v2663, %v2665
  %v2689 = vsel %vm469, %v2665, %v2667
  %v2690 = vsel %vm469, %v2667, %v2669
  %v2691 = vsel %vm469, %v2669, %v2671
  %v2692 = vsel %vm469, %v2673, %v2675
  %v2693 = vsel %vm469, %v2675, %v2677
  %v2694 = vsel %vm469, %v2677, %v2679
  %v2695 = vsel %vm469, %v2679, %v2681
  %v2696 = vsel %vm469, %v2681, %v2683
  %v2697 = vsel %vm469, %v2683, %v2685
  %v2711 = vsel %vm2418, %v2657, 0
  %2713 = vmatpush.bf16.msra.mxu0 0
  %2714 = vmatpush.bf16.msra.mxu0 0
  %2715 = vmatpush.bf16.msra.mxu0 0
  %2716 = vmatpush.bf16.msra.mxu0 0
  %2717 = vmatpush.bf16.msra.mxu0 0
  %2718 = vmatpush.bf16.msra.mxu0 0
  %2719 = vmatpush.bf16.msra.mxu0 %v2692
  %2720 = vmatpush.bf16.msra.mxu0 %v2686
  %2721 = vmatmul.bf16.gmra.mxu0 %v2711
  %v2722 = vpop.f32.mrf.mxu0
  %v2723 = vadd.f32 0.0, %v2722
  %v2724 = vpop.f32.mrf.mxu0
  %v2725 = vadd.f32 0.0, %v2724
  %2726 = vdwg.mxu0
  %2727 = vmatpush.bf16.msra.mxu0 0
  %2728 = vmatpush.bf16.msra.mxu0 0
  %2729 = vmatpush.bf16.msra.mxu0 0
  %2730 = vmatpush.bf16.msra.mxu0 0
  %2731 = vmatpush.bf16.msra.mxu0 0
  %2732 = vmatpush.bf16.msra.mxu0 0
  %2733 = vmatpush.bf16.msra.mxu0 %v2693
  %2734 = vmatpush.bf16.msra.mxu0 %v2687
  %2735 = vmatmul.bf16.gmra.mxu0 %v2711
  %v2736 = vpop.f32.mrf.mxu0
  %v2737 = vadd.f32 0.0, %v2736
  %v2738 = vpop.f32.mrf.mxu0
  %v2739 = vadd.f32 0.0, %v2738
  %2740 = vdwg.mxu0
  %2741 = vmatpush.bf16.msra.mxu0 0
  %2742 = vmatpush.bf16.msra.mxu0 0
  %2743 = vmatpush.bf16.msra.mxu0 0
  %2744 = vmatpush.bf16.msra.mxu0 0
  %2745 = vmatpush.bf16.msra.mxu0 0
  %2746 = vmatpush.bf16.msra.mxu0 0
  %2747 = vmatpush.bf16.msra.mxu0 %v2694
  %2748 = vmatpush.bf16.msra.mxu0 %v2688
  %2749 = vmatmul.bf16.gmra.mxu0 %v2711
  %v2750 = vpop.f32.mrf.mxu0
  %v2751 = vadd.f32 0.0, %v2750
  %v2752 = vpop.f32.mrf.mxu0
  %v2753 = vadd.f32 0.0, %v2752
  %2754 = vdwg.mxu0
  %2755 = vmatpush.bf16.msra.mxu0 0
  %2756 = vmatpush.bf16.msra.mxu0 0
  %2757 = vmatpush.bf16.msra.mxu0 0
  %2758 = vmatpush.bf16.msra.mxu0 0
  %2759 = vmatpush.bf16.msra.mxu0 0
  %2760 = vmatpush.bf16.msra.mxu0 0
  %2761 = vmatpush.bf16.msra.mxu0 %v2695
  %2762 = vmatpush.bf16.msra.mxu0 %v2689
  %2763 = vmatmul.bf16.gmra.mxu0 %v2711
  %v2764 = vpop.f32.mrf.mxu0
  %v2765 = vadd.f32 0.0, %v2764
  %v2766 = vpop.f32.mrf.mxu0
  %v2767 = vadd.f32 0.0, %v2766
  %2768 = vdwg.mxu0
  %2769 = vmatpush.bf16.msra.mxu0 0
  %2770 = vmatpush.bf16.msra.mxu0 0
  %2771 = vmatpush.bf16.msra.mxu0 0
  %2772 = vmatpush.bf16.msra.mxu0 0
  %2773 = vmatpush.bf16.msra.mxu0 0
  %2774 = vmatpush.bf16.msra.mxu0 0
  %2775 = vmatpush.bf16.msra.mxu0 %v2696
  %2776 = vmatpush.bf16.msra.mxu0 %v2690
  %2777 = vmatmul.bf16.gmra.mxu0 %v2711
  %v2778 = vpop.f32.mrf.mxu0
  %v2779 = vadd.f32 0.0, %v2778
  %v2780 = vpop.f32.mrf.mxu0
  %v2781 = vadd.f32 0.0, %v2780
  %2782 = vdwg.mxu0
  %2783 = vmatpush.bf16.msra.mxu0 0
  %2784 = vmatpush.bf16.msra.mxu0 0
  %2785 = vmatpush.bf16.msra.mxu0 0
  %2786 = vmatpush.bf16.msra.mxu0 0
  %2787 = vmatpush.bf16.msra.mxu0 0
  %2788 = vmatpush.bf16.msra.mxu0 0
  %2789 = vmatpush.bf16.msra.mxu0 %v2697
  %2790 = vmatpush.bf16.msra.mxu0 %v2691
  %2791 = vmatmul.bf16.gmra.mxu0 %v2711
  %v2792 = vpop.f32.mrf.mxu0
  %v2793 = vadd.f32 0.0, %v2792
  %v2794 = vpop.f32.mrf.mxu0
  %v2795 = vadd.f32 0.0, %v2794
  %2796 = vdwg.mxu0
  %v2797 = vadd.f32 %v2576, %v2723
  %v2798 = vadd.f32 %v2590, %v2737
  %v2799 = vadd.f32 %v2604, %v2751
  %v2800 = vadd.f32 %v2618, %v2765
  %v2801 = vadd.f32 %v2632, %v2779
  %v2802 = vadd.f32 %v2646, %v2793
  %v2803 = vadd.f32 %v2578, %v2725
  %v2804 = vadd.f32 %v2592, %v2739
  %v2805 = vadd.f32 %v2606, %v2753
  %v2806 = vadd.f32 %v2620, %v2767
  %v2807 = vadd.f32 %v2634, %v2781
  %v2808 = vadd.f32 %v2648, %v2795
  %s2809 = scalar_lea.vmem %s5, 24
  %v2810 = vld [vmem:[%s2809] sm:$0xf]
  %v2811 = vld [vmem:[%s2809 + $0x4] sm:$0xf]
  %v2814 = vunpack.c.l.b16 %v2810
  %v2815 = vunpack.c.l.b16 %v2811
  %v2816 = vpack.c.b16 %v2815, %v2814
  %2817 = vrot.lane.b32.xlu0 %v2352, 1
  %v2818 = vpop.permute.xlu0 %2817
  %2819 = vrot.lane.b32.xlu0 %v2353, 1
  %v2820 = vpop.permute.xlu0 %2819
  %2821 = vrot.lane.b32.xlu0 %v2354, 1
  %v2822 = vpop.permute.xlu0 %2821
  %2823 = vrot.lane.b32.xlu0 %v2355, 1
  %v2824 = vpop.permute.xlu0 %2823
  %2825 = vrot.lane.b32.xlu0 %v2356, 1
  %v2826 = vpop.permute.xlu0 %2825
  %2827 = vrot.lane.b32.xlu0 %v2357, 1
  %v2828 = vpop.permute.xlu0 %2827
  %2829 = vrot.lane.b32.xlu0 %v2358, 1
  %v2830 = vpop.permute.xlu0 %2829
  %2831 = vrot.lane.b32.xlu0 %v2359, 1
  %v2832 = vpop.permute.xlu0 %2831
  %2833 = vrot.lane.b32.xlu0 %v2360, 1
  %v2834 = vpop.permute.xlu0 %2833
  %2835 = vrot.lane.b32.xlu0 %v2361, 1
  %v2836 = vpop.permute.xlu0 %2835
  %2837 = vrot.lane.b32.xlu0 %v2362, 1
  %v2838 = vpop.permute.xlu0 %2837
  %2839 = vrot.lane.b32.xlu0 %v2363, 1
  %v2840 = vpop.permute.xlu0 %2839
  %2841 = vrot.lane.b32.xlu0 %v2364, 1
  %v2842 = vpop.permute.xlu0 %2841
  %2843 = vrot.lane.b32.xlu0 %v2365, 1
  %v2844 = vpop.permute.xlu0 %2843
  %v2845 = vsel %vm667, %v2818, %v2820
  %v2846 = vsel %vm667, %v2820, %v2822
  %v2847 = vsel %vm667, %v2822, %v2824
  %v2848 = vsel %vm667, %v2824, %v2826
  %v2849 = vsel %vm667, %v2826, %v2828
  %v2850 = vsel %vm667, %v2828, %v2830
  %v2851 = vsel %vm667, %v2832, %v2834
  %v2852 = vsel %vm667, %v2834, %v2836
  %v2853 = vsel %vm667, %v2836, %v2838
  %v2854 = vsel %vm667, %v2838, %v2840
  %v2855 = vsel %vm667, %v2840, %v2842
  %v2856 = vsel %vm667, %v2842, %v2844
  %v2870 = vsel %vm2418, %v2816, 0
  %2872 = vmatpush.bf16.msra.mxu0 0
  %2873 = vmatpush.bf16.msra.mxu0 0
  %2874 = vmatpush.bf16.msra.mxu0 0
  %2875 = vmatpush.bf16.msra.mxu0 0
  %2876 = vmatpush.bf16.msra.mxu0 0
  %2877 = vmatpush.bf16.msra.mxu0 0
  %2878 = vmatpush.bf16.msra.mxu0 %v2851
  %2879 = vmatpush.bf16.msra.mxu0 %v2845
  %2880 = vmatmul.bf16.gmra.mxu0 %v2870
  %v2881 = vpop.f32.mrf.mxu0
  %v2882 = vadd.f32 0.0, %v2881
  %v2883 = vpop.f32.mrf.mxu0
  %v2884 = vadd.f32 0.0, %v2883
  %2885 = vdwg.mxu0
  %2886 = vmatpush.bf16.msra.mxu0 0
  %2887 = vmatpush.bf16.msra.mxu0 0
  %2888 = vmatpush.bf16.msra.mxu0 0
  %2889 = vmatpush.bf16.msra.mxu0 0
  %2890 = vmatpush.bf16.msra.mxu0 0
  %2891 = vmatpush.bf16.msra.mxu0 0
  %2892 = vmatpush.bf16.msra.mxu0 %v2852
  %2893 = vmatpush.bf16.msra.mxu0 %v2846
  %2894 = vmatmul.bf16.gmra.mxu0 %v2870
  %v2895 = vpop.f32.mrf.mxu0
  %v2896 = vadd.f32 0.0, %v2895
  %v2897 = vpop.f32.mrf.mxu0
  %v2898 = vadd.f32 0.0, %v2897
  %2899 = vdwg.mxu0
  %2900 = vmatpush.bf16.msra.mxu0 0
  %2901 = vmatpush.bf16.msra.mxu0 0
  %2902 = vmatpush.bf16.msra.mxu0 0
  %2903 = vmatpush.bf16.msra.mxu0 0
  %2904 = vmatpush.bf16.msra.mxu0 0
  %2905 = vmatpush.bf16.msra.mxu0 0
  %2906 = vmatpush.bf16.msra.mxu0 %v2853
  %2907 = vmatpush.bf16.msra.mxu0 %v2847
  %2908 = vmatmul.bf16.gmra.mxu0 %v2870
  %v2909 = vpop.f32.mrf.mxu0
  %v2910 = vadd.f32 0.0, %v2909
  %v2911 = vpop.f32.mrf.mxu0
  %v2912 = vadd.f32 0.0, %v2911
  %2913 = vdwg.mxu0
  %2914 = vmatpush.bf16.msra.mxu0 0
  %2915 = vmatpush.bf16.msra.mxu0 0
  %2916 = vmatpush.bf16.msra.mxu0 0
  %2917 = vmatpush.bf16.msra.mxu0 0
  %2918 = vmatpush.bf16.msra.mxu0 0
  %2919 = vmatpush.bf16.msra.mxu0 0
  %2920 = vmatpush.bf16.msra.mxu0 %v2854
  %2921 = vmatpush.bf16.msra.mxu0 %v2848
  %2922 = vmatmul.bf16.gmra.mxu0 %v2870
  %v2923 = vpop.f32.mrf.mxu0
  %v2924 = vadd.f32 0.0, %v2923
  %v2925 = vpop.f32.mrf.mxu0
  %v2926 = vadd.f32 0.0, %v2925
  %2927 = vdwg.mxu0
  %2928 = vmatpush.bf16.msra.mxu0 0
  %2929 = vmatpush.bf16.msra.mxu0 0
  %2930 = vmatpush.bf16.msra.mxu0 0
  %2931 = vmatpush.bf16.msra.mxu0 0
  %2932 = vmatpush.bf16.msra.mxu0 0
  %2933 = vmatpush.bf16.msra.mxu0 0
  %2934 = vmatpush.bf16.msra.mxu0 %v2855
  %2935 = vmatpush.bf16.msra.mxu0 %v2849
  %2936 = vmatmul.bf16.gmra.mxu0 %v2870
  %v2937 = vpop.f32.mrf.mxu0
  %v2938 = vadd.f32 0.0, %v2937
  %v2939 = vpop.f32.mrf.mxu0
  %v2940 = vadd.f32 0.0, %v2939
  %2941 = vdwg.mxu0
  %2942 = vmatpush.bf16.msra.mxu0 0
  %2943 = vmatpush.bf16.msra.mxu0 0
  %2944 = vmatpush.bf16.msra.mxu0 0
  %2945 = vmatpush.bf16.msra.mxu0 0
  %2946 = vmatpush.bf16.msra.mxu0 0
  %2947 = vmatpush.bf16.msra.mxu0 0
  %2948 = vmatpush.bf16.msra.mxu0 %v2856
  %2949 = vmatpush.bf16.msra.mxu0 %v2850
  %2950 = vmatmul.bf16.gmra.mxu0 %v2870
  %v2951 = vpop.f32.mrf.mxu0
  %v2952 = vadd.f32 0.0, %v2951
  %v2953 = vpop.f32.mrf.mxu0
  %v2954 = vadd.f32 0.0, %v2953
  %2955 = vdwg.mxu0
  %v2956 = vadd.f32 %v2797, %v2882
  %v2957 = vadd.f32 %v2798, %v2896
  %v2958 = vadd.f32 %v2799, %v2910
  %v2959 = vadd.f32 %v2800, %v2924
  %v2960 = vadd.f32 %v2801, %v2938
  %v2961 = vadd.f32 %v2802, %v2952
  %v2962 = vadd.f32 %v2803, %v2884
  %v2963 = vadd.f32 %v2804, %v2898
  %v2964 = vadd.f32 %v2805, %v2912
  %v2965 = vadd.f32 %v2806, %v2926
  %v2966 = vadd.f32 %v2807, %v2940
  %v2967 = vadd.f32 %v2808, %v2954
  %v2968 = vld [vmem:[#allocation2 + $0x4] sm:$0xff]
  %v2969 = vld [vmem:[#allocation2 + $0xc] sm:$0xff]
  %v2970 = vld [vmem:[#allocation2 + $0x14] sm:$0xff]
  %v2971 = vld [vmem:[#allocation2 + $0x24] sm:$0xff]
  %v2972 = vld [vmem:[#allocation2 + $0x2c] sm:$0xff]
  %v2973 = vld [vmem:[#allocation2 + $0x34] sm:$0xff]
  %v2974 = vld [vmem:[#allocation2 + $0x44] sm:$0xff]
  %v2975 = vld [vmem:[#allocation2 + $0x4c] sm:$0xff]
  %v2976 = vld [vmem:[#allocation2 + $0x54] sm:$0xff]
  %v2977 = vld [vmem:[#allocation2 + $0x64] sm:$0xff]
  %v2978 = vld [vmem:[#allocation2 + $0x6c] sm:$0xff]
  %v2979 = vld [vmem:[#allocation2 + $0x74] sm:$0xff]
  %s2980 = scalar_lea.vmem %s5, 32
  %v2981 = vld [vmem:[%s2980] sm:$0xf]
  %v2982 = vld [vmem:[%s2980 + $0x4] sm:$0xf]
  %v2985 = vunpack.c.l.b16 %v2981
  %v2986 = vunpack.c.l.b16 %v2982
  %v2987 = vpack.c.b16 %v2986, %v2985
  %v3000 = vunpack.c.l.b16 %v2968
  %v3001 = vunpack.c.h.b16 %v2968
  %v3002 = vunpack.c.l.b16 %v2969
  %v3003 = vunpack.c.h.b16 %v2969
  %v3004 = vunpack.c.l.b16 %v2970
  %v3005 = vunpack.c.h.b16 %v2970
  %v3006 = vunpack.c.l.b16 %v2971
  %v3007 = vunpack.c.h.b16 %v2971
  %v3008 = vunpack.c.l.b16 %v2972
  %v3009 = vunpack.c.h.b16 %v2972
  %v3010 = vunpack.c.l.b16 %v2973
  %v3011 = vunpack.c.h.b16 %v2973
  %v3012 = vunpack.c.l.b16 %v2974
  %v3013 = vunpack.c.h.b16 %v2974
  %v3014 = vunpack.c.l.b16 %v2975
  %v3015 = vunpack.c.h.b16 %v2975
  %v3016 = vunpack.c.l.b16 %v2976
  %v3017 = vunpack.c.h.b16 %v2976
  %v3018 = vunpack.c.l.b16 %v2977
  %v3019 = vunpack.c.h.b16 %v2977
  %v3020 = vunpack.c.l.b16 %v2978
  %v3021 = vunpack.c.h.b16 %v2978
  %v3022 = vunpack.c.l.b16 %v2979
  %v3023 = vunpack.c.h.b16 %v2979
  %v3024 = vpack.c.b16 %v3006, %v3000
  %v3025 = vpack.c.b16 %v3007, %v3001
  %v3026 = vpack.c.b16 %v3008, %v3002
  %v3027 = vpack.c.b16 %v3009, %v3003
  %v3028 = vpack.c.b16 %v3010, %v3004
  %v3029 = vpack.c.b16 %v3011, %v3005
  %v3030 = vpack.c.b16 %v3018, %v3012
  %v3031 = vpack.c.b16 %v3019, %v3013
  %v3032 = vpack.c.b16 %v3020, %v3014
  %v3033 = vpack.c.b16 %v3021, %v3015
  %v3034 = vpack.c.b16 %v3022, %v3016
  %v3035 = vpack.c.b16 %v3023, %v3017
  %v3049 = vsel %vm2418, %v2987, 0
  %3051 = vmatpush.bf16.msra.mxu0 0
  %3052 = vmatpush.bf16.msra.mxu0 0
  %3053 = vmatpush.bf16.msra.mxu0 0
  %3054 = vmatpush.bf16.msra.mxu0 0
  %3055 = vmatpush.bf16.msra.mxu0 0
  %3056 = vmatpush.bf16.msra.mxu0 0
  %3057 = vmatpush.bf16.msra.mxu0 %v3030
  %3058 = vmatpush.bf16.msra.mxu0 %v3024
  %3059 = vmatmul.bf16.gmra.mxu0 %v3049
  %v3060 = vpop.f32.mrf.mxu0
  %v3061 = vadd.f32 0.0, %v3060
  %v3062 = vpop.f32.mrf.mxu0
  %v3063 = vadd.f32 0.0, %v3062
  %3064 = vdwg.mxu0
  %3065 = vmatpush.bf16.msra.mxu0 0
  %3066 = vmatpush.bf16.msra.mxu0 0
  %3067 = vmatpush.bf16.msra.mxu0 0
  %3068 = vmatpush.bf16.msra.mxu0 0
  %3069 = vmatpush.bf16.msra.mxu0 0
  %3070 = vmatpush.bf16.msra.mxu0 0
  %3071 = vmatpush.bf16.msra.mxu0 %v3031
  %3072 = vmatpush.bf16.msra.mxu0 %v3025
  %3073 = vmatmul.bf16.gmra.mxu0 %v3049
  %v3074 = vpop.f32.mrf.mxu0
  %v3075 = vadd.f32 0.0, %v3074
  %v3076 = vpop.f32.mrf.mxu0
  %v3077 = vadd.f32 0.0, %v3076
  %3078 = vdwg.mxu0
  %3079 = vmatpush.bf16.msra.mxu0 0
  %3080 = vmatpush.bf16.msra.mxu0 0
  %3081 = vmatpush.bf16.msra.mxu0 0
  %3082 = vmatpush.bf16.msra.mxu0 0
  %3083 = vmatpush.bf16.msra.mxu0 0
  %3084 = vmatpush.bf16.msra.mxu0 0
  %3085 = vmatpush.bf16.msra.mxu0 %v3032
  %3086 = vmatpush.bf16.msra.mxu0 %v3026
  %3087 = vmatmul.bf16.gmra.mxu0 %v3049
  %v3088 = vpop.f32.mrf.mxu0
  %v3089 = vadd.f32 0.0, %v3088
  %v3090 = vpop.f32.mrf.mxu0
  %v3091 = vadd.f32 0.0, %v3090
  %3092 = vdwg.mxu0
  %3093 = vmatpush.bf16.msra.mxu0 0
  %3094 = vmatpush.bf16.msra.mxu0 0
  %3095 = vmatpush.bf16.msra.mxu0 0
  %3096 = vmatpush.bf16.msra.mxu0 0
  %3097 = vmatpush.bf16.msra.mxu0 0
  %3098 = vmatpush.bf16.msra.mxu0 0
  %3099 = vmatpush.bf16.msra.mxu0 %v3033
  %3100 = vmatpush.bf16.msra.mxu0 %v3027
  %3101 = vmatmul.bf16.gmra.mxu0 %v3049
  %v3102 = vpop.f32.mrf.mxu0
  %v3103 = vadd.f32 0.0, %v3102
  %v3104 = vpop.f32.mrf.mxu0
  %v3105 = vadd.f32 0.0, %v3104
  %3106 = vdwg.mxu0
  %3107 = vmatpush.bf16.msra.mxu0 0
  %3108 = vmatpush.bf16.msra.mxu0 0
  %3109 = vmatpush.bf16.msra.mxu0 0
  %3110 = vmatpush.bf16.msra.mxu0 0
  %3111 = vmatpush.bf16.msra.mxu0 0
  %3112 = vmatpush.bf16.msra.mxu0 0
  %3113 = vmatpush.bf16.msra.mxu0 %v3034
  %3114 = vmatpush.bf16.msra.mxu0 %v3028
  %3115 = vmatmul.bf16.gmra.mxu0 %v3049
  %v3116 = vpop.f32.mrf.mxu0
  %v3117 = vadd.f32 0.0, %v3116
  %v3118 = vpop.f32.mrf.mxu0
  %v3119 = vadd.f32 0.0, %v3118
  %3120 = vdwg.mxu0
  %3121 = vmatpush.bf16.msra.mxu0 0
  %3122 = vmatpush.bf16.msra.mxu0 0
  %3123 = vmatpush.bf16.msra.mxu0 0
  %3124 = vmatpush.bf16.msra.mxu0 0
  %3125 = vmatpush.bf16.msra.mxu0 0
  %3126 = vmatpush.bf16.msra.mxu0 0
  %3127 = vmatpush.bf16.msra.mxu0 %v3035
  %3128 = vmatpush.bf16.msra.mxu0 %v3029
  %3129 = vmatmul.bf16.gmra.mxu0 %v3049
  %v3130 = vpop.f32.mrf.mxu0
  %v3131 = vadd.f32 0.0, %v3130
  %v3132 = vpop.f32.mrf.mxu0
  %v3133 = vadd.f32 0.0, %v3132
  %3134 = vdwg.mxu0
  %v3135 = vadd.f32 %v2956, %v3061
  %v3136 = vadd.f32 %v2957, %v3075
  %v3137 = vadd.f32 %v2958, %v3089
  %v3138 = vadd.f32 %v2959, %v3103
  %v3139 = vadd.f32 %v2960, %v3117
  %v3140 = vadd.f32 %v2961, %v3131
  %v3141 = vadd.f32 %v2962, %v3063
  %v3142 = vadd.f32 %v2963, %v3077
  %v3143 = vadd.f32 %v2964, %v3091
  %v3144 = vadd.f32 %v2965, %v3105
  %v3145 = vadd.f32 %v2966, %v3119
  %v3146 = vadd.f32 %v2967, %v3133
  %v3147 = vld [vmem:[#allocation2 + $0x4] sm:$0xff]
  %v3148 = vld [vmem:[#allocation2 + $0xc] sm:$0xff]
  %v3149 = vld [vmem:[#allocation2 + $0x14] sm:$0xff]
  %v3150 = vld [vmem:[#allocation2 + $0x1c] sm:$0xf]
  %v3151 = vld [vmem:[#allocation2 + $0x24] sm:$0xff]
  %v3152 = vld [vmem:[#allocation2 + $0x2c] sm:$0xff]
  %v3153 = vld [vmem:[#allocation2 + $0x34] sm:$0xff]
  %v3154 = vld [vmem:[#allocation2 + $0x3c] sm:$0xf]
  %v3155 = vld [vmem:[#allocation2 + $0x44] sm:$0xff]
  %v3156 = vld [vmem:[#allocation2 + $0x4c] sm:$0xff]
  %v3157 = vld [vmem:[#allocation2 + $0x54] sm:$0xff]
  %v3158 = vld [vmem:[#allocation2 + $0x5c] sm:$0xf]
  %v3159 = vld [vmem:[#allocation2 + $0x64] sm:$0xff]
  %v3160 = vld [vmem:[#allocation2 + $0x6c] sm:$0xff]
  %v3161 = vld [vmem:[#allocation2 + $0x74] sm:$0xff]
  %v3162 = vld [vmem:[#allocation2 + $0x7c] sm:$0xf]
  %s3163 = scalar_lea.vmem %s5, 40
  %v3164 = vld [vmem:[%s3163] sm:$0xf]
  %v3165 = vld [vmem:[%s3163 + $0x4] sm:$0xf]
  %v3168 = vunpack.c.l.b16 %v3164
  %v3169 = vunpack.c.l.b16 %v3165
  %v3170 = vpack.c.b16 %v3169, %v3168
  %v3187 = vunpack.c.l.b16 %v3147
  %v3188 = vunpack.c.h.b16 %v3147
  %v3189 = vunpack.c.l.b16 %v3148
  %v3190 = vunpack.c.h.b16 %v3148
  %v3191 = vunpack.c.l.b16 %v3149
  %v3192 = vunpack.c.h.b16 %v3149
  %v3193 = vunpack.c.l.b16 %v3150
  %v3194 = vunpack.c.l.b16 %v3151
  %v3195 = vunpack.c.h.b16 %v3151
  %v3196 = vunpack.c.l.b16 %v3152
  %v3197 = vunpack.c.h.b16 %v3152
  %v3198 = vunpack.c.l.b16 %v3153
  %v3199 = vunpack.c.h.b16 %v3153
  %v3200 = vunpack.c.l.b16 %v3154
  %v3201 = vunpack.c.l.b16 %v3155
  %v3202 = vunpack.c.h.b16 %v3155
  %v3203 = vunpack.c.l.b16 %v3156
  %v3204 = vunpack.c.h.b16 %v3156
  %v3205 = vunpack.c.l.b16 %v3157
  %v3206 = vunpack.c.h.b16 %v3157
  %v3207 = vunpack.c.l.b16 %v3158
  %v3208 = vunpack.c.l.b16 %v3159
  %v3209 = vunpack.c.h.b16 %v3159
  %v3210 = vunpack.c.l.b16 %v3160
  %v3211 = vunpack.c.h.b16 %v3160
  %v3212 = vunpack.c.l.b16 %v3161
  %v3213 = vunpack.c.h.b16 %v3161
  %v3214 = vunpack.c.l.b16 %v3162
  %v3215 = vpack.c.b16 %v3194, %v3187
  %v3216 = vpack.c.b16 %v3195, %v3188
  %v3217 = vpack.c.b16 %v3196, %v3189
  %v3218 = vpack.c.b16 %v3197, %v3190
  %v3219 = vpack.c.b16 %v3198, %v3191
  %v3220 = vpack.c.b16 %v3199, %v3192
  %v3221 = vpack.c.b16 %v3200, %v3193
  %v3222 = vpack.c.b16 %v3208, %v3201
  %v3223 = vpack.c.b16 %v3209, %v3202
  %v3224 = vpack.c.b16 %v3210, %v3203
  %v3225 = vpack.c.b16 %v3211, %v3204
  %v3226 = vpack.c.b16 %v3212, %v3205
  %v3227 = vpack.c.b16 %v3213, %v3206
  %v3228 = vpack.c.b16 %v3214, %v3207
  %3229 = vrot.lane.b32.xlu0 %v3215, 127
  %v3230 = vpop.permute.xlu0 %3229
  %3231 = vrot.lane.b32.xlu0 %v3216, 127
  %v3232 = vpop.permute.xlu0 %3231
  %3233 = vrot.lane.b32.xlu0 %v3217, 127
  %v3234 = vpop.permute.xlu0 %3233
  %3235 = vrot.lane.b32.xlu0 %v3218, 127
  %v3236 = vpop.permute.xlu0 %3235
  %3237 = vrot.lane.b32.xlu0 %v3219, 127
  %v3238 = vpop.permute.xlu0 %3237
  %3239 = vrot.lane.b32.xlu0 %v3220, 127
  %v3240 = vpop.permute.xlu0 %3239
  %3241 = vrot.lane.b32.xlu0 %v3221, 127
  %v3242 = vpop.permute.xlu0 %3241
  %3243 = vrot.lane.b32.xlu0 %v3222, 127
  %v3244 = vpop.permute.xlu0 %3243
  %3245 = vrot.lane.b32.xlu0 %v3223, 127
  %v3246 = vpop.permute.xlu0 %3245
  %3247 = vrot.lane.b32.xlu0 %v3224, 127
  %v3248 = vpop.permute.xlu0 %3247
  %3249 = vrot.lane.b32.xlu0 %v3225, 127
  %v3250 = vpop.permute.xlu0 %3249
  %3251 = vrot.lane.b32.xlu0 %v3226, 127
  %v3252 = vpop.permute.xlu0 %3251
  %3253 = vrot.lane.b32.xlu0 %v3227, 127
  %v3254 = vpop.permute.xlu0 %3253
  %3255 = vrot.lane.b32.xlu0 %v3228, 127
  %v3256 = vpop.permute.xlu0 %3255
  %v3257 = vsel %vm1082, %v3230, %v3232
  %v3258 = vsel %vm1082, %v3232, %v3234
  %v3259 = vsel %vm1082, %v3234, %v3236
  %v3260 = vsel %vm1082, %v3236, %v3238
  %v3261 = vsel %vm1082, %v3238, %v3240
  %v3262 = vsel %vm1082, %v3240, %v3242
  %v3263 = vsel %vm1082, %v3244, %v3246
  %v3264 = vsel %vm1082, %v3246, %v3248
  %v3265 = vsel %vm1082, %v3248, %v3250
  %v3266 = vsel %vm1082, %v3250, %v3252
  %v3267 = vsel %vm1082, %v3252, %v3254
  %v3268 = vsel %vm1082, %v3254, %v3256
  %v3282 = vsel %vm2418, %v3170, 0
  %3284 = vmatpush.bf16.msra.mxu0 0
  %3285 = vmatpush.bf16.msra.mxu0 0
  %3286 = vmatpush.bf16.msra.mxu0 0
  %3287 = vmatpush.bf16.msra.mxu0 0
  %3288 = vmatpush.bf16.msra.mxu0 0
  %3289 = vmatpush.bf16.msra.mxu0 0
  %3290 = vmatpush.bf16.msra.mxu0 %v3263
  %3291 = vmatpush.bf16.msra.mxu0 %v3257
  %3292 = vmatmul.bf16.gmra.mxu0 %v3282
  %v3293 = vpop.f32.mrf.mxu0
  %v3294 = vadd.f32 0.0, %v3293
  %v3295 = vpop.f32.mrf.mxu0
  %v3296 = vadd.f32 0.0, %v3295
  %3297 = vdwg.mxu0
  %3298 = vmatpush.bf16.msra.mxu0 0
  %3299 = vmatpush.bf16.msra.mxu0 0
  %3300 = vmatpush.bf16.msra.mxu0 0
  %3301 = vmatpush.bf16.msra.mxu0 0
  %3302 = vmatpush.bf16.msra.mxu0 0
  %3303 = vmatpush.bf16.msra.mxu0 0
  %3304 = vmatpush.bf16.msra.mxu0 %v3264
  %3305 = vmatpush.bf16.msra.mxu0 %v3258
  %3306 = vmatmul.bf16.gmra.mxu0 %v3282
  %v3307 = vpop.f32.mrf.mxu0
  %v3308 = vadd.f32 0.0, %v3307
  %v3309 = vpop.f32.mrf.mxu0
  %v3310 = vadd.f32 0.0, %v3309
  %3311 = vdwg.mxu0
  %3312 = vmatpush.bf16.msra.mxu0 0
  %3313 = vmatpush.bf16.msra.mxu0 0
  %3314 = vmatpush.bf16.msra.mxu0 0
  %3315 = vmatpush.bf16.msra.mxu0 0
  %3316 = vmatpush.bf16.msra.mxu0 0
  %3317 = vmatpush.bf16.msra.mxu0 0
  %3318 = vmatpush.bf16.msra.mxu0 %v3265
  %3319 = vmatpush.bf16.msra.mxu0 %v3259
  %3320 = vmatmul.bf16.gmra.mxu0 %v3282
  %v3321 = vpop.f32.mrf.mxu0
  %v3322 = vadd.f32 0.0, %v3321
  %v3323 = vpop.f32.mrf.mxu0
  %v3324 = vadd.f32 0.0, %v3323
  %3325 = vdwg.mxu0
  %3326 = vmatpush.bf16.msra.mxu0 0
  %3327 = vmatpush.bf16.msra.mxu0 0
  %3328 = vmatpush.bf16.msra.mxu0 0
  %3329 = vmatpush.bf16.msra.mxu0 0
  %3330 = vmatpush.bf16.msra.mxu0 0
  %3331 = vmatpush.bf16.msra.mxu0 0
  %3332 = vmatpush.bf16.msra.mxu0 %v3266
  %3333 = vmatpush.bf16.msra.mxu0 %v3260
  %3334 = vmatmul.bf16.gmra.mxu0 %v3282
  %v3335 = vpop.f32.mrf.mxu0
  %v3336 = vadd.f32 0.0, %v3335
  %v3337 = vpop.f32.mrf.mxu0
  %v3338 = vadd.f32 0.0, %v3337
  %3339 = vdwg.mxu0
  %3340 = vmatpush.bf16.msra.mxu0 0
  %3341 = vmatpush.bf16.msra.mxu0 0
  %3342 = vmatpush.bf16.msra.mxu0 0
  %3343 = vmatpush.bf16.msra.mxu0 0
  %3344 = vmatpush.bf16.msra.mxu0 0
  %3345 = vmatpush.bf16.msra.mxu0 0
  %3346 = vmatpush.bf16.msra.mxu0 %v3267
  %3347 = vmatpush.bf16.msra.mxu0 %v3261
  %3348 = vmatmul.bf16.gmra.mxu0 %v3282
  %v3349 = vpop.f32.mrf.mxu0
  %v3350 = vadd.f32 0.0, %v3349
  %v3351 = vpop.f32.mrf.mxu0
  %v3352 = vadd.f32 0.0, %v3351
  %3353 = vdwg.mxu0
  %3354 = vmatpush.bf16.msra.mxu0 0
  %3355 = vmatpush.bf16.msra.mxu0 0
  %3356 = vmatpush.bf16.msra.mxu0 0
  %3357 = vmatpush.bf16.msra.mxu0 0
  %3358 = vmatpush.bf16.msra.mxu0 0
  %3359 = vmatpush.bf16.msra.mxu0 0
  %3360 = vmatpush.bf16.msra.mxu0 %v3268
  %3361 = vmatpush.bf16.msra.mxu0 %v3262
  %3362 = vmatmul.bf16.gmra.mxu0 %v3282
  %v3363 = vpop.f32.mrf.mxu0
  %v3364 = vadd.f32 0.0, %v3363
  %v3365 = vpop.f32.mrf.mxu0
  %v3366 = vadd.f32 0.0, %v3365
  %3367 = vdwg.mxu0
  %v3368 = vadd.f32 %v3135, %v3294
  %v3369 = vadd.f32 %v3136, %v3308
  %v3370 = vadd.f32 %v3137, %v3322
  %v3371 = vadd.f32 %v3138, %v3336
  %v3372 = vadd.f32 %v3139, %v3350
  %v3373 = vadd.f32 %v3140, %v3364
  %v3374 = vadd.f32 %v3141, %v3296
  %v3375 = vadd.f32 %v3142, %v3310
  %v3376 = vadd.f32 %v3143, %v3324
  %v3377 = vadd.f32 %v3144, %v3338
  %v3378 = vadd.f32 %v3145, %v3352
  %v3379 = vadd.f32 %v3146, %v3366
  %s3380 = scalar_lea.vmem %s5, 48
  %v3381 = vld [vmem:[%s3380] sm:$0xf]
  %v3382 = vld [vmem:[%s3380 + $0x4] sm:$0xf]
  %v3385 = vunpack.c.l.b16 %v3381
  %v3386 = vunpack.c.l.b16 %v3382
  %v3387 = vpack.c.b16 %v3386, %v3385
  %3388 = vrot.lane.b32.xlu0 %v3215, 111
  %v3389 = vpop.permute.xlu0 %3388
  %3390 = vrot.lane.b32.xlu0 %v3216, 111
  %v3391 = vpop.permute.xlu0 %3390
  %3392 = vrot.lane.b32.xlu0 %v3217, 111
  %v3393 = vpop.permute.xlu0 %3392
  %3394 = vrot.lane.b32.xlu0 %v3218, 111
  %v3395 = vpop.permute.xlu0 %3394
  %3396 = vrot.lane.b32.xlu0 %v3219, 111
  %v3397 = vpop.permute.xlu0 %3396
  %3398 = vrot.lane.b32.xlu0 %v3220, 111
  %v3399 = vpop.permute.xlu0 %3398
  %3400 = vrot.lane.b32.xlu0 %v3221, 111
  %v3401 = vpop.permute.xlu0 %3400
  %3402 = vrot.lane.b32.xlu0 %v3222, 111
  %v3403 = vpop.permute.xlu0 %3402
  %3404 = vrot.lane.b32.xlu0 %v3223, 111
  %v3405 = vpop.permute.xlu0 %3404
  %3406 = vrot.lane.b32.xlu0 %v3224, 111
  %v3407 = vpop.permute.xlu0 %3406
  %3408 = vrot.lane.b32.xlu0 %v3225, 111
  %v3409 = vpop.permute.xlu0 %3408
  %3410 = vrot.lane.b32.xlu0 %v3226, 111
  %v3411 = vpop.permute.xlu0 %3410
  %3412 = vrot.lane.b32.xlu0 %v3227, 111
  %v3413 = vpop.permute.xlu0 %3412
  %3414 = vrot.lane.b32.xlu0 %v3228, 111
  %v3415 = vpop.permute.xlu0 %3414
  %v3416 = vsel %vm1280, %v3389, %v3391
  %v3417 = vsel %vm1280, %v3391, %v3393
  %v3418 = vsel %vm1280, %v3393, %v3395
  %v3419 = vsel %vm1280, %v3395, %v3397
  %v3420 = vsel %vm1280, %v3397, %v3399
  %v3421 = vsel %vm1280, %v3399, %v3401
  %v3422 = vsel %vm1280, %v3403, %v3405
  %v3423 = vsel %vm1280, %v3405, %v3407
  %v3424 = vsel %vm1280, %v3407, %v3409
  %v3425 = vsel %vm1280, %v3409, %v3411
  %v3426 = vsel %vm1280, %v3411, %v3413
  %v3427 = vsel %vm1280, %v3413, %v3415
  %v3441 = vsel %vm2418, %v3387, 0
  %3443 = vmatpush.bf16.msra.mxu0 0
  %3444 = vmatpush.bf16.msra.mxu0 0
  %3445 = vmatpush.bf16.msra.mxu0 0
  %3446 = vmatpush.bf16.msra.mxu0 0
  %3447 = vmatpush.bf16.msra.mxu0 0
  %3448 = vmatpush.bf16.msra.mxu0 0
  %3449 = vmatpush.bf16.msra.mxu0 %v3422
  %3450 = vmatpush.bf16.msra.mxu0 %v3416
  %3451 = vmatmul.bf16.gmra.mxu0 %v3441
  %v3452 = vpop.f32.mrf.mxu0
  %v3453 = vadd.f32 0.0, %v3452
  %v3454 = vpop.f32.mrf.mxu0
  %v3455 = vadd.f32 0.0, %v3454
  %3456 = vdwg.mxu0
  %3457 = vmatpush.bf16.msra.mxu0 0
  %3458 = vmatpush.bf16.msra.mxu0 0
  %3459 = vmatpush.bf16.msra.mxu0 0
  %3460 = vmatpush.bf16.msra.mxu0 0
  %3461 = vmatpush.bf16.msra.mxu0 0
  %3462 = vmatpush.bf16.msra.mxu0 0
  %3463 = vmatpush.bf16.msra.mxu0 %v3423
  %3464 = vmatpush.bf16.msra.mxu0 %v3417
  %3465 = vmatmul.bf16.gmra.mxu0 %v3441
  %v3466 = vpop.f32.mrf.mxu0
  %v3467 = vadd.f32 0.0, %v3466
  %v3468 = vpop.f32.mrf.mxu0
  %v3469 = vadd.f32 0.0, %v3468
  %3470 = vdwg.mxu0
  %3471 = vmatpush.bf16.msra.mxu0 0
  %3472 = vmatpush.bf16.msra.mxu0 0
  %3473 = vmatpush.bf16.msra.mxu0 0
  %3474 = vmatpush.bf16.msra.mxu0 0
  %3475 = vmatpush.bf16.msra.mxu0 0
  %3476 = vmatpush.bf16.msra.mxu0 0
  %3477 = vmatpush.bf16.msra.mxu0 %v3424
  %3478 = vmatpush.bf16.msra.mxu0 %v3418
  %3479 = vmatmul.bf16.gmra.mxu0 %v3441
  %v3480 = vpop.f32.mrf.mxu0
  %v3481 = vadd.f32 0.0, %v3480
  %v3482 = vpop.f32.mrf.mxu0
  %v3483 = vadd.f32 0.0, %v3482
  %3484 = vdwg.mxu0
  %3485 = vmatpush.bf16.msra.mxu0 0
  %3486 = vmatpush.bf16.msra.mxu0 0
  %3487 = vmatpush.bf16.msra.mxu0 0
  %3488 = vmatpush.bf16.msra.mxu0 0
  %3489 = vmatpush.bf16.msra.mxu0 0
  %3490 = vmatpush.bf16.msra.mxu0 0
  %3491 = vmatpush.bf16.msra.mxu0 %v3425
  %3492 = vmatpush.bf16.msra.mxu0 %v3419
  %3493 = vmatmul.bf16.gmra.mxu0 %v3441
  %v3494 = vpop.f32.mrf.mxu0
  %v3495 = vadd.f32 0.0, %v3494
  %v3496 = vpop.f32.mrf.mxu0
  %v3497 = vadd.f32 0.0, %v3496
  %3498 = vdwg.mxu0
  %3499 = vmatpush.bf16.msra.mxu0 0
  %3500 = vmatpush.bf16.msra.mxu0 0
  %3501 = vmatpush.bf16.msra.mxu0 0
  %3502 = vmatpush.bf16.msra.mxu0 0
  %3503 = vmatpush.bf16.msra.mxu0 0
  %3504 = vmatpush.bf16.msra.mxu0 0
  %3505 = vmatpush.bf16.msra.mxu0 %v3426
  %3506 = vmatpush.bf16.msra.mxu0 %v3420
  %3507 = vmatmul.bf16.gmra.mxu0 %v3441
  %v3508 = vpop.f32.mrf.mxu0
  %v3509 = vadd.f32 0.0, %v3508
  %v3510 = vpop.f32.mrf.mxu0
  %v3511 = vadd.f32 0.0, %v3510
  %3512 = vdwg.mxu0
  %3513 = vmatpush.bf16.msra.mxu0 0
  %3514 = vmatpush.bf16.msra.mxu0 0
  %3515 = vmatpush.bf16.msra.mxu0 0
  %3516 = vmatpush.bf16.msra.mxu0 0
  %3517 = vmatpush.bf16.msra.mxu0 0
  %3518 = vmatpush.bf16.msra.mxu0 0
  %3519 = vmatpush.bf16.msra.mxu0 %v3427
  %3520 = vmatpush.bf16.msra.mxu0 %v3421
  %3521 = vmatmul.bf16.gmra.mxu0 %v3441
  %v3522 = vpop.f32.mrf.mxu0
  %v3523 = vadd.f32 0.0, %v3522
  %v3524 = vpop.f32.mrf.mxu0
  %v3525 = vadd.f32 0.0, %v3524
  %3526 = vdwg.mxu0
  %v3527 = vadd.f32 %v3368, %v3453
  %v3528 = vadd.f32 %v3369, %v3467
  %v3529 = vadd.f32 %v3370, %v3481
  %v3530 = vadd.f32 %v3371, %v3495
  %v3531 = vadd.f32 %v3372, %v3509
  %v3532 = vadd.f32 %v3373, %v3523
  %v3533 = vadd.f32 %v3374, %v3455
  %v3534 = vadd.f32 %v3375, %v3469
  %v3535 = vadd.f32 %v3376, %v3483
  %v3536 = vadd.f32 %v3377, %v3497
  %v3537 = vadd.f32 %v3378, %v3511
  %v3538 = vadd.f32 %v3379, %v3525
  %s3539 = scalar_lea.vmem %s5, 56
  %v3540 = vld [vmem:[%s3539] sm:$0xf]
  %v3541 = vld [vmem:[%s3539 + $0x4] sm:$0xf]
  %v3544 = vunpack.c.l.b16 %v3540
  %v3545 = vunpack.c.l.b16 %v3541
  %v3546 = vpack.c.b16 %v3545, %v3544
  %3547 = vrot.lane.b32.xlu0 %v3215, 110
  %v3548 = vpop.permute.xlu0 %3547
  %3549 = vrot.lane.b32.xlu0 %v3216, 110
  %v3550 = vpop.permute.xlu0 %3549
  %3551 = vrot.lane.b32.xlu0 %v3217, 110
  %v3552 = vpop.permute.xlu0 %3551
  %3553 = vrot.lane.b32.xlu0 %v3218, 110
  %v3554 = vpop.permute.xlu0 %3553
  %3555 = vrot.lane.b32.xlu0 %v3219, 110
  %v3556 = vpop.permute.xlu0 %3555
  %3557 = vrot.lane.b32.xlu0 %v3220, 110
  %v3558 = vpop.permute.xlu0 %3557
  %3559 = vrot.lane.b32.xlu0 %v3221, 110
  %v3560 = vpop.permute.xlu0 %3559
  %3561 = vrot.lane.b32.xlu0 %v3222, 110
  %v3562 = vpop.permute.xlu0 %3561
  %3563 = vrot.lane.b32.xlu0 %v3223, 110
  %v3564 = vpop.permute.xlu0 %3563
  %3565 = vrot.lane.b32.xlu0 %v3224, 110
  %v3566 = vpop.permute.xlu0 %3565
  %3567 = vrot.lane.b32.xlu0 %v3225, 110
  %v3568 = vpop.permute.xlu0 %3567
  %3569 = vrot.lane.b32.xlu0 %v3226, 110
  %v3570 = vpop.permute.xlu0 %3569
  %3571 = vrot.lane.b32.xlu0 %v3227, 110
  %v3572 = vpop.permute.xlu0 %3571
  %3573 = vrot.lane.b32.xlu0 %v3228, 110
  %v3574 = vpop.permute.xlu0 %3573
  %v3575 = vsel %vm1478, %v3548, %v3550
  %v3576 = vsel %vm1478, %v3550, %v3552
  %v3577 = vsel %vm1478, %v3552, %v3554
  %v3578 = vsel %vm1478, %v3554, %v3556
  %v3579 = vsel %vm1478, %v3556, %v3558
  %v3580 = vsel %vm1478, %v3558, %v3560
  %v3581 = vsel %vm1478, %v3562, %v3564
  %v3582 = vsel %vm1478, %v3564, %v3566
  %v3583 = vsel %vm1478, %v3566, %v3568
  %v3584 = vsel %vm1478, %v3568, %v3570
  %v3585 = vsel %vm1478, %v3570, %v3572
  %v3586 = vsel %vm1478, %v3572, %v3574
  %v3600 = vsel %vm2418, %v3546, 0
  %3602 = vmatpush.bf16.msra.mxu0 0
  %3603 = vmatpush.bf16.msra.mxu0 0
  %3604 = vmatpush.bf16.msra.mxu0 0
  %3605 = vmatpush.bf16.msra.mxu0 0
  %3606 = vmatpush.bf16.msra.mxu0 0
  %3607 = vmatpush.bf16.msra.mxu0 0
  %3608 = vmatpush.bf16.msra.mxu0 %v3581
  %3609 = vmatpush.bf16.msra.mxu0 %v3575
  %3610 = vmatmul.bf16.gmra.mxu0 %v3600
  %v3611 = vpop.f32.mrf.mxu0
  %v3612 = vadd.f32 0.0, %v3611
  %v3613 = vpop.f32.mrf.mxu0
  %v3614 = vadd.f32 0.0, %v3613
  %3615 = vdwg.mxu0
  %3616 = vmatpush.bf16.msra.mxu0 0
  %3617 = vmatpush.bf16.msra.mxu0 0
  %3618 = vmatpush.bf16.msra.mxu0 0
  %3619 = vmatpush.bf16.msra.mxu0 0
  %3620 = vmatpush.bf16.msra.mxu0 0
  %3621 = vmatpush.bf16.msra.mxu0 0
  %3622 = vmatpush.bf16.msra.mxu0 %v3582
  %3623 = vmatpush.bf16.msra.mxu0 %v3576
  %3624 = vmatmul.bf16.gmra.mxu0 %v3600
  %v3625 = vpop.f32.mrf.mxu0
  %v3626 = vadd.f32 0.0, %v3625
  %v3627 = vpop.f32.mrf.mxu0
  %v3628 = vadd.f32 0.0, %v3627
  %3629 = vdwg.mxu0
  %3630 = vmatpush.bf16.msra.mxu0 0
  %3631 = vmatpush.bf16.msra.mxu0 0
  %3632 = vmatpush.bf16.msra.mxu0 0
  %3633 = vmatpush.bf16.msra.mxu0 0
  %3634 = vmatpush.bf16.msra.mxu0 0
  %3635 = vmatpush.bf16.msra.mxu0 0
  %3636 = vmatpush.bf16.msra.mxu0 %v3583
  %3637 = vmatpush.bf16.msra.mxu0 %v3577
  %3638 = vmatmul.bf16.gmra.mxu0 %v3600
  %v3639 = vpop.f32.mrf.mxu0
  %v3640 = vadd.f32 0.0, %v3639
  %v3641 = vpop.f32.mrf.mxu0
  %v3642 = vadd.f32 0.0, %v3641
  %3643 = vdwg.mxu0
  %3644 = vmatpush.bf16.msra.mxu0 0
  %3645 = vmatpush.bf16.msra.mxu0 0
  %3646 = vmatpush.bf16.msra.mxu0 0
  %3647 = vmatpush.bf16.msra.mxu0 0
  %3648 = vmatpush.bf16.msra.mxu0 0
  %3649 = vmatpush.bf16.msra.mxu0 0
  %3650 = vmatpush.bf16.msra.mxu0 %v3584
  %3651 = vmatpush.bf16.msra.mxu0 %v3578
  %3652 = vmatmul.bf16.gmra.mxu0 %v3600
  %v3653 = vpop.f32.mrf.mxu0
  %v3654 = vadd.f32 0.0, %v3653
  %v3655 = vpop.f32.mrf.mxu0
  %v3656 = vadd.f32 0.0, %v3655
  %3657 = vdwg.mxu0
  %3658 = vmatpush.bf16.msra.mxu0 0
  %3659 = vmatpush.bf16.msra.mxu0 0
  %3660 = vmatpush.bf16.msra.mxu0 0
  %3661 = vmatpush.bf16.msra.mxu0 0
  %3662 = vmatpush.bf16.msra.mxu0 0
  %3663 = vmatpush.bf16.msra.mxu0 0
  %3664 = vmatpush.bf16.msra.mxu0 %v3585
  %3665 = vmatpush.bf16.msra.mxu0 %v3579
  %3666 = vmatmul.bf16.gmra.mxu0 %v3600
  %v3667 = vpop.f32.mrf.mxu0
  %v3668 = vadd.f32 0.0, %v3667
  %v3669 = vpop.f32.mrf.mxu0
  %v3670 = vadd.f32 0.0, %v3669
  %3671 = vdwg.mxu0
  %3672 = vmatpush.bf16.msra.mxu0 0
  %3673 = vmatpush.bf16.msra.mxu0 0
  %3674 = vmatpush.bf16.msra.mxu0 0
  %3675 = vmatpush.bf16.msra.mxu0 0
  %3676 = vmatpush.bf16.msra.mxu0 0
  %3677 = vmatpush.bf16.msra.mxu0 0
  %3678 = vmatpush.bf16.msra.mxu0 %v3586
  %3679 = vmatpush.bf16.msra.mxu0 %v3580
  %3680 = vmatmul.bf16.gmra.mxu0 %v3600
  %v3681 = vpop.f32.mrf.mxu0
  %v3682 = vadd.f32 0.0, %v3681
  %v3683 = vpop.f32.mrf.mxu0
  %v3684 = vadd.f32 0.0, %v3683
  %3685 = vdwg.mxu0
  %v3686 = vadd.f32 %v3527, %v3612
  %v3687 = vadd.f32 %v3528, %v3626
  %v3688 = vadd.f32 %v3529, %v3640
  %v3689 = vadd.f32 %v3530, %v3654
  %v3690 = vadd.f32 %v3531, %v3668
  %v3691 = vadd.f32 %v3532, %v3682
  %v3692 = vadd.f32 %v3533, %v3614
  %v3693 = vadd.f32 %v3534, %v3628
  %v3694 = vadd.f32 %v3535, %v3642
  %v3695 = vadd.f32 %v3536, %v3656
  %v3696 = vadd.f32 %v3537, %v3670
  %v3697 = vadd.f32 %v3538, %v3684
  %s3698 = scalar_lea.vmem %s5, 64
  %v3699 = vld [vmem:[%s3698] sm:$0xf]
  %v3700 = vld [vmem:[%s3698 + $0x4] sm:$0xf]
  %v3703 = vunpack.c.l.b16 %v3699
  %v3704 = vunpack.c.l.b16 %v3700
  %v3705 = vpack.c.b16 %v3704, %v3703
  %3706 = vrot.lane.b32.xlu0 %v3215, 109
  %v3707 = vpop.permute.xlu0 %3706
  %3708 = vrot.lane.b32.xlu0 %v3216, 109
  %v3709 = vpop.permute.xlu0 %3708
  %3710 = vrot.lane.b32.xlu0 %v3217, 109
  %v3711 = vpop.permute.xlu0 %3710
  %3712 = vrot.lane.b32.xlu0 %v3218, 109
  %v3713 = vpop.permute.xlu0 %3712
  %3714 = vrot.lane.b32.xlu0 %v3219, 109
  %v3715 = vpop.permute.xlu0 %3714
  %3716 = vrot.lane.b32.xlu0 %v3220, 109
  %v3717 = vpop.permute.xlu0 %3716
  %3718 = vrot.lane.b32.xlu0 %v3221, 109
  %v3719 = vpop.permute.xlu0 %3718
  %3720 = vrot.lane.b32.xlu0 %v3222, 109
  %v3721 = vpop.permute.xlu0 %3720
  %3722 = vrot.lane.b32.xlu0 %v3223, 109
  %v3723 = vpop.permute.xlu0 %3722
  %3724 = vrot.lane.b32.xlu0 %v3224, 109
  %v3725 = vpop.permute.xlu0 %3724
  %3726 = vrot.lane.b32.xlu0 %v3225, 109
  %v3727 = vpop.permute.xlu0 %3726
  %3728 = vrot.lane.b32.xlu0 %v3226, 109
  %v3729 = vpop.permute.xlu0 %3728
  %3730 = vrot.lane.b32.xlu0 %v3227, 109
  %v3731 = vpop.permute.xlu0 %3730
  %3732 = vrot.lane.b32.xlu0 %v3228, 109
  %v3733 = vpop.permute.xlu0 %3732
  %v3734 = vsel %vm1676, %v3707, %v3709
  %v3735 = vsel %vm1676, %v3709, %v3711
  %v3736 = vsel %vm1676, %v3711, %v3713
  %v3737 = vsel %vm1676, %v3713, %v3715
  %v3738 = vsel %vm1676, %v3715, %v3717
  %v3739 = vsel %vm1676, %v3717, %v3719
  %v3740 = vsel %vm1676, %v3721, %v3723
  %v3741 = vsel %vm1676, %v3723, %v3725
  %v3742 = vsel %vm1676, %v3725, %v3727
  %v3743 = vsel %vm1676, %v3727, %v3729
  %v3744 = vsel %vm1676, %v3729, %v3731
  %v3745 = vsel %vm1676, %v3731, %v3733
  %v3759 = vsel %vm2418, %v3705, 0
  %3761 = vmatpush.bf16.msra.mxu0 0
  %3762 = vmatpush.bf16.msra.mxu0 0
  %3763 = vmatpush.bf16.msra.mxu0 0
  %3764 = vmatpush.bf16.msra.mxu0 0
  %3765 = vmatpush.bf16.msra.mxu0 0
  %3766 = vmatpush.bf16.msra.mxu0 0
  %3767 = vmatpush.bf16.msra.mxu0 %v3740
  %3768 = vmatpush.bf16.msra.mxu0 %v3734
  %3769 = vmatmul.bf16.gmra.mxu0 %v3759
  %v3770 = vpop.f32.mrf.mxu0
  %v3771 = vadd.f32 0.0, %v3770
  %v3772 = vpop.f32.mrf.mxu0
  %v3773 = vadd.f32 0.0, %v3772
  %3774 = vdwg.mxu0
  %3775 = vmatpush.bf16.msra.mxu0 0
  %3776 = vmatpush.bf16.msra.mxu0 0
  %3777 = vmatpush.bf16.msra.mxu0 0
  %3778 = vmatpush.bf16.msra.mxu0 0
  %3779 = vmatpush.bf16.msra.mxu0 0
  %3780 = vmatpush.bf16.msra.mxu0 0
  %3781 = vmatpush.bf16.msra.mxu0 %v3741
  %3782 = vmatpush.bf16.msra.mxu0 %v3735
  %3783 = vmatmul.bf16.gmra.mxu0 %v3759
  %v3784 = vpop.f32.mrf.mxu0
  %v3785 = vadd.f32 0.0, %v3784
  %v3786 = vpop.f32.mrf.mxu0
  %v3787 = vadd.f32 0.0, %v3786
  %3788 = vdwg.mxu0
  %3789 = vmatpush.bf16.msra.mxu0 0
  %3790 = vmatpush.bf16.msra.mxu0 0
  %3791 = vmatpush.bf16.msra.mxu0 0
  %3792 = vmatpush.bf16.msra.mxu0 0
  %3793 = vmatpush.bf16.msra.mxu0 0
  %3794 = vmatpush.bf16.msra.mxu0 0
  %3795 = vmatpush.bf16.msra.mxu0 %v3742
  %3796 = vmatpush.bf16.msra.mxu0 %v3736
  %3797 = vmatmul.bf16.gmra.mxu0 %v3759
  %v3798 = vpop.f32.mrf.mxu0
  %v3799 = vadd.f32 0.0, %v3798
  %v3800 = vpop.f32.mrf.mxu0
  %v3801 = vadd.f32 0.0, %v3800
  %3802 = vdwg.mxu0
  %3803 = vmatpush.bf16.msra.mxu0 0
  %3804 = vmatpush.bf16.msra.mxu0 0
  %3805 = vmatpush.bf16.msra.mxu0 0
  %3806 = vmatpush.bf16.msra.mxu0 0
  %3807 = vmatpush.bf16.msra.mxu0 0
  %3808 = vmatpush.bf16.msra.mxu0 0
  %3809 = vmatpush.bf16.msra.mxu0 %v3743
  %3810 = vmatpush.bf16.msra.mxu0 %v3737
  %3811 = vmatmul.bf16.gmra.mxu0 %v3759
  %v3812 = vpop.f32.mrf.mxu0
  %v3813 = vadd.f32 0.0, %v3812
  %v3814 = vpop.f32.mrf.mxu0
  %v3815 = vadd.f32 0.0, %v3814
  %3816 = vdwg.mxu0
  %3817 = vmatpush.bf16.msra.mxu0 0
  %3818 = vmatpush.bf16.msra.mxu0 0
  %3819 = vmatpush.bf16.msra.mxu0 0
  %3820 = vmatpush.bf16.msra.mxu0 0
  %3821 = vmatpush.bf16.msra.mxu0 0
  %3822 = vmatpush.bf16.msra.mxu0 0
  %3823 = vmatpush.bf16.msra.mxu0 %v3744
  %3824 = vmatpush.bf16.msra.mxu0 %v3738
  %3825 = vmatmul.bf16.gmra.mxu0 %v3759
  %v3826 = vpop.f32.mrf.mxu0
  %v3827 = vadd.f32 0.0, %v3826
  %v3828 = vpop.f32.mrf.mxu0
  %v3829 = vadd.f32 0.0, %v3828
  %3830 = vdwg.mxu0
  %3831 = vmatpush.bf16.msra.mxu0 0
  %3832 = vmatpush.bf16.msra.mxu0 0
  %3833 = vmatpush.bf16.msra.mxu0 0
  %3834 = vmatpush.bf16.msra.mxu0 0
  %3835 = vmatpush.bf16.msra.mxu0 0
  %3836 = vmatpush.bf16.msra.mxu0 0
  %3837 = vmatpush.bf16.msra.mxu0 %v3745
  %3838 = vmatpush.bf16.msra.mxu0 %v3739
  %3839 = vmatmul.bf16.gmra.mxu0 %v3759
  %v3840 = vpop.f32.mrf.mxu0
  %v3841 = vadd.f32 0.0, %v3840
  %v3842 = vpop.f32.mrf.mxu0
  %v3843 = vadd.f32 0.0, %v3842
  %3844 = vdwg.mxu0
  %v3845 = vadd.f32 %v3686, %v3771
  %v3846 = vadd.f32 %v3687, %v3785
  %v3847 = vadd.f32 %v3688, %v3799
  %v3848 = vadd.f32 %v3689, %v3813
  %v3849 = vadd.f32 %v3690, %v3827
  %v3850 = vadd.f32 %v3691, %v3841
  %v3851 = vadd.f32 %v3692, %v3773
  %v3852 = vadd.f32 %v3693, %v3787
  %v3853 = vadd.f32 %v3694, %v3801
  %v3854 = vadd.f32 %v3695, %v3815
  %v3855 = vadd.f32 %v3696, %v3829
  %v3856 = vadd.f32 %v3697, %v3843
  %v3857 = vmul.f32 %v3845, %v1846
  %v3858 = vmul.f32 %v3846, %v1847
  %v3859 = vmul.f32 %v3847, %v1848
  %v3860 = vmul.f32 %v3848, %v1849
  %v3861 = vmul.f32 %v3849, %v1850
  %v3862 = vmul.f32 %v3850, %v1851
  %v3863 = vmul.f32 %v3851, %v1846
  %v3864 = vmul.f32 %v3852, %v1847
  %v3865 = vmul.f32 %v3853, %v1848
  %v3866 = vmul.f32 %v3854, %v1849
  %v3867 = vmul.f32 %v3855, %v1850
  %v3868 = vmul.f32 %v3856, %v1851
  %v3869 = vadd.f32 %v3857, %v3858
  %v3870 = vadd.f32 %v3869, %v3859
  %v3871 = vadd.f32 %v3870, %v3860
  %v3872 = vadd.f32 %v3871, %v3861
  %v3873 = vadd.f32 %v3872, %v3862
  %3874 = vadd.xlane.f32.xlu0 %v3873
  %v3875 = vpop.xlane.xlu0 %3874
  %v3876 = vadd.f32 %v3863, %v3864
  %v3877 = vadd.f32 %v3876, %v3865
  %v3878 = vadd.f32 %v3877, %v3866
  %v3879 = vadd.f32 %v3878, %v3867
  %v3880 = vadd.f32 %v3879, %v3868
  %3881 = vadd.xlane.f32.xlu0 %v3880
  %v3882 = vpop.xlane.xlu0 %3881
  %v3883 = vmul.f32 %v3875, 0.001953125
  %v3884 = vmul.f32 %v3882, 0.001953125
  %v3885 = vsub.f32 %v3845, %v3883
  %v3886 = vsub.f32 %v3846, %v3883
  %v3887 = vsub.f32 %v3847, %v3883
  %v3888 = vsub.f32 %v3848, %v3883
  %v3889 = vsub.f32 %v3849, %v3883
  %v3890 = vsub.f32 %v3850, %v3883
  %v3891 = vsub.f32 %v3851, %v3884
  %v3892 = vsub.f32 %v3852, %v3884
  %v3893 = vsub.f32 %v3853, %v3884
  %v3894 = vsub.f32 %v3854, %v3884
  %v3895 = vsub.f32 %v3855, %v3884
  %v3896 = vsub.f32 %v3856, %v3884
  %v3897 = vmul.f32 %v3885, %v1846
  %v3898 = vmul.f32 %v3886, %v1847
  %v3899 = vmul.f32 %v3887, %v1848
  %v3900 = vmul.f32 %v3888, %v1849
  %v3901 = vmul.f32 %v3889, %v1850
  %v3902 = vmul.f32 %v3890, %v1851
  %v3903 = vmul.f32 %v3891, %v1846
  %v3904 = vmul.f32 %v3892, %v1847
  %v3905 = vmul.f32 %v3893, %v1848
  %v3906 = vmul.f32 %v3894, %v1849
  %v3907 = vmul.f32 %v3895, %v1850
  %v3908 = vmul.f32 %v3896, %v1851
  %v3909 = vmul.f32 %v3897, %v3897
  %v3910 = vmul.f32 %v3898, %v3898
  %v3911 = vmul.f32 %v3899, %v3899
  %v3912 = vmul.f32 %v3900, %v3900
  %v3913 = vmul.f32 %v3901, %v3901
  %v3914 = vmul.f32 %v3902, %v3902
  %v3915 = vmul.f32 %v3903, %v3903
  %v3916 = vmul.f32 %v3904, %v3904
  %v3917 = vmul.f32 %v3905, %v3905
  %v3918 = vmul.f32 %v3906, %v3906
  %v3919 = vmul.f32 %v3907, %v3907
  %v3920 = vmul.f32 %v3908, %v3908
  %v3921 = vadd.f32 %v3909, %v3910
  %v3922 = vadd.f32 %v3921, %v3911
  %v3923 = vadd.f32 %v3922, %v3912
  %v3924 = vadd.f32 %v3923, %v3913
  %v3925 = vadd.f32 %v3924, %v3914
  %3926 = vadd.xlane.f32.xlu0 %v3925
  %v3927 = vpop.xlane.xlu0 %3926
  %v3928 = vadd.f32 %v3915, %v3916
  %v3929 = vadd.f32 %v3928, %v3917
  %v3930 = vadd.f32 %v3929, %v3918
  %v3931 = vadd.f32 %v3930, %v3919
  %v3932 = vadd.f32 %v3931, %v3920
  %3933 = vadd.xlane.f32.xlu0 %v3932
  %v3934 = vpop.xlane.xlu0 %3933
  %v3935 = vmul.f32 %v3927, 0.001953125
  %v3936 = vmul.f32 %v3934, 0.001953125
  %v3937 = vadd.f32 %v3935, 1e-05
  %v3938 = vadd.f32 %v3936, 1e-05
  %v3939 = vrsqrt.pop %v3937
  %v3940 = vmul.f32 %v3939, %v3937
  %v3941 = vmul.f32 %v3940, %v3939
  %v3942 = vmul.f32 0.5, %v3941
  %v3943 = vsub.f32 1.5, %v3942
  %v3944 = vmul.f32 %v3939, %v3943
  %vm3945 = vweird.f32 %v3937
  %vm3946 = vweird.f32 %v3939
  %vm3947 = vmor %vm3945, %vm3946
  %v3948 = vsel %vm3947, %v3939, %v3944
  %v3949 = vrsqrt.pop %v3938
  %v3950 = vmul.f32 %v3949, %v3938
  %v3951 = vmul.f32 %v3950, %v3949
  %v3952 = vmul.f32 0.5, %v3951
  %v3953 = vsub.f32 1.5, %v3952
  %v3954 = vmul.f32 %v3949, %v3953
  %vm3955 = vweird.f32 %v3938
  %vm3956 = vweird.f32 %v3949
  %vm3957 = vmor %vm3955, %vm3956
  %v3958 = vsel %vm3957, %v3949, %v3954
  %v3959 = vld [vmem:[%s6] sm:$0xff]
  %v3960 = vld [vmem:[%s6 + $0x8] sm:$0xff]
  %v3961 = vmul.f32 %v3948, %v3959
  %v3962 = vmul.f32 %v3958, %v3960
  %3964 = vset.pattern.permute.xlu0 0
  %3965 = vperm.xlu0 %3964, %v3961
  %v3966 = vpop.permute.xlu0 %3965
  %3969 = vset.pattern.permute.xlu0 0
  %3970 = vperm.xlu0 %3969, %v3962
  %v3971 = vpop.permute.xlu0 %3970
  %v3973 = vmul.f32 %v3897, %v3966
  %v3974 = vmul.f32 %v3898, %v3966
  %v3975 = vmul.f32 %v3899, %v3966
  %v3976 = vmul.f32 %v3900, %v3966
  %v3977 = vmul.f32 %v3901, %v3966
  %v3978 = vmul.f32 %v3902, %v3966
  %v3979 = vmul.f32 %v3903, %v3971
  %v3980 = vmul.f32 %v3904, %v3971
  %v3981 = vmul.f32 %v3905, %v3971
  %v3982 = vmul.f32 %v3906, %v3971
  %v3983 = vmul.f32 %v3907, %v3971
  %v3984 = vmul.f32 %v3908, %v3971
  %v3985 = vld [vmem:[%s7] sm:$0xff]
  %v3986 = vld [vmem:[%s7 + $0x8] sm:$0xff]
  %3988 = vset.pattern.permute.xlu0 0
  %3989 = vperm.xlu0 %3988, %v3985
  %v3990 = vpop.permute.xlu0 %3989
  %3993 = vset.pattern.permute.xlu0 0
  %3994 = vperm.xlu0 %3993, %v3986
  %v3995 = vpop.permute.xlu0 %3994
  %v3997 = vadd.f32 %v3973, %v3990
  %v3998 = vadd.f32 %v3974, %v3990
  %v3999 = vadd.f32 %v3975, %v3990
  %v4000 = vadd.f32 %v3976, %v3990
  %v4001 = vadd.f32 %v3977, %v3990
  %v4002 = vadd.f32 %v3978, %v3990
  %v4003 = vadd.f32 %v3979, %v3995
  %v4004 = vadd.f32 %v3980, %v3995
  %v4005 = vadd.f32 %v3981, %v3995
  %v4006 = vadd.f32 %v3982, %v3995
  %v4007 = vadd.f32 %v3983, %v3995
  %v4008 = vadd.f32 %v3984, %v3995
  %vm4009 = vcmp.ge.f32.partialorder %v3997, 0.0
  %vm4010 = vcmp.ge.f32.partialorder %v3998, 0.0
  %vm4011 = vcmp.ge.f32.partialorder %v3999, 0.0
  %vm4012 = vcmp.ge.f32.partialorder %v4000, 0.0
  %vm4013 = vcmp.ge.f32.partialorder %v4001, 0.0
  %vm4014 = vcmp.ge.f32.partialorder %v4002, 0.0
  %vm4015 = vcmp.ge.f32.partialorder %v4003, 0.0
  %vm4016 = vcmp.ge.f32.partialorder %v4004, 0.0
  %vm4017 = vcmp.ge.f32.partialorder %v4005, 0.0
  %vm4018 = vcmp.ge.f32.partialorder %v4006, 0.0
  %vm4019 = vcmp.ge.f32.partialorder %v4007, 0.0
  %vm4020 = vcmp.ge.f32.partialorder %v4008, 0.0
  %v4021 = vmul.f32 %v3997, 0.2
  %v4022 = vmul.f32 %v3998, 0.2
  %v4023 = vmul.f32 %v3999, 0.2
  %v4024 = vmul.f32 %v4000, 0.2
  %v4025 = vmul.f32 %v4001, 0.2
  %v4026 = vmul.f32 %v4002, 0.2
  %v4027 = vmul.f32 %v4003, 0.2
  %v4028 = vmul.f32 %v4004, 0.2
  %v4029 = vmul.f32 %v4005, 0.2
  %v4030 = vmul.f32 %v4006, 0.2
  %v4031 = vmul.f32 %v4007, 0.2
  %v4032 = vmul.f32 %v4008, 0.2
  %v4033 = vsel %vm4009, %v3997, %v4021
  %v4034 = vsel %vm4010, %v3998, %v4022
  %v4035 = vsel %vm4011, %v3999, %v4023
  %v4036 = vsel %vm4012, %v4000, %v4024
  %v4037 = vsel %vm4013, %v4001, %v4025
  %v4038 = vsel %vm4014, %v4002, %v4026
  %v4039 = vsel %vm4015, %v4003, %v4027
  %v4040 = vsel %vm4016, %v4004, %v4028
  %v4041 = vsel %vm4017, %v4005, %v4029
  %v4042 = vsel %vm4018, %v4006, %v4030
  %v4043 = vsel %vm4019, %v4007, %v4031
  %v4044 = vsel %vm4020, %v4008, %v4032
  %v4045 = vmul.f32 %v4033, %v1846
  %v4046 = vmul.f32 %v4034, %v1847
  %v4047 = vmul.f32 %v4035, %v1848
  %v4048 = vmul.f32 %v4036, %v1849
  %v4049 = vmul.f32 %v4037, %v1850
  %v4050 = vmul.f32 %v4038, %v1851
  %v4051 = vmul.f32 %v4039, %v1846
  %v4052 = vmul.f32 %v4040, %v1847
  %v4053 = vmul.f32 %v4041, %v1848
  %v4054 = vmul.f32 %v4042, %v1849
  %v4055 = vmul.f32 %v4043, %v1850
  %v4056 = vmul.f32 %v4044, %v1851
  %v4057 = vpack.c.bf16 %v4046, %v4045
  %v4058 = vpack.c.bf16 %v4048, %v4047
  %v4059 = vpack.c.bf16 %v4050, %v4049
  %v4060 = vpack.c.bf16 %v4052, %v4051
  %v4061 = vpack.c.bf16 %v4054, %v4053
  %v4062 = vpack.c.bf16 %v4056, %v4055
  %4063 = vst [vmem:[#allocation2 + $0x4] sm:$0xff] %v4057
  %4064 = vst [vmem:[#allocation2 + $0xc] sm:$0xff] %v4058
  %4065 = vst [vmem:[#allocation2 + $0x14] sm:$0xff] %v4059
  %4066 = vst [vmem:[#allocation2 + $0x24] sm:$0xff] %v4060
  %4067 = vst [vmem:[#allocation2 + $0x2c] sm:$0xff] %v4061
  %4068 = vst [vmem:[#allocation2 + $0x34] sm:$0xff] %v4062
  %v4069 = vld [vmem:[#allocation2] sm:$0xff]
  %v4070 = vld [vmem:[#allocation2 + $0x8] sm:$0xff]
  %v4071 = vld [vmem:[#allocation2 + $0x10] sm:$0xff]
  %v4072 = vld [vmem:[#allocation2 + $0x18] sm:$0xf]
  %v4073 = vld [vmem:[#allocation2 + $0x20] sm:$0xff]
  %v4074 = vld [vmem:[#allocation2 + $0x28] sm:$0xff]
  %v4075 = vld [vmem:[#allocation2 + $0x30] sm:$0xff]
  %v4076 = vld [vmem:[#allocation2 + $0x38] sm:$0xf]
  %v4077 = vld [vmem:[%s8] sm:$0xf]
  %s4078 = scalar_lea.vmem %s8, 4
  %v4079 = vld [vmem:[%s4078] sm:$0xf]
  %v4088 = vunpack.c.l.b16 %v4069
  %v4089 = vunpack.c.h.b16 %v4069
  %v4090 = vunpack.c.l.b16 %v4070
  %v4091 = vunpack.c.h.b16 %v4070
  %v4092 = vunpack.c.l.b16 %v4071
  %v4093 = vunpack.c.h.b16 %v4071
  %v4094 = vunpack.c.l.b16 %v4072
  %v4095 = vunpack.c.l.b16 %v4073
  %v4096 = vunpack.c.h.b16 %v4073
  %v4097 = vunpack.c.l.b16 %v4074
  %v4098 = vunpack.c.h.b16 %v4074
  %v4099 = vunpack.c.l.b16 %v4075
  %v4100 = vunpack.c.h.b16 %v4075
  %v4101 = vunpack.c.l.b16 %v4076
  %v4102 = vpack.c.b16 %v4095, %v4088
  %v4103 = vpack.c.b16 %v4096, %v4089
  %v4104 = vpack.c.b16 %v4097, %v4090
  %v4105 = vpack.c.b16 %v4098, %v4091
  %v4106 = vpack.c.b16 %v4099, %v4092
  %v4107 = vpack.c.b16 %v4100, %v4093
  %v4108 = vpack.c.b16 %v4101, %v4094
  %4109 = vrot.lane.b32.xlu0 %v4102, 18
  %v4110 = vpop.permute.xlu0 %4109
  %4111 = vrot.lane.b32.xlu0 %v4103, 18
  %v4112 = vpop.permute.xlu0 %4111
  %4113 = vrot.lane.b32.xlu0 %v4104, 18
  %v4114 = vpop.permute.xlu0 %4113
  %4115 = vrot.lane.b32.xlu0 %v4105, 18
  %v4116 = vpop.permute.xlu0 %4115
  %4117 = vrot.lane.b32.xlu0 %v4106, 18
  %v4118 = vpop.permute.xlu0 %4117
  %4119 = vrot.lane.b32.xlu0 %v4107, 18
  %v4120 = vpop.permute.xlu0 %4119
  %4121 = vrot.lane.b32.xlu0 %v4108, 18
  %v4122 = vpop.permute.xlu0 %4121
  %v4123 = vsel %vm124, %v4110, %v4112
  %v4124 = vsel %vm124, %v4112, %v4114
  %v4125 = vsel %vm124, %v4114, %v4116
  %v4126 = vsel %vm124, %v4116, %v4118
  %v4127 = vsel %vm124, %v4118, %v4120
  %v4128 = vsel %vm124, %v4120, %v4122
  %vm4135 = vcmask 130048
  %v4137 = vsel %vm4135, %v4079, 0
  %4139 = vmatpush.bf16.msra.mxu0 0
  %4140 = vmatpush.bf16.msra.mxu0 0
  %4141 = vmatpush.bf16.msra.mxu0 0
  %4142 = vmatpush.bf16.msra.mxu0 0
  %4143 = vmatpush.bf16.msra.mxu0 0
  %4144 = vmatpush.bf16.msra.mxu0 0
  %4145 = vmatpush.bf16.msra.mxu0 0
  %4146 = vmatpush.bf16.msra.mxu0 %v4123
  %4147 = vmatmul.bf16.gmra.mxu0 %v4137
  %v4148 = vpop.f32.mrf.mxu0
  %v4149 = vadd.f32 0.0, %v4148
  %v4150 = vpop.f32.mrf.mxu0
  %4151 = vdwg.mxu0
  %4152 = vmatpush.bf16.msra.mxu0 0
  %4153 = vmatpush.bf16.msra.mxu0 0
  %4154 = vmatpush.bf16.msra.mxu0 0
  %4155 = vmatpush.bf16.msra.mxu0 0
  %4156 = vmatpush.bf16.msra.mxu0 0
  %4157 = vmatpush.bf16.msra.mxu0 0
  %4158 = vmatpush.bf16.msra.mxu0 0
  %4159 = vmatpush.bf16.msra.mxu0 %v4124
  %4160 = vmatmul.bf16.gmra.mxu0 %v4137
  %v4161 = vpop.f32.mrf.mxu0
  %v4162 = vadd.f32 0.0, %v4161
  %v4163 = vpop.f32.mrf.mxu0
  %4164 = vdwg.mxu0
  %4165 = vmatpush.bf16.msra.mxu0 0
  %4166 = vmatpush.bf16.msra.mxu0 0
  %4167 = vmatpush.bf16.msra.mxu0 0
  %4168 = vmatpush.bf16.msra.mxu0 0
  %4169 = vmatpush.bf16.msra.mxu0 0
  %4170 = vmatpush.bf16.msra.mxu0 0
  %4171 = vmatpush.bf16.msra.mxu0 0
  %4172 = vmatpush.bf16.msra.mxu0 %v4125
  %4173 = vmatmul.bf16.gmra.mxu0 %v4137
  %v4174 = vpop.f32.mrf.mxu0
  %v4175 = vadd.f32 0.0, %v4174
  %v4176 = vpop.f32.mrf.mxu0
  %4177 = vdwg.mxu0
  %4178 = vmatpush.bf16.msra.mxu0 0
  %4179 = vmatpush.bf16.msra.mxu0 0
  %4180 = vmatpush.bf16.msra.mxu0 0
  %4181 = vmatpush.bf16.msra.mxu0 0
  %4182 = vmatpush.bf16.msra.mxu0 0
  %4183 = vmatpush.bf16.msra.mxu0 0
  %4184 = vmatpush.bf16.msra.mxu0 0
  %4185 = vmatpush.bf16.msra.mxu0 %v4126
  %4186 = vmatmul.bf16.gmra.mxu0 %v4137
  %v4187 = vpop.f32.mrf.mxu0
  %v4188 = vadd.f32 0.0, %v4187
  %v4189 = vpop.f32.mrf.mxu0
  %4190 = vdwg.mxu0
  %4191 = vmatpush.bf16.msra.mxu0 0
  %4192 = vmatpush.bf16.msra.mxu0 0
  %4193 = vmatpush.bf16.msra.mxu0 0
  %4194 = vmatpush.bf16.msra.mxu0 0
  %4195 = vmatpush.bf16.msra.mxu0 0
  %4196 = vmatpush.bf16.msra.mxu0 0
  %4197 = vmatpush.bf16.msra.mxu0 0
  %4198 = vmatpush.bf16.msra.mxu0 %v4127
  %4199 = vmatmul.bf16.gmra.mxu0 %v4137
  %v4200 = vpop.f32.mrf.mxu0
  %v4201 = vadd.f32 0.0, %v4200
  %v4202 = vpop.f32.mrf.mxu0
  %4203 = vdwg.mxu0
  %4204 = vmatpush.bf16.msra.mxu0 0
  %4205 = vmatpush.bf16.msra.mxu0 0
  %4206 = vmatpush.bf16.msra.mxu0 0
  %4207 = vmatpush.bf16.msra.mxu0 0
  %4208 = vmatpush.bf16.msra.mxu0 0
  %4209 = vmatpush.bf16.msra.mxu0 0
  %4210 = vmatpush.bf16.msra.mxu0 0
  %4211 = vmatpush.bf16.msra.mxu0 %v4128
  %4212 = vmatmul.bf16.gmra.mxu0 %v4137
  %v4213 = vpop.f32.mrf.mxu0
  %v4214 = vadd.f32 0.0, %v4213
  %v4215 = vpop.f32.mrf.mxu0
  %4216 = vdwg.mxu0
  %4217 = vrot.lane.b32.xlu0 %v4102, 19
  %v4218 = vpop.permute.xlu0 %4217
  %4219 = vrot.lane.b32.xlu0 %v4103, 19
  %v4220 = vpop.permute.xlu0 %4219
  %4221 = vrot.lane.b32.xlu0 %v4104, 19
  %v4222 = vpop.permute.xlu0 %4221
  %4223 = vrot.lane.b32.xlu0 %v4105, 19
  %v4224 = vpop.permute.xlu0 %4223
  %4225 = vrot.lane.b32.xlu0 %v4106, 19
  %v4226 = vpop.permute.xlu0 %4225
  %4227 = vrot.lane.b32.xlu0 %v4107, 19
  %v4228 = vpop.permute.xlu0 %4227
  %4229 = vrot.lane.b32.xlu0 %v4108, 19
  %v4230 = vpop.permute.xlu0 %4229
  %v4231 = vsel %vm295, %v4218, %v4220
  %v4232 = vsel %vm295, %v4220, %v4222
  %v4233 = vsel %vm295, %v4222, %v4224
  %v4234 = vsel %vm295, %v4224, %v4226
  %v4235 = vsel %vm295, %v4226, %v4228
  %v4236 = vsel %vm295, %v4228, %v4230
  %v4244 = vsel %vm4135, %v4077, 0
  %4246 = vmatpush.bf16.msra.mxu0 0
  %4247 = vmatpush.bf16.msra.mxu0 0
  %4248 = vmatpush.bf16.msra.mxu0 0
  %4249 = vmatpush.bf16.msra.mxu0 0
  %4250 = vmatpush.bf16.msra.mxu0 0
  %4251 = vmatpush.bf16.msra.mxu0 0
  %4252 = vmatpush.bf16.msra.mxu0 0
  %4253 = vmatpush.bf16.msra.mxu0 %v4231
  %4254 = vmatmul.bf16.gmra.mxu0 %v4244
  %v4255 = vpop.f32.mrf.mxu0
  %v4256 = vadd.f32 %v4149, %v4255
  %v4257 = vpop.f32.mrf.mxu0
  %4258 = vdwg.mxu0
  %4259 = vmatpush.bf16.msra.mxu0 0
  %4260 = vmatpush.bf16.msra.mxu0 0
  %4261 = vmatpush.bf16.msra.mxu0 0
  %4262 = vmatpush.bf16.msra.mxu0 0
  %4263 = vmatpush.bf16.msra.mxu0 0
  %4264 = vmatpush.bf16.msra.mxu0 0
  %4265 = vmatpush.bf16.msra.mxu0 0
  %4266 = vmatpush.bf16.msra.mxu0 %v4232
  %4267 = vmatmul.bf16.gmra.mxu0 %v4244
  %v4268 = vpop.f32.mrf.mxu0
  %v4269 = vadd.f32 %v4162, %v4268
  %v4270 = vpop.f32.mrf.mxu0
  %4271 = vdwg.mxu0
  %4272 = vmatpush.bf16.msra.mxu0 0
  %4273 = vmatpush.bf16.msra.mxu0 0
  %4274 = vmatpush.bf16.msra.mxu0 0
  %4275 = vmatpush.bf16.msra.mxu0 0
  %4276 = vmatpush.bf16.msra.mxu0 0
  %4277 = vmatpush.bf16.msra.mxu0 0
  %4278 = vmatpush.bf16.msra.mxu0 0
  %4279 = vmatpush.bf16.msra.mxu0 %v4233
  %4280 = vmatmul.bf16.gmra.mxu0 %v4244
  %v4281 = vpop.f32.mrf.mxu0
  %v4282 = vadd.f32 %v4175, %v4281
  %v4283 = vpop.f32.mrf.mxu0
  %4284 = vdwg.mxu0
  %4285 = vmatpush.bf16.msra.mxu0 0
  %4286 = vmatpush.bf16.msra.mxu0 0
  %4287 = vmatpush.bf16.msra.mxu0 0
  %4288 = vmatpush.bf16.msra.mxu0 0
  %4289 = vmatpush.bf16.msra.mxu0 0
  %4290 = vmatpush.bf16.msra.mxu0 0
  %4291 = vmatpush.bf16.msra.mxu0 0
  %4292 = vmatpush.bf16.msra.mxu0 %v4234
  %4293 = vmatmul.bf16.gmra.mxu0 %v4244
  %v4294 = vpop.f32.mrf.mxu0
  %v4295 = vadd.f32 %v4188, %v4294
  %v4296 = vpop.f32.mrf.mxu0
  %4297 = vdwg.mxu0
  %4298 = vmatpush.bf16.msra.mxu0 0
  %4299 = vmatpush.bf16.msra.mxu0 0
  %4300 = vmatpush.bf16.msra.mxu0 0
  %4301 = vmatpush.bf16.msra.mxu0 0
  %4302 = vmatpush.bf16.msra.mxu0 0
  %4303 = vmatpush.bf16.msra.mxu0 0
  %4304 = vmatpush.bf16.msra.mxu0 0
  %4305 = vmatpush.bf16.msra.mxu0 %v4235
  %4306 = vmatmul.bf16.gmra.mxu0 %v4244
  %v4307 = vpop.f32.mrf.mxu0
  %v4308 = vadd.f32 %v4201, %v4307
  %v4309 = vpop.f32.mrf.mxu0
  %4310 = vdwg.mxu0
  %4311 = vmatpush.bf16.msra.mxu0 0
  %4312 = vmatpush.bf16.msra.mxu0 0
  %4313 = vmatpush.bf16.msra.mxu0 0
  %4314 = vmatpush.bf16.msra.mxu0 0
  %4315 = vmatpush.bf16.msra.mxu0 0
  %4316 = vmatpush.bf16.msra.mxu0 0
  %4317 = vmatpush.bf16.msra.mxu0 0
  %4318 = vmatpush.bf16.msra.mxu0 %v4236
  %4319 = vmatmul.bf16.gmra.mxu0 %v4244
  %v4320 = vpop.f32.mrf.mxu0
  %v4321 = vadd.f32 %v4214, %v4320
  %v4322 = vpop.f32.mrf.mxu0
  %4323 = vdwg.mxu0
  %s4324 = scalar_lea.vmem %s8, 8
  %v4325 = vld [vmem:[%s4324] sm:$0xf]
  %4326 = vrot.lane.b32.xlu0 %v4102, 17
  %v4327 = vpop.permute.xlu0 %4326
  %4328 = vrot.lane.b32.xlu0 %v4103, 17
  %v4329 = vpop.permute.xlu0 %4328
  %4330 = vrot.lane.b32.xlu0 %v4104, 17
  %v4331 = vpop.permute.xlu0 %4330
  %4332 = vrot.lane.b32.xlu0 %v4105, 17
  %v4333 = vpop.permute.xlu0 %4332
  %4334 = vrot.lane.b32.xlu0 %v4106, 17
  %v4335 = vpop.permute.xlu0 %4334
  %4336 = vrot.lane.b32.xlu0 %v4107, 17
  %v4337 = vpop.permute.xlu0 %4336
  %4338 = vrot.lane.b32.xlu0 %v4108, 17
  %v4339 = vpop.permute.xlu0 %4338
  %v4340 = vsel %vm469, %v4327, %v4329
  %v4341 = vsel %vm469, %v4329, %v4331
  %v4342 = vsel %vm469, %v4331, %v4333
  %v4343 = vsel %vm469, %v4333, %v4335
  %v4344 = vsel %vm469, %v4335, %v4337
  %v4345 = vsel %vm469, %v4337, %v4339
  %v4353 = vsel %vm4135, %v4325, 0
  %4355 = vmatpush.bf16.msra.mxu0 0
  %4356 = vmatpush.bf16.msra.mxu0 0
  %4357 = vmatpush.bf16.msra.mxu0 0
  %4358 = vmatpush.bf16.msra.mxu0 0
  %4359 = vmatpush.bf16.msra.mxu0 0
  %4360 = vmatpush.bf16.msra.mxu0 0
  %4361 = vmatpush.bf16.msra.mxu0 0
  %4362 = vmatpush.bf16.msra.mxu0 %v4340
  %4363 = vmatmul.bf16.gmra.mxu0 %v4353
  %v4364 = vpop.f32.mrf.mxu0
  %v4365 = vadd.f32 0.0, %v4364
  %v4366 = vpop.f32.mrf.mxu0
  %4367 = vdwg.mxu0
  %4368 = vmatpush.bf16.msra.mxu0 0
  %4369 = vmatpush.bf16.msra.mxu0 0
  %4370 = vmatpush.bf16.msra.mxu0 0
  %4371 = vmatpush.bf16.msra.mxu0 0
  %4372 = vmatpush.bf16.msra.mxu0 0
  %4373 = vmatpush.bf16.msra.mxu0 0
  %4374 = vmatpush.bf16.msra.mxu0 0
  %4375 = vmatpush.bf16.msra.mxu0 %v4341
  %4376 = vmatmul.bf16.gmra.mxu0 %v4353
  %v4377 = vpop.f32.mrf.mxu0
  %v4378 = vadd.f32 0.0, %v4377
  %v4379 = vpop.f32.mrf.mxu0
  %4380 = vdwg.mxu0
  %4381 = vmatpush.bf16.msra.mxu0 0
  %4382 = vmatpush.bf16.msra.mxu0 0
  %4383 = vmatpush.bf16.msra.mxu0 0
  %4384 = vmatpush.bf16.msra.mxu0 0
  %4385 = vmatpush.bf16.msra.mxu0 0
  %4386 = vmatpush.bf16.msra.mxu0 0
  %4387 = vmatpush.bf16.msra.mxu0 0
  %4388 = vmatpush.bf16.msra.mxu0 %v4342
  %4389 = vmatmul.bf16.gmra.mxu0 %v4353
  %v4390 = vpop.f32.mrf.mxu0
  %v4391 = vadd.f32 0.0, %v4390
  %v4392 = vpop.f32.mrf.mxu0
  %4393 = vdwg.mxu0
  %4394 = vmatpush.bf16.msra.mxu0 0
  %4395 = vmatpush.bf16.msra.mxu0 0
  %4396 = vmatpush.bf16.msra.mxu0 0
  %4397 = vmatpush.bf16.msra.mxu0 0
  %4398 = vmatpush.bf16.msra.mxu0 0
  %4399 = vmatpush.bf16.msra.mxu0 0
  %4400 = vmatpush.bf16.msra.mxu0 0
  %4401 = vmatpush.bf16.msra.mxu0 %v4343
  %4402 = vmatmul.bf16.gmra.mxu0 %v4353
  %v4403 = vpop.f32.mrf.mxu0
  %v4404 = vadd.f32 0.0, %v4403
  %v4405 = vpop.f32.mrf.mxu0
  %4406 = vdwg.mxu0
  %4407 = vmatpush.bf16.msra.mxu0 0
  %4408 = vmatpush.bf16.msra.mxu0 0
  %4409 = vmatpush.bf16.msra.mxu0 0
  %4410 = vmatpush.bf16.msra.mxu0 0
  %4411 = vmatpush.bf16.msra.mxu0 0
  %4412 = vmatpush.bf16.msra.mxu0 0
  %4413 = vmatpush.bf16.msra.mxu0 0
  %4414 = vmatpush.bf16.msra.mxu0 %v4344
  %4415 = vmatmul.bf16.gmra.mxu0 %v4353
  %v4416 = vpop.f32.mrf.mxu0
  %v4417 = vadd.f32 0.0, %v4416
  %v4418 = vpop.f32.mrf.mxu0
  %4419 = vdwg.mxu0
  %4420 = vmatpush.bf16.msra.mxu0 0
  %4421 = vmatpush.bf16.msra.mxu0 0
  %4422 = vmatpush.bf16.msra.mxu0 0
  %4423 = vmatpush.bf16.msra.mxu0 0
  %4424 = vmatpush.bf16.msra.mxu0 0
  %4425 = vmatpush.bf16.msra.mxu0 0
  %4426 = vmatpush.bf16.msra.mxu0 0
  %4427 = vmatpush.bf16.msra.mxu0 %v4345
  %4428 = vmatmul.bf16.gmra.mxu0 %v4353
  %v4429 = vpop.f32.mrf.mxu0
  %v4430 = vadd.f32 0.0, %v4429
  %v4431 = vpop.f32.mrf.mxu0
  %4432 = vdwg.mxu0
  %v4433 = vadd.f32 %v4256, %v4365
  %v4434 = vadd.f32 %v4269, %v4378
  %v4435 = vadd.f32 %v4282, %v4391
  %v4436 = vadd.f32 %v4295, %v4404
  %v4437 = vadd.f32 %v4308, %v4417
  %v4438 = vadd.f32 %v4321, %v4430
  %s4439 = scalar_lea.vmem %s8, 12
  %v4440 = vld [vmem:[%s4439] sm:$0xf]
  %4441 = vrot.lane.b32.xlu0 %v4102, 1
  %v4442 = vpop.permute.xlu0 %4441
  %4443 = vrot.lane.b32.xlu0 %v4103, 1
  %v4444 = vpop.permute.xlu0 %4443
  %4445 = vrot.lane.b32.xlu0 %v4104, 1
  %v4446 = vpop.permute.xlu0 %4445
  %4447 = vrot.lane.b32.xlu0 %v4105, 1
  %v4448 = vpop.permute.xlu0 %4447
  %4449 = vrot.lane.b32.xlu0 %v4106, 1
  %v4450 = vpop.permute.xlu0 %4449
  %4451 = vrot.lane.b32.xlu0 %v4107, 1
  %v4452 = vpop.permute.xlu0 %4451
  %4453 = vrot.lane.b32.xlu0 %v4108, 1
  %v4454 = vpop.permute.xlu0 %4453
  %v4455 = vsel %vm667, %v4442, %v4444
  %v4456 = vsel %vm667, %v4444, %v4446
  %v4457 = vsel %vm667, %v4446, %v4448
  %v4458 = vsel %vm667, %v4448, %v4450
  %v4459 = vsel %vm667, %v4450, %v4452
  %v4460 = vsel %vm667, %v4452, %v4454
  %v4468 = vsel %vm4135, %v4440, 0
  %4470 = vmatpush.bf16.msra.mxu0 0
  %4471 = vmatpush.bf16.msra.mxu0 0
  %4472 = vmatpush.bf16.msra.mxu0 0
  %4473 = vmatpush.bf16.msra.mxu0 0
  %4474 = vmatpush.bf16.msra.mxu0 0
  %4475 = vmatpush.bf16.msra.mxu0 0
  %4476 = vmatpush.bf16.msra.mxu0 0
  %4477 = vmatpush.bf16.msra.mxu0 %v4455
  %4478 = vmatmul.bf16.gmra.mxu0 %v4468
  %v4479 = vpop.f32.mrf.mxu0
  %v4480 = vadd.f32 0.0, %v4479
  %v4481 = vpop.f32.mrf.mxu0
  %4482 = vdwg.mxu0
  %4483 = vmatpush.bf16.msra.mxu0 0
  %4484 = vmatpush.bf16.msra.mxu0 0
  %4485 = vmatpush.bf16.msra.mxu0 0
  %4486 = vmatpush.bf16.msra.mxu0 0
  %4487 = vmatpush.bf16.msra.mxu0 0
  %4488 = vmatpush.bf16.msra.mxu0 0
  %4489 = vmatpush.bf16.msra.mxu0 0
  %4490 = vmatpush.bf16.msra.mxu0 %v4456
  %4491 = vmatmul.bf16.gmra.mxu0 %v4468
  %v4492 = vpop.f32.mrf.mxu0
  %v4493 = vadd.f32 0.0, %v4492
  %v4494 = vpop.f32.mrf.mxu0
  %4495 = vdwg.mxu0
  %4496 = vmatpush.bf16.msra.mxu0 0
  %4497 = vmatpush.bf16.msra.mxu0 0
  %4498 = vmatpush.bf16.msra.mxu0 0
  %4499 = vmatpush.bf16.msra.mxu0 0
  %4500 = vmatpush.bf16.msra.mxu0 0
  %4501 = vmatpush.bf16.msra.mxu0 0
  %4502 = vmatpush.bf16.msra.mxu0 0
  %4503 = vmatpush.bf16.msra.mxu0 %v4457
  %4504 = vmatmul.bf16.gmra.mxu0 %v4468
  %v4505 = vpop.f32.mrf.mxu0
  %v4506 = vadd.f32 0.0, %v4505
  %v4507 = vpop.f32.mrf.mxu0
  %4508 = vdwg.mxu0
  %4509 = vmatpush.bf16.msra.mxu0 0
  %4510 = vmatpush.bf16.msra.mxu0 0
  %4511 = vmatpush.bf16.msra.mxu0 0
  %4512 = vmatpush.bf16.msra.mxu0 0
  %4513 = vmatpush.bf16.msra.mxu0 0
  %4514 = vmatpush.bf16.msra.mxu0 0
  %4515 = vmatpush.bf16.msra.mxu0 0
  %4516 = vmatpush.bf16.msra.mxu0 %v4458
  %4517 = vmatmul.bf16.gmra.mxu0 %v4468
  %v4518 = vpop.f32.mrf.mxu0
  %v4519 = vadd.f32 0.0, %v4518
  %v4520 = vpop.f32.mrf.mxu0
  %4521 = vdwg.mxu0
  %4522 = vmatpush.bf16.msra.mxu0 0
  %4523 = vmatpush.bf16.msra.mxu0 0
  %4524 = vmatpush.bf16.msra.mxu0 0
  %4525 = vmatpush.bf16.msra.mxu0 0
  %4526 = vmatpush.bf16.msra.mxu0 0
  %4527 = vmatpush.bf16.msra.mxu0 0
  %4528 = vmatpush.bf16.msra.mxu0 0
  %4529 = vmatpush.bf16.msra.mxu0 %v4459
  %4530 = vmatmul.bf16.gmra.mxu0 %v4468
  %v4531 = vpop.f32.mrf.mxu0
  %v4532 = vadd.f32 0.0, %v4531
  %v4533 = vpop.f32.mrf.mxu0
  %4534 = vdwg.mxu0
  %4535 = vmatpush.bf16.msra.mxu0 0
  %4536 = vmatpush.bf16.msra.mxu0 0
  %4537 = vmatpush.bf16.msra.mxu0 0
  %4538 = vmatpush.bf16.msra.mxu0 0
  %4539 = vmatpush.bf16.msra.mxu0 0
  %4540 = vmatpush.bf16.msra.mxu0 0
  %4541 = vmatpush.bf16.msra.mxu0 0
  %4542 = vmatpush.bf16.msra.mxu0 %v4460
  %4543 = vmatmul.bf16.gmra.mxu0 %v4468
  %v4544 = vpop.f32.mrf.mxu0
  %v4545 = vadd.f32 0.0, %v4544
  %v4546 = vpop.f32.mrf.mxu0
  %4547 = vdwg.mxu0
  %v4548 = vadd.f32 %v4433, %v4480
  %v4549 = vadd.f32 %v4434, %v4493
  %v4550 = vadd.f32 %v4435, %v4506
  %v4551 = vadd.f32 %v4436, %v4519
  %v4552 = vadd.f32 %v4437, %v4532
  %v4553 = vadd.f32 %v4438, %v4545
  %v4554 = vld [vmem:[#allocation2 + $0x4] sm:$0xff]
  %v4555 = vld [vmem:[#allocation2 + $0xc] sm:$0xff]
  %v4556 = vld [vmem:[#allocation2 + $0x14] sm:$0xff]
  %v4557 = vld [vmem:[#allocation2 + $0x24] sm:$0xff]
  %v4558 = vld [vmem:[#allocation2 + $0x2c] sm:$0xff]
  %v4559 = vld [vmem:[#allocation2 + $0x34] sm:$0xff]
  %s4560 = scalar_lea.vmem %s8, 16
  %v4561 = vld [vmem:[%s4560] sm:$0xf]
  %v4568 = vunpack.c.l.b16 %v4554
  %v4569 = vunpack.c.h.b16 %v4554
  %v4570 = vunpack.c.l.b16 %v4555
  %v4571 = vunpack.c.h.b16 %v4555
  %v4572 = vunpack.c.l.b16 %v4556
  %v4573 = vunpack.c.h.b16 %v4556
  %v4574 = vunpack.c.l.b16 %v4557
  %v4575 = vunpack.c.h.b16 %v4557
  %v4576 = vunpack.c.l.b16 %v4558
  %v4577 = vunpack.c.h.b16 %v4558
  %v4578 = vunpack.c.l.b16 %v4559
  %v4579 = vunpack.c.h.b16 %v4559
  %v4580 = vpack.c.b16 %v4574, %v4568
  %v4581 = vpack.c.b16 %v4575, %v4569
  %v4582 = vpack.c.b16 %v4576, %v4570
  %v4583 = vpack.c.b16 %v4577, %v4571
  %v4584 = vpack.c.b16 %v4578, %v4572
  %v4585 = vpack.c.b16 %v4579, %v4573
  %v4593 = vsel %vm4135, %v4561, 0
  %4595 = vmatpush.bf16.msra.mxu0 0
  %4596 = vmatpush.bf16.msra.mxu0 0
  %4597 = vmatpush.bf16.msra.mxu0 0
  %4598 = vmatpush.bf16.msra.mxu0 0
  %4599 = vmatpush.bf16.msra.mxu0 0
  %4600 = vmatpush.bf16.msra.mxu0 0
  %4601 = vmatpush.bf16.msra.mxu0 0
  %4602 = vmatpush.bf16.msra.mxu0 %v4580
  %4603 = vmatmul.bf16.gmra.mxu0 %v4593
  %v4604 = vpop.f32.mrf.mxu0
  %v4605 = vadd.f32 0.0, %v4604
  %v4606 = vpop.f32.mrf.mxu0
  %4607 = vdwg.mxu0
  %4608 = vmatpush.bf16.msra.mxu0 0
  %4609 = vmatpush.bf16.msra.mxu0 0
  %4610 = vmatpush.bf16.msra.mxu0 0
  %4611 = vmatpush.bf16.msra.mxu0 0
  %4612 = vmatpush.bf16.msra.mxu0 0
  %4613 = vmatpush.bf16.msra.mxu0 0
  %4614 = vmatpush.bf16.msra.mxu0 0
  %4615 = vmatpush.bf16.msra.mxu0 %v4581
  %4616 = vmatmul.bf16.gmra.mxu0 %v4593
  %v4617 = vpop.f32.mrf.mxu0
  %v4618 = vadd.f32 0.0, %v4617
  %v4619 = vpop.f32.mrf.mxu0
  %4620 = vdwg.mxu0
  %4621 = vmatpush.bf16.msra.mxu0 0
  %4622 = vmatpush.bf16.msra.mxu0 0
  %4623 = vmatpush.bf16.msra.mxu0 0
  %4624 = vmatpush.bf16.msra.mxu0 0
  %4625 = vmatpush.bf16.msra.mxu0 0
  %4626 = vmatpush.bf16.msra.mxu0 0
  %4627 = vmatpush.bf16.msra.mxu0 0
  %4628 = vmatpush.bf16.msra.mxu0 %v4582
  %4629 = vmatmul.bf16.gmra.mxu0 %v4593
  %v4630 = vpop.f32.mrf.mxu0
  %v4631 = vadd.f32 0.0, %v4630
  %v4632 = vpop.f32.mrf.mxu0
  %4633 = vdwg.mxu0
  %4634 = vmatpush.bf16.msra.mxu0 0
  %4635 = vmatpush.bf16.msra.mxu0 0
  %4636 = vmatpush.bf16.msra.mxu0 0
  %4637 = vmatpush.bf16.msra.mxu0 0
  %4638 = vmatpush.bf16.msra.mxu0 0
  %4639 = vmatpush.bf16.msra.mxu0 0
  %4640 = vmatpush.bf16.msra.mxu0 0
  %4641 = vmatpush.bf16.msra.mxu0 %v4583
  %4642 = vmatmul.bf16.gmra.mxu0 %v4593
  %v4643 = vpop.f32.mrf.mxu0
  %v4644 = vadd.f32 0.0, %v4643
  %v4645 = vpop.f32.mrf.mxu0
  %4646 = vdwg.mxu0
  %4647 = vmatpush.bf16.msra.mxu0 0
  %4648 = vmatpush.bf16.msra.mxu0 0
  %4649 = vmatpush.bf16.msra.mxu0 0
  %4650 = vmatpush.bf16.msra.mxu0 0
  %4651 = vmatpush.bf16.msra.mxu0 0
  %4652 = vmatpush.bf16.msra.mxu0 0
  %4653 = vmatpush.bf16.msra.mxu0 0
  %4654 = vmatpush.bf16.msra.mxu0 %v4584
  %4655 = vmatmul.bf16.gmra.mxu0 %v4593
  %v4656 = vpop.f32.mrf.mxu0
  %v4657 = vadd.f32 0.0, %v4656
  %v4658 = vpop.f32.mrf.mxu0
  %4659 = vdwg.mxu0
  %4660 = vmatpush.bf16.msra.mxu0 0
  %4661 = vmatpush.bf16.msra.mxu0 0
  %4662 = vmatpush.bf16.msra.mxu0 0
  %4663 = vmatpush.bf16.msra.mxu0 0
  %4664 = vmatpush.bf16.msra.mxu0 0
  %4665 = vmatpush.bf16.msra.mxu0 0
  %4666 = vmatpush.bf16.msra.mxu0 0
  %4667 = vmatpush.bf16.msra.mxu0 %v4585
  %4668 = vmatmul.bf16.gmra.mxu0 %v4593
  %v4669 = vpop.f32.mrf.mxu0
  %v4670 = vadd.f32 0.0, %v4669
  %v4671 = vpop.f32.mrf.mxu0
  %4672 = vdwg.mxu0
  %v4673 = vadd.f32 %v4548, %v4605
  %v4674 = vadd.f32 %v4549, %v4618
  %v4675 = vadd.f32 %v4550, %v4631
  %v4676 = vadd.f32 %v4551, %v4644
  %v4677 = vadd.f32 %v4552, %v4657
  %v4678 = vadd.f32 %v4553, %v4670
  %v4679 = vld [vmem:[#allocation2 + $0x4] sm:$0xff]
  %v4680 = vld [vmem:[#allocation2 + $0xc] sm:$0xff]
  %v4681 = vld [vmem:[#allocation2 + $0x14] sm:$0xff]
  %v4682 = vld [vmem:[#allocation2 + $0x1c] sm:$0xf]
  %v4683 = vld [vmem:[#allocation2 + $0x24] sm:$0xff]
  %v4684 = vld [vmem:[#allocation2 + $0x2c] sm:$0xff]
  %v4685 = vld [vmem:[#allocation2 + $0x34] sm:$0xff]
  %v4686 = vld [vmem:[#allocation2 + $0x3c] sm:$0xf]
  %s4687 = scalar_lea.vmem %s8, 20
  %v4688 = vld [vmem:[%s4687] sm:$0xf]
  %v4697 = vunpack.c.l.b16 %v4679
  %v4698 = vunpack.c.h.b16 %v4679
  %v4699 = vunpack.c.l.b16 %v4680
  %v4700 = vunpack.c.h.b16 %v4680
  %v4701 = vunpack.c.l.b16 %v4681
  %v4702 = vunpack.c.h.b16 %v4681
  %v4703 = vunpack.c.l.b16 %v4682
  %v4704 = vunpack.c.l.b16 %v4683
  %v4705 = vunpack.c.h.b16 %v4683
  %v4706 = vunpack.c.l.b16 %v4684
  %v4707 = vunpack.c.h.b16 %v4684
  %v4708 = vunpack.c.l.b16 %v4685
  %v4709 = vunpack.c.h.b16 %v4685
  %v4710 = vunpack.c.l.b16 %v4686
  %v4711 = vpack.c.b16 %v4704, %v4697
  %v4712 = vpack.c.b16 %v4705, %v4698
  %v4713 = vpack.c.b16 %v4706, %v4699
  %v4714 = vpack.c.b16 %v4707, %v4700
  %v4715 = vpack.c.b16 %v4708, %v4701
  %v4716 = vpack.c.b16 %v4709, %v4702
  %v4717 = vpack.c.b16 %v4710, %v4703
  %4718 = vrot.lane.b32.xlu0 %v4711, 127
  %v4719 = vpop.permute.xlu0 %4718
  %4720 = vrot.lane.b32.xlu0 %v4712, 127
  %v4721 = vpop.permute.xlu0 %4720
  %4722 = vrot.lane.b32.xlu0 %v4713, 127
  %v4723 = vpop.permute.xlu0 %4722
  %4724 = vrot.lane.b32.xlu0 %v4714, 127
  %v4725 = vpop.permute.xlu0 %4724
  %4726 = vrot.lane.b32.xlu0 %v4715, 127
  %v4727 = vpop.permute.xlu0 %4726
  %4728 = vrot.lane.b32.xlu0 %v4716, 127
  %v4729 = vpop.permute.xlu0 %4728
  %4730 = vrot.lane.b32.xlu0 %v4717, 127
  %v4731 = vpop.permute.xlu0 %4730
  %v4732 = vsel %vm1082, %v4719, %v4721
  %v4733 = vsel %vm1082, %v4721, %v4723
  %v4734 = vsel %vm1082, %v4723, %v4725
  %v4735 = vsel %vm1082, %v4725, %v4727
  %v4736 = vsel %vm1082, %v4727, %v4729
  %v4737 = vsel %vm1082, %v4729, %v4731
  %v4745 = vsel %vm4135, %v4688, 0
  %4747 = vmatpush.bf16.msra.mxu0 0
  %4748 = vmatpush.bf16.msra.mxu0 0
  %4749 = vmatpush.bf16.msra.mxu0 0
  %4750 = vmatpush.bf16.msra.mxu0 0
  %4751 = vmatpush.bf16.msra.mxu0 0
  %4752 = vmatpush.bf16.msra.mxu0 0
  %4753 = vmatpush.bf16.msra.mxu0 0
  %4754 = vmatpush.bf16.msra.mxu0 %v4732
  %4755 = vmatmul.bf16.gmra.mxu0 %v4745
  %v4756 = vpop.f32.mrf.mxu0
  %v4757 = vadd.f32 0.0, %v4756
  %v4758 = vpop.f32.mrf.mxu0
  %4759 = vdwg.mxu0
  %4760 = vmatpush.bf16.msra.mxu0 0
  %4761 = vmatpush.bf16.msra.mxu0 0
  %4762 = vmatpush.bf16.msra.mxu0 0
  %4763 = vmatpush.bf16.msra.mxu0 0
  %4764 = vmatpush.bf16.msra.mxu0 0
  %4765 = vmatpush.bf16.msra.mxu0 0
  %4766 = vmatpush.bf16.msra.mxu0 0
  %4767 = vmatpush.bf16.msra.mxu0 %v4733
  %4768 = vmatmul.bf16.gmra.mxu0 %v4745
  %v4769 = vpop.f32.mrf.mxu0
  %v4770 = vadd.f32 0.0, %v4769
  %v4771 = vpop.f32.mrf.mxu0
  %4772 = vdwg.mxu0
  %4773 = vmatpush.bf16.msra.mxu0 0
  %4774 = vmatpush.bf16.msra.mxu0 0
  %4775 = vmatpush.bf16.msra.mxu0 0
  %4776 = vmatpush.bf16.msra.mxu0 0
  %4777 = vmatpush.bf16.msra.mxu0 0
  %4778 = vmatpush.bf16.msra.mxu0 0
  %4779 = vmatpush.bf16.msra.mxu0 0
  %4780 = vmatpush.bf16.msra.mxu0 %v4734
  %4781 = vmatmul.bf16.gmra.mxu0 %v4745
  %v4782 = vpop.f32.mrf.mxu0
  %v4783 = vadd.f32 0.0, %v4782
  %v4784 = vpop.f32.mrf.mxu0
  %4785 = vdwg.mxu0
  %4786 = vmatpush.bf16.msra.mxu0 0
  %4787 = vmatpush.bf16.msra.mxu0 0
  %4788 = vmatpush.bf16.msra.mxu0 0
  %4789 = vmatpush.bf16.msra.mxu0 0
  %4790 = vmatpush.bf16.msra.mxu0 0
  %4791 = vmatpush.bf16.msra.mxu0 0
  %4792 = vmatpush.bf16.msra.mxu0 0
  %4793 = vmatpush.bf16.msra.mxu0 %v4735
  %4794 = vmatmul.bf16.gmra.mxu0 %v4745
  %v4795 = vpop.f32.mrf.mxu0
  %v4796 = vadd.f32 0.0, %v4795
  %v4797 = vpop.f32.mrf.mxu0
  %4798 = vdwg.mxu0
  %4799 = vmatpush.bf16.msra.mxu0 0
  %4800 = vmatpush.bf16.msra.mxu0 0
  %4801 = vmatpush.bf16.msra.mxu0 0
  %4802 = vmatpush.bf16.msra.mxu0 0
  %4803 = vmatpush.bf16.msra.mxu0 0
  %4804 = vmatpush.bf16.msra.mxu0 0
  %4805 = vmatpush.bf16.msra.mxu0 0
  %4806 = vmatpush.bf16.msra.mxu0 %v4736
  %4807 = vmatmul.bf16.gmra.mxu0 %v4745
  %v4808 = vpop.f32.mrf.mxu0
  %v4809 = vadd.f32 0.0, %v4808
  %v4810 = vpop.f32.mrf.mxu0
  %4811 = vdwg.mxu0
  %4812 = vmatpush.bf16.msra.mxu0 0
  %4813 = vmatpush.bf16.msra.mxu0 0
  %4814 = vmatpush.bf16.msra.mxu0 0
  %4815 = vmatpush.bf16.msra.mxu0 0
  %4816 = vmatpush.bf16.msra.mxu0 0
  %4817 = vmatpush.bf16.msra.mxu0 0
  %4818 = vmatpush.bf16.msra.mxu0 0
  %4819 = vmatpush.bf16.msra.mxu0 %v4737
  %4820 = vmatmul.bf16.gmra.mxu0 %v4745
  %v4821 = vpop.f32.mrf.mxu0
  %v4822 = vadd.f32 0.0, %v4821
  %v4823 = vpop.f32.mrf.mxu0
  %4824 = vdwg.mxu0
  %v4825 = vadd.f32 %v4673, %v4757
  %v4826 = vadd.f32 %v4674, %v4770
  %v4827 = vadd.f32 %v4675, %v4783
  %v4828 = vadd.f32 %v4676, %v4796
  %v4829 = vadd.f32 %v4677, %v4809
  %v4830 = vadd.f32 %v4678, %v4822
  %s4831 = scalar_lea.vmem %s8, 24
  %v4832 = vld [vmem:[%s4831] sm:$0xf]
  %4833 = vrot.lane.b32.xlu0 %v4711, 111
  %v4834 = vpop.permute.xlu0 %4833
  %4835 = vrot.lane.b32.xlu0 %v4712, 111
  %v4836 = vpop.permute.xlu0 %4835
  %4837 = vrot.lane.b32.xlu0 %v4713, 111
  %v4838 = vpop.permute.xlu0 %4837
  %4839 = vrot.lane.b32.xlu0 %v4714, 111
  %v4840 = vpop.permute.xlu0 %4839
  %4841 = vrot.lane.b32.xlu0 %v4715, 111
  %v4842 = vpop.permute.xlu0 %4841
  %4843 = vrot.lane.b32.xlu0 %v4716, 111
  %v4844 = vpop.permute.xlu0 %4843
  %4845 = vrot.lane.b32.xlu0 %v4717, 111
  %v4846 = vpop.permute.xlu0 %4845
  %v4847 = vsel %vm1280, %v4834, %v4836
  %v4848 = vsel %vm1280, %v4836, %v4838
  %v4849 = vsel %vm1280, %v4838, %v4840
  %v4850 = vsel %vm1280, %v4840, %v4842
  %v4851 = vsel %vm1280, %v4842, %v4844
  %v4852 = vsel %vm1280, %v4844, %v4846
  %v4860 = vsel %vm4135, %v4832, 0
  %4862 = vmatpush.bf16.msra.mxu0 0
  %4863 = vmatpush.bf16.msra.mxu0 0
  %4864 = vmatpush.bf16.msra.mxu0 0
  %4865 = vmatpush.bf16.msra.mxu0 0
  %4866 = vmatpush.bf16.msra.mxu0 0
  %4867 = vmatpush.bf16.msra.mxu0 0
  %4868 = vmatpush.bf16.msra.mxu0 0
  %4869 = vmatpush.bf16.msra.mxu0 %v4847
  %4870 = vmatmul.bf16.gmra.mxu0 %v4860
  %v4871 = vpop.f32.mrf.mxu0
  %v4872 = vadd.f32 0.0, %v4871
  %v4873 = vpop.f32.mrf.mxu0
  %4874 = vdwg.mxu0
  %4875 = vmatpush.bf16.msra.mxu0 0
  %4876 = vmatpush.bf16.msra.mxu0 0
  %4877 = vmatpush.bf16.msra.mxu0 0
  %4878 = vmatpush.bf16.msra.mxu0 0
  %4879 = vmatpush.bf16.msra.mxu0 0
  %4880 = vmatpush.bf16.msra.mxu0 0
  %4881 = vmatpush.bf16.msra.mxu0 0
  %4882 = vmatpush.bf16.msra.mxu0 %v4848
  %4883 = vmatmul.bf16.gmra.mxu0 %v4860
  %v4884 = vpop.f32.mrf.mxu0
  %v4885 = vadd.f32 0.0, %v4884
  %v4886 = vpop.f32.mrf.mxu0
  %4887 = vdwg.mxu0
  %4888 = vmatpush.bf16.msra.mxu0 0
  %4889 = vmatpush.bf16.msra.mxu0 0
  %4890 = vmatpush.bf16.msra.mxu0 0
  %4891 = vmatpush.bf16.msra.mxu0 0
  %4892 = vmatpush.bf16.msra.mxu0 0
  %4893 = vmatpush.bf16.msra.mxu0 0
  %4894 = vmatpush.bf16.msra.mxu0 0
  %4895 = vmatpush.bf16.msra.mxu0 %v4849
  %4896 = vmatmul.bf16.gmra.mxu0 %v4860
  %v4897 = vpop.f32.mrf.mxu0
  %v4898 = vadd.f32 0.0, %v4897
  %v4899 = vpop.f32.mrf.mxu0
  %4900 = vdwg.mxu0
  %4901 = vmatpush.bf16.msra.mxu0 0
  %4902 = vmatpush.bf16.msra.mxu0 0
  %4903 = vmatpush.bf16.msra.mxu0 0
  %4904 = vmatpush.bf16.msra.mxu0 0
  %4905 = vmatpush.bf16.msra.mxu0 0
  %4906 = vmatpush.bf16.msra.mxu0 0
  %4907 = vmatpush.bf16.msra.mxu0 0
  %4908 = vmatpush.bf16.msra.mxu0 %v4850
  %4909 = vmatmul.bf16.gmra.mxu0 %v4860
  %v4910 = vpop.f32.mrf.mxu0
  %v4911 = vadd.f32 0.0, %v4910
  %v4912 = vpop.f32.mrf.mxu0
  %4913 = vdwg.mxu0
  %4914 = vmatpush.bf16.msra.mxu0 0
  %4915 = vmatpush.bf16.msra.mxu0 0
  %4916 = vmatpush.bf16.msra.mxu0 0
  %4917 = vmatpush.bf16.msra.mxu0 0
  %4918 = vmatpush.bf16.msra.mxu0 0
  %4919 = vmatpush.bf16.msra.mxu0 0
  %4920 = vmatpush.bf16.msra.mxu0 0
  %4921 = vmatpush.bf16.msra.mxu0 %v4851
  %4922 = vmatmul.bf16.gmra.mxu0 %v4860
  %v4923 = vpop.f32.mrf.mxu0
  %v4924 = vadd.f32 0.0, %v4923
  %v4925 = vpop.f32.mrf.mxu0
  %4926 = vdwg.mxu0
  %4927 = vmatpush.bf16.msra.mxu0 0
  %4928 = vmatpush.bf16.msra.mxu0 0
  %4929 = vmatpush.bf16.msra.mxu0 0
  %4930 = vmatpush.bf16.msra.mxu0 0
  %4931 = vmatpush.bf16.msra.mxu0 0
  %4932 = vmatpush.bf16.msra.mxu0 0
  %4933 = vmatpush.bf16.msra.mxu0 0
  %4934 = vmatpush.bf16.msra.mxu0 %v4852
  %4935 = vmatmul.bf16.gmra.mxu0 %v4860
  %v4936 = vpop.f32.mrf.mxu0
  %v4937 = vadd.f32 0.0, %v4936
  %v4938 = vpop.f32.mrf.mxu0
  %4939 = vdwg.mxu0
  %v4940 = vadd.f32 %v4825, %v4872
  %v4941 = vadd.f32 %v4826, %v4885
  %v4942 = vadd.f32 %v4827, %v4898
  %v4943 = vadd.f32 %v4828, %v4911
  %v4944 = vadd.f32 %v4829, %v4924
  %v4945 = vadd.f32 %v4830, %v4937
  %s4946 = scalar_lea.vmem %s8, 28
  %v4947 = vld [vmem:[%s4946] sm:$0xf]
  %4948 = vrot.lane.b32.xlu0 %v4711, 110
  %v4949 = vpop.permute.xlu0 %4948
  %4950 = vrot.lane.b32.xlu0 %v4712, 110
  %v4951 = vpop.permute.xlu0 %4950
  %4952 = vrot.lane.b32.xlu0 %v4713, 110
  %v4953 = vpop.permute.xlu0 %4952
  %4954 = vrot.lane.b32.xlu0 %v4714, 110
  %v4955 = vpop.permute.xlu0 %4954
  %4956 = vrot.lane.b32.xlu0 %v4715, 110
  %v4957 = vpop.permute.xlu0 %4956
  %4958 = vrot.lane.b32.xlu0 %v4716, 110
  %v4959 = vpop.permute.xlu0 %4958
  %4960 = vrot.lane.b32.xlu0 %v4717, 110
  %v4961 = vpop.permute.xlu0 %4960
  %v4962 = vsel %vm1478, %v4949, %v4951
  %v4963 = vsel %vm1478, %v4951, %v4953
  %v4964 = vsel %vm1478, %v4953, %v4955
  %v4965 = vsel %vm1478, %v4955, %v4957
  %v4966 = vsel %vm1478, %v4957, %v4959
  %v4967 = vsel %vm1478, %v4959, %v4961
  %v4975 = vsel %vm4135, %v4947, 0
  %4977 = vmatpush.bf16.msra.mxu0 0
  %4978 = vmatpush.bf16.msra.mxu0 0
  %4979 = vmatpush.bf16.msra.mxu0 0
  %4980 = vmatpush.bf16.msra.mxu0 0
  %4981 = vmatpush.bf16.msra.mxu0 0
  %4982 = vmatpush.bf16.msra.mxu0 0
  %4983 = vmatpush.bf16.msra.mxu0 0
  %4984 = vmatpush.bf16.msra.mxu0 %v4962
  %4985 = vmatmul.bf16.gmra.mxu0 %v4975
  %v4986 = vpop.f32.mrf.mxu0
  %v4987 = vadd.f32 0.0, %v4986
  %v4988 = vpop.f32.mrf.mxu0
  %4989 = vdwg.mxu0
  %4990 = vmatpush.bf16.msra.mxu0 0
  %4991 = vmatpush.bf16.msra.mxu0 0
  %4992 = vmatpush.bf16.msra.mxu0 0
  %4993 = vmatpush.bf16.msra.mxu0 0
  %4994 = vmatpush.bf16.msra.mxu0 0
  %4995 = vmatpush.bf16.msra.mxu0 0
  %4996 = vmatpush.bf16.msra.mxu0 0
  %4997 = vmatpush.bf16.msra.mxu0 %v4963
  %4998 = vmatmul.bf16.gmra.mxu0 %v4975
  %v4999 = vpop.f32.mrf.mxu0
  %v5000 = vadd.f32 0.0, %v4999
  %v5001 = vpop.f32.mrf.mxu0
  %5002 = vdwg.mxu0
  %5003 = vmatpush.bf16.msra.mxu0 0
  %5004 = vmatpush.bf16.msra.mxu0 0
  %5005 = vmatpush.bf16.msra.mxu0 0
  %5006 = vmatpush.bf16.msra.mxu0 0
  %5007 = vmatpush.bf16.msra.mxu0 0
  %5008 = vmatpush.bf16.msra.mxu0 0
  %5009 = vmatpush.bf16.msra.mxu0 0
  %5010 = vmatpush.bf16.msra.mxu0 %v4964
  %5011 = vmatmul.bf16.gmra.mxu0 %v4975
  %v5012 = vpop.f32.mrf.mxu0
  %v5013 = vadd.f32 0.0, %v5012
  %v5014 = vpop.f32.mrf.mxu0
  %5015 = vdwg.mxu0
  %5016 = vmatpush.bf16.msra.mxu0 0
  %5017 = vmatpush.bf16.msra.mxu0 0
  %5018 = vmatpush.bf16.msra.mxu0 0
  %5019 = vmatpush.bf16.msra.mxu0 0
  %5020 = vmatpush.bf16.msra.mxu0 0
  %5021 = vmatpush.bf16.msra.mxu0 0
  %5022 = vmatpush.bf16.msra.mxu0 0
  %5023 = vmatpush.bf16.msra.mxu0 %v4965
  %5024 = vmatmul.bf16.gmra.mxu0 %v4975
  %v5025 = vpop.f32.mrf.mxu0
  %v5026 = vadd.f32 0.0, %v5025
  %v5027 = vpop.f32.mrf.mxu0
  %5028 = vdwg.mxu0
  %5029 = vmatpush.bf16.msra.mxu0 0
  %5030 = vmatpush.bf16.msra.mxu0 0
  %5031 = vmatpush.bf16.msra.mxu0 0
  %5032 = vmatpush.bf16.msra.mxu0 0
  %5033 = vmatpush.bf16.msra.mxu0 0
  %5034 = vmatpush.bf16.msra.mxu0 0
  %5035 = vmatpush.bf16.msra.mxu0 0
  %5036 = vmatpush.bf16.msra.mxu0 %v4966
  %5037 = vmatmul.bf16.gmra.mxu0 %v4975
  %v5038 = vpop.f32.mrf.mxu0
  %v5039 = vadd.f32 0.0, %v5038
  %v5040 = vpop.f32.mrf.mxu0
  %5041 = vdwg.mxu0
  %5042 = vmatpush.bf16.msra.mxu0 0
  %5043 = vmatpush.bf16.msra.mxu0 0
  %5044 = vmatpush.bf16.msra.mxu0 0
  %5045 = vmatpush.bf16.msra.mxu0 0
  %5046 = vmatpush.bf16.msra.mxu0 0
  %5047 = vmatpush.bf16.msra.mxu0 0
  %5048 = vmatpush.bf16.msra.mxu0 0
  %5049 = vmatpush.bf16.msra.mxu0 %v4967
  %5050 = vmatmul.bf16.gmra.mxu0 %v4975
  %v5051 = vpop.f32.mrf.mxu0
  %v5052 = vadd.f32 0.0, %v5051
  %v5053 = vpop.f32.mrf.mxu0
  %5054 = vdwg.mxu0
  %v5055 = vadd.f32 %v4940, %v4987
  %v5056 = vadd.f32 %v4941, %v5000
  %v5057 = vadd.f32 %v4942, %v5013
  %v5058 = vadd.f32 %v4943, %v5026
  %v5059 = vadd.f32 %v4944, %v5039
  %v5060 = vadd.f32 %v4945, %v5052
  %s5061 = scalar_lea.vmem %s8, 32
  %v5062 = vld [vmem:[%s5061] sm:$0xf]
  %5063 = vrot.lane.b32.xlu0 %v4711, 109
  %v5064 = vpop.permute.xlu0 %5063
  %5065 = vrot.lane.b32.xlu0 %v4712, 109
  %v5066 = vpop.permute.xlu0 %5065
  %5067 = vrot.lane.b32.xlu0 %v4713, 109
  %v5068 = vpop.permute.xlu0 %5067
  %5069 = vrot.lane.b32.xlu0 %v4714, 109
  %v5070 = vpop.permute.xlu0 %5069
  %5071 = vrot.lane.b32.xlu0 %v4715, 109
  %v5072 = vpop.permute.xlu0 %5071
  %5073 = vrot.lane.b32.xlu0 %v4716, 109
  %v5074 = vpop.permute.xlu0 %5073
  %5075 = vrot.lane.b32.xlu0 %v4717, 109
  %v5076 = vpop.permute.xlu0 %5075
  %v5077 = vsel %vm1676, %v5064, %v5066
  %v5078 = vsel %vm1676, %v5066, %v5068
  %v5079 = vsel %vm1676, %v5068, %v5070
  %v5080 = vsel %vm1676, %v5070, %v5072
  %v5081 = vsel %vm1676, %v5072, %v5074
  %v5082 = vsel %vm1676, %v5074, %v5076
  %v5090 = vsel %vm4135, %v5062, 0
  %5092 = vmatpush.bf16.msra.mxu0 0
  %5093 = vmatpush.bf16.msra.mxu0 0
  %5094 = vmatpush.bf16.msra.mxu0 0
  %5095 = vmatpush.bf16.msra.mxu0 0
  %5096 = vmatpush.bf16.msra.mxu0 0
  %5097 = vmatpush.bf16.msra.mxu0 0
  %5098 = vmatpush.bf16.msra.mxu0 0
  %5099 = vmatpush.bf16.msra.mxu0 %v5077
  %5100 = vmatmul.bf16.gmra.mxu0 %v5090
  %v5101 = vpop.f32.mrf.mxu0
  %v5102 = vadd.f32 0.0, %v5101
  %v5103 = vpop.f32.mrf.mxu0
  %5104 = vdwg.mxu0
  %5105 = vmatpush.bf16.msra.mxu0 0
  %5106 = vmatpush.bf16.msra.mxu0 0
  %5107 = vmatpush.bf16.msra.mxu0 0
  %5108 = vmatpush.bf16.msra.mxu0 0
  %5109 = vmatpush.bf16.msra.mxu0 0
  %5110 = vmatpush.bf16.msra.mxu0 0
  %5111 = vmatpush.bf16.msra.mxu0 0
  %5112 = vmatpush.bf16.msra.mxu0 %v5078
  %5113 = vmatmul.bf16.gmra.mxu0 %v5090
  %v5114 = vpop.f32.mrf.mxu0
  %v5115 = vadd.f32 0.0, %v5114
  %v5116 = vpop.f32.mrf.mxu0
  %5117 = vdwg.mxu0
  %5118 = vmatpush.bf16.msra.mxu0 0
  %5119 = vmatpush.bf16.msra.mxu0 0
  %5120 = vmatpush.bf16.msra.mxu0 0
  %5121 = vmatpush.bf16.msra.mxu0 0
  %5122 = vmatpush.bf16.msra.mxu0 0
  %5123 = vmatpush.bf16.msra.mxu0 0
  %5124 = vmatpush.bf16.msra.mxu0 0
  %5125 = vmatpush.bf16.msra.mxu0 %v5079
  %5126 = vmatmul.bf16.gmra.mxu0 %v5090
  %v5127 = vpop.f32.mrf.mxu0
  %v5128 = vadd.f32 0.0, %v5127
  %v5129 = vpop.f32.mrf.mxu0
  %5130 = vdwg.mxu0
  %5131 = vmatpush.bf16.msra.mxu0 0
  %5132 = vmatpush.bf16.msra.mxu0 0
  %5133 = vmatpush.bf16.msra.mxu0 0
  %5134 = vmatpush.bf16.msra.mxu0 0
  %5135 = vmatpush.bf16.msra.mxu0 0
  %5136 = vmatpush.bf16.msra.mxu0 0
  %5137 = vmatpush.bf16.msra.mxu0 0
  %5138 = vmatpush.bf16.msra.mxu0 %v5080
  %5139 = vmatmul.bf16.gmra.mxu0 %v5090
  %v5140 = vpop.f32.mrf.mxu0
  %v5141 = vadd.f32 0.0, %v5140
  %v5142 = vpop.f32.mrf.mxu0
  %5143 = vdwg.mxu0
  %5144 = vmatpush.bf16.msra.mxu0 0
  %5145 = vmatpush.bf16.msra.mxu0 0
  %5146 = vmatpush.bf16.msra.mxu0 0
  %5147 = vmatpush.bf16.msra.mxu0 0
  %5148 = vmatpush.bf16.msra.mxu0 0
  %5149 = vmatpush.bf16.msra.mxu0 0
  %5150 = vmatpush.bf16.msra.mxu0 0
  %5151 = vmatpush.bf16.msra.mxu0 %v5081
  %5152 = vmatmul.bf16.gmra.mxu0 %v5090
  %v5153 = vpop.f32.mrf.mxu0
  %v5154 = vadd.f32 0.0, %v5153
  %v5155 = vpop.f32.mrf.mxu0
  %5156 = vdwg.mxu0
  %5157 = vmatpush.bf16.msra.mxu0 0
  %5158 = vmatpush.bf16.msra.mxu0 0
  %5159 = vmatpush.bf16.msra.mxu0 0
  %5160 = vmatpush.bf16.msra.mxu0 0
  %5161 = vmatpush.bf16.msra.mxu0 0
  %5162 = vmatpush.bf16.msra.mxu0 0
  %5163 = vmatpush.bf16.msra.mxu0 0
  %5164 = vmatpush.bf16.msra.mxu0 %v5082
  %5165 = vmatmul.bf16.gmra.mxu0 %v5090
  %v5166 = vpop.f32.mrf.mxu0
  %v5167 = vadd.f32 0.0, %v5166
  %v5168 = vpop.f32.mrf.mxu0
  %5169 = vdwg.mxu0
  %v5170 = vadd.f32 %v5055, %v5102
  %v5171 = vadd.f32 %v5056, %v5115
  %v5172 = vadd.f32 %v5057, %v5128
  %v5173 = vadd.f32 %v5058, %v5141
  %v5174 = vadd.f32 %v5059, %v5154
  %v5175 = vadd.f32 %v5060, %v5167
  %v5176 = vmul.f32 %v5170, %v1846
  %v5177 = vmul.f32 %v5171, %v1847
  %v5178 = vmul.f32 %v5172, %v1848
  %v5179 = vmul.f32 %v5173, %v1849
  %v5180 = vmul.f32 %v5174, %v1850
  %v5181 = vmul.f32 %v5175, %v1851
  %v5182 = vadd.f32 %v5176, %v5177
  %v5183 = vadd.f32 %v5182, %v5178
  %v5184 = vadd.f32 %v5183, %v5179
  %v5185 = vadd.f32 %v5184, %v5180
  %v5186 = vadd.f32 %v5185, %v5181
  %5187 = vadd.xlane.f32.xlu0 %v5186
  %v5188 = vpop.xlane.xlu0 %5187
  %v5189 = vmul.f32 %v5188, 0.001953125
  %v5190 = vsub.f32 %v5170, %v5189
  %v5191 = vsub.f32 %v5171, %v5189
  %v5192 = vsub.f32 %v5172, %v5189
  %v5193 = vsub.f32 %v5173, %v5189
  %v5194 = vsub.f32 %v5174, %v5189
  %v5195 = vsub.f32 %v5175, %v5189
  %v5196 = vmul.f32 %v5190, %v1846
  %v5197 = vmul.f32 %v5191, %v1847
  %v5198 = vmul.f32 %v5192, %v1848
  %v5199 = vmul.f32 %v5193, %v1849
  %v5200 = vmul.f32 %v5194, %v1850
  %v5201 = vmul.f32 %v5195, %v1851
  %v5202 = vmul.f32 %v5196, %v5196
  %v5203 = vmul.f32 %v5197, %v5197
  %v5204 = vmul.f32 %v5198, %v5198
  %v5205 = vmul.f32 %v5199, %v5199
  %v5206 = vmul.f32 %v5200, %v5200
  %v5207 = vmul.f32 %v5201, %v5201
  %v5208 = vadd.f32 %v5202, %v5203
  %v5209 = vadd.f32 %v5208, %v5204
  %v5210 = vadd.f32 %v5209, %v5205
  %v5211 = vadd.f32 %v5210, %v5206
  %v5212 = vadd.f32 %v5211, %v5207
  %5213 = vadd.xlane.f32.xlu0 %v5212
  %v5214 = vpop.xlane.xlu0 %5213
  %v5215 = vmul.f32 %v5214, 0.001953125
  %v5216 = vadd.f32 %v5215, 1e-05
  %v5217 = vrsqrt.pop %v5216
  %v5218 = vmul.f32 %v5217, %v5216
  %v5219 = vmul.f32 %v5218, %v5217
  %v5220 = vmul.f32 0.5, %v5219
  %v5221 = vsub.f32 1.5, %v5220
  %v5222 = vmul.f32 %v5217, %v5221
  %vm5223 = vweird.f32 %v5216
  %vm5224 = vweird.f32 %v5217
  %vm5225 = vmor %vm5223, %vm5224
  %v5226 = vsel %vm5225, %v5217, %v5222
  %v5227 = vld [vmem:[%s9] sm:$0xff]
  %v5228 = vmul.f32 %v5226, %v5227
  %5230 = vset.pattern.permute.xlu0 0
  %5231 = vperm.xlu0 %5230, %v5228
  %v5232 = vpop.permute.xlu0 %5231
  %v5234 = vmul.f32 %v5196, %v5232
  %v5235 = vmul.f32 %v5197, %v5232
  %v5236 = vmul.f32 %v5198, %v5232
  %v5237 = vmul.f32 %v5199, %v5232
  %v5238 = vmul.f32 %v5200, %v5232
  %v5239 = vmul.f32 %v5201, %v5232
  %v5240 = vld [vmem:[%s10] sm:$0xff]
  %5242 = vset.pattern.permute.xlu0 0
  %5243 = vperm.xlu0 %5242, %v5240
  %v5244 = vpop.permute.xlu0 %5243
  %v5246 = vadd.f32 %v5234, %v5244
  %v5247 = vadd.f32 %v5235, %v5244
  %v5248 = vadd.f32 %v5236, %v5244
  %v5249 = vadd.f32 %v5237, %v5244
  %v5250 = vadd.f32 %v5238, %v5244
  %v5251 = vadd.f32 %v5239, %v5244
  %vm5252 = vcmp.ge.f32.partialorder %v5246, 0.0
  %vm5253 = vcmp.ge.f32.partialorder %v5247, 0.0
  %vm5254 = vcmp.ge.f32.partialorder %v5248, 0.0
  %vm5255 = vcmp.ge.f32.partialorder %v5249, 0.0
  %vm5256 = vcmp.ge.f32.partialorder %v5250, 0.0
  %vm5257 = vcmp.ge.f32.partialorder %v5251, 0.0
  %v5258 = vmul.f32 %v5246, 0.2
  %v5259 = vmul.f32 %v5247, 0.2
  %v5260 = vmul.f32 %v5248, 0.2
  %v5261 = vmul.f32 %v5249, 0.2
  %v5262 = vmul.f32 %v5250, 0.2
  %v5263 = vmul.f32 %v5251, 0.2
  %v5264 = vsel %vm5252, %v5246, %v5258
  %v5265 = vsel %vm5253, %v5247, %v5259
  %v5266 = vsel %vm5254, %v5248, %v5260
  %v5267 = vsel %vm5255, %v5249, %v5261
  %v5268 = vsel %vm5256, %v5250, %v5262
  %v5269 = vsel %vm5257, %v5251, %v5263
  %v5270 = vmul.f32 %v5264, %v1846
  %v5271 = vmul.f32 %v5265, %v1847
  %v5272 = vmul.f32 %v5266, %v1848
  %v5273 = vmul.f32 %v5267, %v1849
  %v5274 = vmul.f32 %v5268, %v1850
  %v5275 = vmul.f32 %v5269, %v1851
  %v5276 = vpack.c.bf16 %v5271, %v5270
  %v5277 = vpack.c.bf16 %v5273, %v5272
  %v5278 = vpack.c.bf16 %v5275, %v5274
  %5279 = vst [vmem:[#allocation2 + $0x4] sm:$0xff] %v5276
  %5280 = vst [vmem:[#allocation2 + $0xc] sm:$0xff] %v5277
  %5281 = vst [vmem:[#allocation2 + $0x14] sm:$0xff] %v5278
  %v5282 = vld [vmem:[#allocation2] sm:$0xff]
  %v5283 = vld [vmem:[#allocation2 + $0x8] sm:$0xff]
  %v5284 = vld [vmem:[#allocation2 + $0x10] sm:$0xff]
  %v5285 = vld [vmem:[#allocation2 + $0x18] sm:$0xf]
  %v5286 = vld [vmem:[%s11] sm:$0xf]
  %s5287 = scalar_lea.vmem %s11, 4
  %v5288 = vld [vmem:[%s5287] sm:$0xf]
  %v5293 = vunpack.c.l.b16 %v5282
  %v5294 = vunpack.c.h.b16 %v5282
  %v5295 = vunpack.c.l.b16 %v5283
  %v5296 = vunpack.c.h.b16 %v5283
  %v5297 = vunpack.c.l.b16 %v5284
  %v5298 = vunpack.c.h.b16 %v5284
  %v5299 = vunpack.c.l.b16 %v5285
  %v5300 = vpack.c.b16 %v5293, %v5293
  %v5301 = vpack.c.b16 %v5294, %v5294
  %v5302 = vpack.c.b16 %v5295, %v5295
  %v5303 = vpack.c.b16 %v5296, %v5296
  %v5304 = vpack.c.b16 %v5297, %v5297
  %v5305 = vpack.c.b16 %v5298, %v5298
  %v5306 = vpack.c.b16 %v5299, %v5299
  %5307 = vrot.lane.b32.xlu0 %v5300, 18
  %v5308 = vpop.permute.xlu0 %5307
  %5309 = vrot.lane.b32.xlu0 %v5301, 18
  %v5310 = vpop.permute.xlu0 %5309
  %5311 = vrot.lane.b32.xlu0 %v5302, 18
  %v5312 = vpop.permute.xlu0 %5311
  %5313 = vrot.lane.b32.xlu0 %v5303, 18
  %v5314 = vpop.permute.xlu0 %5313
  %5315 = vrot.lane.b32.xlu0 %v5304, 18
  %v5316 = vpop.permute.xlu0 %5315
  %5317 = vrot.lane.b32.xlu0 %v5305, 18
  %v5318 = vpop.permute.xlu0 %5317
  %5319 = vrot.lane.b32.xlu0 %v5306, 18
  %v5320 = vpop.permute.xlu0 %5319
  %v5321 = vsel %vm124, %v5308, %v5310
  %v5322 = vsel %vm124, %v5310, %v5312
  %v5323 = vsel %vm124, %v5312, %v5314
  %v5324 = vsel %vm124, %v5314, %v5316
  %v5325 = vsel %vm124, %v5316, %v5318
  %v5326 = vsel %vm124, %v5318, %v5320
  %v5328 = vsel %vm131, %v5288, 0
  %v5331 = vsel %vm138, %v5321, 0
  %v5334 = vsel %vm138, %v5322, 0
  %v5337 = vsel %vm138, %v5323, 0
  %v5340 = vsel %vm138, %v5324, 0
  %v5343 = vsel %vm138, %v5325, 0
  %v5346 = vsel %vm138, %v5326, 0
  %5348 = vmatpush.bf16.msra.mxu0 0
  %5349 = vmatpush.bf16.msra.mxu0 0
  %5350 = vmatpush.bf16.msra.mxu0 0
  %5351 = vmatpush.bf16.msra.mxu0 0
  %5352 = vmatpush.bf16.msra.mxu0 0
  %5353 = vmatpush.bf16.msra.mxu0 0
  %5354 = vmatpush.bf16.msra.mxu0 0
  %5355 = vmatpush.bf16.msra.mxu0 %v5331
  %5356 = vmatmul.bf16.gmra.mxu0 %v5328
  %v5357 = vpop.f32.mrf.mxu0
  %v5358 = vadd.f32 0.0, %v5357
  %v5359 = vpop.f32.mrf.mxu0
  %5360 = vdwg.mxu0
  %5361 = vmatpush.bf16.msra.mxu0 0
  %5362 = vmatpush.bf16.msra.mxu0 0
  %5363 = vmatpush.bf16.msra.mxu0 0
  %5364 = vmatpush.bf16.msra.mxu0 0
  %5365 = vmatpush.bf16.msra.mxu0 0
  %5366 = vmatpush.bf16.msra.mxu0 0
  %5367 = vmatpush.bf16.msra.mxu0 0
  %5368 = vmatpush.bf16.msra.mxu0 %v5334
  %5369 = vmatmul.bf16.gmra.mxu0 %v5328
  %v5370 = vpop.f32.mrf.mxu0
  %v5371 = vadd.f32 0.0, %v5370
  %v5372 = vpop.f32.mrf.mxu0
  %5373 = vdwg.mxu0
  %5374 = vmatpush.bf16.msra.mxu0 0
  %5375 = vmatpush.bf16.msra.mxu0 0
  %5376 = vmatpush.bf16.msra.mxu0 0
  %5377 = vmatpush.bf16.msra.mxu0 0
  %5378 = vmatpush.bf16.msra.mxu0 0
  %5379 = vmatpush.bf16.msra.mxu0 0
  %5380 = vmatpush.bf16.msra.mxu0 0
  %5381 = vmatpush.bf16.msra.mxu0 %v5337
  %5382 = vmatmul.bf16.gmra.mxu0 %v5328
  %v5383 = vpop.f32.mrf.mxu0
  %v5384 = vadd.f32 0.0, %v5383
  %v5385 = vpop.f32.mrf.mxu0
  %5386 = vdwg.mxu0
  %5387 = vmatpush.bf16.msra.mxu0 0
  %5388 = vmatpush.bf16.msra.mxu0 0
  %5389 = vmatpush.bf16.msra.mxu0 0
  %5390 = vmatpush.bf16.msra.mxu0 0
  %5391 = vmatpush.bf16.msra.mxu0 0
  %5392 = vmatpush.bf16.msra.mxu0 0
  %5393 = vmatpush.bf16.msra.mxu0 0
  %5394 = vmatpush.bf16.msra.mxu0 %v5340
  %5395 = vmatmul.bf16.gmra.mxu0 %v5328
  %v5396 = vpop.f32.mrf.mxu0
  %v5397 = vadd.f32 0.0, %v5396
  %v5398 = vpop.f32.mrf.mxu0
  %5399 = vdwg.mxu0
  %5400 = vmatpush.bf16.msra.mxu0 0
  %5401 = vmatpush.bf16.msra.mxu0 0
  %5402 = vmatpush.bf16.msra.mxu0 0
  %5403 = vmatpush.bf16.msra.mxu0 0
  %5404 = vmatpush.bf16.msra.mxu0 0
  %5405 = vmatpush.bf16.msra.mxu0 0
  %5406 = vmatpush.bf16.msra.mxu0 0
  %5407 = vmatpush.bf16.msra.mxu0 %v5343
  %5408 = vmatmul.bf16.gmra.mxu0 %v5328
  %v5409 = vpop.f32.mrf.mxu0
  %v5410 = vadd.f32 0.0, %v5409
  %v5411 = vpop.f32.mrf.mxu0
  %5412 = vdwg.mxu0
  %5413 = vmatpush.bf16.msra.mxu0 0
  %5414 = vmatpush.bf16.msra.mxu0 0
  %5415 = vmatpush.bf16.msra.mxu0 0
  %5416 = vmatpush.bf16.msra.mxu0 0
  %5417 = vmatpush.bf16.msra.mxu0 0
  %5418 = vmatpush.bf16.msra.mxu0 0
  %5419 = vmatpush.bf16.msra.mxu0 0
  %5420 = vmatpush.bf16.msra.mxu0 %v5346
  %5421 = vmatmul.bf16.gmra.mxu0 %v5328
  %v5422 = vpop.f32.mrf.mxu0
  %v5423 = vadd.f32 0.0, %v5422
  %v5424 = vpop.f32.mrf.mxu0
  %5425 = vdwg.mxu0
  %5426 = vrot.lane.b32.xlu0 %v5300, 19
  %v5427 = vpop.permute.xlu0 %5426
  %5428 = vrot.lane.b32.xlu0 %v5301, 19
  %v5429 = vpop.permute.xlu0 %5428
  %5430 = vrot.lane.b32.xlu0 %v5302, 19
  %v5431 = vpop.permute.xlu0 %5430
  %5432 = vrot.lane.b32.xlu0 %v5303, 19
  %v5433 = vpop.permute.xlu0 %5432
  %5434 = vrot.lane.b32.xlu0 %v5304, 19
  %v5435 = vpop.permute.xlu0 %5434
  %5436 = vrot.lane.b32.xlu0 %v5305, 19
  %v5437 = vpop.permute.xlu0 %5436
  %5438 = vrot.lane.b32.xlu0 %v5306, 19
  %v5439 = vpop.permute.xlu0 %5438
  %v5440 = vsel %vm295, %v5427, %v5429
  %v5441 = vsel %vm295, %v5429, %v5431
  %v5442 = vsel %vm295, %v5431, %v5433
  %v5443 = vsel %vm295, %v5433, %v5435
  %v5444 = vsel %vm295, %v5435, %v5437
  %v5445 = vsel %vm295, %v5437, %v5439
  %v5447 = vsel %vm131, %v5286, 0
  %v5450 = vsel %vm138, %v5440, 0
  %v5453 = vsel %vm138, %v5441, 0
  %v5456 = vsel %vm138, %v5442, 0
  %v5459 = vsel %vm138, %v5443, 0
  %v5462 = vsel %vm138, %v5444, 0
  %v5465 = vsel %vm138, %v5445, 0
  %5467 = vmatpush.bf16.msra.mxu0 0
  %5468 = vmatpush.bf16.msra.mxu0 0
  %5469 = vmatpush.bf16.msra.mxu0 0
  %5470 = vmatpush.bf16.msra.mxu0 0
  %5471 = vmatpush.bf16.msra.mxu0 0
  %5472 = vmatpush.bf16.msra.mxu0 0
  %5473 = vmatpush.bf16.msra.mxu0 0
  %5474 = vmatpush.bf16.msra.mxu0 %v5450
  %5475 = vmatmul.bf16.gmra.mxu0 %v5447
  %v5476 = vpop.f32.mrf.mxu0
  %v5477 = vadd.f32 %v5358, %v5476
  %v5478 = vpop.f32.mrf.mxu0
  %5479 = vdwg.mxu0
  %5480 = vmatpush.bf16.msra.mxu0 0
  %5481 = vmatpush.bf16.msra.mxu0 0
  %5482 = vmatpush.bf16.msra.mxu0 0
  %5483 = vmatpush.bf16.msra.mxu0 0
  %5484 = vmatpush.bf16.msra.mxu0 0
  %5485 = vmatpush.bf16.msra.mxu0 0
  %5486 = vmatpush.bf16.msra.mxu0 0
  %5487 = vmatpush.bf16.msra.mxu0 %v5453
  %5488 = vmatmul.bf16.gmra.mxu0 %v5447
  %v5489 = vpop.f32.mrf.mxu0
  %v5490 = vadd.f32 %v5371, %v5489
  %v5491 = vpop.f32.mrf.mxu0
  %5492 = vdwg.mxu0
  %5493 = vmatpush.bf16.msra.mxu0 0
  %5494 = vmatpush.bf16.msra.mxu0 0
  %5495 = vmatpush.bf16.msra.mxu0 0
  %5496 = vmatpush.bf16.msra.mxu0 0
  %5497 = vmatpush.bf16.msra.mxu0 0
  %5498 = vmatpush.bf16.msra.mxu0 0
  %5499 = vmatpush.bf16.msra.mxu0 0
  %5500 = vmatpush.bf16.msra.mxu0 %v5456
  %5501 = vmatmul.bf16.gmra.mxu0 %v5447
  %v5502 = vpop.f32.mrf.mxu0
  %v5503 = vadd.f32 %v5384, %v5502
  %v5504 = vpop.f32.mrf.mxu0
  %5505 = vdwg.mxu0
  %5506 = vmatpush.bf16.msra.mxu0 0
  %5507 = vmatpush.bf16.msra.mxu0 0
  %5508 = vmatpush.bf16.msra.mxu0 0
  %5509 = vmatpush.bf16.msra.mxu0 0
  %5510 = vmatpush.bf16.msra.mxu0 0
  %5511 = vmatpush.bf16.msra.mxu0 0
  %5512 = vmatpush.bf16.msra.mxu0 0
  %5513 = vmatpush.bf16.msra.mxu0 %v5459
  %5514 = vmatmul.bf16.gmra.mxu0 %v5447
  %v5515 = vpop.f32.mrf.mxu0
  %v5516 = vadd.f32 %v5397, %v5515
  %v5517 = vpop.f32.mrf.mxu0
  %5518 = vdwg.mxu0
  %5519 = vmatpush.bf16.msra.mxu0 0
  %5520 = vmatpush.bf16.msra.mxu0 0
  %5521 = vmatpush.bf16.msra.mxu0 0
  %5522 = vmatpush.bf16.msra.mxu0 0
  %5523 = vmatpush.bf16.msra.mxu0 0
  %5524 = vmatpush.bf16.msra.mxu0 0
  %5525 = vmatpush.bf16.msra.mxu0 0
  %5526 = vmatpush.bf16.msra.mxu0 %v5462
  %5527 = vmatmul.bf16.gmra.mxu0 %v5447
  %v5528 = vpop.f32.mrf.mxu0
  %v5529 = vadd.f32 %v5410, %v5528
  %v5530 = vpop.f32.mrf.mxu0
  %5531 = vdwg.mxu0
  %5532 = vmatpush.bf16.msra.mxu0 0
  %5533 = vmatpush.bf16.msra.mxu0 0
  %5534 = vmatpush.bf16.msra.mxu0 0
  %5535 = vmatpush.bf16.msra.mxu0 0
  %5536 = vmatpush.bf16.msra.mxu0 0
  %5537 = vmatpush.bf16.msra.mxu0 0
  %5538 = vmatpush.bf16.msra.mxu0 0
  %5539 = vmatpush.bf16.msra.mxu0 %v5465
  %5540 = vmatmul.bf16.gmra.mxu0 %v5447
  %v5541 = vpop.f32.mrf.mxu0
  %v5542 = vadd.f32 %v5423, %v5541
  %v5543 = vpop.f32.mrf.mxu0
  %5544 = vdwg.mxu0
  %s5545 = scalar_lea.vmem %s11, 8
  %v5546 = vld [vmem:[%s5545] sm:$0xf]
  %5547 = vrot.lane.b32.xlu0 %v5300, 17
  %v5548 = vpop.permute.xlu0 %5547
  %5549 = vrot.lane.b32.xlu0 %v5301, 17
  %v5550 = vpop.permute.xlu0 %5549
  %5551 = vrot.lane.b32.xlu0 %v5302, 17
  %v5552 = vpop.permute.xlu0 %5551
  %5553 = vrot.lane.b32.xlu0 %v5303, 17
  %v5554 = vpop.permute.xlu0 %5553
  %5555 = vrot.lane.b32.xlu0 %v5304, 17
  %v5556 = vpop.permute.xlu0 %5555
  %5557 = vrot.lane.b32.xlu0 %v5305, 17
  %v5558 = vpop.permute.xlu0 %5557
  %5559 = vrot.lane.b32.xlu0 %v5306, 17
  %v5560 = vpop.permute.xlu0 %5559
  %v5561 = vsel %vm469, %v5548, %v5550
  %v5562 = vsel %vm469, %v5550, %v5552
  %v5563 = vsel %vm469, %v5552, %v5554
  %v5564 = vsel %vm469, %v5554, %v5556
  %v5565 = vsel %vm469, %v5556, %v5558
  %v5566 = vsel %vm469, %v5558, %v5560
  %v5568 = vsel %vm131, %v5546, 0
  %v5571 = vsel %vm138, %v5561, 0
  %v5574 = vsel %vm138, %v5562, 0
  %v5577 = vsel %vm138, %v5563, 0
  %v5580 = vsel %vm138, %v5564, 0
  %v5583 = vsel %vm138, %v5565, 0
  %v5586 = vsel %vm138, %v5566, 0
  %5588 = vmatpush.bf16.msra.mxu0 0
  %5589 = vmatpush.bf16.msra.mxu0 0
  %5590 = vmatpush.bf16.msra.mxu0 0
  %5591 = vmatpush.bf16.msra.mxu0 0
  %5592 = vmatpush.bf16.msra.mxu0 0
  %5593 = vmatpush.bf16.msra.mxu0 0
  %5594 = vmatpush.bf16.msra.mxu0 0
  %5595 = vmatpush.bf16.msra.mxu0 %v5571
  %5596 = vmatmul.bf16.gmra.mxu0 %v5568
  %v5597 = vpop.f32.mrf.mxu0
  %v5598 = vadd.f32 0.0, %v5597
  %v5599 = vpop.f32.mrf.mxu0
  %5600 = vdwg.mxu0
  %5601 = vmatpush.bf16.msra.mxu0 0
  %5602 = vmatpush.bf16.msra.mxu0 0
  %5603 = vmatpush.bf16.msra.mxu0 0
  %5604 = vmatpush.bf16.msra.mxu0 0
  %5605 = vmatpush.bf16.msra.mxu0 0
  %5606 = vmatpush.bf16.msra.mxu0 0
  %5607 = vmatpush.bf16.msra.mxu0 0
  %5608 = vmatpush.bf16.msra.mxu0 %v5574
  %5609 = vmatmul.bf16.gmra.mxu0 %v5568
  %v5610 = vpop.f32.mrf.mxu0
  %v5611 = vadd.f32 0.0, %v5610
  %v5612 = vpop.f32.mrf.mxu0
  %5613 = vdwg.mxu0
  %5614 = vmatpush.bf16.msra.mxu0 0
  %5615 = vmatpush.bf16.msra.mxu0 0
  %5616 = vmatpush.bf16.msra.mxu0 0
  %5617 = vmatpush.bf16.msra.mxu0 0
  %5618 = vmatpush.bf16.msra.mxu0 0
  %5619 = vmatpush.bf16.msra.mxu0 0
  %5620 = vmatpush.bf16.msra.mxu0 0
  %5621 = vmatpush.bf16.msra.mxu0 %v5577
  %5622 = vmatmul.bf16.gmra.mxu0 %v5568
  %v5623 = vpop.f32.mrf.mxu0
  %v5624 = vadd.f32 0.0, %v5623
  %v5625 = vpop.f32.mrf.mxu0
  %5626 = vdwg.mxu0
  %5627 = vmatpush.bf16.msra.mxu0 0
  %5628 = vmatpush.bf16.msra.mxu0 0
  %5629 = vmatpush.bf16.msra.mxu0 0
  %5630 = vmatpush.bf16.msra.mxu0 0
  %5631 = vmatpush.bf16.msra.mxu0 0
  %5632 = vmatpush.bf16.msra.mxu0 0
  %5633 = vmatpush.bf16.msra.mxu0 0
  %5634 = vmatpush.bf16.msra.mxu0 %v5580
  %5635 = vmatmul.bf16.gmra.mxu0 %v5568
  %v5636 = vpop.f32.mrf.mxu0
  %v5637 = vadd.f32 0.0, %v5636
  %v5638 = vpop.f32.mrf.mxu0
  %5639 = vdwg.mxu0
  %5640 = vmatpush.bf16.msra.mxu0 0
  %5641 = vmatpush.bf16.msra.mxu0 0
  %5642 = vmatpush.bf16.msra.mxu0 0
  %5643 = vmatpush.bf16.msra.mxu0 0
  %5644 = vmatpush.bf16.msra.mxu0 0
  %5645 = vmatpush.bf16.msra.mxu0 0
  %5646 = vmatpush.bf16.msra.mxu0 0
  %5647 = vmatpush.bf16.msra.mxu0 %v5583
  %5648 = vmatmul.bf16.gmra.mxu0 %v5568
  %v5649 = vpop.f32.mrf.mxu0
  %v5650 = vadd.f32 0.0, %v5649
  %v5651 = vpop.f32.mrf.mxu0
  %5652 = vdwg.mxu0
  %5653 = vmatpush.bf16.msra.mxu0 0
  %5654 = vmatpush.bf16.msra.mxu0 0
  %5655 = vmatpush.bf16.msra.mxu0 0
  %5656 = vmatpush.bf16.msra.mxu0 0
  %5657 = vmatpush.bf16.msra.mxu0 0
  %5658 = vmatpush.bf16.msra.mxu0 0
  %5659 = vmatpush.bf16.msra.mxu0 0
  %5660 = vmatpush.bf16.msra.mxu0 %v5586
  %5661 = vmatmul.bf16.gmra.mxu0 %v5568
  %v5662 = vpop.f32.mrf.mxu0
  %v5663 = vadd.f32 0.0, %v5662
  %v5664 = vpop.f32.mrf.mxu0
  %5665 = vdwg.mxu0
  %v5666 = vadd.f32 %v5477, %v5598
  %v5667 = vadd.f32 %v5490, %v5611
  %v5668 = vadd.f32 %v5503, %v5624
  %v5669 = vadd.f32 %v5516, %v5637
  %v5670 = vadd.f32 %v5529, %v5650
  %v5671 = vadd.f32 %v5542, %v5663
  %s5672 = scalar_lea.vmem %s11, 12
  %v5673 = vld [vmem:[%s5672] sm:$0xf]
  %5674 = vrot.lane.b32.xlu0 %v5300, 1
  %v5675 = vpop.permute.xlu0 %5674
  %5676 = vrot.lane.b32.xlu0 %v5301, 1
  %v5677 = vpop.permute.xlu0 %5676
  %5678 = vrot.lane.b32.xlu0 %v5302, 1
  %v5679 = vpop.permute.xlu0 %5678
  %5680 = vrot.lane.b32.xlu0 %v5303, 1
  %v5681 = vpop.permute.xlu0 %5680
  %5682 = vrot.lane.b32.xlu0 %v5304, 1
  %v5683 = vpop.permute.xlu0 %5682
  %5684 = vrot.lane.b32.xlu0 %v5305, 1
  %v5685 = vpop.permute.xlu0 %5684
  %5686 = vrot.lane.b32.xlu0 %v5306, 1
  %v5687 = vpop.permute.xlu0 %5686
  %v5688 = vsel %vm667, %v5675, %v5677
  %v5689 = vsel %vm667, %v5677, %v5679
  %v5690 = vsel %vm667, %v5679, %v5681
  %v5691 = vsel %vm667, %v5681, %v5683
  %v5692 = vsel %vm667, %v5683, %v5685
  %v5693 = vsel %vm667, %v5685, %v5687
  %v5695 = vsel %vm131, %v5673, 0
  %v5698 = vsel %vm138, %v5688, 0
  %v5701 = vsel %vm138, %v5689, 0
  %v5704 = vsel %vm138, %v5690, 0
  %v5707 = vsel %vm138, %v5691, 0
  %v5710 = vsel %vm138, %v5692, 0
  %v5713 = vsel %vm138, %v5693, 0
  %5715 = vmatpush.bf16.msra.mxu0 0
  %5716 = vmatpush.bf16.msra.mxu0 0
  %5717 = vmatpush.bf16.msra.mxu0 0
  %5718 = vmatpush.bf16.msra.mxu0 0
  %5719 = vmatpush.bf16.msra.mxu0 0
  %5720 = vmatpush.bf16.msra.mxu0 0
  %5721 = vmatpush.bf16.msra.mxu0 0
  %5722 = vmatpush.bf16.msra.mxu0 %v5698
  %5723 = vmatmul.bf16.gmra.mxu0 %v5695
  %v5724 = vpop.f32.mrf.mxu0
  %v5725 = vadd.f32 0.0, %v5724
  %v5726 = vpop.f32.mrf.mxu0
  %5727 = vdwg.mxu0
  %5728 = vmatpush.bf16.msra.mxu0 0
  %5729 = vmatpush.bf16.msra.mxu0 0
  %5730 = vmatpush.bf16.msra.mxu0 0
  %5731 = vmatpush.bf16.msra.mxu0 0
  %5732 = vmatpush.bf16.msra.mxu0 0
  %5733 = vmatpush.bf16.msra.mxu0 0
  %5734 = vmatpush.bf16.msra.mxu0 0
  %5735 = vmatpush.bf16.msra.mxu0 %v5701
  %5736 = vmatmul.bf16.gmra.mxu0 %v5695
  %v5737 = vpop.f32.mrf.mxu0
  %v5738 = vadd.f32 0.0, %v5737
  %v5739 = vpop.f32.mrf.mxu0
  %5740 = vdwg.mxu0
  %5741 = vmatpush.bf16.msra.mxu0 0
  %5742 = vmatpush.bf16.msra.mxu0 0
  %5743 = vmatpush.bf16.msra.mxu0 0
  %5744 = vmatpush.bf16.msra.mxu0 0
  %5745 = vmatpush.bf16.msra.mxu0 0
  %5746 = vmatpush.bf16.msra.mxu0 0
  %5747 = vmatpush.bf16.msra.mxu0 0
  %5748 = vmatpush.bf16.msra.mxu0 %v5704
  %5749 = vmatmul.bf16.gmra.mxu0 %v5695
  %v5750 = vpop.f32.mrf.mxu0
  %v5751 = vadd.f32 0.0, %v5750
  %v5752 = vpop.f32.mrf.mxu0
  %5753 = vdwg.mxu0
  %5754 = vmatpush.bf16.msra.mxu0 0
  %5755 = vmatpush.bf16.msra.mxu0 0
  %5756 = vmatpush.bf16.msra.mxu0 0
  %5757 = vmatpush.bf16.msra.mxu0 0
  %5758 = vmatpush.bf16.msra.mxu0 0
  %5759 = vmatpush.bf16.msra.mxu0 0
  %5760 = vmatpush.bf16.msra.mxu0 0
  %5761 = vmatpush.bf16.msra.mxu0 %v5707
  %5762 = vmatmul.bf16.gmra.mxu0 %v5695
  %v5763 = vpop.f32.mrf.mxu0
  %v5764 = vadd.f32 0.0, %v5763
  %v5765 = vpop.f32.mrf.mxu0
  %5766 = vdwg.mxu0
  %5767 = vmatpush.bf16.msra.mxu0 0
  %5768 = vmatpush.bf16.msra.mxu0 0
  %5769 = vmatpush.bf16.msra.mxu0 0
  %5770 = vmatpush.bf16.msra.mxu0 0
  %5771 = vmatpush.bf16.msra.mxu0 0
  %5772 = vmatpush.bf16.msra.mxu0 0
  %5773 = vmatpush.bf16.msra.mxu0 0
  %5774 = vmatpush.bf16.msra.mxu0 %v5710
  %5775 = vmatmul.bf16.gmra.mxu0 %v5695
  %v5776 = vpop.f32.mrf.mxu0
  %v5777 = vadd.f32 0.0, %v5776
  %v5778 = vpop.f32.mrf.mxu0
  %5779 = vdwg.mxu0
  %5780 = vmatpush.bf16.msra.mxu0 0
  %5781 = vmatpush.bf16.msra.mxu0 0
  %5782 = vmatpush.bf16.msra.mxu0 0
  %5783 = vmatpush.bf16.msra.mxu0 0
  %5784 = vmatpush.bf16.msra.mxu0 0
  %5785 = vmatpush.bf16.msra.mxu0 0
  %5786 = vmatpush.bf16.msra.mxu0 0
  %5787 = vmatpush.bf16.msra.mxu0 %v5713
  %5788 = vmatmul.bf16.gmra.mxu0 %v5695
  %v5789 = vpop.f32.mrf.mxu0
  %v5790 = vadd.f32 0.0, %v5789
  %v5791 = vpop.f32.mrf.mxu0
  %5792 = vdwg.mxu0
  %v5793 = vadd.f32 %v5666, %v5725
  %v5794 = vadd.f32 %v5667, %v5738
  %v5795 = vadd.f32 %v5668, %v5751
  %v5796 = vadd.f32 %v5669, %v5764
  %v5797 = vadd.f32 %v5670, %v5777
  %v5798 = vadd.f32 %v5671, %v5790
  %v5799 = vld [vmem:[#allocation2 + $0x4] sm:$0xff]
  %v5800 = vld [vmem:[#allocation2 + $0xc] sm:$0xff]
  %v5801 = vld [vmem:[#allocation2 + $0x14] sm:$0xff]
  %s5802 = scalar_lea.vmem %s11, 16
  %v5803 = vld [vmem:[%s5802] sm:$0xf]
  %v5807 = vunpack.c.l.b16 %v5799
  %v5808 = vunpack.c.h.b16 %v5799
  %v5809 = vunpack.c.l.b16 %v5800
  %v5810 = vunpack.c.h.b16 %v5800
  %v5811 = vunpack.c.l.b16 %v5801
  %v5812 = vunpack.c.h.b16 %v5801
  %v5813 = vpack.c.b16 %v5807, %v5807
  %v5814 = vpack.c.b16 %v5808, %v5808
  %v5815 = vpack.c.b16 %v5809, %v5809
  %v5816 = vpack.c.b16 %v5810, %v5810
  %v5817 = vpack.c.b16 %v5811, %v5811
  %v5818 = vpack.c.b16 %v5812, %v5812
  %v5820 = vsel %vm131, %v5803, 0
  %v5823 = vsel %vm138, %v5813, 0
  %v5826 = vsel %vm138, %v5814, 0
  %v5829 = vsel %vm138, %v5815, 0
  %v5832 = vsel %vm138, %v5816, 0
  %v5835 = vsel %vm138, %v5817, 0
  %v5838 = vsel %vm138, %v5818, 0
  %5840 = vmatpush.bf16.msra.mxu0 0
  %5841 = vmatpush.bf16.msra.mxu0 0
  %5842 = vmatpush.bf16.msra.mxu0 0
  %5843 = vmatpush.bf16.msra.mxu0 0
  %5844 = vmatpush.bf16.msra.mxu0 0
  %5845 = vmatpush.bf16.msra.mxu0 0
  %5846 = vmatpush.bf16.msra.mxu0 0
  %5847 = vmatpush.bf16.msra.mxu0 %v5823
  %5848 = vmatmul.bf16.gmra.mxu0 %v5820
  %v5849 = vpop.f32.mrf.mxu0
  %v5850 = vadd.f32 0.0, %v5849
  %v5851 = vpop.f32.mrf.mxu0
  %5852 = vdwg.mxu0
  %5853 = vmatpush.bf16.msra.mxu0 0
  %5854 = vmatpush.bf16.msra.mxu0 0
  %5855 = vmatpush.bf16.msra.mxu0 0
  %5856 = vmatpush.bf16.msra.mxu0 0
  %5857 = vmatpush.bf16.msra.mxu0 0
  %5858 = vmatpush.bf16.msra.mxu0 0
  %5859 = vmatpush.bf16.msra.mxu0 0
  %5860 = vmatpush.bf16.msra.mxu0 %v5826
  %5861 = vmatmul.bf16.gmra.mxu0 %v5820
  %v5862 = vpop.f32.mrf.mxu0
  %v5863 = vadd.f32 0.0, %v5862
  %v5864 = vpop.f32.mrf.mxu0
  %5865 = vdwg.mxu0
  %5866 = vmatpush.bf16.msra.mxu0 0
  %5867 = vmatpush.bf16.msra.mxu0 0
  %5868 = vmatpush.bf16.msra.mxu0 0
  %5869 = vmatpush.bf16.msra.mxu0 0
  %5870 = vmatpush.bf16.msra.mxu0 0
  %5871 = vmatpush.bf16.msra.mxu0 0
  %5872 = vmatpush.bf16.msra.mxu0 0
  %5873 = vmatpush.bf16.msra.mxu0 %v5829
  %5874 = vmatmul.bf16.gmra.mxu0 %v5820
  %v5875 = vpop.f32.mrf.mxu0
  %v5876 = vadd.f32 0.0, %v5875
  %v5877 = vpop.f32.mrf.mxu0
  %5878 = vdwg.mxu0
  %5879 = vmatpush.bf16.msra.mxu0 0
  %5880 = vmatpush.bf16.msra.mxu0 0
  %5881 = vmatpush.bf16.msra.mxu0 0
  %5882 = vmatpush.bf16.msra.mxu0 0
  %5883 = vmatpush.bf16.msra.mxu0 0
  %5884 = vmatpush.bf16.msra.mxu0 0
  %5885 = vmatpush.bf16.msra.mxu0 0
  %5886 = vmatpush.bf16.msra.mxu0 %v5832
  %5887 = vmatmul.bf16.gmra.mxu0 %v5820
  %v5888 = vpop.f32.mrf.mxu0
  %v5889 = vadd.f32 0.0, %v5888
  %v5890 = vpop.f32.mrf.mxu0
  %5891 = vdwg.mxu0
  %5892 = vmatpush.bf16.msra.mxu0 0
  %5893 = vmatpush.bf16.msra.mxu0 0
  %5894 = vmatpush.bf16.msra.mxu0 0
  %5895 = vmatpush.bf16.msra.mxu0 0
  %5896 = vmatpush.bf16.msra.mxu0 0
  %5897 = vmatpush.bf16.msra.mxu0 0
  %5898 = vmatpush.bf16.msra.mxu0 0
  %5899 = vmatpush.bf16.msra.mxu0 %v5835
  %5900 = vmatmul.bf16.gmra.mxu0 %v5820
  %v5901 = vpop.f32.mrf.mxu0
  %v5902 = vadd.f32 0.0, %v5901
  %v5903 = vpop.f32.mrf.mxu0
  %5904 = vdwg.mxu0
  %5905 = vmatpush.bf16.msra.mxu0 0
  %5906 = vmatpush.bf16.msra.mxu0 0
  %5907 = vmatpush.bf16.msra.mxu0 0
  %5908 = vmatpush.bf16.msra.mxu0 0
  %5909 = vmatpush.bf16.msra.mxu0 0
  %5910 = vmatpush.bf16.msra.mxu0 0
  %5911 = vmatpush.bf16.msra.mxu0 0
  %5912 = vmatpush.bf16.msra.mxu0 %v5838
  %5913 = vmatmul.bf16.gmra.mxu0 %v5820
  %v5914 = vpop.f32.mrf.mxu0
  %v5915 = vadd.f32 0.0, %v5914
  %v5916 = vpop.f32.mrf.mxu0
  %5917 = vdwg.mxu0
  %v5918 = vadd.f32 %v5793, %v5850
  %v5919 = vadd.f32 %v5794, %v5863
  %v5920 = vadd.f32 %v5795, %v5876
  %v5921 = vadd.f32 %v5796, %v5889
  %v5922 = vadd.f32 %v5797, %v5902
  %v5923 = vadd.f32 %v5798, %v5915
  %v5924 = vld [vmem:[#allocation2 + $0x4] sm:$0xff]
  %v5925 = vld [vmem:[#allocation2 + $0xc] sm:$0xff]
  %v5926 = vld [vmem:[#allocation2 + $0x14] sm:$0xff]
  %v5927 = vld [vmem:[#allocation2 + $0x1c] sm:$0xf]
  %s5928 = scalar_lea.vmem %s11, 20
  %v5929 = vld [vmem:[%s5928] sm:$0xf]
  %v5934 = vunpack.c.l.b16 %v5924
  %v5935 = vunpack.c.h.b16 %v5924
  %v5936 = vunpack.c.l.b16 %v5925
  %v5937 = vunpack.c.h.b16 %v5925
  %v5938 = vunpack.c.l.b16 %v5926
  %v5939 = vunpack.c.h.b16 %v5926
  %v5940 = vunpack.c.l.b16 %v5927
  %v5941 = vpack.c.b16 %v5934, %v5934
  %v5942 = vpack.c.b16 %v5935, %v5935
  %v5943 = vpack.c.b16 %v5936, %v5936
  %v5944 = vpack.c.b16 %v5937, %v5937
  %v5945 = vpack.c.b16 %v5938, %v5938
  %v5946 = vpack.c.b16 %v5939, %v5939
  %v5947 = vpack.c.b16 %v5940, %v5940
  %5948 = vrot.lane.b32.xlu0 %v5941, 127
  %v5949 = vpop.permute.xlu0 %5948
  %5950 = vrot.lane.b32.xlu0 %v5942, 127
  %v5951 = vpop.permute.xlu0 %5950
  %5952 = vrot.lane.b32.xlu0 %v5943, 127
  %v5953 = vpop.permute.xlu0 %5952
  %5954 = vrot.lane.b32.xlu0 %v5944, 127
  %v5955 = vpop.permute.xlu0 %5954
  %5956 = vrot.lane.b32.xlu0 %v5945, 127
  %v5957 = vpop.permute.xlu0 %5956
  %5958 = vrot.lane.b32.xlu0 %v5946, 127
  %v5959 = vpop.permute.xlu0 %5958
  %5960 = vrot.lane.b32.xlu0 %v5947, 127
  %v5961 = vpop.permute.xlu0 %5960
  %v5962 = vsel %vm1082, %v5949, %v5951
  %v5963 = vsel %vm1082, %v5951, %v5953
  %v5964 = vsel %vm1082, %v5953, %v5955
  %v5965 = vsel %vm1082, %v5955, %v5957
  %v5966 = vsel %vm1082, %v5957, %v5959
  %v5967 = vsel %vm1082, %v5959, %v5961
  %v5969 = vsel %vm131, %v5929, 0
  %v5972 = vsel %vm138, %v5962, 0
  %v5975 = vsel %vm138, %v5963, 0
  %v5978 = vsel %vm138, %v5964, 0
  %v5981 = vsel %vm138, %v5965, 0
  %v5984 = vsel %vm138, %v5966, 0
  %v5987 = vsel %vm138, %v5967, 0
  %5989 = vmatpush.bf16.msra.mxu0 0
  %5990 = vmatpush.bf16.msra.mxu0 0
  %5991 = vmatpush.bf16.msra.mxu0 0
  %5992 = vmatpush.bf16.msra.mxu0 0
  %5993 = vmatpush.bf16.msra.mxu0 0
  %5994 = vmatpush.bf16.msra.mxu0 0
  %5995 = vmatpush.bf16.msra.mxu0 0
  %5996 = vmatpush.bf16.msra.mxu0 %v5972
  %5997 = vmatmul.bf16.gmra.mxu0 %v5969
  %v5998 = vpop.f32.mrf.mxu0
  %v5999 = vadd.f32 0.0, %v5998
  %v6000 = vpop.f32.mrf.mxu0
  %6001 = vdwg.mxu0
  %6002 = vmatpush.bf16.msra.mxu0 0
  %6003 = vmatpush.bf16.msra.mxu0 0
  %6004 = vmatpush.bf16.msra.mxu0 0
  %6005 = vmatpush.bf16.msra.mxu0 0
  %6006 = vmatpush.bf16.msra.mxu0 0
  %6007 = vmatpush.bf16.msra.mxu0 0
  %6008 = vmatpush.bf16.msra.mxu0 0
  %6009 = vmatpush.bf16.msra.mxu0 %v5975
  %6010 = vmatmul.bf16.gmra.mxu0 %v5969
  %v6011 = vpop.f32.mrf.mxu0
  %v6012 = vadd.f32 0.0, %v6011
  %v6013 = vpop.f32.mrf.mxu0
  %6014 = vdwg.mxu0
  %6015 = vmatpush.bf16.msra.mxu0 0
  %6016 = vmatpush.bf16.msra.mxu0 0
  %6017 = vmatpush.bf16.msra.mxu0 0
  %6018 = vmatpush.bf16.msra.mxu0 0
  %6019 = vmatpush.bf16.msra.mxu0 0
  %6020 = vmatpush.bf16.msra.mxu0 0
  %6021 = vmatpush.bf16.msra.mxu0 0
  %6022 = vmatpush.bf16.msra.mxu0 %v5978
  %6023 = vmatmul.bf16.gmra.mxu0 %v5969
  %v6024 = vpop.f32.mrf.mxu0
  %v6025 = vadd.f32 0.0, %v6024
  %v6026 = vpop.f32.mrf.mxu0
  %6027 = vdwg.mxu0
  %6028 = vmatpush.bf16.msra.mxu0 0
  %6029 = vmatpush.bf16.msra.mxu0 0
  %6030 = vmatpush.bf16.msra.mxu0 0
  %6031 = vmatpush.bf16.msra.mxu0 0
  %6032 = vmatpush.bf16.msra.mxu0 0
  %6033 = vmatpush.bf16.msra.mxu0 0
  %6034 = vmatpush.bf16.msra.mxu0 0
  %6035 = vmatpush.bf16.msra.mxu0 %v5981
  %6036 = vmatmul.bf16.gmra.mxu0 %v5969
  %v6037 = vpop.f32.mrf.mxu0
  %v6038 = vadd.f32 0.0, %v6037
  %v6039 = vpop.f32.mrf.mxu0
  %6040 = vdwg.mxu0
  %6041 = vmatpush.bf16.msra.mxu0 0
  %6042 = vmatpush.bf16.msra.mxu0 0
  %6043 = vmatpush.bf16.msra.mxu0 0
  %6044 = vmatpush.bf16.msra.mxu0 0
  %6045 = vmatpush.bf16.msra.mxu0 0
  %6046 = vmatpush.bf16.msra.mxu0 0
  %6047 = vmatpush.bf16.msra.mxu0 0
  %6048 = vmatpush.bf16.msra.mxu0 %v5984
  %6049 = vmatmul.bf16.gmra.mxu0 %v5969
  %v6050 = vpop.f32.mrf.mxu0
  %v6051 = vadd.f32 0.0, %v6050
  %v6052 = vpop.f32.mrf.mxu0
  %6053 = vdwg.mxu0
  %6054 = vmatpush.bf16.msra.mxu0 0
  %6055 = vmatpush.bf16.msra.mxu0 0
  %6056 = vmatpush.bf16.msra.mxu0 0
  %6057 = vmatpush.bf16.msra.mxu0 0
  %6058 = vmatpush.bf16.msra.mxu0 0
  %6059 = vmatpush.bf16.msra.mxu0 0
  %6060 = vmatpush.bf16.msra.mxu0 0
  %6061 = vmatpush.bf16.msra.mxu0 %v5987
  %6062 = vmatmul.bf16.gmra.mxu0 %v5969
  %v6063 = vpop.f32.mrf.mxu0
  %v6064 = vadd.f32 0.0, %v6063
  %v6065 = vpop.f32.mrf.mxu0
  %6066 = vdwg.mxu0
  %v6067 = vadd.f32 %v5918, %v5999
  %v6068 = vadd.f32 %v5919, %v6012
  %v6069 = vadd.f32 %v5920, %v6025
  %v6070 = vadd.f32 %v5921, %v6038
  %v6071 = vadd.f32 %v5922, %v6051
  %v6072 = vadd.f32 %v5923, %v6064
  %s6073 = scalar_lea.vmem %s11, 24
  %v6074 = vld [vmem:[%s6073] sm:$0xf]
  %6075 = vrot.lane.b32.xlu0 %v5941, 111
  %v6076 = vpop.permute.xlu0 %6075
  %6077 = vrot.lane.b32.xlu0 %v5942, 111
  %v6078 = vpop.permute.xlu0 %6077
  %6079 = vrot.lane.b32.xlu0 %v5943, 111
  %v6080 = vpop.permute.xlu0 %6079
  %6081 = vrot.lane.b32.xlu0 %v5944, 111
  %v6082 = vpop.permute.xlu0 %6081
  %6083 = vrot.lane.b32.xlu0 %v5945, 111
  %v6084 = vpop.permute.xlu0 %6083
  %6085 = vrot.lane.b32.xlu0 %v5946, 111
  %v6086 = vpop.permute.xlu0 %6085
  %6087 = vrot.lane.b32.xlu0 %v5947, 111
  %v6088 = vpop.permute.xlu0 %6087
  %v6089 = vsel %vm1280, %v6076, %v6078
  %v6090 = vsel %vm1280, %v6078, %v6080
  %v6091 = vsel %vm1280, %v6080, %v6082
  %v6092 = vsel %vm1280, %v6082, %v6084
  %v6093 = vsel %vm1280, %v6084, %v6086
  %v6094 = vsel %vm1280, %v6086, %v6088
  %v6096 = vsel %vm131, %v6074, 0
  %v6099 = vsel %vm138, %v6089, 0
  %v6102 = vsel %vm138, %v6090, 0
  %v6105 = vsel %vm138, %v6091, 0
  %v6108 = vsel %vm138, %v6092, 0
  %v6111 = vsel %vm138, %v6093, 0
  %v6114 = vsel %vm138, %v6094, 0
  %6116 = vmatpush.bf16.msra.mxu0 0
  %6117 = vmatpush.bf16.msra.mxu0 0
  %6118 = vmatpush.bf16.msra.mxu0 0
  %6119 = vmatpush.bf16.msra.mxu0 0
  %6120 = vmatpush.bf16.msra.mxu0 0
  %6121 = vmatpush.bf16.msra.mxu0 0
  %6122 = vmatpush.bf16.msra.mxu0 0
  %6123 = vmatpush.bf16.msra.mxu0 %v6099
  %6124 = vmatmul.bf16.gmra.mxu0 %v6096
  %v6125 = vpop.f32.mrf.mxu0
  %v6126 = vadd.f32 0.0, %v6125
  %v6127 = vpop.f32.mrf.mxu0
  %6128 = vdwg.mxu0
  %6129 = vmatpush.bf16.msra.mxu0 0
  %6130 = vmatpush.bf16.msra.mxu0 0
  %6131 = vmatpush.bf16.msra.mxu0 0
  %6132 = vmatpush.bf16.msra.mxu0 0
  %6133 = vmatpush.bf16.msra.mxu0 0
  %6134 = vmatpush.bf16.msra.mxu0 0
  %6135 = vmatpush.bf16.msra.mxu0 0
  %6136 = vmatpush.bf16.msra.mxu0 %v6102
  %6137 = vmatmul.bf16.gmra.mxu0 %v6096
  %v6138 = vpop.f32.mrf.mxu0
  %v6139 = vadd.f32 0.0, %v6138
  %v6140 = vpop.f32.mrf.mxu0
  %6141 = vdwg.mxu0
  %6142 = vmatpush.bf16.msra.mxu0 0
  %6143 = vmatpush.bf16.msra.mxu0 0
  %6144 = vmatpush.bf16.msra.mxu0 0
  %6145 = vmatpush.bf16.msra.mxu0 0
  %6146 = vmatpush.bf16.msra.mxu0 0
  %6147 = vmatpush.bf16.msra.mxu0 0
  %6148 = vmatpush.bf16.msra.mxu0 0
  %6149 = vmatpush.bf16.msra.mxu0 %v6105
  %6150 = vmatmul.bf16.gmra.mxu0 %v6096
  %v6151 = vpop.f32.mrf.mxu0
  %v6152 = vadd.f32 0.0, %v6151
  %v6153 = vpop.f32.mrf.mxu0
  %6154 = vdwg.mxu0
  %6155 = vmatpush.bf16.msra.mxu0 0
  %6156 = vmatpush.bf16.msra.mxu0 0
  %6157 = vmatpush.bf16.msra.mxu0 0
  %6158 = vmatpush.bf16.msra.mxu0 0
  %6159 = vmatpush.bf16.msra.mxu0 0
  %6160 = vmatpush.bf16.msra.mxu0 0
  %6161 = vmatpush.bf16.msra.mxu0 0
  %6162 = vmatpush.bf16.msra.mxu0 %v6108
  %6163 = vmatmul.bf16.gmra.mxu0 %v6096
  %v6164 = vpop.f32.mrf.mxu0
  %v6165 = vadd.f32 0.0, %v6164
  %v6166 = vpop.f32.mrf.mxu0
  %6167 = vdwg.mxu0
  %6168 = vmatpush.bf16.msra.mxu0 0
  %6169 = vmatpush.bf16.msra.mxu0 0
  %6170 = vmatpush.bf16.msra.mxu0 0
  %6171 = vmatpush.bf16.msra.mxu0 0
  %6172 = vmatpush.bf16.msra.mxu0 0
  %6173 = vmatpush.bf16.msra.mxu0 0
  %6174 = vmatpush.bf16.msra.mxu0 0
  %6175 = vmatpush.bf16.msra.mxu0 %v6111
  %6176 = vmatmul.bf16.gmra.mxu0 %v6096
  %v6177 = vpop.f32.mrf.mxu0
  %v6178 = vadd.f32 0.0, %v6177
  %v6179 = vpop.f32.mrf.mxu0
  %6180 = vdwg.mxu0
  %6181 = vmatpush.bf16.msra.mxu0 0
  %6182 = vmatpush.bf16.msra.mxu0 0
  %6183 = vmatpush.bf16.msra.mxu0 0
  %6184 = vmatpush.bf16.msra.mxu0 0
  %6185 = vmatpush.bf16.msra.mxu0 0
  %6186 = vmatpush.bf16.msra.mxu0 0
  %6187 = vmatpush.bf16.msra.mxu0 0
  %6188 = vmatpush.bf16.msra.mxu0 %v6114
  %6189 = vmatmul.bf16.gmra.mxu0 %v6096
  %v6190 = vpop.f32.mrf.mxu0
  %v6191 = vadd.f32 0.0, %v6190
  %v6192 = vpop.f32.mrf.mxu0
  %6193 = vdwg.mxu0
  %v6194 = vadd.f32 %v6067, %v6126
  %v6195 = vadd.f32 %v6068, %v6139
  %v6196 = vadd.f32 %v6069, %v6152
  %v6197 = vadd.f32 %v6070, %v6165
  %v6198 = vadd.f32 %v6071, %v6178
  %v6199 = vadd.f32 %v6072, %v6191
  %s6200 = scalar_lea.vmem %s11, 28
  %v6201 = vld [vmem:[%s6200] sm:$0xf]
  %6202 = vrot.lane.b32.xlu0 %v5941, 110
  %v6203 = vpop.permute.xlu0 %6202
  %6204 = vrot.lane.b32.xlu0 %v5942, 110
  %v6205 = vpop.permute.xlu0 %6204
  %6206 = vrot.lane.b32.xlu0 %v5943, 110
  %v6207 = vpop.permute.xlu0 %6206
  %6208 = vrot.lane.b32.xlu0 %v5944, 110
  %v6209 = vpop.permute.xlu0 %6208
  %6210 = vrot.lane.b32.xlu0 %v5945, 110
  %v6211 = vpop.permute.xlu0 %6210
  %6212 = vrot.lane.b32.xlu0 %v5946, 110
  %v6213 = vpop.permute.xlu0 %6212
  %6214 = vrot.lane.b32.xlu0 %v5947, 110
  %v6215 = vpop.permute.xlu0 %6214
  %v6216 = vsel %vm1478, %v6203, %v6205
  %v6217 = vsel %vm1478, %v6205, %v6207
  %v6218 = vsel %vm1478, %v6207, %v6209
  %v6219 = vsel %vm1478, %v6209, %v6211
  %v6220 = vsel %vm1478, %v6211, %v6213
  %v6221 = vsel %vm1478, %v6213, %v6215
  %v6223 = vsel %vm131, %v6201, 0
  %v6226 = vsel %vm138, %v6216, 0
  %v6229 = vsel %vm138, %v6217, 0
  %v6232 = vsel %vm138, %v6218, 0
  %v6235 = vsel %vm138, %v6219, 0
  %v6238 = vsel %vm138, %v6220, 0
  %v6241 = vsel %vm138, %v6221, 0
  %6243 = vmatpush.bf16.msra.mxu0 0
  %6244 = vmatpush.bf16.msra.mxu0 0
  %6245 = vmatpush.bf16.msra.mxu0 0
  %6246 = vmatpush.bf16.msra.mxu0 0
  %6247 = vmatpush.bf16.msra.mxu0 0
  %6248 = vmatpush.bf16.msra.mxu0 0
  %6249 = vmatpush.bf16.msra.mxu0 0
  %6250 = vmatpush.bf16.msra.mxu0 %v6226
  %6251 = vmatmul.bf16.gmra.mxu0 %v6223
  %v6252 = vpop.f32.mrf.mxu0
  %v6253 = vadd.f32 0.0, %v6252
  %v6254 = vpop.f32.mrf.mxu0
  %6255 = vdwg.mxu0
  %6256 = vmatpush.bf16.msra.mxu0 0
  %6257 = vmatpush.bf16.msra.mxu0 0
  %6258 = vmatpush.bf16.msra.mxu0 0
  %6259 = vmatpush.bf16.msra.mxu0 0
  %6260 = vmatpush.bf16.msra.mxu0 0
  %6261 = vmatpush.bf16.msra.mxu0 0
  %6262 = vmatpush.bf16.msra.mxu0 0
  %6263 = vmatpush.bf16.msra.mxu0 %v6229
  %6264 = vmatmul.bf16.gmra.mxu0 %v6223
  %v6265 = vpop.f32.mrf.mxu0
  %v6266 = vadd.f32 0.0, %v6265
  %v6267 = vpop.f32.mrf.mxu0
  %6268 = vdwg.mxu0
  %6269 = vmatpush.bf16.msra.mxu0 0
  %6270 = vmatpush.bf16.msra.mxu0 0
  %6271 = vmatpush.bf16.msra.mxu0 0
  %6272 = vmatpush.bf16.msra.mxu0 0
  %6273 = vmatpush.bf16.msra.mxu0 0
  %6274 = vmatpush.bf16.msra.mxu0 0
  %6275 = vmatpush.bf16.msra.mxu0 0
  %6276 = vmatpush.bf16.msra.mxu0 %v6232
  %6277 = vmatmul.bf16.gmra.mxu0 %v6223
  %v6278 = vpop.f32.mrf.mxu0
  %v6279 = vadd.f32 0.0, %v6278
  %v6280 = vpop.f32.mrf.mxu0
  %6281 = vdwg.mxu0
  %6282 = vmatpush.bf16.msra.mxu0 0
  %6283 = vmatpush.bf16.msra.mxu0 0
  %6284 = vmatpush.bf16.msra.mxu0 0
  %6285 = vmatpush.bf16.msra.mxu0 0
  %6286 = vmatpush.bf16.msra.mxu0 0
  %6287 = vmatpush.bf16.msra.mxu0 0
  %6288 = vmatpush.bf16.msra.mxu0 0
  %6289 = vmatpush.bf16.msra.mxu0 %v6235
  %6290 = vmatmul.bf16.gmra.mxu0 %v6223
  %v6291 = vpop.f32.mrf.mxu0
  %v6292 = vadd.f32 0.0, %v6291
  %v6293 = vpop.f32.mrf.mxu0
  %6294 = vdwg.mxu0
  %6295 = vmatpush.bf16.msra.mxu0 0
  %6296 = vmatpush.bf16.msra.mxu0 0
  %6297 = vmatpush.bf16.msra.mxu0 0
  %6298 = vmatpush.bf16.msra.mxu0 0
  %6299 = vmatpush.bf16.msra.mxu0 0
  %6300 = vmatpush.bf16.msra.mxu0 0
  %6301 = vmatpush.bf16.msra.mxu0 0
  %6302 = vmatpush.bf16.msra.mxu0 %v6238
  %6303 = vmatmul.bf16.gmra.mxu0 %v6223
  %v6304 = vpop.f32.mrf.mxu0
  %v6305 = vadd.f32 0.0, %v6304
  %v6306 = vpop.f32.mrf.mxu0
  %6307 = vdwg.mxu0
  %6308 = vmatpush.bf16.msra.mxu0 0
  %6309 = vmatpush.bf16.msra.mxu0 0
  %6310 = vmatpush.bf16.msra.mxu0 0
  %6311 = vmatpush.bf16.msra.mxu0 0
  %6312 = vmatpush.bf16.msra.mxu0 0
  %6313 = vmatpush.bf16.msra.mxu0 0
  %6314 = vmatpush.bf16.msra.mxu0 0
  %6315 = vmatpush.bf16.msra.mxu0 %v6241
  %6316 = vmatmul.bf16.gmra.mxu0 %v6223
  %v6317 = vpop.f32.mrf.mxu0
  %v6318 = vadd.f32 0.0, %v6317
  %v6319 = vpop.f32.mrf.mxu0
  %6320 = vdwg.mxu0
  %v6321 = vadd.f32 %v6194, %v6253
  %v6322 = vadd.f32 %v6195, %v6266
  %v6323 = vadd.f32 %v6196, %v6279
  %v6324 = vadd.f32 %v6197, %v6292
  %v6325 = vadd.f32 %v6198, %v6305
  %v6326 = vadd.f32 %v6199, %v6318
  %s6327 = scalar_lea.vmem %s11, 32
  %v6328 = vld [vmem:[%s6327] sm:$0xf]
  %6329 = vrot.lane.b32.xlu0 %v5941, 109
  %v6330 = vpop.permute.xlu0 %6329
  %6331 = vrot.lane.b32.xlu0 %v5942, 109
  %v6332 = vpop.permute.xlu0 %6331
  %6333 = vrot.lane.b32.xlu0 %v5943, 109
  %v6334 = vpop.permute.xlu0 %6333
  %6335 = vrot.lane.b32.xlu0 %v5944, 109
  %v6336 = vpop.permute.xlu0 %6335
  %6337 = vrot.lane.b32.xlu0 %v5945, 109
  %v6338 = vpop.permute.xlu0 %6337
  %6339 = vrot.lane.b32.xlu0 %v5946, 109
  %v6340 = vpop.permute.xlu0 %6339
  %6341 = vrot.lane.b32.xlu0 %v5947, 109
  %v6342 = vpop.permute.xlu0 %6341
  %v6343 = vsel %vm1676, %v6330, %v6332
  %v6344 = vsel %vm1676, %v6332, %v6334
  %v6345 = vsel %vm1676, %v6334, %v6336
  %v6346 = vsel %vm1676, %v6336, %v6338
  %v6347 = vsel %vm1676, %v6338, %v6340
  %v6348 = vsel %vm1676, %v6340, %v6342
  %v6350 = vsel %vm131, %v6328, 0
  %v6353 = vsel %vm138, %v6343, 0
  %v6356 = vsel %vm138, %v6344, 0
  %v6359 = vsel %vm138, %v6345, 0
  %v6362 = vsel %vm138, %v6346, 0
  %v6365 = vsel %vm138, %v6347, 0
  %v6368 = vsel %vm138, %v6348, 0
  %6370 = vmatpush.bf16.msra.mxu0 0
  %6371 = vmatpush.bf16.msra.mxu0 0
  %6372 = vmatpush.bf16.msra.mxu0 0
  %6373 = vmatpush.bf16.msra.mxu0 0
  %6374 = vmatpush.bf16.msra.mxu0 0
  %6375 = vmatpush.bf16.msra.mxu0 0
  %6376 = vmatpush.bf16.msra.mxu0 0
  %6377 = vmatpush.bf16.msra.mxu0 %v6353
  %6378 = vmatmul.bf16.gmra.mxu0 %v6350
  %v6379 = vpop.f32.mrf.mxu0
  %v6380 = vadd.f32 0.0, %v6379
  %v6381 = vpop.f32.mrf.mxu0
  %6382 = vdwg.mxu0
  %6383 = vmatpush.bf16.msra.mxu0 0
  %6384 = vmatpush.bf16.msra.mxu0 0
  %6385 = vmatpush.bf16.msra.mxu0 0
  %6386 = vmatpush.bf16.msra.mxu0 0
  %6387 = vmatpush.bf16.msra.mxu0 0
  %6388 = vmatpush.bf16.msra.mxu0 0
  %6389 = vmatpush.bf16.msra.mxu0 0
  %6390 = vmatpush.bf16.msra.mxu0 %v6356
  %6391 = vmatmul.bf16.gmra.mxu0 %v6350
  %v6392 = vpop.f32.mrf.mxu0
  %v6393 = vadd.f32 0.0, %v6392
  %v6394 = vpop.f32.mrf.mxu0
  %6395 = vdwg.mxu0
  %6396 = vmatpush.bf16.msra.mxu0 0
  %6397 = vmatpush.bf16.msra.mxu0 0
  %6398 = vmatpush.bf16.msra.mxu0 0
  %6399 = vmatpush.bf16.msra.mxu0 0
  %6400 = vmatpush.bf16.msra.mxu0 0
  %6401 = vmatpush.bf16.msra.mxu0 0
  %6402 = vmatpush.bf16.msra.mxu0 0
  %6403 = vmatpush.bf16.msra.mxu0 %v6359
  %6404 = vmatmul.bf16.gmra.mxu0 %v6350
  %v6405 = vpop.f32.mrf.mxu0
  %v6406 = vadd.f32 0.0, %v6405
  %v6407 = vpop.f32.mrf.mxu0
  %6408 = vdwg.mxu0
  %6409 = vmatpush.bf16.msra.mxu0 0
  %6410 = vmatpush.bf16.msra.mxu0 0
  %6411 = vmatpush.bf16.msra.mxu0 0
  %6412 = vmatpush.bf16.msra.mxu0 0
  %6413 = vmatpush.bf16.msra.mxu0 0
  %6414 = vmatpush.bf16.msra.mxu0 0
  %6415 = vmatpush.bf16.msra.mxu0 0
  %6416 = vmatpush.bf16.msra.mxu0 %v6362
  %6417 = vmatmul.bf16.gmra.mxu0 %v6350
  %v6418 = vpop.f32.mrf.mxu0
  %v6419 = vadd.f32 0.0, %v6418
  %v6420 = vpop.f32.mrf.mxu0
  %6421 = vdwg.mxu0
  %6422 = vmatpush.bf16.msra.mxu0 0
  %6423 = vmatpush.bf16.msra.mxu0 0
  %6424 = vmatpush.bf16.msra.mxu0 0
  %6425 = vmatpush.bf16.msra.mxu0 0
  %6426 = vmatpush.bf16.msra.mxu0 0
  %6427 = vmatpush.bf16.msra.mxu0 0
  %6428 = vmatpush.bf16.msra.mxu0 0
  %6429 = vmatpush.bf16.msra.mxu0 %v6365
  %6430 = vmatmul.bf16.gmra.mxu0 %v6350
  %v6431 = vpop.f32.mrf.mxu0
  %v6432 = vadd.f32 0.0, %v6431
  %v6433 = vpop.f32.mrf.mxu0
  %6434 = vdwg.mxu0
  %6435 = vmatpush.bf16.msra.mxu0 0
  %6436 = vmatpush.bf16.msra.mxu0 0
  %6437 = vmatpush.bf16.msra.mxu0 0
  %6438 = vmatpush.bf16.msra.mxu0 0
  %6439 = vmatpush.bf16.msra.mxu0 0
  %6440 = vmatpush.bf16.msra.mxu0 0
  %6441 = vmatpush.bf16.msra.mxu0 0
  %6442 = vmatpush.bf16.msra.mxu0 %v6368
  %6443 = vmatmul.bf16.gmra.mxu0 %v6350
  %v6444 = vpop.f32.mrf.mxu0
  %v6445 = vadd.f32 0.0, %v6444
  %v6446 = vpop.f32.mrf.mxu0
  %6447 = vdwg.mxu0
  %v6448 = vadd.f32 %v6321, %v6380
  %v6449 = vadd.f32 %v6322, %v6393
  %v6450 = vadd.f32 %v6323, %v6406
  %v6451 = vadd.f32 %v6324, %v6419
  %v6452 = vadd.f32 %v6325, %v6432
  %v6453 = vadd.f32 %v6326, %v6445
  %v6454 = vmul.f32 %v6448, %v1846
  %v6455 = vmul.f32 %v6449, %v1847
  %v6456 = vmul.f32 %v6450, %v1848
  %v6457 = vmul.f32 %v6451, %v1849
  %v6458 = vmul.f32 %v6452, %v1850
  %v6459 = vmul.f32 %v6453, %v1851
  %v6460 = vadd.f32 %v6454, %v6455
  %v6461 = vadd.f32 %v6460, %v6456
  %v6462 = vadd.f32 %v6461, %v6457
  %v6463 = vadd.f32 %v6462, %v6458
  %v6464 = vadd.f32 %v6463, %v6459
  %6465 = vadd.xlane.f32.xlu0 %v6464
  %v6466 = vpop.xlane.xlu0 %6465
  %v6467 = vmul.f32 %v6466, 0.001953125
  %v6468 = vsub.f32 %v6448, %v6467
  %v6469 = vsub.f32 %v6449, %v6467
  %v6470 = vsub.f32 %v6450, %v6467
  %v6471 = vsub.f32 %v6451, %v6467
  %v6472 = vsub.f32 %v6452, %v6467
  %v6473 = vsub.f32 %v6453, %v6467
  %v6474 = vmul.f32 %v6468, %v1846
  %v6475 = vmul.f32 %v6469, %v1847
  %v6476 = vmul.f32 %v6470, %v1848
  %v6477 = vmul.f32 %v6471, %v1849
  %v6478 = vmul.f32 %v6472, %v1850
  %v6479 = vmul.f32 %v6473, %v1851
  %v6480 = vmul.f32 %v6474, %v6474
  %v6481 = vmul.f32 %v6475, %v6475
  %v6482 = vmul.f32 %v6476, %v6476
  %v6483 = vmul.f32 %v6477, %v6477
  %v6484 = vmul.f32 %v6478, %v6478
  %v6485 = vmul.f32 %v6479, %v6479
  %v6486 = vadd.f32 %v6480, %v6481
  %v6487 = vadd.f32 %v6486, %v6482
  %v6488 = vadd.f32 %v6487, %v6483
  %v6489 = vadd.f32 %v6488, %v6484
  %v6490 = vadd.f32 %v6489, %v6485
  %6491 = vadd.xlane.f32.xlu0 %v6490
  %v6492 = vpop.xlane.xlu0 %6491
  %v6493 = vmul.f32 %v6492, 0.001953125
  %v6494 = vadd.f32 %v6493, 1e-05
  %v6495 = vrsqrt.pop %v6494
  %v6496 = vmul.f32 %v6495, %v6494
  %v6497 = vmul.f32 %v6496, %v6495
  %v6498 = vmul.f32 0.5, %v6497
  %v6499 = vsub.f32 1.5, %v6498
  %v6500 = vmul.f32 %v6495, %v6499
  %vm6501 = vweird.f32 %v6494
  %vm6502 = vweird.f32 %v6495
  %vm6503 = vmor %vm6501, %vm6502
  %v6504 = vsel %vm6503, %v6495, %v6500
  %v6505 = vld [vmem:[%s12] sm:$0xff]
  %v6506 = vmul.f32 %v6504, %v6505
  %6508 = vset.pattern.permute.xlu0 0
  %6509 = vperm.xlu0 %6508, %v6506
  %v6510 = vpop.permute.xlu0 %6509
  %v6512 = vmul.f32 %v6474, %v6510
  %v6513 = vmul.f32 %v6475, %v6510
  %v6514 = vmul.f32 %v6476, %v6510
  %v6515 = vmul.f32 %v6477, %v6510
  %v6516 = vmul.f32 %v6478, %v6510
  %v6517 = vmul.f32 %v6479, %v6510
  %v6518 = vld [vmem:[%s13] sm:$0xff]
  %6520 = vset.pattern.permute.xlu0 0
  %6521 = vperm.xlu0 %6520, %v6518
  %v6522 = vpop.permute.xlu0 %6521
  %v6524 = vadd.f32 %v6512, %v6522
  %v6525 = vadd.f32 %v6513, %v6522
  %v6526 = vadd.f32 %v6514, %v6522
  %v6527 = vadd.f32 %v6515, %v6522
  %v6528 = vadd.f32 %v6516, %v6522
  %v6529 = vadd.f32 %v6517, %v6522
  %vm6530 = vcmp.ge.f32.partialorder %v6524, 0.0
  %vm6531 = vcmp.ge.f32.partialorder %v6525, 0.0
  %vm6532 = vcmp.ge.f32.partialorder %v6526, 0.0
  %vm6533 = vcmp.ge.f32.partialorder %v6527, 0.0
  %vm6534 = vcmp.ge.f32.partialorder %v6528, 0.0
  %vm6535 = vcmp.ge.f32.partialorder %v6529, 0.0
  %v6536 = vmul.f32 %v6524, 0.2
  %v6537 = vmul.f32 %v6525, 0.2
  %v6538 = vmul.f32 %v6526, 0.2
  %v6539 = vmul.f32 %v6527, 0.2
  %v6540 = vmul.f32 %v6528, 0.2
  %v6541 = vmul.f32 %v6529, 0.2
  %v6542 = vsel %vm6530, %v6524, %v6536
  %v6543 = vsel %vm6531, %v6525, %v6537
  %v6544 = vsel %vm6532, %v6526, %v6538
  %v6545 = vsel %vm6533, %v6527, %v6539
  %v6546 = vsel %vm6534, %v6528, %v6540
  %v6547 = vsel %vm6535, %v6529, %v6541
  %v6548 = vmul.f32 %v6542, %v1846
  %v6549 = vmul.f32 %v6543, %v1847
  %v6550 = vmul.f32 %v6544, %v1848
  %v6551 = vmul.f32 %v6545, %v1849
  %v6552 = vmul.f32 %v6546, %v1850
  %v6553 = vmul.f32 %v6547, %v1851
  %v6554 = vpack.c.bf16 %v6549, %v6548
  %v6555 = vpack.c.bf16 %v6551, %v6550
  %v6556 = vpack.c.bf16 %v6553, %v6552
  %6557 = vst [vmem:[#allocation2 + $0x4] sm:$0xff] %v6554
  %6558 = vst [vmem:[#allocation2 + $0xc] sm:$0xff] %v6555
  %6559 = vst [vmem:[#allocation2 + $0x14] sm:$0xff] %v6556
  %v6560 = vld [vmem:[#allocation2] sm:$0xff]
  %v6561 = vld [vmem:[#allocation2 + $0x8] sm:$0xff]
  %v6562 = vld [vmem:[#allocation2 + $0x10] sm:$0xff]
  %v6563 = vld [vmem:[#allocation2 + $0x18] sm:$0xf]
  %v6564 = vld [vmem:[%s14] sm:$0x3]
  %s6565 = scalar_lea.vmem %s14, 2
  %v6566 = vld [vmem:[%s6565] sm:$0x3]
  %v6571 = vunpack.c.l.b16 %v6560
  %v6572 = vunpack.c.h.b16 %v6560
  %v6573 = vunpack.c.l.b16 %v6561
  %v6574 = vunpack.c.h.b16 %v6561
  %v6575 = vunpack.c.l.b16 %v6562
  %v6576 = vunpack.c.h.b16 %v6562
  %v6577 = vunpack.c.l.b16 %v6563
  %v6578 = vpack.c.b16 %v6571, %v6571
  %v6579 = vpack.c.b16 %v6572, %v6572
  %v6580 = vpack.c.b16 %v6573, %v6573
  %v6581 = vpack.c.b16 %v6574, %v6574
  %v6582 = vpack.c.b16 %v6575, %v6575
  %v6583 = vpack.c.b16 %v6576, %v6576
  %v6584 = vpack.c.b16 %v6577, %v6577
  %6585 = vrot.lane.b32.xlu0 %v6578, 18
  %v6586 = vpop.permute.xlu0 %6585
  %6587 = vrot.lane.b32.xlu0 %v6579, 18
  %v6588 = vpop.permute.xlu0 %6587
  %6589 = vrot.lane.b32.xlu0 %v6580, 18
  %v6590 = vpop.permute.xlu0 %6589
  %6591 = vrot.lane.b32.xlu0 %v6581, 18
  %v6592 = vpop.permute.xlu0 %6591
  %6593 = vrot.lane.b32.xlu0 %v6582, 18
  %v6594 = vpop.permute.xlu0 %6593
  %6595 = vrot.lane.b32.xlu0 %v6583, 18
  %v6596 = vpop.permute.xlu0 %6595
  %6597 = vrot.lane.b32.xlu0 %v6584, 18
  %v6598 = vpop.permute.xlu0 %6597
  %v6599 = vsel %vm124, %v6586, %v6588
  %v6600 = vsel %vm124, %v6588, %v6590
  %v6601 = vsel %vm124, %v6590, %v6592
  %v6602 = vsel %vm124, %v6592, %v6594
  %v6603 = vsel %vm124, %v6594, %v6596
  %v6604 = vsel %vm124, %v6596, %v6598
  %v6606 = vsel %vm131, %v6566, 0
  %v6609 = vsel %vm138, %v6599, 0
  %v6612 = vsel %vm138, %v6600, 0
  %v6615 = vsel %vm138, %v6601, 0
  %v6618 = vsel %vm138, %v6602, 0
  %v6621 = vsel %vm138, %v6603, 0
  %v6624 = vsel %vm138, %v6604, 0
  %6626 = vmatpush.bf16.msra.mxu0 0
  %6627 = vmatpush.bf16.msra.mxu0 0
  %6628 = vmatpush.bf16.msra.mxu0 0
  %6629 = vmatpush.bf16.msra.mxu0 0
  %6630 = vmatpush.bf16.msra.mxu0 0
  %6631 = vmatpush.bf16.msra.mxu0 0
  %6632 = vmatpush.bf16.msra.mxu0 0
  %6633 = vmatpush.bf16.msra.mxu0 %v6609
  %6634 = vmatmul.bf16.gmra.mxu0 %v6606
  %v6635 = vpop.f32.mrf.mxu0
  %v6636 = vadd.f32 0.0, %v6635
  %v6637 = vpop.f32.mrf.mxu0
  %6638 = vdwg.mxu0
  %6639 = vmatpush.bf16.msra.mxu0 0
  %6640 = vmatpush.bf16.msra.mxu0 0
  %6641 = vmatpush.bf16.msra.mxu0 0
  %6642 = vmatpush.bf16.msra.mxu0 0
  %6643 = vmatpush.bf16.msra.mxu0 0
  %6644 = vmatpush.bf16.msra.mxu0 0
  %6645 = vmatpush.bf16.msra.mxu0 0
  %6646 = vmatpush.bf16.msra.mxu0 %v6612
  %6647 = vmatmul.bf16.gmra.mxu0 %v6606
  %v6648 = vpop.f32.mrf.mxu0
  %v6649 = vadd.f32 0.0, %v6648
  %v6650 = vpop.f32.mrf.mxu0
  %6651 = vdwg.mxu0
  %6652 = vmatpush.bf16.msra.mxu0 0
  %6653 = vmatpush.bf16.msra.mxu0 0
  %6654 = vmatpush.bf16.msra.mxu0 0
  %6655 = vmatpush.bf16.msra.mxu0 0
  %6656 = vmatpush.bf16.msra.mxu0 0
  %6657 = vmatpush.bf16.msra.mxu0 0
  %6658 = vmatpush.bf16.msra.mxu0 0
  %6659 = vmatpush.bf16.msra.mxu0 %v6615
  %6660 = vmatmul.bf16.gmra.mxu0 %v6606
  %v6661 = vpop.f32.mrf.mxu0
  %v6662 = vadd.f32 0.0, %v6661
  %v6663 = vpop.f32.mrf.mxu0
  %6664 = vdwg.mxu0
  %6665 = vmatpush.bf16.msra.mxu0 0
  %6666 = vmatpush.bf16.msra.mxu0 0
  %6667 = vmatpush.bf16.msra.mxu0 0
  %6668 = vmatpush.bf16.msra.mxu0 0
  %6669 = vmatpush.bf16.msra.mxu0 0
  %6670 = vmatpush.bf16.msra.mxu0 0
  %6671 = vmatpush.bf16.msra.mxu0 0
  %6672 = vmatpush.bf16.msra.mxu0 %v6618
  %6673 = vmatmul.bf16.gmra.mxu0 %v6606
  %v6674 = vpop.f32.mrf.mxu0
  %v6675 = vadd.f32 0.0, %v6674
  %v6676 = vpop.f32.mrf.mxu0
  %6677 = vdwg.mxu0
  %6678 = vmatpush.bf16.msra.mxu0 0
  %6679 = vmatpush.bf16.msra.mxu0 0
  %6680 = vmatpush.bf16.msra.mxu0 0
  %6681 = vmatpush.bf16.msra.mxu0 0
  %6682 = vmatpush.bf16.msra.mxu0 0
  %6683 = vmatpush.bf16.msra.mxu0 0
  %6684 = vmatpush.bf16.msra.mxu0 0
  %6685 = vmatpush.bf16.msra.mxu0 %v6621
  %6686 = vmatmul.bf16.gmra.mxu0 %v6606
  %v6687 = vpop.f32.mrf.mxu0
  %v6688 = vadd.f32 0.0, %v6687
  %v6689 = vpop.f32.mrf.mxu0
  %6690 = vdwg.mxu0
  %6691 = vmatpush.bf16.msra.mxu0 0
  %6692 = vmatpush.bf16.msra.mxu0 0
  %6693 = vmatpush.bf16.msra.mxu0 0
  %6694 = vmatpush.bf16.msra.mxu0 0
  %6695 = vmatpush.bf16.msra.mxu0 0
  %6696 = vmatpush.bf16.msra.mxu0 0
  %6697 = vmatpush.bf16.msra.mxu0 0
  %6698 = vmatpush.bf16.msra.mxu0 %v6624
  %6699 = vmatmul.bf16.gmra.mxu0 %v6606
  %v6700 = vpop.f32.mrf.mxu0
  %v6701 = vadd.f32 0.0, %v6700
  %v6702 = vpop.f32.mrf.mxu0
  %6703 = vdwg.mxu0
  %6704 = vrot.lane.b32.xlu0 %v6578, 19
  %v6705 = vpop.permute.xlu0 %6704
  %6706 = vrot.lane.b32.xlu0 %v6579, 19
  %v6707 = vpop.permute.xlu0 %6706
  %6708 = vrot.lane.b32.xlu0 %v6580, 19
  %v6709 = vpop.permute.xlu0 %6708
  %6710 = vrot.lane.b32.xlu0 %v6581, 19
  %v6711 = vpop.permute.xlu0 %6710
  %6712 = vrot.lane.b32.xlu0 %v6582, 19
  %v6713 = vpop.permute.xlu0 %6712
  %6714 = vrot.lane.b32.xlu0 %v6583, 19
  %v6715 = vpop.permute.xlu0 %6714
  %6716 = vrot.lane.b32.xlu0 %v6584, 19
  %v6717 = vpop.permute.xlu0 %6716
  %v6718 = vsel %vm295, %v6705, %v6707
  %v6719 = vsel %vm295, %v6707, %v6709
  %v6720 = vsel %vm295, %v6709, %v6711
  %v6721 = vsel %vm295, %v6711, %v6713
  %v6722 = vsel %vm295, %v6713, %v6715
  %v6723 = vsel %vm295, %v6715, %v6717
  %v6725 = vsel %vm131, %v6564, 0
  %v6728 = vsel %vm138, %v6718, 0
  %v6731 = vsel %vm138, %v6719, 0
  %v6734 = vsel %vm138, %v6720, 0
  %v6737 = vsel %vm138, %v6721, 0
  %v6740 = vsel %vm138, %v6722, 0
  %v6743 = vsel %vm138, %v6723, 0
  %6745 = vmatpush.bf16.msra.mxu0 0
  %6746 = vmatpush.bf16.msra.mxu0 0
  %6747 = vmatpush.bf16.msra.mxu0 0
  %6748 = vmatpush.bf16.msra.mxu0 0
  %6749 = vmatpush.bf16.msra.mxu0 0
  %6750 = vmatpush.bf16.msra.mxu0 0
  %6751 = vmatpush.bf16.msra.mxu0 0
  %6752 = vmatpush.bf16.msra.mxu0 %v6728
  %6753 = vmatmul.bf16.gmra.mxu0 %v6725
  %v6754 = vpop.f32.mrf.mxu0
  %v6755 = vadd.f32 %v6636, %v6754
  %v6756 = vpop.f32.mrf.mxu0
  %6757 = vdwg.mxu0
  %6758 = vmatpush.bf16.msra.mxu0 0
  %6759 = vmatpush.bf16.msra.mxu0 0
  %6760 = vmatpush.bf16.msra.mxu0 0
  %6761 = vmatpush.bf16.msra.mxu0 0
  %6762 = vmatpush.bf16.msra.mxu0 0
  %6763 = vmatpush.bf16.msra.mxu0 0
  %6764 = vmatpush.bf16.msra.mxu0 0
  %6765 = vmatpush.bf16.msra.mxu0 %v6731
  %6766 = vmatmul.bf16.gmra.mxu0 %v6725
  %v6767 = vpop.f32.mrf.mxu0
  %v6768 = vadd.f32 %v6649, %v6767
  %v6769 = vpop.f32.mrf.mxu0
  %6770 = vdwg.mxu0
  %6771 = vmatpush.bf16.msra.mxu0 0
  %6772 = vmatpush.bf16.msra.mxu0 0
  %6773 = vmatpush.bf16.msra.mxu0 0
  %6774 = vmatpush.bf16.msra.mxu0 0
  %6775 = vmatpush.bf16.msra.mxu0 0
  %6776 = vmatpush.bf16.msra.mxu0 0
  %6777 = vmatpush.bf16.msra.mxu0 0
  %6778 = vmatpush.bf16.msra.mxu0 %v6734
  %6779 = vmatmul.bf16.gmra.mxu0 %v6725
  %v6780 = vpop.f32.mrf.mxu0
  %v6781 = vadd.f32 %v6662, %v6780
  %v6782 = vpop.f32.mrf.mxu0
  %6783 = vdwg.mxu0
  %6784 = vmatpush.bf16.msra.mxu0 0
  %6785 = vmatpush.bf16.msra.mxu0 0
  %6786 = vmatpush.bf16.msra.mxu0 0
  %6787 = vmatpush.bf16.msra.mxu0 0
  %6788 = vmatpush.bf16.msra.mxu0 0
  %6789 = vmatpush.bf16.msra.mxu0 0
  %6790 = vmatpush.bf16.msra.mxu0 0
  %6791 = vmatpush.bf16.msra.mxu0 %v6737
  %6792 = vmatmul.bf16.gmra.mxu0 %v6725
  %v6793 = vpop.f32.mrf.mxu0
  %v6794 = vadd.f32 %v6675, %v6793
  %v6795 = vpop.f32.mrf.mxu0
  %6796 = vdwg.mxu0
  %6797 = vmatpush.bf16.msra.mxu0 0
  %6798 = vmatpush.bf16.msra.mxu0 0
  %6799 = vmatpush.bf16.msra.mxu0 0
  %6800 = vmatpush.bf16.msra.mxu0 0
  %6801 = vmatpush.bf16.msra.mxu0 0
  %6802 = vmatpush.bf16.msra.mxu0 0
  %6803 = vmatpush.bf16.msra.mxu0 0
  %6804 = vmatpush.bf16.msra.mxu0 %v6740
  %6805 = vmatmul.bf16.gmra.mxu0 %v6725
  %v6806 = vpop.f32.mrf.mxu0
  %v6807 = vadd.f32 %v6688, %v6806
  %v6808 = vpop.f32.mrf.mxu0
  %6809 = vdwg.mxu0
  %6810 = vmatpush.bf16.msra.mxu0 0
  %6811 = vmatpush.bf16.msra.mxu0 0
  %6812 = vmatpush.bf16.msra.mxu0 0
  %6813 = vmatpush.bf16.msra.mxu0 0
  %6814 = vmatpush.bf16.msra.mxu0 0
  %6815 = vmatpush.bf16.msra.mxu0 0
  %6816 = vmatpush.bf16.msra.mxu0 0
  %6817 = vmatpush.bf16.msra.mxu0 %v6743
  %6818 = vmatmul.bf16.gmra.mxu0 %v6725
  %v6819 = vpop.f32.mrf.mxu0
  %v6820 = vadd.f32 %v6701, %v6819
  %v6821 = vpop.f32.mrf.mxu0
  %6822 = vdwg.mxu0
  %s6823 = scalar_lea.vmem %s14, 4
  %v6824 = vld [vmem:[%s6823] sm:$0x3]
  %6825 = vrot.lane.b32.xlu0 %v6578, 17
  %v6826 = vpop.permute.xlu0 %6825
  %6827 = vrot.lane.b32.xlu0 %v6579, 17
  %v6828 = vpop.permute.xlu0 %6827
  %6829 = vrot.lane.b32.xlu0 %v6580, 17
  %v6830 = vpop.permute.xlu0 %6829
  %6831 = vrot.lane.b32.xlu0 %v6581, 17
  %v6832 = vpop.permute.xlu0 %6831
  %6833 = vrot.lane.b32.xlu0 %v6582, 17
  %v6834 = vpop.permute.xlu0 %6833
  %6835 = vrot.lane.b32.xlu0 %v6583, 17
  %v6836 = vpop.permute.xlu0 %6835
  %6837 = vrot.lane.b32.xlu0 %v6584, 17
  %v6838 = vpop.permute.xlu0 %6837
  %v6839 = vsel %vm469, %v6826, %v6828
  %v6840 = vsel %vm469, %v6828, %v6830
  %v6841 = vsel %vm469, %v6830, %v6832
  %v6842 = vsel %vm469, %v6832, %v6834
  %v6843 = vsel %vm469, %v6834, %v6836
  %v6844 = vsel %vm469, %v6836, %v6838
  %v6846 = vsel %vm131, %v6824, 0
  %v6849 = vsel %vm138, %v6839, 0
  %v6852 = vsel %vm138, %v6840, 0
  %v6855 = vsel %vm138, %v6841, 0
  %v6858 = vsel %vm138, %v6842, 0
  %v6861 = vsel %vm138, %v6843, 0
  %v6864 = vsel %vm138, %v6844, 0
  %6866 = vmatpush.bf16.msra.mxu0 0
  %6867 = vmatpush.bf16.msra.mxu0 0
  %6868 = vmatpush.bf16.msra.mxu0 0
  %6869 = vmatpush.bf16.msra.mxu0 0
  %6870 = vmatpush.bf16.msra.mxu0 0
  %6871 = vmatpush.bf16.msra.mxu0 0
  %6872 = vmatpush.bf16.msra.mxu0 0
  %6873 = vmatpush.bf16.msra.mxu0 %v6849
  %6874 = vmatmul.bf16.gmra.mxu0 %v6846
  %v6875 = vpop.f32.mrf.mxu0
  %v6876 = vadd.f32 0.0, %v6875
  %v6877 = vpop.f32.mrf.mxu0
  %6878 = vdwg.mxu0
  %6879 = vmatpush.bf16.msra.mxu0 0
  %6880 = vmatpush.bf16.msra.mxu0 0
  %6881 = vmatpush.bf16.msra.mxu0 0
  %6882 = vmatpush.bf16.msra.mxu0 0
  %6883 = vmatpush.bf16.msra.mxu0 0
  %6884 = vmatpush.bf16.msra.mxu0 0
  %6885 = vmatpush.bf16.msra.mxu0 0
  %6886 = vmatpush.bf16.msra.mxu0 %v6852
  %6887 = vmatmul.bf16.gmra.mxu0 %v6846
  %v6888 = vpop.f32.mrf.mxu0
  %v6889 = vadd.f32 0.0, %v6888
  %v6890 = vpop.f32.mrf.mxu0
  %6891 = vdwg.mxu0
  %6892 = vmatpush.bf16.msra.mxu0 0
  %6893 = vmatpush.bf16.msra.mxu0 0
  %6894 = vmatpush.bf16.msra.mxu0 0
  %6895 = vmatpush.bf16.msra.mxu0 0
  %6896 = vmatpush.bf16.msra.mxu0 0
  %6897 = vmatpush.bf16.msra.mxu0 0
  %6898 = vmatpush.bf16.msra.mxu0 0
  %6899 = vmatpush.bf16.msra.mxu0 %v6855
  %6900 = vmatmul.bf16.gmra.mxu0 %v6846
  %v6901 = vpop.f32.mrf.mxu0
  %v6902 = vadd.f32 0.0, %v6901
  %v6903 = vpop.f32.mrf.mxu0
  %6904 = vdwg.mxu0
  %6905 = vmatpush.bf16.msra.mxu0 0
  %6906 = vmatpush.bf16.msra.mxu0 0
  %6907 = vmatpush.bf16.msra.mxu0 0
  %6908 = vmatpush.bf16.msra.mxu0 0
  %6909 = vmatpush.bf16.msra.mxu0 0
  %6910 = vmatpush.bf16.msra.mxu0 0
  %6911 = vmatpush.bf16.msra.mxu0 0
  %6912 = vmatpush.bf16.msra.mxu0 %v6858
  %6913 = vmatmul.bf16.gmra.mxu0 %v6846
  %v6914 = vpop.f32.mrf.mxu0
  %v6915 = vadd.f32 0.0, %v6914
  %v6916 = vpop.f32.mrf.mxu0
  %6917 = vdwg.mxu0
  %6918 = vmatpush.bf16.msra.mxu0 0
  %6919 = vmatpush.bf16.msra.mxu0 0
  %6920 = vmatpush.bf16.msra.mxu0 0
  %6921 = vmatpush.bf16.msra.mxu0 0
  %6922 = vmatpush.bf16.msra.mxu0 0
  %6923 = vmatpush.bf16.msra.mxu0 0
  %6924 = vmatpush.bf16.msra.mxu0 0
  %6925 = vmatpush.bf16.msra.mxu0 %v6861
  %6926 = vmatmul.bf16.gmra.mxu0 %v6846
  %v6927 = vpop.f32.mrf.mxu0
  %v6928 = vadd.f32 0.0, %v6927
  %v6929 = vpop.f32.mrf.mxu0
  %6930 = vdwg.mxu0
  %6931 = vmatpush.bf16.msra.mxu0 0
  %6932 = vmatpush.bf16.msra.mxu0 0
  %6933 = vmatpush.bf16.msra.mxu0 0
  %6934 = vmatpush.bf16.msra.mxu0 0
  %6935 = vmatpush.bf16.msra.mxu0 0
  %6936 = vmatpush.bf16.msra.mxu0 0
  %6937 = vmatpush.bf16.msra.mxu0 0
  %6938 = vmatpush.bf16.msra.mxu0 %v6864
  %6939 = vmatmul.bf16.gmra.mxu0 %v6846
  %v6940 = vpop.f32.mrf.mxu0
  %v6941 = vadd.f32 0.0, %v6940
  %v6942 = vpop.f32.mrf.mxu0
  %6943 = vdwg.mxu0
  %v6944 = vadd.f32 %v6755, %v6876
  %v6945 = vadd.f32 %v6768, %v6889
  %v6946 = vadd.f32 %v6781, %v6902
  %v6947 = vadd.f32 %v6794, %v6915
  %v6948 = vadd.f32 %v6807, %v6928
  %v6949 = vadd.f32 %v6820, %v6941
  %s6950 = scalar_lea.vmem %s14, 6
  %v6951 = vld [vmem:[%s6950] sm:$0x3]
  %6952 = vrot.lane.b32.xlu0 %v6578, 1
  %v6953 = vpop.permute.xlu0 %6952
  %6954 = vrot.lane.b32.xlu0 %v6579, 1
  %v6955 = vpop.permute.xlu0 %6954
  %6956 = vrot.lane.b32.xlu0 %v6580, 1
  %v6957 = vpop.permute.xlu0 %6956
  %6958 = vrot.lane.b32.xlu0 %v6581, 1
  %v6959 = vpop.permute.xlu0 %6958
  %6960 = vrot.lane.b32.xlu0 %v6582, 1
  %v6961 = vpop.permute.xlu0 %6960
  %6962 = vrot.lane.b32.xlu0 %v6583, 1
  %v6963 = vpop.permute.xlu0 %6962
  %6964 = vrot.lane.b32.xlu0 %v6584, 1
  %v6965 = vpop.permute.xlu0 %6964
  %v6966 = vsel %vm667, %v6953, %v6955
  %v6967 = vsel %vm667, %v6955, %v6957
  %v6968 = vsel %vm667, %v6957, %v6959
  %v6969 = vsel %vm667, %v6959, %v6961
  %v6970 = vsel %vm667, %v6961, %v6963
  %v6971 = vsel %vm667, %v6963, %v6965
  %v6973 = vsel %vm131, %v6951, 0
  %v6976 = vsel %vm138, %v6966, 0
  %v6979 = vsel %vm138, %v6967, 0
  %v6982 = vsel %vm138, %v6968, 0
  %v6985 = vsel %vm138, %v6969, 0
  %v6988 = vsel %vm138, %v6970, 0
  %v6991 = vsel %vm138, %v6971, 0
  %6993 = vmatpush.bf16.msra.mxu0 0
  %6994 = vmatpush.bf16.msra.mxu0 0
  %6995 = vmatpush.bf16.msra.mxu0 0
  %6996 = vmatpush.bf16.msra.mxu0 0
  %6997 = vmatpush.bf16.msra.mxu0 0
  %6998 = vmatpush.bf16.msra.mxu0 0
  %6999 = vmatpush.bf16.msra.mxu0 0
  %7000 = vmatpush.bf16.msra.mxu0 %v6976
  %7001 = vmatmul.bf16.gmra.mxu0 %v6973
  %v7002 = vpop.f32.mrf.mxu0
  %v7003 = vadd.f32 0.0, %v7002
  %v7004 = vpop.f32.mrf.mxu0
  %7005 = vdwg.mxu0
  %7006 = vmatpush.bf16.msra.mxu0 0
  %7007 = vmatpush.bf16.msra.mxu0 0
  %7008 = vmatpush.bf16.msra.mxu0 0
  %7009 = vmatpush.bf16.msra.mxu0 0
  %7010 = vmatpush.bf16.msra.mxu0 0
  %7011 = vmatpush.bf16.msra.mxu0 0
  %7012 = vmatpush.bf16.msra.mxu0 0
  %7013 = vmatpush.bf16.msra.mxu0 %v6979
  %7014 = vmatmul.bf16.gmra.mxu0 %v6973
  %v7015 = vpop.f32.mrf.mxu0
  %v7016 = vadd.f32 0.0, %v7015
  %v7017 = vpop.f32.mrf.mxu0
  %7018 = vdwg.mxu0
  %7019 = vmatpush.bf16.msra.mxu0 0
  %7020 = vmatpush.bf16.msra.mxu0 0
  %7021 = vmatpush.bf16.msra.mxu0 0
  %7022 = vmatpush.bf16.msra.mxu0 0
  %7023 = vmatpush.bf16.msra.mxu0 0
  %7024 = vmatpush.bf16.msra.mxu0 0
  %7025 = vmatpush.bf16.msra.mxu0 0
  %7026 = vmatpush.bf16.msra.mxu0 %v6982
  %7027 = vmatmul.bf16.gmra.mxu0 %v6973
  %v7028 = vpop.f32.mrf.mxu0
  %v7029 = vadd.f32 0.0, %v7028
  %v7030 = vpop.f32.mrf.mxu0
  %7031 = vdwg.mxu0
  %7032 = vmatpush.bf16.msra.mxu0 0
  %7033 = vmatpush.bf16.msra.mxu0 0
  %7034 = vmatpush.bf16.msra.mxu0 0
  %7035 = vmatpush.bf16.msra.mxu0 0
  %7036 = vmatpush.bf16.msra.mxu0 0
  %7037 = vmatpush.bf16.msra.mxu0 0
  %7038 = vmatpush.bf16.msra.mxu0 0
  %7039 = vmatpush.bf16.msra.mxu0 %v6985
  %7040 = vmatmul.bf16.gmra.mxu0 %v6973
  %v7041 = vpop.f32.mrf.mxu0
  %v7042 = vadd.f32 0.0, %v7041
  %v7043 = vpop.f32.mrf.mxu0
  %7044 = vdwg.mxu0
  %7045 = vmatpush.bf16.msra.mxu0 0
  %7046 = vmatpush.bf16.msra.mxu0 0
  %7047 = vmatpush.bf16.msra.mxu0 0
  %7048 = vmatpush.bf16.msra.mxu0 0
  %7049 = vmatpush.bf16.msra.mxu0 0
  %7050 = vmatpush.bf16.msra.mxu0 0
  %7051 = vmatpush.bf16.msra.mxu0 0
  %7052 = vmatpush.bf16.msra.mxu0 %v6988
  %7053 = vmatmul.bf16.gmra.mxu0 %v6973
  %v7054 = vpop.f32.mrf.mxu0
  %v7055 = vadd.f32 0.0, %v7054
  %v7056 = vpop.f32.mrf.mxu0
  %7057 = vdwg.mxu0
  %7058 = vmatpush.bf16.msra.mxu0 0
  %7059 = vmatpush.bf16.msra.mxu0 0
  %7060 = vmatpush.bf16.msra.mxu0 0
  %7061 = vmatpush.bf16.msra.mxu0 0
  %7062 = vmatpush.bf16.msra.mxu0 0
  %7063 = vmatpush.bf16.msra.mxu0 0
  %7064 = vmatpush.bf16.msra.mxu0 0
  %7065 = vmatpush.bf16.msra.mxu0 %v6991
  %7066 = vmatmul.bf16.gmra.mxu0 %v6973
  %v7067 = vpop.f32.mrf.mxu0
  %v7068 = vadd.f32 0.0, %v7067
  %v7069 = vpop.f32.mrf.mxu0
  %7070 = vdwg.mxu0
  %v7071 = vadd.f32 %v6944, %v7003
  %v7072 = vadd.f32 %v6945, %v7016
  %v7073 = vadd.f32 %v6946, %v7029
  %v7074 = vadd.f32 %v6947, %v7042
  %v7075 = vadd.f32 %v6948, %v7055
  %v7076 = vadd.f32 %v6949, %v7068
  %v7077 = vld [vmem:[#allocation2 + $0x4] sm:$0xff]
  %v7078 = vld [vmem:[#allocation2 + $0xc] sm:$0xff]
  %v7079 = vld [vmem:[#allocation2 + $0x14] sm:$0xff]
  %s7080 = scalar_lea.vmem %s14, 8
  %v7081 = vld [vmem:[%s7080] sm:$0x3]
  %v7085 = vunpack.c.l.b16 %v7077
  %v7086 = vunpack.c.h.b16 %v7077
  %v7087 = vunpack.c.l.b16 %v7078
  %v7088 = vunpack.c.h.b16 %v7078
  %v7089 = vunpack.c.l.b16 %v7079
  %v7090 = vunpack.c.h.b16 %v7079
  %v7091 = vpack.c.b16 %v7085, %v7085
  %v7092 = vpack.c.b16 %v7086, %v7086
  %v7093 = vpack.c.b16 %v7087, %v7087
  %v7094 = vpack.c.b16 %v7088, %v7088
  %v7095 = vpack.c.b16 %v7089, %v7089
  %v7096 = vpack.c.b16 %v7090, %v7090
  %v7098 = vsel %vm131, %v7081, 0
  %v7101 = vsel %vm138, %v7091, 0
  %v7104 = vsel %vm138, %v7092, 0
  %v7107 = vsel %vm138, %v7093, 0
  %v7110 = vsel %vm138, %v7094, 0
  %v7113 = vsel %vm138, %v7095, 0
  %v7116 = vsel %vm138, %v7096, 0
  %7118 = vmatpush.bf16.msra.mxu0 0
  %7119 = vmatpush.bf16.msra.mxu0 0
  %7120 = vmatpush.bf16.msra.mxu0 0
  %7121 = vmatpush.bf16.msra.mxu0 0
  %7122 = vmatpush.bf16.msra.mxu0 0
  %7123 = vmatpush.bf16.msra.mxu0 0
  %7124 = vmatpush.bf16.msra.mxu0 0
  %7125 = vmatpush.bf16.msra.mxu0 %v7101
  %7126 = vmatmul.bf16.gmra.mxu0 %v7098
  %v7127 = vpop.f32.mrf.mxu0
  %v7128 = vadd.f32 0.0, %v7127
  %v7129 = vpop.f32.mrf.mxu0
  %7130 = vdwg.mxu0
  %7131 = vmatpush.bf16.msra.mxu0 0
  %7132 = vmatpush.bf16.msra.mxu0 0
  %7133 = vmatpush.bf16.msra.mxu0 0
  %7134 = vmatpush.bf16.msra.mxu0 0
  %7135 = vmatpush.bf16.msra.mxu0 0
  %7136 = vmatpush.bf16.msra.mxu0 0
  %7137 = vmatpush.bf16.msra.mxu0 0
  %7138 = vmatpush.bf16.msra.mxu0 %v7104
  %7139 = vmatmul.bf16.gmra.mxu0 %v7098
  %v7140 = vpop.f32.mrf.mxu0
  %v7141 = vadd.f32 0.0, %v7140
  %v7142 = vpop.f32.mrf.mxu0
  %7143 = vdwg.mxu0
  %7144 = vmatpush.bf16.msra.mxu0 0
  %7145 = vmatpush.bf16.msra.mxu0 0
  %7146 = vmatpush.bf16.msra.mxu0 0
  %7147 = vmatpush.bf16.msra.mxu0 0
  %7148 = vmatpush.bf16.msra.mxu0 0
  %7149 = vmatpush.bf16.msra.mxu0 0
  %7150 = vmatpush.bf16.msra.mxu0 0
  %7151 = vmatpush.bf16.msra.mxu0 %v7107
  %7152 = vmatmul.bf16.gmra.mxu0 %v7098
  %v7153 = vpop.f32.mrf.mxu0
  %v7154 = vadd.f32 0.0, %v7153
  %v7155 = vpop.f32.mrf.mxu0
  %7156 = vdwg.mxu0
  %7157 = vmatpush.bf16.msra.mxu0 0
  %7158 = vmatpush.bf16.msra.mxu0 0
  %7159 = vmatpush.bf16.msra.mxu0 0
  %7160 = vmatpush.bf16.msra.mxu0 0
  %7161 = vmatpush.bf16.msra.mxu0 0
  %7162 = vmatpush.bf16.msra.mxu0 0
  %7163 = vmatpush.bf16.msra.mxu0 0
  %7164 = vmatpush.bf16.msra.mxu0 %v7110
  %7165 = vmatmul.bf16.gmra.mxu0 %v7098
  %v7166 = vpop.f32.mrf.mxu0
  %v7167 = vadd.f32 0.0, %v7166
  %v7168 = vpop.f32.mrf.mxu0
  %7169 = vdwg.mxu0
  %7170 = vmatpush.bf16.msra.mxu0 0
  %7171 = vmatpush.bf16.msra.mxu0 0
  %7172 = vmatpush.bf16.msra.mxu0 0
  %7173 = vmatpush.bf16.msra.mxu0 0
  %7174 = vmatpush.bf16.msra.mxu0 0
  %7175 = vmatpush.bf16.msra.mxu0 0
  %7176 = vmatpush.bf16.msra.mxu0 0
  %7177 = vmatpush.bf16.msra.mxu0 %v7113
  %7178 = vmatmul.bf16.gmra.mxu0 %v7098
  %v7179 = vpop.f32.mrf.mxu0
  %v7180 = vadd.f32 0.0, %v7179
  %v7181 = vpop.f32.mrf.mxu0
  %7182 = vdwg.mxu0
  %7183 = vmatpush.bf16.msra.mxu0 0
  %7184 = vmatpush.bf16.msra.mxu0 0
  %7185 = vmatpush.bf16.msra.mxu0 0
  %7186 = vmatpush.bf16.msra.mxu0 0
  %7187 = vmatpush.bf16.msra.mxu0 0
  %7188 = vmatpush.bf16.msra.mxu0 0
  %7189 = vmatpush.bf16.msra.mxu0 0
  %7190 = vmatpush.bf16.msra.mxu0 %v7116
  %7191 = vmatmul.bf16.gmra.mxu0 %v7098
  %v7192 = vpop.f32.mrf.mxu0
  %v7193 = vadd.f32 0.0, %v7192
  %v7194 = vpop.f32.mrf.mxu0
  %7195 = vdwg.mxu0
  %v7196 = vadd.f32 %v7071, %v7128
  %v7197 = vadd.f32 %v7072, %v7141
  %v7198 = vadd.f32 %v7073, %v7154
  %v7199 = vadd.f32 %v7074, %v7167
  %v7200 = vadd.f32 %v7075, %v7180
  %v7201 = vadd.f32 %v7076, %v7193
  %v7202 = vld [vmem:[#allocation2 + $0x4] sm:$0xff]
  %v7203 = vld [vmem:[#allocation2 + $0xc] sm:$0xff]
  %v7204 = vld [vmem:[#allocation2 + $0x14] sm:$0xff]
  %v7205 = vld [vmem:[#allocation2 + $0x1c] sm:$0xf]
  %s7206 = scalar_lea.vmem %s14, 10
  %v7207 = vld [vmem:[%s7206] sm:$0x3]
  %v7212 = vunpack.c.l.b16 %v7202
  %v7213 = vunpack.c.h.b16 %v7202
  %v7214 = vunpack.c.l.b16 %v7203
  %v7215 = vunpack.c.h.b16 %v7203
  %v7216 = vunpack.c.l.b16 %v7204
  %v7217 = vunpack.c.h.b16 %v7204
  %v7218 = vunpack.c.l.b16 %v7205
  %v7219 = vpack.c.b16 %v7212, %v7212
  %v7220 = vpack.c.b16 %v7213, %v7213
  %v7221 = vpack.c.b16 %v7214, %v7214
  %v7222 = vpack.c.b16 %v7215, %v7215
  %v7223 = vpack.c.b16 %v7216, %v7216
  %v7224 = vpack.c.b16 %v7217, %v7217
  %v7225 = vpack.c.b16 %v7218, %v7218
  %7226 = vrot.lane.b32.xlu0 %v7219, 127
  %v7227 = vpop.permute.xlu0 %7226
  %7228 = vrot.lane.b32.xlu0 %v7220, 127
  %v7229 = vpop.permute.xlu0 %7228
  %7230 = vrot.lane.b32.xlu0 %v7221, 127
  %v7231 = vpop.permute.xlu0 %7230
  %7232 = vrot.lane.b32.xlu0 %v7222, 127
  %v7233 = vpop.permute.xlu0 %7232
  %7234 = vrot.lane.b32.xlu0 %v7223, 127
  %v7235 = vpop.permute.xlu0 %7234
  %7236 = vrot.lane.b32.xlu0 %v7224, 127
  %v7237 = vpop.permute.xlu0 %7236
  %7238 = vrot.lane.b32.xlu0 %v7225, 127
  %v7239 = vpop.permute.xlu0 %7238
  %v7240 = vsel %vm1082, %v7227, %v7229
  %v7241 = vsel %vm1082, %v7229, %v7231
  %v7242 = vsel %vm1082, %v7231, %v7233
  %v7243 = vsel %vm1082, %v7233, %v7235
  %v7244 = vsel %vm1082, %v7235, %v7237
  %v7245 = vsel %vm1082, %v7237, %v7239
  %v7247 = vsel %vm131, %v7207, 0
  %v7250 = vsel %vm138, %v7240, 0
  %v7253 = vsel %vm138, %v7241, 0
  %v7256 = vsel %vm138, %v7242, 0
  %v7259 = vsel %vm138, %v7243, 0
  %v7262 = vsel %vm138, %v7244, 0
  %v7265 = vsel %vm138, %v7245, 0
  %7267 = vmatpush.bf16.msra.mxu0 0
  %7268 = vmatpush.bf16.msra.mxu0 0
  %7269 = vmatpush.bf16.msra.mxu0 0
  %7270 = vmatpush.bf16.msra.mxu0 0
  %7271 = vmatpush.bf16.msra.mxu0 0
  %7272 = vmatpush.bf16.msra.mxu0 0
  %7273 = vmatpush.bf16.msra.mxu0 0
  %7274 = vmatpush.bf16.msra.mxu0 %v7250
  %7275 = vmatmul.bf16.gmra.mxu0 %v7247
  %v7276 = vpop.f32.mrf.mxu0
  %v7277 = vadd.f32 0.0, %v7276
  %v7278 = vpop.f32.mrf.mxu0
  %7279 = vdwg.mxu0
  %7280 = vmatpush.bf16.msra.mxu0 0
  %7281 = vmatpush.bf16.msra.mxu0 0
  %7282 = vmatpush.bf16.msra.mxu0 0
  %7283 = vmatpush.bf16.msra.mxu0 0
  %7284 = vmatpush.bf16.msra.mxu0 0
  %7285 = vmatpush.bf16.msra.mxu0 0
  %7286 = vmatpush.bf16.msra.mxu0 0
  %7287 = vmatpush.bf16.msra.mxu0 %v7253
  %7288 = vmatmul.bf16.gmra.mxu0 %v7247
  %v7289 = vpop.f32.mrf.mxu0
  %v7290 = vadd.f32 0.0, %v7289
  %v7291 = vpop.f32.mrf.mxu0
  %7292 = vdwg.mxu0
  %7293 = vmatpush.bf16.msra.mxu0 0
  %7294 = vmatpush.bf16.msra.mxu0 0
  %7295 = vmatpush.bf16.msra.mxu0 0
  %7296 = vmatpush.bf16.msra.mxu0 0
  %7297 = vmatpush.bf16.msra.mxu0 0
  %7298 = vmatpush.bf16.msra.mxu0 0
  %7299 = vmatpush.bf16.msra.mxu0 0
  %7300 = vmatpush.bf16.msra.mxu0 %v7256
  %7301 = vmatmul.bf16.gmra.mxu0 %v7247
  %v7302 = vpop.f32.mrf.mxu0
  %v7303 = vadd.f32 0.0, %v7302
  %v7304 = vpop.f32.mrf.mxu0
  %7305 = vdwg.mxu0
  %7306 = vmatpush.bf16.msra.mxu0 0
  %7307 = vmatpush.bf16.msra.mxu0 0
  %7308 = vmatpush.bf16.msra.mxu0 0
  %7309 = vmatpush.bf16.msra.mxu0 0
  %7310 = vmatpush.bf16.msra.mxu0 0
  %7311 = vmatpush.bf16.msra.mxu0 0
  %7312 = vmatpush.bf16.msra.mxu0 0
  %7313 = vmatpush.bf16.msra.mxu0 %v7259
  %7314 = vmatmul.bf16.gmra.mxu0 %v7247
  %v7315 = vpop.f32.mrf.mxu0
  %v7316 = vadd.f32 0.0, %v7315
  %v7317 = vpop.f32.mrf.mxu0
  %7318 = vdwg.mxu0
  %7319 = vmatpush.bf16.msra.mxu0 0
  %7320 = vmatpush.bf16.msra.mxu0 0
  %7321 = vmatpush.bf16.msra.mxu0 0
  %7322 = vmatpush.bf16.msra.mxu0 0
  %7323 = vmatpush.bf16.msra.mxu0 0
  %7324 = vmatpush.bf16.msra.mxu0 0
  %7325 = vmatpush.bf16.msra.mxu0 0
  %7326 = vmatpush.bf16.msra.mxu0 %v7262
  %7327 = vmatmul.bf16.gmra.mxu0 %v7247
  %v7328 = vpop.f32.mrf.mxu0
  %v7329 = vadd.f32 0.0, %v7328
  %v7330 = vpop.f32.mrf.mxu0
  %7331 = vdwg.mxu0
  %7332 = vmatpush.bf16.msra.mxu0 0
  %7333 = vmatpush.bf16.msra.mxu0 0
  %7334 = vmatpush.bf16.msra.mxu0 0
  %7335 = vmatpush.bf16.msra.mxu0 0
  %7336 = vmatpush.bf16.msra.mxu0 0
  %7337 = vmatpush.bf16.msra.mxu0 0
  %7338 = vmatpush.bf16.msra.mxu0 0
  %7339 = vmatpush.bf16.msra.mxu0 %v7265
  %7340 = vmatmul.bf16.gmra.mxu0 %v7247
  %v7341 = vpop.f32.mrf.mxu0
  %v7342 = vadd.f32 0.0, %v7341
  %v7343 = vpop.f32.mrf.mxu0
  %7344 = vdwg.mxu0
  %v7345 = vadd.f32 %v7196, %v7277
  %v7346 = vadd.f32 %v7197, %v7290
  %v7347 = vadd.f32 %v7198, %v7303
  %v7348 = vadd.f32 %v7199, %v7316
  %v7349 = vadd.f32 %v7200, %v7329
  %v7350 = vadd.f32 %v7201, %v7342
  %s7351 = scalar_lea.vmem %s14, 12
  %v7352 = vld [vmem:[%s7351] sm:$0x3]
  %7353 = vrot.lane.b32.xlu0 %v7219, 111
  %v7354 = vpop.permute.xlu0 %7353
  %7355 = vrot.lane.b32.xlu0 %v7220, 111
  %v7356 = vpop.permute.xlu0 %7355
  %7357 = vrot.lane.b32.xlu0 %v7221, 111
  %v7358 = vpop.permute.xlu0 %7357
  %7359 = vrot.lane.b32.xlu0 %v7222, 111
  %v7360 = vpop.permute.xlu0 %7359
  %7361 = vrot.lane.b32.xlu0 %v7223, 111
  %v7362 = vpop.permute.xlu0 %7361
  %7363 = vrot.lane.b32.xlu0 %v7224, 111
  %v7364 = vpop.permute.xlu0 %7363
  %7365 = vrot.lane.b32.xlu0 %v7225, 111
  %v7366 = vpop.permute.xlu0 %7365
  %v7367 = vsel %vm1280, %v7354, %v7356
  %v7368 = vsel %vm1280, %v7356, %v7358
  %v7369 = vsel %vm1280, %v7358, %v7360
  %v7370 = vsel %vm1280, %v7360, %v7362
  %v7371 = vsel %vm1280, %v7362, %v7364
  %v7372 = vsel %vm1280, %v7364, %v7366
  %v7374 = vsel %vm131, %v7352, 0
  %v7377 = vsel %vm138, %v7367, 0
  %v7380 = vsel %vm138, %v7368, 0
  %v7383 = vsel %vm138, %v7369, 0
  %v7386 = vsel %vm138, %v7370, 0
  %v7389 = vsel %vm138, %v7371, 0
  %v7392 = vsel %vm138, %v7372, 0
  %7394 = vmatpush.bf16.msra.mxu0 0
  %7395 = vmatpush.bf16.msra.mxu0 0
  %7396 = vmatpush.bf16.msra.mxu0 0
  %7397 = vmatpush.bf16.msra.mxu0 0
  %7398 = vmatpush.bf16.msra.mxu0 0
  %7399 = vmatpush.bf16.msra.mxu0 0
  %7400 = vmatpush.bf16.msra.mxu0 0
  %7401 = vmatpush.bf16.msra.mxu0 %v7377
  %7402 = vmatmul.bf16.gmra.mxu0 %v7374
  %v7403 = vpop.f32.mrf.mxu0
  %v7404 = vadd.f32 0.0, %v7403
  %v7405 = vpop.f32.mrf.mxu0
  %7406 = vdwg.mxu0
  %7407 = vmatpush.bf16.msra.mxu0 0
  %7408 = vmatpush.bf16.msra.mxu0 0
  %7409 = vmatpush.bf16.msra.mxu0 0
  %7410 = vmatpush.bf16.msra.mxu0 0
  %7411 = vmatpush.bf16.msra.mxu0 0
  %7412 = vmatpush.bf16.msra.mxu0 0
  %7413 = vmatpush.bf16.msra.mxu0 0
  %7414 = vmatpush.bf16.msra.mxu0 %v7380
  %7415 = vmatmul.bf16.gmra.mxu0 %v7374
  %v7416 = vpop.f32.mrf.mxu0
  %v7417 = vadd.f32 0.0, %v7416
  %v7418 = vpop.f32.mrf.mxu0
  %7419 = vdwg.mxu0
  %7420 = vmatpush.bf16.msra.mxu0 0
  %7421 = vmatpush.bf16.msra.mxu0 0
  %7422 = vmatpush.bf16.msra.mxu0 0
  %7423 = vmatpush.bf16.msra.mxu0 0
  %7424 = vmatpush.bf16.msra.mxu0 0
  %7425 = vmatpush.bf16.msra.mxu0 0
  %7426 = vmatpush.bf16.msra.mxu0 0
  %7427 = vmatpush.bf16.msra.mxu0 %v7383
  %7428 = vmatmul.bf16.gmra.mxu0 %v7374
  %v7429 = vpop.f32.mrf.mxu0
  %v7430 = vadd.f32 0.0, %v7429
  %v7431 = vpop.f32.mrf.mxu0
  %7432 = vdwg.mxu0
  %7433 = vmatpush.bf16.msra.mxu0 0
  %7434 = vmatpush.bf16.msra.mxu0 0
  %7435 = vmatpush.bf16.msra.mxu0 0
  %7436 = vmatpush.bf16.msra.mxu0 0
  %7437 = vmatpush.bf16.msra.mxu0 0
  %7438 = vmatpush.bf16.msra.mxu0 0
  %7439 = vmatpush.bf16.msra.mxu0 0
  %7440 = vmatpush.bf16.msra.mxu0 %v7386
  %7441 = vmatmul.bf16.gmra.mxu0 %v7374
  %v7442 = vpop.f32.mrf.mxu0
  %v7443 = vadd.f32 0.0, %v7442
  %v7444 = vpop.f32.mrf.mxu0
  %7445 = vdwg.mxu0
  %7446 = vmatpush.bf16.msra.mxu0 0
  %7447 = vmatpush.bf16.msra.mxu0 0
  %7448 = vmatpush.bf16.msra.mxu0 0
  %7449 = vmatpush.bf16.msra.mxu0 0
  %7450 = vmatpush.bf16.msra.mxu0 0
  %7451 = vmatpush.bf16.msra.mxu0 0
  %7452 = vmatpush.bf16.msra.mxu0 0
  %7453 = vmatpush.bf16.msra.mxu0 %v7389
  %7454 = vmatmul.bf16.gmra.mxu0 %v7374
  %v7455 = vpop.f32.mrf.mxu0
  %v7456 = vadd.f32 0.0, %v7455
  %v7457 = vpop.f32.mrf.mxu0
  %7458 = vdwg.mxu0
  %7459 = vmatpush.bf16.msra.mxu0 0
  %7460 = vmatpush.bf16.msra.mxu0 0
  %7461 = vmatpush.bf16.msra.mxu0 0
  %7462 = vmatpush.bf16.msra.mxu0 0
  %7463 = vmatpush.bf16.msra.mxu0 0
  %7464 = vmatpush.bf16.msra.mxu0 0
  %7465 = vmatpush.bf16.msra.mxu0 0
  %7466 = vmatpush.bf16.msra.mxu0 %v7392
  %7467 = vmatmul.bf16.gmra.mxu0 %v7374
  %v7468 = vpop.f32.mrf.mxu0
  %v7469 = vadd.f32 0.0, %v7468
  %v7470 = vpop.f32.mrf.mxu0
  %7471 = vdwg.mxu0
  %v7472 = vadd.f32 %v7345, %v7404
  %v7473 = vadd.f32 %v7346, %v7417
  %v7474 = vadd.f32 %v7347, %v7430
  %v7475 = vadd.f32 %v7348, %v7443
  %v7476 = vadd.f32 %v7349, %v7456
  %v7477 = vadd.f32 %v7350, %v7469
  %s7478 = scalar_lea.vmem %s14, 14
  %v7479 = vld [vmem:[%s7478] sm:$0x3]
  %7480 = vrot.lane.b32.xlu0 %v7219, 110
  %v7481 = vpop.permute.xlu0 %7480
  %7482 = vrot.lane.b32.xlu0 %v7220, 110
  %v7483 = vpop.permute.xlu0 %7482
  %7484 = vrot.lane.b32.xlu0 %v7221, 110
  %v7485 = vpop.permute.xlu0 %7484
  %7486 = vrot.lane.b32.xlu0 %v7222, 110
  %v7487 = vpop.permute.xlu0 %7486
  %7488 = vrot.lane.b32.xlu0 %v7223, 110
  %v7489 = vpop.permute.xlu0 %7488
  %7490 = vrot.lane.b32.xlu0 %v7224, 110
  %v7491 = vpop.permute.xlu0 %7490
  %7492 = vrot.lane.b32.xlu0 %v7225, 110
  %v7493 = vpop.permute.xlu0 %7492
  %v7494 = vsel %vm1478, %v7481, %v7483
  %v7495 = vsel %vm1478, %v7483, %v7485
  %v7496 = vsel %vm1478, %v7485, %v7487
  %v7497 = vsel %vm1478, %v7487, %v7489
  %v7498 = vsel %vm1478, %v7489, %v7491
  %v7499 = vsel %vm1478, %v7491, %v7493
  %v7501 = vsel %vm131, %v7479, 0
  %v7504 = vsel %vm138, %v7494, 0
  %v7507 = vsel %vm138, %v7495, 0
  %v7510 = vsel %vm138, %v7496, 0
  %v7513 = vsel %vm138, %v7497, 0
  %v7516 = vsel %vm138, %v7498, 0
  %v7519 = vsel %vm138, %v7499, 0
  %7521 = vmatpush.bf16.msra.mxu0 0
  %7522 = vmatpush.bf16.msra.mxu0 0
  %7523 = vmatpush.bf16.msra.mxu0 0
  %7524 = vmatpush.bf16.msra.mxu0 0
  %7525 = vmatpush.bf16.msra.mxu0 0
  %7526 = vmatpush.bf16.msra.mxu0 0
  %7527 = vmatpush.bf16.msra.mxu0 0
  %7528 = vmatpush.bf16.msra.mxu0 %v7504
  %7529 = vmatmul.bf16.gmra.mxu0 %v7501
  %v7530 = vpop.f32.mrf.mxu0
  %v7531 = vadd.f32 0.0, %v7530
  %v7532 = vpop.f32.mrf.mxu0
  %7533 = vdwg.mxu0
  %7534 = vmatpush.bf16.msra.mxu0 0
  %7535 = vmatpush.bf16.msra.mxu0 0
  %7536 = vmatpush.bf16.msra.mxu0 0
  %7537 = vmatpush.bf16.msra.mxu0 0
  %7538 = vmatpush.bf16.msra.mxu0 0
  %7539 = vmatpush.bf16.msra.mxu0 0
  %7540 = vmatpush.bf16.msra.mxu0 0
  %7541 = vmatpush.bf16.msra.mxu0 %v7507
  %7542 = vmatmul.bf16.gmra.mxu0 %v7501
  %v7543 = vpop.f32.mrf.mxu0
  %v7544 = vadd.f32 0.0, %v7543
  %v7545 = vpop.f32.mrf.mxu0
  %7546 = vdwg.mxu0
  %7547 = vmatpush.bf16.msra.mxu0 0
  %7548 = vmatpush.bf16.msra.mxu0 0
  %7549 = vmatpush.bf16.msra.mxu0 0
  %7550 = vmatpush.bf16.msra.mxu0 0
  %7551 = vmatpush.bf16.msra.mxu0 0
  %7552 = vmatpush.bf16.msra.mxu0 0
  %7553 = vmatpush.bf16.msra.mxu0 0
  %7554 = vmatpush.bf16.msra.mxu0 %v7510
  %7555 = vmatmul.bf16.gmra.mxu0 %v7501
  %v7556 = vpop.f32.mrf.mxu0
  %v7557 = vadd.f32 0.0, %v7556
  %v7558 = vpop.f32.mrf.mxu0
  %7559 = vdwg.mxu0
  %7560 = vmatpush.bf16.msra.mxu0 0
  %7561 = vmatpush.bf16.msra.mxu0 0
  %7562 = vmatpush.bf16.msra.mxu0 0
  %7563 = vmatpush.bf16.msra.mxu0 0
  %7564 = vmatpush.bf16.msra.mxu0 0
  %7565 = vmatpush.bf16.msra.mxu0 0
  %7566 = vmatpush.bf16.msra.mxu0 0
  %7567 = vmatpush.bf16.msra.mxu0 %v7513
  %7568 = vmatmul.bf16.gmra.mxu0 %v7501
  %v7569 = vpop.f32.mrf.mxu0
  %v7570 = vadd.f32 0.0, %v7569
  %v7571 = vpop.f32.mrf.mxu0
  %7572 = vdwg.mxu0
  %7573 = vmatpush.bf16.msra.mxu0 0
  %7574 = vmatpush.bf16.msra.mxu0 0
  %7575 = vmatpush.bf16.msra.mxu0 0
  %7576 = vmatpush.bf16.msra.mxu0 0
  %7577 = vmatpush.bf16.msra.mxu0 0
  %7578 = vmatpush.bf16.msra.mxu0 0
  %7579 = vmatpush.bf16.msra.mxu0 0
  %7580 = vmatpush.bf16.msra.mxu0 %v7516
  %7581 = vmatmul.bf16.gmra.mxu0 %v7501
  %v7582 = vpop.f32.mrf.mxu0
  %v7583 = vadd.f32 0.0, %v7582
  %v7584 = vpop.f32.mrf.mxu0
  %7585 = vdwg.mxu0
  %7586 = vmatpush.bf16.msra.mxu0 0
  %7587 = vmatpush.bf16.msra.mxu0 0
  %7588 = vmatpush.bf16.msra.mxu0 0
  %7589 = vmatpush.bf16.msra.mxu0 0
  %7590 = vmatpush.bf16.msra.mxu0 0
  %7591 = vmatpush.bf16.msra.mxu0 0
  %7592 = vmatpush.bf16.msra.mxu0 0
  %7593 = vmatpush.bf16.msra.mxu0 %v7519
  %7594 = vmatmul.bf16.gmra.mxu0 %v7501
  %v7595 = vpop.f32.mrf.mxu0
  %v7596 = vadd.f32 0.0, %v7595
  %v7597 = vpop.f32.mrf.mxu0
  %7598 = vdwg.mxu0
  %v7599 = vadd.f32 %v7472, %v7531
  %v7600 = vadd.f32 %v7473, %v7544
  %v7601 = vadd.f32 %v7474, %v7557
  %v7602 = vadd.f32 %v7475, %v7570
  %v7603 = vadd.f32 %v7476, %v7583
  %v7604 = vadd.f32 %v7477, %v7596
  %s7605 = scalar_lea.vmem %s14, 16
  %v7606 = vld [vmem:[%s7605] sm:$0x3]
  %7607 = vrot.lane.b32.xlu0 %v7219, 109
  %v7608 = vpop.permute.xlu0 %7607
  %7609 = vrot.lane.b32.xlu0 %v7220, 109
  %v7610 = vpop.permute.xlu0 %7609
  %7611 = vrot.lane.b32.xlu0 %v7221, 109
  %v7612 = vpop.permute.xlu0 %7611
  %7613 = vrot.lane.b32.xlu0 %v7222, 109
  %v7614 = vpop.permute.xlu0 %7613
  %7615 = vrot.lane.b32.xlu0 %v7223, 109
  %v7616 = vpop.permute.xlu0 %7615
  %7617 = vrot.lane.b32.xlu0 %v7224, 109
  %v7618 = vpop.permute.xlu0 %7617
  %7619 = vrot.lane.b32.xlu0 %v7225, 109
  %v7620 = vpop.permute.xlu0 %7619
  %v7621 = vsel %vm1676, %v7608, %v7610
  %v7622 = vsel %vm1676, %v7610, %v7612
  %v7623 = vsel %vm1676, %v7612, %v7614
  %v7624 = vsel %vm1676, %v7614, %v7616
  %v7625 = vsel %vm1676, %v7616, %v7618
  %v7626 = vsel %vm1676, %v7618, %v7620
  %v7628 = vsel %vm131, %v7606, 0
  %v7631 = vsel %vm138, %v7621, 0
  %v7634 = vsel %vm138, %v7622, 0
  %v7637 = vsel %vm138, %v7623, 0
  %v7640 = vsel %vm138, %v7624, 0
  %v7643 = vsel %vm138, %v7625, 0
  %v7646 = vsel %vm138, %v7626, 0
  %7648 = vmatpush.bf16.msra.mxu0 0
  %7649 = vmatpush.bf16.msra.mxu0 0
  %7650 = vmatpush.bf16.msra.mxu0 0
  %7651 = vmatpush.bf16.msra.mxu0 0
  %7652 = vmatpush.bf16.msra.mxu0 0
  %7653 = vmatpush.bf16.msra.mxu0 0
  %7654 = vmatpush.bf16.msra.mxu0 0
  %7655 = vmatpush.bf16.msra.mxu0 %v7631
  %7656 = vmatmul.bf16.gmra.mxu0 %v7628
  %v7657 = vpop.f32.mrf.mxu0
  %v7658 = vadd.f32 0.0, %v7657
  %v7659 = vpop.f32.mrf.mxu0
  %7660 = vdwg.mxu0
  %7661 = vmatpush.bf16.msra.mxu0 0
  %7662 = vmatpush.bf16.msra.mxu0 0
  %7663 = vmatpush.bf16.msra.mxu0 0
  %7664 = vmatpush.bf16.msra.mxu0 0
  %7665 = vmatpush.bf16.msra.mxu0 0
  %7666 = vmatpush.bf16.msra.mxu0 0
  %7667 = vmatpush.bf16.msra.mxu0 0
  %7668 = vmatpush.bf16.msra.mxu0 %v7634
  %7669 = vmatmul.bf16.gmra.mxu0 %v7628
  %v7670 = vpop.f32.mrf.mxu0
  %v7671 = vadd.f32 0.0, %v7670
  %v7672 = vpop.f32.mrf.mxu0
  %7673 = vdwg.mxu0
  %7674 = vmatpush.bf16.msra.mxu0 0
  %7675 = vmatpush.bf16.msra.mxu0 0
  %7676 = vmatpush.bf16.msra.mxu0 0
  %7677 = vmatpush.bf16.msra.mxu0 0
  %7678 = vmatpush.bf16.msra.mxu0 0
  %7679 = vmatpush.bf16.msra.mxu0 0
  %7680 = vmatpush.bf16.msra.mxu0 0
  %7681 = vmatpush.bf16.msra.mxu0 %v7637
  %7682 = vmatmul.bf16.gmra.mxu0 %v7628
  %v7683 = vpop.f32.mrf.mxu0
  %v7684 = vadd.f32 0.0, %v7683
  %v7685 = vpop.f32.mrf.mxu0
  %7686 = vdwg.mxu0
  %7687 = vmatpush.bf16.msra.mxu0 0
  %7688 = vmatpush.bf16.msra.mxu0 0
  %7689 = vmatpush.bf16.msra.mxu0 0
  %7690 = vmatpush.bf16.msra.mxu0 0
  %7691 = vmatpush.bf16.msra.mxu0 0
  %7692 = vmatpush.bf16.msra.mxu0 0
  %7693 = vmatpush.bf16.msra.mxu0 0
  %7694 = vmatpush.bf16.msra.mxu0 %v7640
  %7695 = vmatmul.bf16.gmra.mxu0 %v7628
  %v7696 = vpop.f32.mrf.mxu0
  %v7697 = vadd.f32 0.0, %v7696
  %v7698 = vpop.f32.mrf.mxu0
  %7699 = vdwg.mxu0
  %7700 = vmatpush.bf16.msra.mxu0 0
  %7701 = vmatpush.bf16.msra.mxu0 0
  %7702 = vmatpush.bf16.msra.mxu0 0
  %7703 = vmatpush.bf16.msra.mxu0 0
  %7704 = vmatpush.bf16.msra.mxu0 0
  %7705 = vmatpush.bf16.msra.mxu0 0
  %7706 = vmatpush.bf16.msra.mxu0 0
  %7707 = vmatpush.bf16.msra.mxu0 %v7643
  %7708 = vmatmul.bf16.gmra.mxu0 %v7628
  %v7709 = vpop.f32.mrf.mxu0
  %v7710 = vadd.f32 0.0, %v7709
  %v7711 = vpop.f32.mrf.mxu0
  %7712 = vdwg.mxu0
  %7713 = vmatpush.bf16.msra.mxu0 0
  %7714 = vmatpush.bf16.msra.mxu0 0
  %7715 = vmatpush.bf16.msra.mxu0 0
  %7716 = vmatpush.bf16.msra.mxu0 0
  %7717 = vmatpush.bf16.msra.mxu0 0
  %7718 = vmatpush.bf16.msra.mxu0 0
  %7719 = vmatpush.bf16.msra.mxu0 0
  %7720 = vmatpush.bf16.msra.mxu0 %v7646
  %7721 = vmatmul.bf16.gmra.mxu0 %v7628
  %v7722 = vpop.f32.mrf.mxu0
  %v7723 = vadd.f32 0.0, %v7722
  %v7724 = vpop.f32.mrf.mxu0
  %7725 = vdwg.mxu0
  %v7726 = vadd.f32 %v7599, %v7658
  %v7727 = vadd.f32 %v7600, %v7671
  %v7728 = vadd.f32 %v7601, %v7684
  %v7729 = vadd.f32 %v7602, %v7697
  %v7730 = vadd.f32 %v7603, %v7710
  %v7731 = vadd.f32 %v7604, %v7723
  %v7732 = vld [vmem:[%s15] sm:$0x7]
  %7734 = vset.pattern.permute.xlu0 0
  %7735 = vperm.xlu0 %7734, %v7732
  %v7736 = vpop.permute.xlu0 %7735
  %v7738 = vadd.f32 %v7726, %v7736
  %v7739 = vadd.f32 %v7727, %v7736
  %v7740 = vadd.f32 %v7728, %v7736
  %v7741 = vadd.f32 %v7729, %v7736
  %v7742 = vadd.f32 %v7730, %v7736
  %v7743 = vadd.f32 %v7731, %v7736
  %v7744 = vtanh.pop %v7738
  %v7745 = vtanh.pop %v7739
  %v7746 = vtanh.pop %v7740
  %v7747 = vtanh.pop %v7741
  %v7748 = vtanh.pop %v7742
  %v7749 = vtanh.pop %v7743
  %v7756 = vrot.slane %v7745, 4
  %v7757 = vrot.slane %v7747, 4
  %v7758 = vrot.slane %v7749, 4
  %v7759 = vsel %vm138, %v7744, %v7756
  %v7760 = vsel %vm138, %v7746, %v7757
  %v7761 = vsel %vm138, %v7748, %v7758
  %7765 = vst [vmem:[%s16] sm:$0x77] %v7759
  %7766 = vst [vmem:[%s16 + $0x8] sm:$0x77] %v7760
  %7767 = vst [vmem:[%s16 + $0x10] sm:$0x77] %v7761
  // Predicated region
  $region66: #{forward.1} parent=0 // pred_check
    _
  $region67: #{forward.1} parent=0 // pred_check_branch
    %7769 = sbr.rel (0) target = $region69
  $region68: #{forward.1} parent=0 // pred_region
    _
  $region69: #{forward.1} parent=0 // pred_fallthru
    _
  // Predicated region
  $region70: #{forward.1} parent=0 // pred_check
    _
  $region71: #{forward.1} parent=0 // pred_check_branch
    %7771 = sbr.rel (0) target = $region73
  $region72: #{forward.1} parent=0 // pred_region
    _
  $region73: #{forward.1} parent=0 // pred_fallthru
    _

</llo_original>
